<compile_context>
chip_gen: v7x
topology: tpu7x:2x2x1
jax: 0.10.0
libtpu: 0.0.40
codegen_flags: <defaults>
</compile_context>

<pallas_src>
import jax
import jax.numpy as jnp
import numpy as np
from jax.experimental import pallas as pl
from jax.experimental.pallas import tpu as pltpu

TOKEN_DIM = 768
N_OFFENCE = 4
N_ACTION = 8
HEAD_PAD = 128          # lane-dense fused head width (4 offence + 8 action + zeros)
LN_EPS = 1e-5
TK_MAX = 4096           # max K-tile (multiple of 256 for v6e/v7x MXU, of 128 for v5e)
TN = 384                # T-column tile (768 = 2 x 384) -> 'parallel' axis for megacore


def _round_up(x, m):
    return ((x + m - 1) // m) * m


# -----------------------------------------------------------------------------
# Kernel 1: streaming backbone stub  feats = x @ w_feat + b_feat
#   grid = (T // TN  [parallel],  F_pad // tk  [arbitrary / reduction])
# -----------------------------------------------------------------------------
def _backbone_kernel(x_ref, w_ref, b_ref, feats_ref):
    k = pl.program_id(1)

    @pl.when(k == 0)
    def _init():
        feats_ref[...] = jnp.zeros_like(feats_ref)

    feats_ref[...] += jnp.dot(
        x_ref[...], w_ref[...], preferred_element_type=jnp.float32
    )

    @pl.when(k == pl.num_programs(1) - 1)
    def _finalize():
        feats_ref[...] += b_ref[...]


# -----------------------------------------------------------------------------
# Kernel 2: epilogue (per-view heads, intern Linear+ReLU+LayerNorm, mv heads)
# -----------------------------------------------------------------------------
def _epilogue_kernel(
    feats_ref,    # (V*B_pad, T)   f32
    w_head_ref,   # (T, 128)       bf16  fused [fc_offence | fc_action | 0]
    b_head_ref,   # (1, 128)       f32
    w_in_ref,     # (V, T, V*T)    bf16  intern Linear, split per view
    b_in_ref,     # (1, V*T)       f32
    gamma_ref,    # (1, V*T)       f32
    beta_ref,     # (1, V*T)       f32
    w_mvh_ref,    # (V*T, 128)     bf16  fused [fc_mv_offence | fc_mv_actions | 0]
    b_mvh_ref,    # (1, 128)       f32
    head_ref,     # (V*B_pad, 128) f32
    mvh_ref,      # (B_pad, 128)   f32
):
    num_views = w_in_ref.shape[0]
    b_pad = mvh_ref.shape[0]

    feats = feats_ref[...]                                    # (V*B_pad, T) f32

    # Fused per-view heads: one matmul, lane-dense 128-wide unmasked store.
    head_ref[...] = (
        jnp.dot(feats.astype(jnp.bfloat16), w_head_ref[...],
                preferred_element_type=jnp.float32)
        + b_head_ref[...]
    )

    # intern Linear without torch.cat: sum_v feats_v @ w_in[v].
    # Slice in f32 (8-sublane aligned), cast each slice to bf16 for the MXU.
    y = jnp.dot(
        feats[0:b_pad, :].astype(jnp.bfloat16), w_in_ref[0],
        preferred_element_type=jnp.float32,
    )
    for v in range(1, num_views):                             # V is small, unrolled
        y = y + jnp.dot(
            feats[v * b_pad:(v + 1) * b_pad, :].astype(jnp.bfloat16),
            w_in_ref[v],
            preferred_element_type=jnp.float32,
        )
    y = jnp.maximum(y + b_in_ref[...], 0.0)                   # ReLU

    # Two-pass LayerNorm (centered variance, matches reference / PyTorch).
    mean = jnp.mean(y, axis=-1, keepdims=True)
    centered = y - mean
    var = jnp.mean(centered * centered, axis=-1, keepdims=True)
    yn = centered * jax.lax.rsqrt(var + LN_EPS)
    yn = yn * gamma_ref[...] + beta_ref[...]
    # Dropout(0.2) is identity at inference.

    # Fused multi-view heads.
    mvh_ref[...] = (
        jnp.dot(yn.astype(jnp.bfloat16), w_mvh_ref[...],
                preferred_element_type=jnp.float32)
        + b_mvh_ref[...]
    )


# -----------------------------------------------------------------------------
# One-time parameter preparation (call ONCE, reuse the returned dict).
# All bf16 casts / padding / head fusion happen here, NOT per forward call.
# -----------------------------------------------------------------------------
def prepare_params(params):
    F, T = params["w_feat"].shape
    VT = params["w_in"].shape[1]
    V = VT // T

    tk = min(TK_MAX, _round_up(F, 256))
    F_pad = _round_up(F, tk)

    w_feat = (
        jnp.zeros((F_pad, T), jnp.bfloat16)
        .at[:F, :].set(params["w_feat"].astype(jnp.bfloat16))
    )

    w_head = (
        jnp.zeros((T, HEAD_PAD), jnp.bfloat16)
        .at[:, :N_OFFENCE].set(params["w_off"].astype(jnp.bfloat16))
        .at[:, N_OFFENCE:N_OFFENCE + N_ACTION].set(params["w_act"].astype(jnp.bfloat16))
    )
    b_head = (
        jnp.zeros((1, HEAD_PAD), jnp.float32)
        .at[:, :N_OFFENCE].set(params["b_off"])
        .at[:, N_OFFENCE:N_OFFENCE + N_ACTION].set(params["b_act"])
    )

    w_mvh = (
        jnp.zeros((VT, HEAD_PAD), jnp.bfloat16)
        .at[:, :N_OFFENCE].set(params["w_mvoff"].astype(jnp.bfloat16))
        .at[:, N_OFFENCE:N_OFFENCE + N_ACTION].set(params["w_mvact"].astype(jnp.bfloat16))
    )
    b_mvh = (
        jnp.zeros((1, HEAD_PAD), jnp.float32)
        .at[:, :N_OFFENCE].set(params["b_mvoff"])
        .at[:, N_OFFENCE:N_OFFENCE + N_ACTION].set(params["b_mvact"])
    )

    prep = {
        "w_feat": w_feat,
        "b_feat": params["b_feat"].astype(jnp.float32),
        "w_head": w_head,
        "b_head": b_head,
        "w_in": params["w_in"].astype(jnp.bfloat16).reshape(V, T, VT),
        "b_in": params["b_in"].astype(jnp.float32),
        "gamma": params["gamma"].astype(jnp.float32),
        "beta": params["beta"].astype(jnp.float32),
        "w_mvh": w_mvh,
        "b_mvh": b_mvh,
    }
    return jax.block_until_ready(prep)


# -----------------------------------------------------------------------------
# Forward (jitted): only activation prep + two pallas_calls + cheap slicing.
# -----------------------------------------------------------------------------
@jax.jit
def xin_multimodal_forward(mvimages, prep):
    B, V, C, D, H, W = mvimages.shape
    T = TOKEN_DIM
    F = C * D * H * W
    VT = V * T

    F_pad = prep["w_feat"].shape[0]
    tk = min(TK_MAX, F_pad)          # consistent with prepare_params
    num_k = F_pad // tk
    num_tn = T // TN

    B_pad = _round_up(B, 8)          # per-view rows padded to full sublane tiles
    M = V * B_pad                    # stacked row count

    # Flatten each view (channel-major, matching torch .reshape on NCDHW) and
    # stack views along rows.  Pad only when actually needed.
    x = mvimages.reshape(B, V, F).transpose(1, 0, 2).astype(jnp.bfloat16)  # (V,B,F)
    if B == B_pad and F == F_pad:
        x_stack = x.reshape(M, F_pad)
    else:
        x_stack = (
            jnp.zeros((V, B_pad, F_pad), jnp.bfloat16).at[:, :B, :F].set(x)
        ).reshape(M, F_pad)

    # ---- Kernel 1: streaming backbone stub (HBM-bound) ----
    feats = pl.pallas_call(
        _backbone_kernel,
        out_shape=jax.ShapeDtypeStruct((M, T), jnp.float32),
        grid=(num_tn, num_k),
        in_specs=[
            pl.BlockSpec((M, tk), lambda j, k: (0, k)),       # x       (K-tiled)
            pl.BlockSpec((tk, TN), lambda j, k: (k, j)),      # w_feat  (K,T-tiled)
            pl.BlockSpec((1, TN), lambda j, k: (0, j)),       # b_feat
        ],
        out_specs=pl.BlockSpec((M, TN), lambda j, k: (0, j)), # feats (K-resident)
        compiler_params=pltpu.CompilerParams(
            dimension_semantics=("parallel", "arbitrary"),    # T cols / K reduction
            vmem_limit_bytes=48 * 1024 * 1024,                # safe under v7x 64 MiB
        ),
    )(x_stack, prep["w_feat"], prep["b_feat"])

    # ---- Kernel 2: tiny epilogue (heads + intern + LayerNorm + mv heads) ----
    head, mvh = pl.pallas_call(
        _epilogue_kernel,
        out_shape=[
            jax.ShapeDtypeStruct((M, HEAD_PAD), jnp.float32),
            jax.ShapeDtypeStruct((B_pad, HEAD_PAD), jnp.float32),
        ],
        grid=(1,),
        in_specs=[
            pl.BlockSpec((M, T), lambda i: (0, 0)),            # feats
            pl.BlockSpec((T, HEAD_PAD), lambda i: (0, 0)),     # w_head
            pl.BlockSpec((1, HEAD_PAD), lambda i: (0, 0)),     # b_head
            pl.BlockSpec((V, T, VT), lambda i: (0, 0, 0)),     # w_in
            pl.BlockSpec((1, VT), lambda i: (0, 0)),           # b_in
            pl.BlockSpec((1, VT), lambda i: (0, 0)),           # gamma
            pl.BlockSpec((1, VT), lambda i: (0, 0)),           # beta
            pl.BlockSpec((VT, HEAD_PAD), lambda i: (0, 0)),    # w_mvh
            pl.BlockSpec((1, HEAD_PAD), lambda i: (0, 0)),     # b_mvh
        ],
        out_specs=[
            pl.BlockSpec((M, HEAD_PAD), lambda i: (0, 0)),
            pl.BlockSpec((B_pad, HEAD_PAD), lambda i: (0, 0)),
        ],
        compiler_params=pltpu.CompilerParams(
            dimension_semantics=("arbitrary",),
            vmem_limit_bytes=32 * 1024 * 1024,
        ),
    )(feats, prep["w_head"], prep["b_head"], prep["w_in"], prep["b_in"],
      prep["gamma"], prep["beta"], prep["w_mvh"], prep["b_mvh"])

    # Un-pad / un-fuse in the wrapper (cheap XLA slices).
    head = head.reshape(V, B_pad, HEAD_PAD)
    output = {
        "mv_collection": {
            "offence_logits": mvh[:B, :N_OFFENCE],
            "action_logits": mvh[:B, N_OFFENCE:N_OFFENCE + N_ACTION],
        }
    }
    for i in range(V):
        output[f"single_{i}"] = {
            "offence_logits": head[i, :B, :N_OFFENCE],
            "action_logits": head[i, :B, N_OFFENCE:N_OFFENCE + N_ACTION],
        }
    return output


# -----------------------------------------------------------------------------
# Deterministic parameter initialization (synthetic weights)
# -----------------------------------------------------------------------------
def init_params(key, num_views, feat_in):
    T = TOKEN_DIM
    VT = num_views * T
    scale = 0.02
    ks = jax.random.split(key, 16)
    rnd = lambda k, shape: (scale * jax.random.normal(k, shape)).astype(jnp.float32)
    return {
        "w_feat": rnd(ks[0], (feat_in, T)),
        "b_feat": rnd(ks[1], (1, T)),
        "w_off": rnd(ks[2], (T, N_OFFENCE)),
        "b_off": rnd(ks[3], (1, N_OFFENCE)),
        "w_act": rnd(ks[4], (T, N_ACTION)),
        "b_act": rnd(ks[5], (1, N_ACTION)),
        "w_in": rnd(ks[6], (VT, VT)),
        "b_in": rnd(ks[7], (1, VT)),
        "gamma": jnp.ones((1, VT), jnp.float32),
        "beta": jnp.zeros((1, VT), jnp.float32),
        "w_mvoff": rnd(ks[8], (VT, N_OFFENCE)),
        "b_mvoff": rnd(ks[9], (1, N_OFFENCE)),
        "w_mvact": rnd(ks[10], (VT, N_ACTION)),
        "b_mvact": rnd(ks[11], (1, N_ACTION)),
    }


# -----------------------------------------------------------------------------
# Pure-JAX reference (same math & same bf16 casting pattern) for sanity check
# -----------------------------------------------------------------------------
def reference_forward(mvimages, params):
    B, V, C, D, H, W = mvimages.shape
    F = C * D * H * W
    x = mvimages.reshape(B, V, F).transpose(1, 0, 2)
    xb = x.astype(jnp.bfloat16)
    wf = params["w_feat"].astype(jnp.bfloat16)
    bf16 = jnp.bfloat16
    feats, offs, acts = [], [], []
    for v in range(V):
        f = jnp.dot(xb[v], wf, preferred_element_type=jnp.float32) + params["b_feat"]
        feats.append(f)
        fb = f.astype(bf16)
        offs.append(jnp.dot(fb, params["w_off"].astype(bf16),
                            preferred_element_type=jnp.float32) + params["b_off"])
        acts.append(jnp.dot(fb, params["w_act"].astype(bf16),
                            preferred_element_type=jnp.float32) + params["b_act"])
    h = jnp.concatenate([f.astype(bf16) for f in feats], axis=-1)
    y = jnp.dot(h, params["w_in"].astype(bf16),
                preferred_element_type=jnp.float32) + params["b_in"]
    y = jnp.maximum(y, 0.0)
    mean = jnp.mean(y, axis=-1, keepdims=True)
    var = jnp.mean((y - mean) ** 2, axis=-1, keepdims=True)
    yn = (y - mean) * jax.lax.rsqrt(var + LN_EPS) * params["gamma"] + params["beta"]
    yb = yn.astype(bf16)
    mvoff = jnp.dot(yb, params["w_mvoff"].astype(bf16),
                    preferred_element_type=jnp.float32) + params["b_mvoff"]
    mvact = jnp.dot(yb, params["w_mvact"].astype(bf16),
                    preferred_element_type=jnp.float32) + params["b_mvact"]
    return offs, acts, mvoff, mvact


if __name__ == "__main__":
    # Small shapes consistent with the module's (B, V, C, D, H, W) input.
    B, V, C, D, H, W = 2, 2, 3, 4, 8, 8
    key = jax.random.PRNGKey(0)
    k_in, k_par = jax.random.split(key)
    mvimages = jax.random.normal(k_in, (B, V, C, D, H, W), dtype=jnp.float32)
    params = init_params(k_par, V, C * D * H * W)

    # One-time parameter preparation (cached device arrays, reused every call).
    prep = prepare_params(params)

    out = xin_multimodal_forward(mvimages, prep)
    out = jax.block_until_ready(out)

    # Sanity check against the pure-JAX reference (bf16 matmuls, f32 accum).
    r_offs, r_acts, r_mvoff, r_mvact = reference_forward(mvimages, params)
    for i in range(V):
        np.testing.assert_allclose(
            np.asarray(out[f"single_{i}"]["offence_logits"]), np.asarray(r_offs[i]),
            atol=2e-2, rtol=2e-2)
        np.testing.assert_allclose(
            np.asarray(out[f"single_{i}"]["action_logits"]), np.asarray(r_acts[i]),
            atol=2e-2, rtol=2e-2)
    np.testing.assert_allclose(
        np.asarray(out["mv_collection"]["offence_logits"]), np.asarray(r_mvoff),
        atol=2e-2, rtol=2e-2)
    np.testing.assert_allclose(
        np.asarray(out["mv_collection"]["action_logits"]), np.asarray(r_mvact),
        atol=2e-2, rtol=2e-2)

    print("KERNEL_OK")
</pallas_src>

<mosaic_0001>
module attributes {stable_mosaic.version = 11 : i64} {
  func.func @_backbone_kernel(%arg0: i32, %arg1: i32, %arg2: memref<16x768xbf16, #tpu.memory_space<vmem>>, %arg3: memref<768x384xbf16, #tpu.memory_space<vmem>>, %arg4: memref<1x384xf32, #tpu.memory_space<vmem>>, %arg5: memref<16x384xf32, #tpu.memory_space<vmem>>) attributes {dimension_semantics = [#tpu.dimension_semantics<parallel>, #tpu.dimension_semantics<arbitrary>], iteration_bounds = array<i64: 2, 1>, scalar_prefetch = 0 : i64, scratch_operands = 0 : i64, tpu.core_type = #tpu.core_type<tc>, window_params = [{transform_indices = @transform_0, window_bounds = array<i64: 16, 768>}, {transform_indices = @transform_1, window_bounds = array<i64: 768, 384>}, {transform_indices = @transform_2, window_bounds = array<i64: 1, 384>}, {transform_indices = @transform_3, window_bounds = array<i64: 16, 384>}]} {
    %c0_i32 = arith.constant 0 : i32
    %0 = arith.cmpi eq, %arg1, %c0_i32 : i32
    %1 = arith.extui %0 : i1 to i32
    %c0_i32_0 = arith.constant 0 : i32
    %2 = arith.cmpi ne, %1, %c0_i32_0 : i32
    scf.if %2 {
      %cst_10 = arith.constant 0.000000e+00 : f32
      %12 = vector.broadcast %cst_10 : f32 to vector<16x384xf32>
      %c0_11 = arith.constant 0 : index
      %c0_12 = arith.constant 0 : index
      %13 = vector.load %arg5[%c0_11, %c0_12] : memref<16x384xf32, #tpu.memory_space<vmem>>, vector<16x384xf32>
      tpu.vector_store %arg5[%c0_11, %c0_12], %12 {strides = array<i32>} : memref<16x384xf32, #tpu.memory_space<vmem>>, vector<16x384xf32>,
    } else {
    }
    %c0 = arith.constant 0 : index
    %c0_1 = arith.constant 0 : index
    %3 = vector.load %arg5[%c0, %c0_1] : memref<16x384xf32, #tpu.memory_space<vmem>>, vector<16x384xf32>
    %c0_2 = arith.constant 0 : index
    %c0_3 = arith.constant 0 : index
    %4 = vector.load %arg2[%c0_2, %c0_3] : memref<16x768xbf16, #tpu.memory_space<vmem>>, vector<16x768xbf16>
    %c0_4 = arith.constant 0 : index
    %c0_5 = arith.constant 0 : index
    %5 = vector.load %arg3[%c0_4, %c0_5] : memref<768x384xbf16, #tpu.memory_space<vmem>>, vector<768x384xbf16>
    %cst = arith.constant dense<0.000000e+00> : vector<16x384xf32>
    %6 = tpu.matmul %4, %5, %cst {dimension_numbers = #tpu.dot_dimension_numbers<[1], [0], [0], [1], [0, 0, 1, 1], [], []>} : vector<16x768xbf16>, vector<768x384xbf16>, vector<16x384xf32> -> vector<16x384xf32>
    %7 = arith.addf %3, %6 : vector<16x384xf32>
    %c0_6 = arith.constant 0 : index
    %c0_7 = arith.constant 0 : index
    %8 = vector.load %arg5[%c0_6, %c0_7] : memref<16x384xf32, #tpu.memory_space<vmem>>, vector<16x384xf32>
    tpu.vector_store %arg5[%c0_6, %c0_7], %7 {strides = array<i32>} : memref<16x384xf32, #tpu.memory_space<vmem>>, vector<16x384xf32>,
    %c0_i32_8 = arith.constant 0 : i32
    %9 = arith.cmpi eq, %arg1, %c0_i32_8 : i32
    %10 = arith.extui %9 : i1 to i32
    %c0_i32_9 = arith.constant 0 : i32
    %11 = arith.cmpi ne, %10, %c0_i32_9 : i32
    scf.if %11 {
      %c0_10 = arith.constant 0 : index
      %c0_11 = arith.constant 0 : index
      %12 = vector.load %arg5[%c0_10, %c0_11] : memref<16x384xf32, #tpu.memory_space<vmem>>, vector<16x384xf32>
      %c0_12 = arith.constant 0 : index
      %c0_13 = arith.constant 0 : index
      %13 = vector.load %arg4[%c0_12, %c0_13] : memref<1x384xf32, #tpu.memory_space<vmem>>, vector<1x384xf32>
      %14 = vector.broadcast %13 : vector<1x384xf32> to vector<16x384xf32>
      %15 = arith.addf %12, %14 : vector<16x384xf32>
      %c0_14 = arith.constant 0 : index
      %c0_15 = arith.constant 0 : index
      %16 = vector.load %arg5[%c0_14, %c0_15] : memref<16x384xf32, #tpu.memory_space<vmem>>, vector<16x384xf32>
      tpu.vector_store %arg5[%c0_14, %c0_15], %15 {strides = array<i32>} : memref<16x384xf32, #tpu.memory_space<vmem>>, vector<16x384xf32>,
    } else {
    }
    return
  }
  func.func @transform_0(%arg0: i32, %arg1: i32) -> (i32, i32) {
    %c0_i32 = arith.constant 0 : i32
    %c0_i32_0 = arith.constant 0 : i32
    return %c0_i32, %arg1 : i32, i32
  }
  func.func @transform_1(%arg0: i32, %arg1: i32) -> (i32, i32) {
    %c0_i32 = arith.constant 0 : i32
    return %arg1, %arg0 : i32, i32
  }
  func.func @transform_2(%arg0: i32, %arg1: i32) -> (i32, i32) {
    %c0_i32 = arith.constant 0 : i32
    %c0_i32_0 = arith.constant 0 : i32
    return %c0_i32, %arg0 : i32, i32
  }
  func.func @transform_3(%arg0: i32, %arg1: i32) -> (i32, i32) {
    %c0_i32 = arith.constant 0 : i32
    %c0_i32_0 = arith.constant 0 : i32
    return %c0_i32, %arg0 : i32, i32
  }
}

module attributes {stable_mosaic.version = 11 : i64} {
  func.func @_epilogue_kernel(%arg0: i32, %arg1: memref<16x768xf32, #tpu.memory_space<vmem>>, %arg2: memref<768x128xbf16, #tpu.memory_space<vmem>>, %arg3: memref<1x128xf32, #tpu.memory_space<vmem>>, %arg4: memref<2x768x1536xbf16, #tpu.memory_space<vmem>>, %arg5: memref<1x1536xf32, #tpu.memory_space<vmem>>, %arg6: memref<1x1536xf32, #tpu.memory_space<vmem>>, %arg7: memref<1x1536xf32, #tpu.memory_space<vmem>>, %arg8: memref<1536x128xbf16, #tpu.memory_space<vmem>>, %arg9: memref<1x128xf32, #tpu.memory_space<vmem>>, %arg10: memref<16x128xf32, #tpu.memory_space<vmem>>, %arg11: memref<8x128xf32, #tpu.memory_space<vmem>>) attributes {dimension_semantics = [#tpu.dimension_semantics<arbitrary>], iteration_bounds = array<i64: 1>, scalar_prefetch = 0 : i64, scratch_operands = 0 : i64, tpu.core_type = #tpu.core_type<tc>, window_params = [{pipeline_mode = #tpu.pipeline_mode<synchronous>, transform_indices = @transform_0, window_bounds = array<i64: 16, 768>}, {pipeline_mode = #tpu.pipeline_mode<synchronous>, transform_indices = @transform_1, window_bounds = array<i64: 768, 128>}, {pipeline_mode = #tpu.pipeline_mode<synchronous>, transform_indices = @transform_2, window_bounds = array<i64: 1, 128>}, {pipeline_mode = #tpu.pipeline_mode<synchronous>, transform_indices = @transform_3, window_bounds = array<i64: 2, 768, 1536>}, {pipeline_mode = #tpu.pipeline_mode<synchronous>, transform_indices = @transform_4, window_bounds = array<i64: 1, 1536>}, {pipeline_mode = #tpu.pipeline_mode<synchronous>, transform_indices = @transform_5, window_bounds = array<i64: 1, 1536>}, {pipeline_mode = #tpu.pipeline_mode<synchronous>, transform_indices = @transform_6, window_bounds = array<i64: 1, 1536>}, {pipeline_mode = #tpu.pipeline_mode<synchronous>, transform_indices = @transform_7, window_bounds = array<i64: 1536, 128>}, {pipeline_mode = #tpu.pipeline_mode<synchronous>, transform_indices = @transform_8, window_bounds = array<i64: 1, 128>}, {pipeline_mode = #tpu.pipeline_mode<synchronous>, transform_indices = @transform_9, window_bounds = array<i64: 16, 128>}, {pipeline_mode = #tpu.pipeline_mode<synchronous>, transform_indices = @transform_10, window_bounds = array<i64: 8, 128>}]} {
    %c0 = arith.constant 0 : index
    %c0_0 = arith.constant 0 : index
    %0 = vector.load %arg1[%c0, %c0_0] : memref<16x768xf32, #tpu.memory_space<vmem>>, vector<16x768xf32>
    %1 = arith.truncf %0 : vector<16x768xf32> to vector<16x768xbf16>
    %c0_1 = arith.constant 0 : index
    %c0_2 = arith.constant 0 : index
    %2 = vector.load %arg2[%c0_1, %c0_2] : memref<768x128xbf16, #tpu.memory_space<vmem>>, vector<768x128xbf16>
    %cst = arith.constant dense<0.000000e+00> : vector<16x128xf32>
    %3 = tpu.matmul %1, %2, %cst {dimension_numbers = #tpu.dot_dimension_numbers<[1], [0], [0], [1], [0, 0, 1, 1], [], []>} : vector<16x768xbf16>, vector<768x128xbf16>, vector<16x128xf32> -> vector<16x128xf32>
    %c0_3 = arith.constant 0 : index
    %c0_4 = arith.constant 0 : index
    %4 = vector.load %arg3[%c0_3, %c0_4] : memref<1x128xf32, #tpu.memory_space<vmem>>, vector<1x128xf32>
    %5 = vector.broadcast %4 : vector<1x128xf32> to vector<16x128xf32>
    %6 = arith.addf %3, %5 : vector<16x128xf32>
    %c0_5 = arith.constant 0 : index
    %c0_6 = arith.constant 0 : index
    %7 = vector.load %arg10[%c0_5, %c0_6] : memref<16x128xf32, #tpu.memory_space<vmem>>, vector<16x128xf32>
    tpu.vector_store %arg10[%c0_5, %c0_6], %6 {strides = array<i32>} : memref<16x128xf32, #tpu.memory_space<vmem>>, vector<16x128xf32>,
    %8 = vector.extract_strided_slice %0 {offsets = [0, 0], sizes = [8, 768], strides = [1, 1]} : vector<16x768xf32> to vector<8x768xf32>
    %9 = arith.truncf %8 : vector<8x768xf32> to vector<8x768xbf16>
    %c0_7 = arith.constant 0 : index
    %c0_8 = arith.constant 0 : index
    %c0_9 = arith.constant 0 : index
    %10 = vector.load %arg4[%c0_7, %c0_8, %c0_9] : memref<2x768x1536xbf16, #tpu.memory_space<vmem>>, vector<1x768x1536xbf16>
    %11 = vector.shape_cast %10 : vector<1x768x1536xbf16> to vector<768x1536xbf16>
    %cst_10 = arith.constant dense<0.000000e+00> : vector<8x1536xf32>
    %12 = tpu.matmul %9, %11, %cst_10 {dimension_numbers = #tpu.dot_dimension_numbers<[1], [0], [0], [1], [0, 0, 1, 1], [], []>} : vector<8x768xbf16>, vector<768x1536xbf16>, vector<8x1536xf32> -> vector<8x1536xf32>
    %13 = vector.extract_strided_slice %0 {offsets = [8, 0], sizes = [8, 768], strides = [1, 1]} : vector<16x768xf32> to vector<8x768xf32>
    %14 = arith.truncf %13 : vector<8x768xf32> to vector<8x768xbf16>
    %c1 = arith.constant 1 : index
    %c0_11 = arith.constant 0 : index
    %c0_12 = arith.constant 0 : index
    %15 = vector.load %arg4[%c1, %c0_11, %c0_12] : memref<2x768x1536xbf16, #tpu.memory_space<vmem>>, vector<1x768x1536xbf16>
    %16 = vector.shape_cast %15 : vector<1x768x1536xbf16> to vector<768x1536xbf16>
    %cst_13 = arith.constant dense<0.000000e+00> : vector<8x1536xf32>
    %17 = tpu.matmul %14, %16, %cst_13 {dimension_numbers = #tpu.dot_dimension_numbers<[1], [0], [0], [1], [0, 0, 1, 1], [], []>} : vector<8x768xbf16>, vector<768x1536xbf16>, vector<8x1536xf32> -> vector<8x1536xf32>
    %18 = arith.addf %12, %17 : vector<8x1536xf32>
    %c0_14 = arith.constant 0 : index
    %c0_15 = arith.constant 0 : index
    %19 = vector.load %arg5[%c0_14, %c0_15] : memref<1x1536xf32, #tpu.memory_space<vmem>>, vector<1x1536xf32>
    %20 = vector.broadcast %19 : vector<1x1536xf32> to vector<8x1536xf32>
    %21 = arith.addf %18, %20 : vector<8x1536xf32>
    %cst_16 = arith.constant 0.000000e+00 : f32
    %22 = vector.broadcast %cst_16 : f32 to vector<8x1536xf32>
    %23 = arith.maximumf %21, %22 : vector<8x1536xf32>
    %cst_17 = arith.constant dense<0.000000e+00> : vector<8xf32>
    %24 = vector.multi_reduction <add>, %23, %cst_17 [1] : vector<8x1536xf32> to vector<8xf32>
    %25 = vector.shape_cast %24 : vector<8xf32> to vector<8x1xf32>
    %cst_18 = arith.constant 1.536000e+03 : f32
    %26 = vector.broadcast %cst_18 : f32 to vector<8x1xf32>
    %27 = arith.divf %25, %26 : vector<8x1xf32>
    %28 = vector.broadcast %27 : vector<8x1xf32> to vector<8x1536xf32>
    %29 = arith.subf %23, %28 : vector<8x1536xf32>
    %30 = arith.mulf %29, %29 : vector<8x1536xf32>
    %cst_19 = arith.constant dense<0.000000e+00> : vector<8xf32>
    %31 = vector.multi_reduction <add>, %30, %cst_19 [1] : vector<8x1536xf32> to vector<8xf32>
    %32 = vector.shape_cast %31 : vector<8xf32> to vector<8x1xf32>
    %cst_20 = arith.constant 1.536000e+03 : f32
    %33 = vector.broadcast %cst_20 : f32 to vector<8x1xf32>
    %34 = arith.divf %32, %33 : vector<8x1xf32>
    %cst_21 = arith.constant 9.99999974E-6 : f32
    %35 = vector.broadcast %cst_21 : f32 to vector<8x1xf32>
    %36 = arith.addf %34, %35 : vector<8x1xf32>
    %37 = math.rsqrt %36 : vector<8x1xf32>
    %38 = vector.broadcast %37 : vector<8x1xf32> to vector<8x1536xf32>
    %39 = arith.mulf %29, %38 : vector<8x1536xf32>
    %c0_22 = arith.constant 0 : index
    %c0_23 = arith.constant 0 : index
    %40 = vector.load %arg6[%c0_22, %c0_23] : memref<1x1536xf32, #tpu.memory_space<vmem>>, vector<1x1536xf32>
    %41 = vector.broadcast %40 : vector<1x1536xf32> to vector<8x1536xf32>
    %42 = arith.mulf %39, %41 : vector<8x1536xf32>
    %c0_24 = arith.constant 0 : index
    %c0_25 = arith.constant 0 : index
    %43 = vector.load %arg7[%c0_24, %c0_25] : memref<1x1536xf32, #tpu.memory_space<vmem>>, vector<1x1536xf32>
    %44 = vector.broadcast %43 : vector<1x1536xf32> to vector<8x1536xf32>
    %45 = arith.addf %42, %44 : vector<8x1536xf32>
    %46 = arith.truncf %45 : vector<8x1536xf32> to vector<8x1536xbf16>
    %c0_26 = arith.constant 0 : index
    %c0_27 = arith.constant 0 : index
    %47 = vector.load %arg8[%c0_26, %c0_27] : memref<1536x128xbf16, #tpu.memory_space<vmem>>, vector<1536x128xbf16>
    %cst_28 = arith.constant dense<0.000000e+00> : vector<8x128xf32>
    %48 = tpu.matmul %46, %47, %cst_28 {dimension_numbers = #tpu.dot_dimension_numbers<[1], [0], [0], [1], [0, 0, 1, 1], [], []>} : vector<8x1536xbf16>, vector<1536x128xbf16>, vector<8x128xf32> -> vector<8x128xf32>
    %c0_29 = arith.constant 0 : index
    %c0_30 = arith.constant 0 : index
    %49 = vector.load %arg9[%c0_29, %c0_30] : memref<1x128xf32, #tpu.memory_space<vmem>>, vector<1x128xf32>
    %50 = vector.broadcast %49 : vector<1x128xf32> to vector<8x128xf32>
    %51 = arith.addf %48, %50 : vector<8x128xf32>
    %c0_31 = arith.constant 0 : index
    %c0_32 = arith.constant 0 : index
    %52 = vector.load %arg11[%c0_31, %c0_32] : memref<8x128xf32, #tpu.memory_space<vmem>>, vector<8x128xf32>
    tpu.vector_store %arg11[%c0_31, %c0_32], %51 {strides = array<i32>} : memref<8x128xf32, #tpu.memory_space<vmem>>, vector<8x128xf32>,
    return
  }
  func.func @transform_0(%arg0: i32) -> (i32, i32) {
    %c0_i32 = arith.constant 0 : i32
    %c0_i32_0 = arith.constant 0 : i32
    %c0_i32_1 = arith.constant 0 : i32
    return %c0_i32, %c0_i32_0 : i32, i32
  }
  func.func @transform_1(%arg0: i32) -> (i32, i32) {
    %c0_i32 = arith.constant 0 : i32
    %c0_i32_0 = arith.constant 0 : i32
    %c0_i32_1 = arith.constant 0 : i32
    return %c0_i32, %c0_i32_0 : i32, i32
  }
  func.func @transform_2(%arg0: i32) -> (i32, i32) {
    %c0_i32 = arith.constant 0 : i32
    %c0_i32_0 = arith.constant 0 : i32
    %c0_i32_1 = arith.constant 0 : i32
    return %c0_i32, %c0_i32_0 : i32, i32
  }
  func.func @transform_3(%arg0: i32) -> (i32, i32, i32) {
    %c0_i32 = arith.constant 0 : i32
    %c0_i32_0 = arith.constant 0 : i32
    %c0_i32_1 = arith.constant 0 : i32
    %c0_i32_2 = arith.constant 0 : i32
    return %c0_i32, %c0_i32_0, %c0_i32_1 : i32, i32, i32
  }
  func.func @transform_4(%arg0: i32) -> (i32, i32) {
    %c0_i32 = arith.constant 0 : i32
    %c0_i32_0 = arith.constant 0 : i32
    %c0_i32_1 = arith.constant 0 : i32
    return %c0_i32, %c0_i32_0 : i32, i32
  }
  func.func @transform_5(%arg0: i32) -> (i32, i32) {
    %c0_i32 = arith.constant 0 : i32
    %c0_i32_0 = arith.constant 0 : i32
    %c0_i32_1 = arith.constant 0 : i32
    return %c0_i32, %c0_i32_0 : i32, i32
  }
  func.func @transform_6(%arg0: i32) -> (i32, i32) {
    %c0_i32 = arith.constant 0 : i32
    %c0_i32_0 = arith.constant 0 : i32
    %c0_i32_1 = arith.constant 0 : i32
    return %c0_i32, %c0_i32_0 : i32, i32
  }
  func.func @transform_7(%arg0: i32) -> (i32, i32) {
    %c0_i32 = arith.constant 0 : i32
    %c0_i32_0 = arith.constant 0 : i32
    %c0_i32_1 = arith.constant 0 : i32
    return %c0_i32, %c0_i32_0 : i32, i32
  }
  func.func @transform_8(%arg0: i32) -> (i32, i32) {
    %c0_i32 = arith.constant 0 : i32
    %c0_i32_0 = arith.constant 0 : i32
    %c0_i32_1 = arith.constant 0 : i32
    return %c0_i32, %c0_i32_0 : i32, i32
  }
  func.func @transform_9(%arg0: i32) -> (i32, i32) {
    %c0_i32 = arith.constant 0 : i32
    %c0_i32_0 = arith.constant 0 : i32
    %c0_i32_1 = arith.constant 0 : i32
    return %c0_i32, %c0_i32_0 : i32, i32
  }
  func.func @transform_10(%arg0: i32) -> (i32, i32) {
    %c0_i32 = arith.constant 0 : i32
    %c0_i32_0 = arith.constant 0 : i32
    %c0_i32_1 = arith.constant 0 : i32
    return %c0_i32, %c0_i32_0 : i32, i32
  }
}

</mosaic_0001>

<llo_original>
// kernel: xin_multimodal_forward.2
$region0: #{xin_multimodal_forward.2}
  #allocation0 [shape = 'u32[]', space=smem, size = 0x4, offset = 0x4, fixed_abs, tag = 'smem constant byte address 0x4 - core index']
  #allocation1 [shape = 'u32[144,128]{1,0:T(1,128)}', space=vmem, size = 0x12000, scoped, tag = 'internal scratch']
  %s0 = inlined_call_operand.vmem [shape: bf16[16,768], index: 0, kind: input, shape index: {}]
  %s1 = inlined_call_operand.hbm [shape: bf16[768,768], index: 1, kind: input, shape index: {}]
  %s2 = inlined_call_operand.hbm [shape: f32[1,768], index: 2, kind: input, shape index: {}]
  %s3 = inlined_call_operand.vmem [shape: f32[16,768], index: 3, kind: output, shape index: {}]
  %s4 = sld [smem:[#allocation0]]
  $region80: #{xin_multimodal_forward.2} parent=0
    _
  %s6 = ssub.s32 1, %s4
  %s7 = scalar_select 0, %s6, %s4
  $region1: #{xin_multimodal_forward.2} parent=0
    #allocation2 [shape = 'u8[1179648]{0}', space=vmem, size = 0x120000, scoped, tag = 'input window, operand 1']
    #allocation3 [shape = 's32[2]{0}', space=sflag, size = 0x8, scoped, tag = 'scoped memory for xin_multimodal_forward.2']
    #allocation4 [shape = 'u8[3072]{0}', space=vmem, size = 0xc00, scoped, tag = 'input window, operand 2']
    #allocation5 [shape = 's32[2]{0}', space=sflag, size = 0x8, scoped, tag = 'scoped memory for xin_multimodal_forward.2']
    #allocation6 [shape = 'u8[49152]{0}', space=vmem, size = 0xc000, scoped, tag = 'output window, operand 0']
    %8 = vsyncpa [#allocation3], 0
    %s9 = scalar_lea.sflag [#allocation3], 1
    %10 = vsyncpa %s9, 0
    %11 = vsyncpa [#allocation5], 0
    %s12 = scalar_lea.sflag [#allocation5], 1
    %13 = vsyncpa %s12, 0
    loop: start=0, step=1, limit=4
    $region2: #{xin_multimodal_forward.2} parent=1 // loop_pre_header
      _
    $region3: #{xin_multimodal_forward.2} parent=1 // loop_header
      %s15 = sphi 0, %s19
      %p16 = scmp.ge.s32.totalorder %s15, 4
      %s22 = sphi 0, %s34
      %s23 = sphi 0, %s30
      %s24 = sphi 0, %s22
      %s25 = sphi 0, %s23
      %s26 = sphi 0, %s24
      %s27 = sphi 0, %s25
      %s37 = sphi 0, %s39
      %s40 = sphi 0, %s37
      %s41 = sphi 0, %s40
      %s57 = sphi 0, %s41
      %s65 = sphi 0, %s67
      %s68 = sphi 0, %s65
      %s69 = sphi 0, %s68
      %s85 = sphi 0, %s69
      %s91 = sphi 0, %s93
      %s94 = sphi 0, %s91
      %s95 = sphi 0, %s94
      %s111 = sphi 0, %s95
      %s117 = sphi 0, %s119
      %s120 = sphi 0, %s117
      %s121 = sphi 0, %s120
      %s137 = sphi 0, %s121
    $region4: #{xin_multimodal_forward.2} parent=1 // loop_header_branch
      %18 = sbr.rel (%p16) target = $region8
    $region5: #{xin_multimodal_forward.2} parent=1 // loop_body
      %s20 = ssub.s32 %s15, 1
      %s21 = ssub.s32 %s15, 2
      %s28 = sadd.s32 1, %s23
      %p29 = scmp.ge.s32.totalorder %s28, 1
      %s30 = scalar_select %p29, 0, %s28
      %s31 = sadd.s32 1, %s22
      %s32 = scalar_select %p29, %s31, %s22
      %p33 = scmp.ge.s32.totalorder %s32, 2
      %s34 = scalar_select %p33, 0, %s32
      %s35 = ssub.s32 %s23, %s30
      %p36 = scmp.eq.s32.totalorder %s35, 0
      %s38 = sadd.s32 %s37, 1
      %s39 = scalar_select %p36, %s37, %s38
      %p42 = pneg %p36
      %p43 = scmp.eq.s32.totalorder %s15, 1
      %p44 = por %p42, %p43
      %p45 = scmp.ne.s32.totalorder %s37, %s40
      %p46 = scmp.eq.s32.totalorder %s15, 0
      %p47 = por %p45, %p46
      %p48 = scmp.ne.s32.totalorder %s37, %s40
      %p49 = scmp.eq.s32.totalorder %s20, 1
      %p50 = por %p48, %p49
      %p51 = scmp.ne.s32.totalorder %s40, %s41
      %p52 = scmp.eq.s32.totalorder %s20, 0
      %p53 = por %p51, %p52
      %p54 = scmp.ne.s32.totalorder %s40, %s41
      %p55 = scmp.eq.s32.totalorder %s21, 1
      %p56 = por %p54, %p55
      %p58 = scmp.ne.s32.totalorder %s41, %s57
      %p59 = scmp.eq.s32.totalorder %s21, 0
      %p60 = por %p58, %p59
      %s61 = ssub.s32 %s23, %s30
      %s62 = ssub.s32 %s22, %s34
      %s63 = sor.u32 %s61, %s62
      %p64 = scmp.eq.s32.totalorder %s63, 0
      %s66 = sadd.s32 %s65, 1
      %s67 = scalar_select %p64, %s65, %s66
      %p70 = pneg %p64
      %p71 = scmp.eq.s32.totalorder %s15, 1
      %p72 = por %p70, %p71
      %p73 = scmp.ne.s32.totalorder %s65, %s68
      %p74 = scmp.eq.s32.totalorder %s15, 0
      %p75 = por %p73, %p74
      %p76 = scmp.ne.s32.totalorder %s65, %s68
      %p77 = scmp.eq.s32.totalorder %s20, 1
      %p78 = por %p76, %p77
      %p79 = scmp.ne.s32.totalorder %s68, %s69
      %p80 = scmp.eq.s32.totalorder %s20, 0
      %p81 = por %p79, %p80
      %p82 = scmp.ne.s32.totalorder %s68, %s69
      %p83 = scmp.eq.s32.totalorder %s21, 1
      %p84 = por %p82, %p83
      %p86 = scmp.ne.s32.totalorder %s69, %s85
      %p87 = scmp.eq.s32.totalorder %s21, 0
      %p88 = por %p86, %p87
      %s89 = ssub.s32 %s22, %s34
      %p90 = scmp.eq.s32.totalorder %s89, 0
      %s92 = sadd.s32 %s91, 1
      %s93 = scalar_select %p90, %s91, %s92
      %p96 = pneg %p90
      %p97 = scmp.eq.s32.totalorder %s15, 1
      %p98 = por %p96, %p97
      %p99 = scmp.ne.s32.totalorder %s91, %s94
      %p100 = scmp.eq.s32.totalorder %s15, 0
      %p101 = por %p99, %p100
      %p102 = scmp.ne.s32.totalorder %s91, %s94
      %p103 = scmp.eq.s32.totalorder %s20, 1
      %p104 = por %p102, %p103
      %p105 = scmp.ne.s32.totalorder %s94, %s95
      %p106 = scmp.eq.s32.totalorder %s20, 0
      %p107 = por %p105, %p106
      %p108 = scmp.ne.s32.totalorder %s94, %s95
      %p109 = scmp.eq.s32.totalorder %s21, 1
      %p110 = por %p108, %p109
      %p112 = scmp.ne.s32.totalorder %s95, %s111
      %p113 = scmp.eq.s32.totalorder %s21, 0
      %p114 = por %p112, %p113
      %s115 = ssub.s32 %s22, %s34
      %p116 = scmp.eq.s32.totalorder %s115, 0
      %s118 = sadd.s32 %s117, 1
      %s119 = scalar_select %p116, %s117, %s118
      %p122 = pneg %p116
      %p123 = scmp.eq.s32.totalorder %s15, 1
      %p124 = por %p122, %p123
      %p125 = scmp.ne.s32.totalorder %s117, %s120
      %p126 = scmp.eq.s32.totalorder %s15, 0
      %p127 = por %p125, %p126
      %p128 = scmp.ne.s32.totalorder %s117, %s120
      %p129 = scmp.eq.s32.totalorder %s20, 1
      %p130 = por %p128, %p129
      %p131 = scmp.ne.s32.totalorder %s120, %s121
      %p132 = scmp.eq.s32.totalorder %s20, 0
      %p133 = por %p131, %p132
      %p134 = scmp.ne.s32.totalorder %s120, %s121
      %p135 = scmp.eq.s32.totalorder %s21, 1
      %p136 = por %p134, %p135
      %p138 = scmp.ne.s32.totalorder %s121, %s137
      %p139 = scmp.eq.s32.totalorder %s21, 0
      %p140 = por %p138, %p139
      %p141 = scmp.le.s32.totalorder 1, %s15
      %p142 = scmp.lt.s32.totalorder %s15, 3
      %p143 = pnand %p141, %p142
      %p144 = pneg %p143
      // Predicated region
      $region9: #{xin_multimodal_forward.2} parent=5 // pred_check
        _
      $region10: #{xin_multimodal_forward.2} parent=5 // pred_check_branch
        %146 = sbr.rel (%p143) target = $region12
      $region11: #{xin_multimodal_forward.2} parent=5 // pred_region
        %s147 = ssub.s32 %s15, 1
        // Predicated region
        $region13: #{xin_multimodal_forward.2} parent=11 // pred_check
          %p148 = pneg %p53
        $region14: #{xin_multimodal_forward.2} parent=11 // pred_check_branch
          %150 = sbr.rel (%p148) target = $region16
        $region15: #{xin_multimodal_forward.2} parent=11 // pred_region
          %s151 = smul.u32 6, %s25
          %p152 = scmp.lt.s32.totalorder %s151, 5
          %s153 = scalar_select %p152, %s151, 5
          %s154 = smul.addr %s153, 4
          %s155 = scalar_lea.vmem %s0, %s154
          %s156 = smul.u32 6, %s25
        $region16: #{xin_multimodal_forward.2} parent=11 // pred_fallthru
          _
      $region12: #{xin_multimodal_forward.2} parent=5 // pred_fallthru
        _
      %p157 = scmp.lt.s32.totalorder %s15, 2
      // Predicated region
      $region17: #{xin_multimodal_forward.2} parent=5 // pred_check
        %p158 = pneg %p157
      $region18: #{xin_multimodal_forward.2} parent=5 // pred_check_branch
        %160 = sbr.rel (%p158) target = $region20
      $region19: #{xin_multimodal_forward.2} parent=5 // pred_region
        // Predicated region
        $region21: #{xin_multimodal_forward.2} parent=19 // pred_check
          %p161 = pneg %p75
        $region22: #{xin_multimodal_forward.2} parent=19 // pred_check_branch
          %163 = sbr.rel (%p161) target = $region24
        $region23: #{xin_multimodal_forward.2} parent=19 // pred_region
          %s164 = sand.u32 %s65, 1
          %s165 = scalar_lea.sflag [#allocation3], %s164
          %s166 = sand.u32 %s65, 1
          %s167 = smul.addr %s166, 1152
          %s168 = scalar_lea.vmem [#allocation2], %s167
          %s169 = smul.u32 96, %s23
          %s170 = smul.u32 3, %s22
          %s172 = ssub.s32 18432, 18432
          %173 = vsyncadd %s165, %s172
          %s174 = smul.addr %s169, 6
          %s175 = sadd.s32 %s170, %s174
          %s176 = smul.addr %s175, 64
          %s177 = scalar_lea.hbm %s1, %s176
          %s178 = sshll.u32 %s168, 4
          %s179 = int_to_ptr.vmem [resolvable:$true] %s178
          %184 = dma.hbm_to_vmem [thread:$0]  %s177, 18432, %s179, %s165, 384, 192, 12
        $region24: #{xin_multimodal_forward.2} parent=19 // pred_fallthru
          _
        // Predicated region
        $region25: #{xin_multimodal_forward.2} parent=19 // pred_check
          %p185 = pneg %p101
        $region26: #{xin_multimodal_forward.2} parent=19 // pred_check_branch
          %187 = sbr.rel (%p185) target = $region28
        $region27: #{xin_multimodal_forward.2} parent=19 // pred_region
          %s188 = sand.u32 %s91, 1
          %s189 = scalar_lea.sflag [#allocation5], %s188
          %s190 = sand.u32 %s91, 1
          %s191 = smul.addr %s190, 3
          %s192 = scalar_lea.vmem [#allocation4], %s191
          %s193 = smul.u32 3, %s22
          %s195 = ssub.s32 48, 48
          %196 = vsyncadd %s189, %s195
          %s197 = smul.addr %s193, 16
          %s198 = scalar_lea.hbm %s2, %s197
          %s200 = sshll.u32 %s192, 4
          %s201 = int_to_ptr.vmem [resolvable:$true] %s200
          %203 = dma.hbm_to_vmem [thread:$0]  %s198, 48, %s201, %s189
        $region28: #{xin_multimodal_forward.2} parent=19 // pred_fallthru
          _
      $region20: #{xin_multimodal_forward.2} parent=5 // pred_fallthru
        _
      %p204 = scmp.le.s32.totalorder 1, %s15
      %p205 = scmp.lt.s32.totalorder %s15, 3
      %p206 = pnand %p204, %p205
      %p207 = pneg %p206
      // Predicated region
      $region29: #{xin_multimodal_forward.2} parent=5 // pred_check
        _
      $region30: #{xin_multimodal_forward.2} parent=5 // pred_check_branch
        %209 = sbr.rel (%p206) target = $region32
      $region31: #{xin_multimodal_forward.2} parent=5 // pred_region
        %s210 = ssub.s32 %s15, 1
        %s211 = sand.u32 %s68, 1
        %s212 = scalar_lea.sflag [#allocation3], %s211
        %s213 = sand.u32 %s68, 1
        %s214 = smul.addr %s213, 1152
        %s215 = scalar_lea.vmem [#allocation2], %s214
        // Predicated region
        $region33: #{xin_multimodal_forward.2} parent=31 // pred_check
          %p216 = pneg %p81
        $region34: #{xin_multimodal_forward.2} parent=31 // pred_check_branch
          %218 = sbr.rel (%p216) target = $region36
        $region35: #{xin_multimodal_forward.2} parent=31 // pred_region
          %219 = dma.done %s212, 18432
        $region36: #{xin_multimodal_forward.2} parent=31 // pred_fallthru
          _
        %s220 = sand.u32 %s94, 1
        %s221 = scalar_lea.sflag [#allocation5], %s220
        %s222 = sand.u32 %s94, 1
        %s223 = smul.addr %s222, 3
        %s224 = scalar_lea.vmem [#allocation4], %s223
        // Predicated region
        $region37: #{xin_multimodal_forward.2} parent=31 // pred_check
          %p225 = pneg %p107
        $region38: #{xin_multimodal_forward.2} parent=31 // pred_check_branch
          %227 = sbr.rel (%p225) target = $region40
        $region39: #{xin_multimodal_forward.2} parent=31 // pred_region
          %228 = dma.done %s221, 48
        $region40: #{xin_multimodal_forward.2} parent=31 // pred_fallthru
          _
        %s229 = smul.u32 6, %s25
        %p230 = scmp.lt.s32.totalorder %s229, 5
        %s231 = scalar_select %p230, %s229, 5
        %s232 = smul.addr %s231, 4
        %s233 = scalar_lea.vmem %s0, %s232
        %p234 = pneg %p53
        %p235 = pneg %p50
        %s236 = sand.u32 %s68, 1
        %s237 = scalar_lea.sflag [#allocation3], %s236
        %s238 = sand.u32 %s68, 1
        %s239 = smul.addr %s238, 1152
        %s240 = scalar_lea.vmem [#allocation2], %s239
        %p241 = pneg %p81
        %p242 = pneg %p78
        %s243 = sand.u32 %s94, 1
        %s244 = scalar_lea.sflag [#allocation5], %s243
        %s245 = sand.u32 %s94, 1
        %s246 = smul.addr %s245, 3
        %s247 = scalar_lea.vmem [#allocation4], %s246
        %p248 = pneg %p107
        %p249 = pneg %p104
        %p250 = pneg %p133
        %p251 = pneg %p130
        %s252 = sand.u32 %s120, 1
        %s253 = sand.u32 %s120, 1
        %s254 = smul.addr %s253, 48
        %s255 = scalar_lea.vmem [#allocation6], %s254
        %s256 = smul.u32 6, %s25
        %p257 = scmp.lt.s32.totalorder %s256, 5
        %s258 = scalar_select %p257, %s256, 5
        %s259 = smul.addr %s258, 4
        %s260 = scalar_lea.vmem %s0, %s259
        %s261 = smul.u32 6, %s25
        %s262 = smul.u32 96, %s25
        %s263 = smul.u32 3, %s24
        %s264 = smul.u32 3, %s24
        %s265 = smul.u32 3, %s24
        %p267 = scmp.eq.s32.totalorder %s25, 0
        // Predicated region
        $region41: #{xin_multimodal_forward.2} parent=31 // pred_check
          %p268 = pneg %p267
        $region42: #{xin_multimodal_forward.2} parent=31 // pred_check_branch
          %270 = sbr.rel (%p268) target = $region44
        $region43: #{xin_multimodal_forward.2} parent=31 // pred_region
          %271 = vst [vmem:[%s255] sm:$0xff] 0.0
          %272 = vst [vmem:[%s255 + $0x8] sm:$0xff] 0.0
          %273 = vst [vmem:[%s255 + $0x10] sm:$0xff] 0.0
          %274 = vst [vmem:[%s255 + $0x18] sm:$0xff] 0.0
          %275 = vst [vmem:[%s255 + $0x20] sm:$0xff] 0.0
          %276 = vst [vmem:[%s255 + $0x28] sm:$0xff] 0.0
        $region44: #{xin_multimodal_forward.2} parent=31 // pred_fallthru
          _
        %v277 = vld [vmem:[%s255] sm:$0xff]
        %v278 = vld [vmem:[%s255 + $0x8] sm:$0xff]
        %v279 = vld [vmem:[%s255 + $0x10] sm:$0xff]
        %v280 = vld [vmem:[%s255 + $0x18] sm:$0xff]
        %v281 = vld [vmem:[%s255 + $0x20] sm:$0xff]
        %v282 = vld [vmem:[%s255 + $0x28] sm:$0xff]
        %v283 = vld [vmem:[%s260] sm:$0xff]
        %v284 = vld [vmem:[%s260 + $0x8] sm:$0xff]
        %v285 = vld [vmem:[%s260 + $0x10] sm:$0xff]
        %v286 = vld [vmem:[%s260 + $0x18] sm:$0xff]
        %v287 = vld [vmem:[%s260 + $0x20] sm:$0xff]
        %v288 = vld [vmem:[%s260 + $0x28] sm:$0xff]
        %v289 = vld [vmem:[%s215] sm:$0xff]
        %v290 = vld [vmem:[%s215 + $0x8] sm:$0xf]
        %v291 = vld [vmem:[%s215 + $0xc] sm:$0xff]
        %v292 = vld [vmem:[%s215 + $0x14] sm:$0xf]
        %v293 = vld [vmem:[%s215 + $0x18] sm:$0xff]
        %v294 = vld [vmem:[%s215 + $0x20] sm:$0xf]
        %v295 = vld [vmem:[%s215 + $0x24] sm:$0xff]
        %v296 = vld [vmem:[%s215 + $0x2c] sm:$0xf]
        %v297 = vld [vmem:[%s215 + $0x30] sm:$0xff]
        %v298 = vld [vmem:[%s215 + $0x38] sm:$0xf]
        %v299 = vld [vmem:[%s215 + $0x3c] sm:$0xff]
        %v300 = vld [vmem:[%s215 + $0x44] sm:$0xf]
        %v301 = vld [vmem:[%s215 + $0x48] sm:$0xff]
        %v302 = vld [vmem:[%s215 + $0x50] sm:$0xf]
        %v303 = vld [vmem:[%s215 + $0x54] sm:$0xff]
        %v304 = vld [vmem:[%s215 + $0x5c] sm:$0xf]
        %v305 = vld [vmem:[%s215 + $0x60] sm:$0xff]
        %v306 = vld [vmem:[%s215 + $0x68] sm:$0xf]
        %v307 = vld [vmem:[%s215 + $0x6c] sm:$0xff]
        %v308 = vld [vmem:[%s215 + $0x74] sm:$0xf]
        %v309 = vld [vmem:[%s215 + $0x78] sm:$0xff]
        %v310 = vld [vmem:[%s215 + $0x80] sm:$0xf]
        %v311 = vld [vmem:[%s215 + $0x84] sm:$0xff]
        %v312 = vld [vmem:[%s215 + $0x8c] sm:$0xf]
        %v313 = vld [vmem:[%s215 + $0x90] sm:$0xff]
        %v314 = vld [vmem:[%s215 + $0x98] sm:$0xf]
        %v315 = vld [vmem:[%s215 + $0x9c] sm:$0xff]
        %v316 = vld [vmem:[%s215 + $0xa4] sm:$0xf]
        %v317 = vld [vmem:[%s215 + $0xa8] sm:$0xff]
        %v318 = vld [vmem:[%s215 + $0xb0] sm:$0xf]
        %v319 = vld [vmem:[%s215 + $0xb4] sm:$0xff]
        %v320 = vld [vmem:[%s215 + $0xbc] sm:$0xf]
        %v321 = vld [vmem:[%s215 + $0xc0] sm:$0xff]
        %v322 = vld [vmem:[%s215 + $0xc8] sm:$0xf]
        %v323 = vld [vmem:[%s215 + $0xcc] sm:$0xff]
        %v324 = vld [vmem:[%s215 + $0xd4] sm:$0xf]
        %v325 = vld [vmem:[%s215 + $0xd8] sm:$0xff]
        %v326 = vld [vmem:[%s215 + $0xe0] sm:$0xf]
        %v327 = vld [vmem:[%s215 + $0xe4] sm:$0xff]
        %v328 = vld [vmem:[%s215 + $0xec] sm:$0xf]
        %v329 = vld [vmem:[%s215 + $0xf0] sm:$0xff]
        %v330 = vld [vmem:[%s215 + $0xf8] sm:$0xf]
        %v331 = vld [vmem:[%s215 + $0xfc] sm:$0xff]
        %v332 = vld [vmem:[%s215 + $0x104] sm:$0xf]
        %v333 = vld [vmem:[%s215 + $0x108] sm:$0xff]
        %v334 = vld [vmem:[%s215 + $0x110] sm:$0xf]
        %v335 = vld [vmem:[%s215 + $0x114] sm:$0xff]
        %v336 = vld [vmem:[%s215 + $0x11c] sm:$0xf]
        %v337 = vld [vmem:[%s215 + $0x120] sm:$0xff]
        %v338 = vld [vmem:[%s215 + $0x128] sm:$0xf]
        %v339 = vld [vmem:[%s215 + $0x12c] sm:$0xff]
        %v340 = vld [vmem:[%s215 + $0x134] sm:$0xf]
        %v341 = vld [vmem:[%s215 + $0x138] sm:$0xff]
        %v342 = vld [vmem:[%s215 + $0x140] sm:$0xf]
        %v343 = vld [vmem:[%s215 + $0x144] sm:$0xff]
        %v344 = vld [vmem:[%s215 + $0x14c] sm:$0xf]
        %v345 = vld [vmem:[%s215 + $0x150] sm:$0xff]
        %v346 = vld [vmem:[%s215 + $0x158] sm:$0xf]
        %v347 = vld [vmem:[%s215 + $0x15c] sm:$0xff]
        %v348 = vld [vmem:[%s215 + $0x164] sm:$0xf]
        %v349 = vld [vmem:[%s215 + $0x168] sm:$0xff]
        %v350 = vld [vmem:[%s215 + $0x170] sm:$0xf]
        %v351 = vld [vmem:[%s215 + $0x174] sm:$0xff]
        %v352 = vld [vmem:[%s215 + $0x17c] sm:$0xf]
        %v353 = vld [vmem:[%s215 + $0x180] sm:$0xff]
        %v354 = vld [vmem:[%s215 + $0x188] sm:$0xf]
        %v355 = vld [vmem:[%s215 + $0x18c] sm:$0xff]
        %v356 = vld [vmem:[%s215 + $0x194] sm:$0xf]
        %v357 = vld [vmem:[%s215 + $0x198] sm:$0xff]
        %v358 = vld [vmem:[%s215 + $0x1a0] sm:$0xf]
        %v359 = vld [vmem:[%s215 + $0x1a4] sm:$0xff]
        %v360 = vld [vmem:[%s215 + $0x1ac] sm:$0xf]
        %v361 = vld [vmem:[%s215 + $0x1b0] sm:$0xff]
        %v362 = vld [vmem:[%s215 + $0x1b8] sm:$0xf]
        %v363 = vld [vmem:[%s215 + $0x1bc] sm:$0xff]
        %v364 = vld [vmem:[%s215 + $0x1c4] sm:$0xf]
        %v365 = vld [vmem:[%s215 + $0x1c8] sm:$0xff]
        %v366 = vld [vmem:[%s215 + $0x1d0] sm:$0xf]
        %v367 = vld [vmem:[%s215 + $0x1d4] sm:$0xff]
        %v368 = vld [vmem:[%s215 + $0x1dc] sm:$0xf]
        %v369 = vld [vmem:[%s215 + $0x1e0] sm:$0xff]
        %v370 = vld [vmem:[%s215 + $0x1e8] sm:$0xf]
        %v371 = vld [vmem:[%s215 + $0x1ec] sm:$0xff]
        %v372 = vld [vmem:[%s215 + $0x1f4] sm:$0xf]
        %v373 = vld [vmem:[%s215 + $0x1f8] sm:$0xff]
        %v374 = vld [vmem:[%s215 + $0x200] sm:$0xf]
        %v375 = vld [vmem:[%s215 + $0x204] sm:$0xff]
        %v376 = vld [vmem:[%s215 + $0x20c] sm:$0xf]
        %v377 = vld [vmem:[%s215 + $0x210] sm:$0xff]
        %v378 = vld [vmem:[%s215 + $0x218] sm:$0xf]
        %v379 = vld [vmem:[%s215 + $0x21c] sm:$0xff]
        %v380 = vld [vmem:[%s215 + $0x224] sm:$0xf]
        %v381 = vld [vmem:[%s215 + $0x228] sm:$0xff]
        %v382 = vld [vmem:[%s215 + $0x230] sm:$0xf]
        %v383 = vld [vmem:[%s215 + $0x234] sm:$0xff]
        %v384 = vld [vmem:[%s215 + $0x23c] sm:$0xf]
        %v385 = vld [vmem:[%s215 + $0x240] sm:$0xff]
        %v386 = vld [vmem:[%s215 + $0x248] sm:$0xf]
        %v387 = vld [vmem:[%s215 + $0x24c] sm:$0xff]
        %v388 = vld [vmem:[%s215 + $0x254] sm:$0xf]
        %v389 = vld [vmem:[%s215 + $0x258] sm:$0xff]
        %v390 = vld [vmem:[%s215 + $0x260] sm:$0xf]
        %v391 = vld [vmem:[%s215 + $0x264] sm:$0xff]
        %v392 = vld [vmem:[%s215 + $0x26c] sm:$0xf]
        %v393 = vld [vmem:[%s215 + $0x270] sm:$0xff]
        %v394 = vld [vmem:[%s215 + $0x278] sm:$0xf]
        %v395 = vld [vmem:[%s215 + $0x27c] sm:$0xff]
        %v396 = vld [vmem:[%s215 + $0x284] sm:$0xf]
        %v397 = vld [vmem:[%s215 + $0x288] sm:$0xff]
        %v398 = vld [vmem:[%s215 + $0x290] sm:$0xf]
        %v399 = vld [vmem:[%s215 + $0x294] sm:$0xff]
        %v400 = vld [vmem:[%s215 + $0x29c] sm:$0xf]
        %v401 = vld [vmem:[%s215 + $0x2a0] sm:$0xff]
        %v402 = vld [vmem:[%s215 + $0x2a8] sm:$0xf]
        %v403 = vld [vmem:[%s215 + $0x2ac] sm:$0xff]
        %v404 = vld [vmem:[%s215 + $0x2b4] sm:$0xf]
        %v405 = vld [vmem:[%s215 + $0x2b8] sm:$0xff]
        %v406 = vld [vmem:[%s215 + $0x2c0] sm:$0xf]
        %v407 = vld [vmem:[%s215 + $0x2c4] sm:$0xff]
        %v408 = vld [vmem:[%s215 + $0x2cc] sm:$0xf]
        %v409 = vld [vmem:[%s215 + $0x2d0] sm:$0xff]
        %v410 = vld [vmem:[%s215 + $0x2d8] sm:$0xf]
        %v411 = vld [vmem:[%s215 + $0x2dc] sm:$0xff]
        %v412 = vld [vmem:[%s215 + $0x2e4] sm:$0xf]
        %v413 = vld [vmem:[%s215 + $0x2e8] sm:$0xff]
        %v414 = vld [vmem:[%s215 + $0x2f0] sm:$0xf]
        %v415 = vld [vmem:[%s215 + $0x2f4] sm:$0xff]
        %v416 = vld [vmem:[%s215 + $0x2fc] sm:$0xf]
        %v417 = vld [vmem:[%s215 + $0x300] sm:$0xff]
        %v418 = vld [vmem:[%s215 + $0x308] sm:$0xf]
        %v419 = vld [vmem:[%s215 + $0x30c] sm:$0xff]
        %v420 = vld [vmem:[%s215 + $0x314] sm:$0xf]
        %v421 = vld [vmem:[%s215 + $0x318] sm:$0xff]
        %v422 = vld [vmem:[%s215 + $0x320] sm:$0xf]
        %v423 = vld [vmem:[%s215 + $0x324] sm:$0xff]
        %v424 = vld [vmem:[%s215 + $0x32c] sm:$0xf]
        %v425 = vld [vmem:[%s215 + $0x330] sm:$0xff]
        %v426 = vld [vmem:[%s215 + $0x338] sm:$0xf]
        %v427 = vld [vmem:[%s215 + $0x33c] sm:$0xff]
        %v428 = vld [vmem:[%s215 + $0x344] sm:$0xf]
        %v429 = vld [vmem:[%s215 + $0x348] sm:$0xff]
        %v430 = vld [vmem:[%s215 + $0x350] sm:$0xf]
        %v431 = vld [vmem:[%s215 + $0x354] sm:$0xff]
        %v432 = vld [vmem:[%s215 + $0x35c] sm:$0xf]
        %v433 = vld [vmem:[%s215 + $0x360] sm:$0xff]
        %v434 = vld [vmem:[%s215 + $0x368] sm:$0xf]
        %v435 = vld [vmem:[%s215 + $0x36c] sm:$0xff]
        %v436 = vld [vmem:[%s215 + $0x374] sm:$0xf]
        %v437 = vld [vmem:[%s215 + $0x378] sm:$0xff]
        %v438 = vld [vmem:[%s215 + $0x380] sm:$0xf]
        %v439 = vld [vmem:[%s215 + $0x384] sm:$0xff]
        %v440 = vld [vmem:[%s215 + $0x38c] sm:$0xf]
        %v441 = vld [vmem:[%s215 + $0x390] sm:$0xff]
        %v442 = vld [vmem:[%s215 + $0x398] sm:$0xf]
        %v443 = vld [vmem:[%s215 + $0x39c] sm:$0xff]
        %v444 = vld [vmem:[%s215 + $0x3a4] sm:$0xf]
        %v445 = vld [vmem:[%s215 + $0x3a8] sm:$0xff]
        %v446 = vld [vmem:[%s215 + $0x3b0] sm:$0xf]
        %v447 = vld [vmem:[%s215 + $0x3b4] sm:$0xff]
        %v448 = vld [vmem:[%s215 + $0x3bc] sm:$0xf]
        %v449 = vld [vmem:[%s215 + $0x3c0] sm:$0xff]
        %v450 = vld [vmem:[%s215 + $0x3c8] sm:$0xf]
        %v451 = vld [vmem:[%s215 + $0x3cc] sm:$0xff]
        %v452 = vld [vmem:[%s215 + $0x3d4] sm:$0xf]
        %v453 = vld [vmem:[%s215 + $0x3d8] sm:$0xff]
        %v454 = vld [vmem:[%s215 + $0x3e0] sm:$0xf]
        %v455 = vld [vmem:[%s215 + $0x3e4] sm:$0xff]
        %v456 = vld [vmem:[%s215 + $0x3ec] sm:$0xf]
        %v457 = vld [vmem:[%s215 + $0x3f0] sm:$0xff]
        %v458 = vld [vmem:[%s215 + $0x3f8] sm:$0xf]
        %v459 = vld [vmem:[%s215 + $0x3fc] sm:$0xff]
        %v460 = vld [vmem:[%s215 + $0x404] sm:$0xf]
        %v461 = vld [vmem:[%s215 + $0x408] sm:$0xff]
        %v462 = vld [vmem:[%s215 + $0x410] sm:$0xf]
        %v463 = vld [vmem:[%s215 + $0x414] sm:$0xff]
        %v464 = vld [vmem:[%s215 + $0x41c] sm:$0xf]
        %v465 = vld [vmem:[%s215 + $0x420] sm:$0xff]
        %v466 = vld [vmem:[%s215 + $0x428] sm:$0xf]
        %v467 = vld [vmem:[%s215 + $0x42c] sm:$0xff]
        %v468 = vld [vmem:[%s215 + $0x434] sm:$0xf]
        %v469 = vld [vmem:[%s215 + $0x438] sm:$0xff]
        %v470 = vld [vmem:[%s215 + $0x440] sm:$0xf]
        %v471 = vld [vmem:[%s215 + $0x444] sm:$0xff]
        %v472 = vld [vmem:[%s215 + $0x44c] sm:$0xf]
        %v473 = vld [vmem:[%s215 + $0x450] sm:$0xff]
        %v474 = vld [vmem:[%s215 + $0x458] sm:$0xf]
        %v475 = vld [vmem:[%s215 + $0x45c] sm:$0xff]
        %v476 = vld [vmem:[%s215 + $0x464] sm:$0xf]
        %v477 = vld [vmem:[%s215 + $0x468] sm:$0xff]
        %v478 = vld [vmem:[%s215 + $0x470] sm:$0xf]
        %v479 = vld [vmem:[%s215 + $0x474] sm:$0xff]
        %v480 = vld [vmem:[%s215 + $0x47c] sm:$0xf]
        %v487 = vunpack.c.l.b16 %v283
        %v488 = vunpack.c.h.b16 %v283
        %v489 = vunpack.c.l.b16 %v284
        %v490 = vunpack.c.h.b16 %v284
        %v491 = vunpack.c.l.b16 %v285
        %v492 = vunpack.c.h.b16 %v285
        %v493 = vunpack.c.l.b16 %v286
        %v494 = vunpack.c.h.b16 %v286
        %v495 = vunpack.c.l.b16 %v287
        %v496 = vunpack.c.h.b16 %v287
        %v497 = vunpack.c.l.b16 %v288
        %v498 = vunpack.c.h.b16 %v288
        %v499 = vpack.c.b16 %v493, %v487
        %v500 = vpack.c.b16 %v494, %v488
        %v501 = vpack.c.b16 %v495, %v489
        %v502 = vpack.c.b16 %v496, %v490
        %v503 = vpack.c.b16 %v497, %v491
        %v504 = vpack.c.b16 %v498, %v492
        %v703 = vunpack.c.l.b16 %v289
        %v704 = vunpack.c.h.b16 %v289
        %v705 = vunpack.c.l.b16 %v290
        %v706 = vunpack.c.l.b16 %v291
        %v707 = vunpack.c.h.b16 %v291
        %v708 = vunpack.c.l.b16 %v292
        %v709 = vunpack.c.l.b16 %v293
        %v710 = vunpack.c.h.b16 %v293
        %v711 = vunpack.c.l.b16 %v294
        %v712 = vunpack.c.l.b16 %v295
        %v713 = vunpack.c.h.b16 %v295
        %v714 = vunpack.c.l.b16 %v296
        %v715 = vunpack.c.l.b16 %v297
        %v716 = vunpack.c.h.b16 %v297
        %v717 = vunpack.c.l.b16 %v298
        %v718 = vunpack.c.l.b16 %v299
        %v719 = vunpack.c.h.b16 %v299
        %v720 = vunpack.c.l.b16 %v300
        %v721 = vunpack.c.l.b16 %v301
        %v722 = vunpack.c.h.b16 %v301
        %v723 = vunpack.c.l.b16 %v302
        %v724 = vunpack.c.l.b16 %v303
        %v725 = vunpack.c.h.b16 %v303
        %v726 = vunpack.c.l.b16 %v304
        %v727 = vunpack.c.l.b16 %v305
        %v728 = vunpack.c.h.b16 %v305
        %v729 = vunpack.c.l.b16 %v306
        %v730 = vunpack.c.l.b16 %v307
        %v731 = vunpack.c.h.b16 %v307
        %v732 = vunpack.c.l.b16 %v308
        %v733 = vunpack.c.l.b16 %v309
        %v734 = vunpack.c.h.b16 %v309
        %v735 = vunpack.c.l.b16 %v310
        %v736 = vunpack.c.l.b16 %v311
        %v737 = vunpack.c.h.b16 %v311
        %v738 = vunpack.c.l.b16 %v312
        %v739 = vunpack.c.l.b16 %v313
        %v740 = vunpack.c.h.b16 %v313
        %v741 = vunpack.c.l.b16 %v314
        %v742 = vunpack.c.l.b16 %v315
        %v743 = vunpack.c.h.b16 %v315
        %v744 = vunpack.c.l.b16 %v316
        %v745 = vunpack.c.l.b16 %v317
        %v746 = vunpack.c.h.b16 %v317
        %v747 = vunpack.c.l.b16 %v318
        %v748 = vunpack.c.l.b16 %v319
        %v749 = vunpack.c.h.b16 %v319
        %v750 = vunpack.c.l.b16 %v320
        %v751 = vunpack.c.l.b16 %v321
        %v752 = vunpack.c.h.b16 %v321
        %v753 = vunpack.c.l.b16 %v322
        %v754 = vunpack.c.l.b16 %v323
        %v755 = vunpack.c.h.b16 %v323
        %v756 = vunpack.c.l.b16 %v324
        %v757 = vunpack.c.l.b16 %v325
        %v758 = vunpack.c.h.b16 %v325
        %v759 = vunpack.c.l.b16 %v326
        %v760 = vunpack.c.l.b16 %v327
        %v761 = vunpack.c.h.b16 %v327
        %v762 = vunpack.c.l.b16 %v328
        %v763 = vunpack.c.l.b16 %v329
        %v764 = vunpack.c.h.b16 %v329
        %v765 = vunpack.c.l.b16 %v330
        %v766 = vunpack.c.l.b16 %v331
        %v767 = vunpack.c.h.b16 %v331
        %v768 = vunpack.c.l.b16 %v332
        %v769 = vunpack.c.l.b16 %v333
        %v770 = vunpack.c.h.b16 %v333
        %v771 = vunpack.c.l.b16 %v334
        %v772 = vunpack.c.l.b16 %v335
        %v773 = vunpack.c.h.b16 %v335
        %v774 = vunpack.c.l.b16 %v336
        %v775 = vunpack.c.l.b16 %v337
        %v776 = vunpack.c.h.b16 %v337
        %v777 = vunpack.c.l.b16 %v338
        %v778 = vunpack.c.l.b16 %v339
        %v779 = vunpack.c.h.b16 %v339
        %v780 = vunpack.c.l.b16 %v340
        %v781 = vunpack.c.l.b16 %v341
        %v782 = vunpack.c.h.b16 %v341
        %v783 = vunpack.c.l.b16 %v342
        %v784 = vunpack.c.l.b16 %v343
        %v785 = vunpack.c.h.b16 %v343
        %v786 = vunpack.c.l.b16 %v344
        %v787 = vunpack.c.l.b16 %v345
        %v788 = vunpack.c.h.b16 %v345
        %v789 = vunpack.c.l.b16 %v346
        %v790 = vunpack.c.l.b16 %v347
        %v791 = vunpack.c.h.b16 %v347
        %v792 = vunpack.c.l.b16 %v348
        %v793 = vunpack.c.l.b16 %v349
        %v794 = vunpack.c.h.b16 %v349
        %v795 = vunpack.c.l.b16 %v350
        %v796 = vunpack.c.l.b16 %v351
        %v797 = vunpack.c.h.b16 %v351
        %v798 = vunpack.c.l.b16 %v352
        %v799 = vunpack.c.l.b16 %v353
        %v800 = vunpack.c.h.b16 %v353
        %v801 = vunpack.c.l.b16 %v354
        %v802 = vunpack.c.l.b16 %v355
        %v803 = vunpack.c.h.b16 %v355
        %v804 = vunpack.c.l.b16 %v356
        %v805 = vunpack.c.l.b16 %v357
        %v806 = vunpack.c.h.b16 %v357
        %v807 = vunpack.c.l.b16 %v358
        %v808 = vunpack.c.l.b16 %v359
        %v809 = vunpack.c.h.b16 %v359
        %v810 = vunpack.c.l.b16 %v360
        %v811 = vunpack.c.l.b16 %v361
        %v812 = vunpack.c.h.b16 %v361
        %v813 = vunpack.c.l.b16 %v362
        %v814 = vunpack.c.l.b16 %v363
        %v815 = vunpack.c.h.b16 %v363
        %v816 = vunpack.c.l.b16 %v364
        %v817 = vunpack.c.l.b16 %v365
        %v818 = vunpack.c.h.b16 %v365
        %v819 = vunpack.c.l.b16 %v366
        %v820 = vunpack.c.l.b16 %v367
        %v821 = vunpack.c.h.b16 %v367
        %v822 = vunpack.c.l.b16 %v368
        %v823 = vunpack.c.l.b16 %v369
        %v824 = vunpack.c.h.b16 %v369
        %v825 = vunpack.c.l.b16 %v370
        %v826 = vunpack.c.l.b16 %v371
        %v827 = vunpack.c.h.b16 %v371
        %v828 = vunpack.c.l.b16 %v372
        %v829 = vunpack.c.l.b16 %v373
        %v830 = vunpack.c.h.b16 %v373
        %v831 = vunpack.c.l.b16 %v374
        %v832 = vunpack.c.l.b16 %v375
        %v833 = vunpack.c.h.b16 %v375
        %v834 = vunpack.c.l.b16 %v376
        %v835 = vunpack.c.l.b16 %v377
        %v836 = vunpack.c.h.b16 %v377
        %v837 = vunpack.c.l.b16 %v378
        %v838 = vunpack.c.l.b16 %v379
        %v839 = vunpack.c.h.b16 %v379
        %v840 = vunpack.c.l.b16 %v380
        %v841 = vunpack.c.l.b16 %v381
        %v842 = vunpack.c.h.b16 %v381
        %v843 = vunpack.c.l.b16 %v382
        %v844 = vunpack.c.l.b16 %v383
        %v845 = vunpack.c.h.b16 %v383
        %v846 = vunpack.c.l.b16 %v384
        %v847 = vunpack.c.l.b16 %v385
        %v848 = vunpack.c.h.b16 %v385
        %v849 = vunpack.c.l.b16 %v386
        %v850 = vunpack.c.l.b16 %v387
        %v851 = vunpack.c.h.b16 %v387
        %v852 = vunpack.c.l.b16 %v388
        %v853 = vunpack.c.l.b16 %v389
        %v854 = vunpack.c.h.b16 %v389
        %v855 = vunpack.c.l.b16 %v390
        %v856 = vunpack.c.l.b16 %v391
        %v857 = vunpack.c.h.b16 %v391
        %v858 = vunpack.c.l.b16 %v392
        %v859 = vunpack.c.l.b16 %v393
        %v860 = vunpack.c.h.b16 %v393
        %v861 = vunpack.c.l.b16 %v394
        %v862 = vunpack.c.l.b16 %v395
        %v863 = vunpack.c.h.b16 %v395
        %v864 = vunpack.c.l.b16 %v396
        %v865 = vunpack.c.l.b16 %v397
        %v866 = vunpack.c.h.b16 %v397
        %v867 = vunpack.c.l.b16 %v398
        %v868 = vunpack.c.l.b16 %v399
        %v869 = vunpack.c.h.b16 %v399
        %v870 = vunpack.c.l.b16 %v400
        %v871 = vunpack.c.l.b16 %v401
        %v872 = vunpack.c.h.b16 %v401
        %v873 = vunpack.c.l.b16 %v402
        %v874 = vunpack.c.l.b16 %v403
        %v875 = vunpack.c.h.b16 %v403
        %v876 = vunpack.c.l.b16 %v404
        %v877 = vunpack.c.l.b16 %v405
        %v878 = vunpack.c.h.b16 %v405
        %v879 = vunpack.c.l.b16 %v406
        %v880 = vunpack.c.l.b16 %v407
        %v881 = vunpack.c.h.b16 %v407
        %v882 = vunpack.c.l.b16 %v408
        %v883 = vunpack.c.l.b16 %v409
        %v884 = vunpack.c.h.b16 %v409
        %v885 = vunpack.c.l.b16 %v410
        %v886 = vunpack.c.l.b16 %v411
        %v887 = vunpack.c.h.b16 %v411
        %v888 = vunpack.c.l.b16 %v412
        %v889 = vunpack.c.l.b16 %v413
        %v890 = vunpack.c.h.b16 %v413
        %v891 = vunpack.c.l.b16 %v414
        %v892 = vunpack.c.l.b16 %v415
        %v893 = vunpack.c.h.b16 %v415
        %v894 = vunpack.c.l.b16 %v416
        %v895 = vunpack.c.l.b16 %v417
        %v896 = vunpack.c.h.b16 %v417
        %v897 = vunpack.c.l.b16 %v418
        %v898 = vunpack.c.l.b16 %v419
        %v899 = vunpack.c.h.b16 %v419
        %v900 = vunpack.c.l.b16 %v420
        %v901 = vunpack.c.l.b16 %v421
        %v902 = vunpack.c.h.b16 %v421
        %v903 = vunpack.c.l.b16 %v422
        %v904 = vunpack.c.l.b16 %v423
        %v905 = vunpack.c.h.b16 %v423
        %v906 = vunpack.c.l.b16 %v424
        %v907 = vunpack.c.l.b16 %v425
        %v908 = vunpack.c.h.b16 %v425
        %v909 = vunpack.c.l.b16 %v426
        %v910 = vunpack.c.l.b16 %v427
        %v911 = vunpack.c.h.b16 %v427
        %v912 = vunpack.c.l.b16 %v428
        %v913 = vunpack.c.l.b16 %v429
        %v914 = vunpack.c.h.b16 %v429
        %v915 = vunpack.c.l.b16 %v430
        %v916 = vunpack.c.l.b16 %v431
        %v917 = vunpack.c.h.b16 %v431
        %v918 = vunpack.c.l.b16 %v432
        %v919 = vunpack.c.l.b16 %v433
        %v920 = vunpack.c.h.b16 %v433
        %v921 = vunpack.c.l.b16 %v434
        %v922 = vunpack.c.l.b16 %v435
        %v923 = vunpack.c.h.b16 %v435
        %v924 = vunpack.c.l.b16 %v436
        %v925 = vunpack.c.l.b16 %v437
        %v926 = vunpack.c.h.b16 %v437
        %v927 = vunpack.c.l.b16 %v438
        %v928 = vunpack.c.l.b16 %v439
        %v929 = vunpack.c.h.b16 %v439
        %v930 = vunpack.c.l.b16 %v440
        %v931 = vunpack.c.l.b16 %v441
        %v932 = vunpack.c.h.b16 %v441
        %v933 = vunpack.c.l.b16 %v442
        %v934 = vunpack.c.l.b16 %v443
        %v935 = vunpack.c.h.b16 %v443
        %v936 = vunpack.c.l.b16 %v444
        %v937 = vunpack.c.l.b16 %v445
        %v938 = vunpack.c.h.b16 %v445
        %v939 = vunpack.c.l.b16 %v446
        %v940 = vunpack.c.l.b16 %v447
        %v941 = vunpack.c.h.b16 %v447
        %v942 = vunpack.c.l.b16 %v448
        %v943 = vunpack.c.l.b16 %v449
        %v944 = vunpack.c.h.b16 %v449
        %v945 = vunpack.c.l.b16 %v450
        %v946 = vunpack.c.l.b16 %v451
        %v947 = vunpack.c.h.b16 %v451
        %v948 = vunpack.c.l.b16 %v452
        %v949 = vunpack.c.l.b16 %v453
        %v950 = vunpack.c.h.b16 %v453
        %v951 = vunpack.c.l.b16 %v454
        %v952 = vunpack.c.l.b16 %v455
        %v953 = vunpack.c.h.b16 %v455
        %v954 = vunpack.c.l.b16 %v456
        %v955 = vunpack.c.l.b16 %v457
        %v956 = vunpack.c.h.b16 %v457
        %v957 = vunpack.c.l.b16 %v458
        %v958 = vunpack.c.l.b16 %v459
        %v959 = vunpack.c.h.b16 %v459
        %v960 = vunpack.c.l.b16 %v460
        %v961 = vunpack.c.l.b16 %v461
        %v962 = vunpack.c.h.b16 %v461
        %v963 = vunpack.c.l.b16 %v462
        %v964 = vunpack.c.l.b16 %v463
        %v965 = vunpack.c.h.b16 %v463
        %v966 = vunpack.c.l.b16 %v464
        %v967 = vunpack.c.l.b16 %v465
        %v968 = vunpack.c.h.b16 %v465
        %v969 = vunpack.c.l.b16 %v466
        %v970 = vunpack.c.l.b16 %v467
        %v971 = vunpack.c.h.b16 %v467
        %v972 = vunpack.c.l.b16 %v468
        %v973 = vunpack.c.l.b16 %v469
        %v974 = vunpack.c.h.b16 %v469
        %v975 = vunpack.c.l.b16 %v470
        %v976 = vunpack.c.l.b16 %v471
        %v977 = vunpack.c.h.b16 %v471
        %v978 = vunpack.c.l.b16 %v472
        %v979 = vunpack.c.l.b16 %v473
        %v980 = vunpack.c.h.b16 %v473
        %v981 = vunpack.c.l.b16 %v474
        %v982 = vunpack.c.l.b16 %v475
        %v983 = vunpack.c.h.b16 %v475
        %v984 = vunpack.c.l.b16 %v476
        %v985 = vunpack.c.l.b16 %v477
        %v986 = vunpack.c.h.b16 %v477
        %v987 = vunpack.c.l.b16 %v478
        %v988 = vunpack.c.l.b16 %v479
        %v989 = vunpack.c.h.b16 %v479
        %v990 = vunpack.c.l.b16 %v480
        %v991 = vpack.c.b16 %v706, %v703
        %v992 = vpack.c.b16 %v707, %v704
        %v993 = vpack.c.b16 %v708, %v705
        %v994 = vpack.c.b16 %v712, %v709
        %v995 = vpack.c.b16 %v713, %v710
        %v996 = vpack.c.b16 %v714, %v711
        %v997 = vpack.c.b16 %v718, %v715
        %v998 = vpack.c.b16 %v719, %v716
        %v999 = vpack.c.b16 %v720, %v717
        %v1000 = vpack.c.b16 %v724, %v721
        %v1001 = vpack.c.b16 %v725, %v722
        %v1002 = vpack.c.b16 %v726, %v723
        %v1003 = vpack.c.b16 %v730, %v727
        %v1004 = vpack.c.b16 %v731, %v728
        %v1005 = vpack.c.b16 %v732, %v729
        %v1006 = vpack.c.b16 %v736, %v733
        %v1007 = vpack.c.b16 %v737, %v734
        %v1008 = vpack.c.b16 %v738, %v735
        %v1009 = vpack.c.b16 %v742, %v739
        %v1010 = vpack.c.b16 %v743, %v740
        %v1011 = vpack.c.b16 %v744, %v741
        %v1012 = vpack.c.b16 %v748, %v745
        %v1013 = vpack.c.b16 %v749, %v746
        %v1014 = vpack.c.b16 %v750, %v747
        %v1015 = vpack.c.b16 %v754, %v751
        %v1016 = vpack.c.b16 %v755, %v752
        %v1017 = vpack.c.b16 %v756, %v753
        %v1018 = vpack.c.b16 %v760, %v757
        %v1019 = vpack.c.b16 %v761, %v758
        %v1020 = vpack.c.b16 %v762, %v759
        %v1021 = vpack.c.b16 %v766, %v763
        %v1022 = vpack.c.b16 %v767, %v764
        %v1023 = vpack.c.b16 %v768, %v765
        %v1024 = vpack.c.b16 %v772, %v769
        %v1025 = vpack.c.b16 %v773, %v770
        %v1026 = vpack.c.b16 %v774, %v771
        %v1027 = vpack.c.b16 %v778, %v775
        %v1028 = vpack.c.b16 %v779, %v776
        %v1029 = vpack.c.b16 %v780, %v777
        %v1030 = vpack.c.b16 %v784, %v781
        %v1031 = vpack.c.b16 %v785, %v782
        %v1032 = vpack.c.b16 %v786, %v783
        %v1033 = vpack.c.b16 %v790, %v787
        %v1034 = vpack.c.b16 %v791, %v788
        %v1035 = vpack.c.b16 %v792, %v789
        %v1036 = vpack.c.b16 %v796, %v793
        %v1037 = vpack.c.b16 %v797, %v794
        %v1038 = vpack.c.b16 %v798, %v795
        %v1039 = vpack.c.b16 %v802, %v799
        %v1040 = vpack.c.b16 %v803, %v800
        %v1041 = vpack.c.b16 %v804, %v801
        %v1042 = vpack.c.b16 %v808, %v805
        %v1043 = vpack.c.b16 %v809, %v806
        %v1044 = vpack.c.b16 %v810, %v807
        %v1045 = vpack.c.b16 %v814, %v811
        %v1046 = vpack.c.b16 %v815, %v812
        %v1047 = vpack.c.b16 %v816, %v813
        %v1048 = vpack.c.b16 %v820, %v817
        %v1049 = vpack.c.b16 %v821, %v818
        %v1050 = vpack.c.b16 %v822, %v819
        %v1051 = vpack.c.b16 %v826, %v823
        %v1052 = vpack.c.b16 %v827, %v824
        %v1053 = vpack.c.b16 %v828, %v825
        %v1054 = vpack.c.b16 %v832, %v829
        %v1055 = vpack.c.b16 %v833, %v830
        %v1056 = vpack.c.b16 %v834, %v831
        %v1057 = vpack.c.b16 %v838, %v835
        %v1058 = vpack.c.b16 %v839, %v836
        %v1059 = vpack.c.b16 %v840, %v837
        %v1060 = vpack.c.b16 %v844, %v841
        %v1061 = vpack.c.b16 %v845, %v842
        %v1062 = vpack.c.b16 %v846, %v843
        %v1063 = vpack.c.b16 %v850, %v847
        %v1064 = vpack.c.b16 %v851, %v848
        %v1065 = vpack.c.b16 %v852, %v849
        %v1066 = vpack.c.b16 %v856, %v853
        %v1067 = vpack.c.b16 %v857, %v854
        %v1068 = vpack.c.b16 %v858, %v855
        %v1069 = vpack.c.b16 %v862, %v859
        %v1070 = vpack.c.b16 %v863, %v860
        %v1071 = vpack.c.b16 %v864, %v861
        %v1072 = vpack.c.b16 %v868, %v865
        %v1073 = vpack.c.b16 %v869, %v866
        %v1074 = vpack.c.b16 %v870, %v867
        %v1075 = vpack.c.b16 %v874, %v871
        %v1076 = vpack.c.b16 %v875, %v872
        %v1077 = vpack.c.b16 %v876, %v873
        %v1078 = vpack.c.b16 %v880, %v877
        %v1079 = vpack.c.b16 %v881, %v878
        %v1080 = vpack.c.b16 %v882, %v879
        %v1081 = vpack.c.b16 %v886, %v883
        %v1082 = vpack.c.b16 %v887, %v884
        %v1083 = vpack.c.b16 %v888, %v885
        %v1084 = vpack.c.b16 %v892, %v889
        %v1085 = vpack.c.b16 %v893, %v890
        %v1086 = vpack.c.b16 %v894, %v891
        %v1087 = vpack.c.b16 %v898, %v895
        %v1088 = vpack.c.b16 %v899, %v896
        %v1089 = vpack.c.b16 %v900, %v897
        %v1090 = vpack.c.b16 %v904, %v901
        %v1091 = vpack.c.b16 %v905, %v902
        %v1092 = vpack.c.b16 %v906, %v903
        %v1093 = vpack.c.b16 %v910, %v907
        %v1094 = vpack.c.b16 %v911, %v908
        %v1095 = vpack.c.b16 %v912, %v909
        %v1096 = vpack.c.b16 %v916, %v913
        %v1097 = vpack.c.b16 %v917, %v914
        %v1098 = vpack.c.b16 %v918, %v915
        %v1099 = vpack.c.b16 %v922, %v919
        %v1100 = vpack.c.b16 %v923, %v920
        %v1101 = vpack.c.b16 %v924, %v921
        %v1102 = vpack.c.b16 %v928, %v925
        %v1103 = vpack.c.b16 %v929, %v926
        %v1104 = vpack.c.b16 %v930, %v927
        %v1105 = vpack.c.b16 %v934, %v931
        %v1106 = vpack.c.b16 %v935, %v932
        %v1107 = vpack.c.b16 %v936, %v933
        %v1108 = vpack.c.b16 %v940, %v937
        %v1109 = vpack.c.b16 %v941, %v938
        %v1110 = vpack.c.b16 %v942, %v939
        %v1111 = vpack.c.b16 %v946, %v943
        %v1112 = vpack.c.b16 %v947, %v944
        %v1113 = vpack.c.b16 %v948, %v945
        %v1114 = vpack.c.b16 %v952, %v949
        %v1115 = vpack.c.b16 %v953, %v950
        %v1116 = vpack.c.b16 %v954, %v951
        %v1117 = vpack.c.b16 %v958, %v955
        %v1118 = vpack.c.b16 %v959, %v956
        %v1119 = vpack.c.b16 %v960, %v957
        %v1120 = vpack.c.b16 %v964, %v961
        %v1121 = vpack.c.b16 %v965, %v962
        %v1122 = vpack.c.b16 %v966, %v963
        %v1123 = vpack.c.b16 %v970, %v967
        %v1124 = vpack.c.b16 %v971, %v968
        %v1125 = vpack.c.b16 %v972, %v969
        %v1126 = vpack.c.b16 %v976, %v973
        %v1127 = vpack.c.b16 %v977, %v974
        %v1128 = vpack.c.b16 %v978, %v975
        %v1129 = vpack.c.b16 %v982, %v979
        %v1130 = vpack.c.b16 %v983, %v980
        %v1131 = vpack.c.b16 %v984, %v981
        %v1132 = vpack.c.b16 %v988, %v985
        %v1133 = vpack.c.b16 %v989, %v986
        %v1134 = vpack.c.b16 %v990, %v987
        %1279 = vmatprep.subr.bf16.mxu0 %v992
        %1280 = vmatpush1.bf16.msra.mxu0 %v991
        %1281 = vmatprep.subr.bf16.mxu0 %v995
        %1282 = vmatpush1.bf16.msra.mxu0 %v994
        %1283 = vmatprep.subr.bf16.mxu0 %v998
        %1284 = vmatpush1.bf16.msra.mxu0 %v997
        %1285 = vmatprep.subr.bf16.mxu0 %v1001
        %1286 = vmatpush1.bf16.msra.mxu0 %v1000
        %1287 = vmatprep.subr.bf16.mxu0 %v1004
        %1288 = vmatpush1.bf16.msra.mxu0 %v1003
        %1289 = vmatprep.subr.bf16.mxu0 %v1007
        %1290 = vmatpush1.bf16.msra.mxu0 %v1006
        %1291 = vmatprep.subr.bf16.mxu0 %v1010
        %1292 = vmatpush1.bf16.msra.mxu0 %v1009
        %1293 = vmatprep.subr.bf16.mxu0 %v1013
        %1294 = vmatpush1.bf16.msra.mxu0 %v1012
        %1295 = vmatprep.subr.bf16.mxu0 %v1016
        %1296 = vmatpush1.bf16.msra.mxu0 %v1015
        %1297 = vmatprep.subr.bf16.mxu0 %v1019
        %1298 = vmatpush1.bf16.msra.mxu0 %v1018
        %1299 = vmatprep.subr.bf16.mxu0 %v1022
        %1300 = vmatpush1.bf16.msra.mxu0 %v1021
        %1301 = vmatprep.subr.bf16.mxu0 %v1025
        %1302 = vmatpush1.bf16.msra.mxu0 %v1024
        %1303 = vmatprep.subr.bf16.mxu0 %v1028
        %1304 = vmatpush1.bf16.msra.mxu0 %v1027
        %1305 = vmatprep.subr.bf16.mxu0 %v1031
        %1306 = vmatpush1.bf16.msra.mxu0 %v1030
        %1307 = vmatprep.subr.bf16.mxu0 %v1034
        %1308 = vmatpush1.bf16.msra.mxu0 %v1033
        %1309 = vmatprep.subr.bf16.mxu0 %v1037
        %1310 = vmatpush1.bf16.msra.mxu0 %v1036
        %1311 = vmatprep.mubr.bf16.mxu0 %v500
        %1312 = vmatmul.mubr.bf16.gmra.mrb[0].mxu0 %v499
        %v1313 = vpop.f32.mrb[0].mxu0
        %v1314 = vadd.f32 0.0, %v1313
        %v1315 = vpop.f32.mrb[0].mxu0
        %v1316 = vadd.f32 0.0, %v1315
        %v1317 = vpop.f32.mrb[0].mxu0
        %v1318 = vadd.f32 0.0, %v1317
        %v1319 = vpop.f32.mrb[0].mxu0
        %v1320 = vadd.f32 0.0, %v1319
        %1321 = vdwg.mxu0
        %1322 = vmatprep.subr.bf16.mxu0 %v1040
        %1323 = vmatpush1.bf16.msra.mxu0 %v1039
        %1324 = vmatprep.subr.bf16.mxu0 %v1043
        %1325 = vmatpush1.bf16.msra.mxu0 %v1042
        %1326 = vmatprep.subr.bf16.mxu0 %v1046
        %1327 = vmatpush1.bf16.msra.mxu0 %v1045
        %1328 = vmatprep.subr.bf16.mxu0 %v1049
        %1329 = vmatpush1.bf16.msra.mxu0 %v1048
        %1330 = vmatprep.subr.bf16.mxu0 %v1052
        %1331 = vmatpush1.bf16.msra.mxu0 %v1051
        %1332 = vmatprep.subr.bf16.mxu0 %v1055
        %1333 = vmatpush1.bf16.msra.mxu0 %v1054
        %1334 = vmatprep.subr.bf16.mxu0 %v1058
        %1335 = vmatpush1.bf16.msra.mxu0 %v1057
        %1336 = vmatprep.subr.bf16.mxu0 %v1061
        %1337 = vmatpush1.bf16.msra.mxu0 %v1060
        %1338 = vmatprep.subr.bf16.mxu0 %v1064
        %1339 = vmatpush1.bf16.msra.mxu0 %v1063
        %1340 = vmatprep.subr.bf16.mxu0 %v1067
        %1341 = vmatpush1.bf16.msra.mxu0 %v1066
        %1342 = vmatprep.subr.bf16.mxu0 %v1070
        %1343 = vmatpush1.bf16.msra.mxu0 %v1069
        %1344 = vmatprep.subr.bf16.mxu0 %v1073
        %1345 = vmatpush1.bf16.msra.mxu0 %v1072
        %1346 = vmatprep.subr.bf16.mxu0 %v1076
        %1347 = vmatpush1.bf16.msra.mxu0 %v1075
        %1348 = vmatprep.subr.bf16.mxu0 %v1079
        %1349 = vmatpush1.bf16.msra.mxu0 %v1078
        %1350 = vmatprep.subr.bf16.mxu0 %v1082
        %1351 = vmatpush1.bf16.msra.mxu0 %v1081
        %1352 = vmatprep.subr.bf16.mxu0 %v1085
        %1353 = vmatpush1.bf16.msra.mxu0 %v1084
        %1354 = vmatprep.mubr.bf16.mxu0 %v502
        %1355 = vmatmul.mubr.bf16.gmra.mrb[0].mxu0 %v501
        %v1356 = vpop.f32.mrb[0].mxu0
        %v1357 = vadd.f32 %v1314, %v1356
        %v1358 = vpop.f32.mrb[0].mxu0
        %v1359 = vadd.f32 %v1316, %v1358
        %v1360 = vpop.f32.mrb[0].mxu0
        %v1361 = vadd.f32 %v1318, %v1360
        %v1362 = vpop.f32.mrb[0].mxu0
        %v1363 = vadd.f32 %v1320, %v1362
        %1364 = vdwg.mxu0
        %1365 = vmatprep.subr.bf16.mxu0 %v1088
        %1366 = vmatpush1.bf16.msra.mxu0 %v1087
        %1367 = vmatprep.subr.bf16.mxu0 %v1091
        %1368 = vmatpush1.bf16.msra.mxu0 %v1090
        %1369 = vmatprep.subr.bf16.mxu0 %v1094
        %1370 = vmatpush1.bf16.msra.mxu0 %v1093
        %1371 = vmatprep.subr.bf16.mxu0 %v1097
        %1372 = vmatpush1.bf16.msra.mxu0 %v1096
        %1373 = vmatprep.subr.bf16.mxu0 %v1100
        %1374 = vmatpush1.bf16.msra.mxu0 %v1099
        %1375 = vmatprep.subr.bf16.mxu0 %v1103
        %1376 = vmatpush1.bf16.msra.mxu0 %v1102
        %1377 = vmatprep.subr.bf16.mxu0 %v1106
        %1378 = vmatpush1.bf16.msra.mxu0 %v1105
        %1379 = vmatprep.subr.bf16.mxu0 %v1109
        %1380 = vmatpush1.bf16.msra.mxu0 %v1108
        %1381 = vmatprep.subr.bf16.mxu0 %v1112
        %1382 = vmatpush1.bf16.msra.mxu0 %v1111
        %1383 = vmatprep.subr.bf16.mxu0 %v1115
        %1384 = vmatpush1.bf16.msra.mxu0 %v1114
        %1385 = vmatprep.subr.bf16.mxu0 %v1118
        %1386 = vmatpush1.bf16.msra.mxu0 %v1117
        %1387 = vmatprep.subr.bf16.mxu0 %v1121
        %1388 = vmatpush1.bf16.msra.mxu0 %v1120
        %1389 = vmatprep.subr.bf16.mxu0 %v1124
        %1390 = vmatpush1.bf16.msra.mxu0 %v1123
        %1391 = vmatprep.subr.bf16.mxu0 %v1127
        %1392 = vmatpush1.bf16.msra.mxu0 %v1126
        %1393 = vmatprep.subr.bf16.mxu0 %v1130
        %1394 = vmatpush1.bf16.msra.mxu0 %v1129
        %1395 = vmatprep.subr.bf16.mxu0 %v1133
        %1396 = vmatpush1.bf16.msra.mxu0 %v1132
        %1397 = vmatprep.mubr.bf16.mxu0 %v504
        %1398 = vmatmul.mubr.bf16.gmra.mrb[0].mxu0 %v503
        %v1399 = vpop.f32.mrb[0].mxu0
        %v1400 = vadd.f32 %v1357, %v1399
        %v1401 = vpop.f32.mrb[0].mxu0
        %v1402 = vadd.f32 %v1359, %v1401
        %v1403 = vpop.f32.mrb[0].mxu0
        %v1404 = vadd.f32 %v1361, %v1403
        %v1405 = vpop.f32.mrb[0].mxu0
        %v1406 = vadd.f32 %v1363, %v1405
        %1407 = vdwg.mxu0
        %1408 = vmatprep.subr.bf16.mxu0 0
        %1409 = vmatpush1.bf16.msra.mxu0 %v993
        %1410 = vmatprep.subr.bf16.mxu0 0
        %1411 = vmatpush1.bf16.msra.mxu0 %v996
        %1412 = vmatprep.subr.bf16.mxu0 0
        %1413 = vmatpush1.bf16.msra.mxu0 %v999
        %1414 = vmatprep.subr.bf16.mxu0 0
        %1415 = vmatpush1.bf16.msra.mxu0 %v1002
        %1416 = vmatprep.subr.bf16.mxu0 0
        %1417 = vmatpush1.bf16.msra.mxu0 %v1005
        %1418 = vmatprep.subr.bf16.mxu0 0
        %1419 = vmatpush1.bf16.msra.mxu0 %v1008
        %1420 = vmatprep.subr.bf16.mxu0 0
        %1421 = vmatpush1.bf16.msra.mxu0 %v1011
        %1422 = vmatprep.subr.bf16.mxu0 0
        %1423 = vmatpush1.bf16.msra.mxu0 %v1014
        %1424 = vmatprep.subr.bf16.mxu0 0
        %1425 = vmatpush1.bf16.msra.mxu0 %v1017
        %1426 = vmatprep.subr.bf16.mxu0 0
        %1427 = vmatpush1.bf16.msra.mxu0 %v1020
        %1428 = vmatprep.subr.bf16.mxu0 0
        %1429 = vmatpush1.bf16.msra.mxu0 %v1023
        %1430 = vmatprep.subr.bf16.mxu0 0
        %1431 = vmatpush1.bf16.msra.mxu0 %v1026
        %1432 = vmatprep.subr.bf16.mxu0 0
        %1433 = vmatpush1.bf16.msra.mxu0 %v1029
        %1434 = vmatprep.subr.bf16.mxu0 0
        %1435 = vmatpush1.bf16.msra.mxu0 %v1032
        %1436 = vmatprep.subr.bf16.mxu0 0
        %1437 = vmatpush1.bf16.msra.mxu0 %v1035
        %1438 = vmatprep.subr.bf16.mxu0 0
        %1439 = vmatpush1.bf16.msra.mxu0 %v1038
        %1440 = vmatprep.mubr.bf16.mxu0 %v500
        %1441 = vmatmul.mubr.bf16.gmra.mrb[0].mxu0 %v499
        %v1442 = vpop.f32.mrb[0].mxu0
        %v1443 = vadd.f32 0.0, %v1442
        %v1444 = vpop.f32.mrb[0].mxu0
        %v1445 = vpop.f32.mrb[0].mxu0
        %v1446 = vadd.f32 0.0, %v1445
        %v1447 = vpop.f32.mrb[0].mxu0
        %1448 = vdwg.mxu0
        %1449 = vmatprep.subr.bf16.mxu0 0
        %1450 = vmatpush1.bf16.msra.mxu0 %v1041
        %1451 = vmatprep.subr.bf16.mxu0 0
        %1452 = vmatpush1.bf16.msra.mxu0 %v1044
        %1453 = vmatprep.subr.bf16.mxu0 0
        %1454 = vmatpush1.bf16.msra.mxu0 %v1047
        %1455 = vmatprep.subr.bf16.mxu0 0
        %1456 = vmatpush1.bf16.msra.mxu0 %v1050
        %1457 = vmatprep.subr.bf16.mxu0 0
        %1458 = vmatpush1.bf16.msra.mxu0 %v1053
        %1459 = vmatprep.subr.bf16.mxu0 0
        %1460 = vmatpush1.bf16.msra.mxu0 %v1056
        %1461 = vmatprep.subr.bf16.mxu0 0
        %1462 = vmatpush1.bf16.msra.mxu0 %v1059
        %1463 = vmatprep.subr.bf16.mxu0 0
        %1464 = vmatpush1.bf16.msra.mxu0 %v1062
        %1465 = vmatprep.subr.bf16.mxu0 0
        %1466 = vmatpush1.bf16.msra.mxu0 %v1065
        %1467 = vmatprep.subr.bf16.mxu0 0
        %1468 = vmatpush1.bf16.msra.mxu0 %v1068
        %1469 = vmatprep.subr.bf16.mxu0 0
        %1470 = vmatpush1.bf16.msra.mxu0 %v1071
        %1471 = vmatprep.subr.bf16.mxu0 0
        %1472 = vmatpush1.bf16.msra.mxu0 %v1074
        %1473 = vmatprep.subr.bf16.mxu0 0
        %1474 = vmatpush1.bf16.msra.mxu0 %v1077
        %1475 = vmatprep.subr.bf16.mxu0 0
        %1476 = vmatpush1.bf16.msra.mxu0 %v1080
        %1477 = vmatprep.subr.bf16.mxu0 0
        %1478 = vmatpush1.bf16.msra.mxu0 %v1083
        %1479 = vmatprep.subr.bf16.mxu0 0
        %1480 = vmatpush1.bf16.msra.mxu0 %v1086
        %1481 = vmatprep.mubr.bf16.mxu0 %v502
        %1482 = vmatmul.mubr.bf16.gmra.mrb[0].mxu0 %v501
        %v1483 = vpop.f32.mrb[0].mxu0
        %v1484 = vadd.f32 %v1443, %v1483
        %v1485 = vpop.f32.mrb[0].mxu0
        %v1486 = vpop.f32.mrb[0].mxu0
        %v1487 = vadd.f32 %v1446, %v1486
        %v1488 = vpop.f32.mrb[0].mxu0
        %1489 = vdwg.mxu0
        %1490 = vmatprep.subr.bf16.mxu0 0
        %1491 = vmatpush1.bf16.msra.mxu0 %v1089
        %1492 = vmatprep.subr.bf16.mxu0 0
        %1493 = vmatpush1.bf16.msra.mxu0 %v1092
        %1494 = vmatprep.subr.bf16.mxu0 0
        %1495 = vmatpush1.bf16.msra.mxu0 %v1095
        %1496 = vmatprep.subr.bf16.mxu0 0
        %1497 = vmatpush1.bf16.msra.mxu0 %v1098
        %1498 = vmatprep.subr.bf16.mxu0 0
        %1499 = vmatpush1.bf16.msra.mxu0 %v1101
        %1500 = vmatprep.subr.bf16.mxu0 0
        %1501 = vmatpush1.bf16.msra.mxu0 %v1104
        %1502 = vmatprep.subr.bf16.mxu0 0
        %1503 = vmatpush1.bf16.msra.mxu0 %v1107
        %1504 = vmatprep.subr.bf16.mxu0 0
        %1505 = vmatpush1.bf16.msra.mxu0 %v1110
        %1506 = vmatprep.subr.bf16.mxu0 0
        %1507 = vmatpush1.bf16.msra.mxu0 %v1113
        %1508 = vmatprep.subr.bf16.mxu0 0
        %1509 = vmatpush1.bf16.msra.mxu0 %v1116
        %1510 = vmatprep.subr.bf16.mxu0 0
        %1511 = vmatpush1.bf16.msra.mxu0 %v1119
        %1512 = vmatprep.subr.bf16.mxu0 0
        %1513 = vmatpush1.bf16.msra.mxu0 %v1122
        %1514 = vmatprep.subr.bf16.mxu0 0
        %1515 = vmatpush1.bf16.msra.mxu0 %v1125
        %1516 = vmatprep.subr.bf16.mxu0 0
        %1517 = vmatpush1.bf16.msra.mxu0 %v1128
        %1518 = vmatprep.subr.bf16.mxu0 0
        %1519 = vmatpush1.bf16.msra.mxu0 %v1131
        %1520 = vmatprep.subr.bf16.mxu0 0
        %1521 = vmatpush1.bf16.msra.mxu0 %v1134
        %1522 = vmatprep.mubr.bf16.mxu0 %v504
        %1523 = vmatmul.mubr.bf16.gmra.mrb[0].mxu0 %v503
        %v1524 = vpop.f32.mrb[0].mxu0
        %v1525 = vadd.f32 %v1484, %v1524
        %v1526 = vpop.f32.mrb[0].mxu0
        %v1527 = vpop.f32.mrb[0].mxu0
        %v1528 = vadd.f32 %v1487, %v1527
        %v1529 = vpop.f32.mrb[0].mxu0
        %1530 = vdwg.mxu0
        %v1531 = vadd.f32 %v277, %v1400
        %v1532 = vadd.f32 %v278, %v1402
        %v1533 = vadd.f32 %v279, %v1525
        %v1534 = vadd.f32 %v280, %v1404
        %v1535 = vadd.f32 %v281, %v1406
        %v1536 = vadd.f32 %v282, %v1528
        %1537 = vst [vmem:[%s255] sm:$0xff] %v1531
        %1538 = vst [vmem:[%s255 + $0x8] sm:$0xff] %v1532
        %1539 = vst [vmem:[%s255 + $0x10] sm:$0xff] %v1533
        %1540 = vst [vmem:[%s255 + $0x18] sm:$0xff] %v1534
        %1541 = vst [vmem:[%s255 + $0x20] sm:$0xff] %v1535
        %1542 = vst [vmem:[%s255 + $0x28] sm:$0xff] %v1536
        // Predicated region
        $region45: #{xin_multimodal_forward.2} parent=31 // pred_check
          %p1543 = pneg %p267
        $region46: #{xin_multimodal_forward.2} parent=31 // pred_check_branch
          %1545 = sbr.rel (%p1543) target = $region48
        $region47: #{xin_multimodal_forward.2} parent=31 // pred_region
          %v1546 = vld [vmem:[%s255] sm:$0xff]
          %v1547 = vld [vmem:[%s255 + $0x8] sm:$0xff]
          %v1548 = vld [vmem:[%s255 + $0x10] sm:$0xff]
          %v1549 = vld [vmem:[%s255 + $0x18] sm:$0xff]
          %v1550 = vld [vmem:[%s255 + $0x20] sm:$0xff]
          %v1551 = vld [vmem:[%s255 + $0x28] sm:$0xff]
          %v1552 = vld [vmem:[%s224] sm:$0x7]
          %v1554 = vlaneseq
          %v1555 = vshrl.u32 %v1554, 7
          %v1556 = vsub.s32 0, %v1555
          %v1557 = vrot.slane %v1552, %v1556
          %v1558 = vlaneseq
          %v1559 = vshrl.u32 %v1558, 7
          %v1560 = vsub.s32 1, %v1559
          %v1561 = vrot.slane %v1552, %v1560
          %v1562 = vlaneseq
          %v1563 = vshrl.u32 %v1562, 7
          %v1564 = vsub.s32 2, %v1563
          %v1565 = vrot.slane %v1552, %v1564
          %v1569 = vadd.f32 %v1546, %v1557
          %v1570 = vadd.f32 %v1547, %v1561
          %v1571 = vadd.f32 %v1548, %v1565
          %v1572 = vadd.f32 %v1549, %v1557
          %v1573 = vadd.f32 %v1550, %v1561
          %v1574 = vadd.f32 %v1551, %v1565
          %1575 = vst [vmem:[%s255] sm:$0xff] %v1569
          %1576 = vst [vmem:[%s255 + $0x8] sm:$0xff] %v1570
          %1577 = vst [vmem:[%s255 + $0x10] sm:$0xff] %v1571
          %1578 = vst [vmem:[%s255 + $0x18] sm:$0xff] %v1572
          %1579 = vst [vmem:[%s255 + $0x20] sm:$0xff] %v1573
          %1580 = vst [vmem:[%s255 + $0x28] sm:$0xff] %v1574
        $region48: #{xin_multimodal_forward.2} parent=31 // pred_fallthru
          _
        %s1581 = sand.u32 %s120, 1
        %s1582 = sand.u32 %s120, 1
        %s1583 = smul.addr %s1582, 48
        %s1584 = scalar_lea.vmem [#allocation6], %s1583
        // Predicated region
        $region49: #{xin_multimodal_forward.2} parent=31 // pred_check
          %p1585 = pneg %p130
        $region50: #{xin_multimodal_forward.2} parent=31 // pred_check_branch
          %1587 = sbr.rel (%p1585) target = $region52
        $region51: #{xin_multimodal_forward.2} parent=31 // pred_region
          %s1588 = smul.u32 3, %s24
          %s1589 = smul.addr %s1588, 8
          %s1590 = scalar_lea.vmem %s3, %s1589
          // Predicated region
          $region53: #{xin_multimodal_forward.2} parent=51 // pred_check
            _
          $region54: #{xin_multimodal_forward.2} parent=51 // pred_check_branch
            %1592 = sbr.rel (0) target = $region56
          $region55: #{xin_multimodal_forward.2} parent=51 // pred_region
            // Predicated region
            $region57: #{xin_multimodal_forward.2} parent=55 // pred_check
              _
            $region58: #{xin_multimodal_forward.2} parent=55 // pred_check_branch
              %1594 = sbr.rel (0) target = $region60
            $region59: #{xin_multimodal_forward.2} parent=55 // pred_region
              loop: start=0, step=1, limit=1
              $region61: #{xin_multimodal_forward.2} parent=59 // loop_pre_header
                _
              $region62: #{xin_multimodal_forward.2} parent=59 // loop_header
                %s1596 = sphi 0, %s1600
                %p1597 = scmp.ge.s32.totalorder %s1596, 1
                %s1601 = sphi %s1584, %s1584
                %s1602 = sphi %s1590, %s1590
              $region63: #{xin_multimodal_forward.2} parent=59 // loop_header_branch
                %1599 = sbr.rel (%p1597) target = $region67
              $region64: #{xin_multimodal_forward.2} parent=59 // loop_body
                %v1603 = vld [vmem:[%s1601] sm:$0xff]
                %1604 = vst [vmem:[%s1602] sm:$0xff] %v1603
                %v1605 = vld [vmem:[%s1601 + $0x8] sm:$0xff]
                %1606 = vst [vmem:[%s1602 + $0x8] sm:$0xff] %v1605
                %v1607 = vld [vmem:[%s1601 + $0x10] sm:$0xff]
                %1608 = vst [vmem:[%s1602 + $0x10] sm:$0xff] %v1607
                %v1609 = vld [vmem:[%s1601 + $0x18] sm:$0xff]
                %1610 = vst [vmem:[%s1602 + $0x30] sm:$0xff] %v1609
                %v1611 = vld [vmem:[%s1601 + $0x20] sm:$0xff]
                %1612 = vst [vmem:[%s1602 + $0x38] sm:$0xff] %v1611
                %v1613 = vld [vmem:[%s1601 + $0x28] sm:$0xff]
                %1614 = vst [vmem:[%s1602 + $0x40] sm:$0xff] %v1613
              $region65: #{xin_multimodal_forward.2} parent=59 // loop_footer
                %s1600 = sadd.s32 1, %s1596
              $region66: #{xin_multimodal_forward.2} parent=59 // loop_footer_branch
                %1595 = sbr.rel target = $region62
              $region67: #{xin_multimodal_forward.2} parent=59 // loop_exit
                _
            $region60: #{xin_multimodal_forward.2} parent=55 // pred_fallthru
              _
            // Predicated region
            $region68: #{xin_multimodal_forward.2} parent=55 // pred_check
              _
            $region69: #{xin_multimodal_forward.2} parent=55 // pred_check_branch
              %1616 = sbr.rel target = $region71
            $region70: #{xin_multimodal_forward.2} parent=55 // pred_region
              _
            $region71: #{xin_multimodal_forward.2} parent=55 // pred_fallthru
              _
          $region56: #{xin_multimodal_forward.2} parent=51 // pred_fallthru
            _
          %1617 = vnop
        $region52: #{xin_multimodal_forward.2} parent=31 // pred_fallthru
          _
      $region32: #{xin_multimodal_forward.2} parent=5 // pred_fallthru
        _
      %p1618 = scmp.le.s32.totalorder 2, %s15
      // Predicated region
      $region72: #{xin_multimodal_forward.2} parent=5 // pred_check
        %p1619 = pneg %p1618
      $region73: #{xin_multimodal_forward.2} parent=5 // pred_check_branch
        %1621 = sbr.rel (%p1619) target = $region75
      $region74: #{xin_multimodal_forward.2} parent=5 // pred_region
        %s1622 = ssub.s32 %s15, 2
        // Predicated region
        $region76: #{xin_multimodal_forward.2} parent=74 // pred_check
          %p1623 = pneg %p136
        $region77: #{xin_multimodal_forward.2} parent=74 // pred_check_branch
          %1625 = sbr.rel (%p1623) target = $region79
        $region78: #{xin_multimodal_forward.2} parent=74 // pred_region
          %s1626 = sand.u32 %s121, 1
          %s1627 = sand.u32 %s121, 1
          %s1628 = smul.addr %s1627, 48
          %s1629 = scalar_lea.vmem [#allocation6], %s1628
        $region79: #{xin_multimodal_forward.2} parent=74 // pred_fallthru
          _
      $region75: #{xin_multimodal_forward.2} parent=5 // pred_fallthru
        _
    $region6: #{xin_multimodal_forward.2} parent=1 // loop_footer
      %s19 = sadd.s32 1, %s15
    $region7: #{xin_multimodal_forward.2} parent=1 // loop_footer_branch
      %14 = sbr.rel target = $region3
    $region8: #{xin_multimodal_forward.2} parent=1 // loop_exit
      _
    %1630 = vsyncpa [#allocation3], 1
    %s1631 = scalar_lea.sflag [#allocation3], 1
    %1632 = vsyncpa %s1631, 1
    %1633 = vsyncpa [#allocation5], 1
    %s1634 = scalar_lea.sflag [#allocation5], 1
    %1635 = vsyncpa %s1634, 1

// kernel: xin_multimodal_forward.3
$region0: #{xin_multimodal_forward.3}
  #allocation0 [shape = 'u32[]', space=smem, size = 0x4, offset = 0x4, fixed_abs, tag = 'smem constant byte address 0x4 - core index']
  #allocation1 [shape = 'u32[144,128]{1,0:T(1,128)}', space=vmem, size = 0x12000, scoped, tag = 'internal scratch']
  %s0 = inlined_call_operand.vmem [shape: f32[16,768], index: 0, kind: input, shape index: {}]
  %s1 = inlined_call_operand.hbm [shape: bf16[768,128], index: 1, kind: input, shape index: {}]
  %s2 = inlined_call_operand.hbm [shape: f32[1,128], index: 2, kind: input, shape index: {}]
  %s3 = inlined_call_operand.hbm [shape: bf16[2,768,1536], index: 3, kind: input, shape index: {}]
  %s4 = inlined_call_operand.hbm [shape: f32[1,1536], index: 4, kind: input, shape index: {}]
  %s5 = inlined_call_operand.hbm [shape: f32[1,1536], index: 5, kind: input, shape index: {}]
  %s6 = inlined_call_operand.hbm [shape: f32[1,1536], index: 6, kind: input, shape index: {}]
  %s7 = inlined_call_operand.hbm [shape: bf16[1536,128], index: 7, kind: input, shape index: {}]
  %s8 = inlined_call_operand.hbm [shape: f32[1,128], index: 8, kind: input, shape index: {}]
  %s9 = inlined_call_operand.vmem [shape: f32[16,128], index: 9, kind: output, shape index: {0}]
  %s10 = inlined_call_operand.vmem [shape: f32[8,128], index: 10, kind: output, shape index: {1}]
  %11 = xla_tuple %s9, %s10
  %s12 = sld [smem:[#allocation0]]
  $region86: #{xin_multimodal_forward.3} parent=0
    _
  %s14 = ssub.s32 1, %s12
  %s15 = scalar_select 0, %s14, %s12
  $region1: #{xin_multimodal_forward.3} parent=0
    #allocation2 [shape = 'u8[196608]{0}', space=vmem, size = 0x30000, scoped, tag = 'input window, operand 1, single buffered']
    #allocation3 [shape = 's32[1]{0}', space=sflag, size = 0x4, scoped, tag = 'scoped memory for xin_multimodal_forward.3']
    #allocation4 [shape = 'u8[512]{0}', space=vmem, size = 0x400, scoped, tag = 'input window, operand 2, single buffered']
    #allocation5 [shape = 's32[1]{0}', space=sflag, size = 0x4, scoped, tag = 'scoped memory for xin_multimodal_forward.3']
    #allocation6 [shape = 'u8[4718592]{0}', space=vmem, size = 0x480000, scoped, tag = 'input window, operand 3, single buffered']
    #allocation7 [shape = 'u8[6144]{0}', space=vmem, size = 0x1800, scoped, tag = 'input window, operand 4, single buffered']
    #allocation8 [shape = 's32[1]{0}', space=sflag, size = 0x4, scoped, tag = 'scoped memory for xin_multimodal_forward.3']
    #allocation9 [shape = 'u8[6144]{0}', space=vmem, size = 0x1800, scoped, tag = 'input window, operand 5, single buffered']
    #allocation10 [shape = 'u8[6144]{0}', space=vmem, size = 0x1800, scoped, tag = 'input window, operand 6, single buffered']
    #allocation11 [shape = 's32[1]{0}', space=sflag, size = 0x4, scoped, tag = 'scoped memory for xin_multimodal_forward.3']
    #allocation12 [shape = 'u8[393216]{0}', space=vmem, size = 0x60000, scoped, tag = 'input window, operand 7, single buffered']
    #allocation13 [shape = 'u8[512]{0}', space=vmem, size = 0x400, scoped, tag = 'input window, operand 8, single buffered']
    #allocation14 [shape = 's32[1]{0}', space=sflag, size = 0x4, scoped, tag = 'scoped memory for xin_multimodal_forward.3']
    %16 = vsyncpa [#allocation3], 0
    %17 = vsyncpa [#allocation5], 0
    %18 = vsyncpa [#allocation8], 0
    %19 = vsyncpa [#allocation11], 0
    %20 = vsyncpa [#allocation14], 0
    // Predicated region
    $region2: #{xin_multimodal_forward.3} parent=1 // pred_check
      _
    $region3: #{xin_multimodal_forward.3} parent=1 // pred_check_branch
      %22 = sbr.rel (0) target = $region5
    $region4: #{xin_multimodal_forward.3} parent=1 // pred_region
      _
    $region5: #{xin_multimodal_forward.3} parent=1 // pred_fallthru
      _
    // Predicated region
    $region6: #{xin_multimodal_forward.3} parent=1 // pred_check
      _
    $region7: #{xin_multimodal_forward.3} parent=1 // pred_check_branch
      %24 = sbr.rel (0) target = $region9
    $region8: #{xin_multimodal_forward.3} parent=1 // pred_region
      %s26 = ssub.s32 6144, 6144
      %27 = vsyncadd [#allocation3], %s26
      %s28 = sshll.u32 [#allocation2], 4
      %s29 = int_to_ptr.vmem [resolvable:$true] %s28
      %34 = dma.hbm_to_vmem [thread:$0]  %s1, 6144, %s29, [#allocation3], 64, 64, 4
    $region9: #{xin_multimodal_forward.3} parent=1 // pred_fallthru
      _
    // Predicated region
    $region10: #{xin_multimodal_forward.3} parent=1 // pred_check
      _
    $region11: #{xin_multimodal_forward.3} parent=1 // pred_check_branch
      %36 = sbr.rel (0) target = $region13
    $region12: #{xin_multimodal_forward.3} parent=1 // pred_region
      %s38 = ssub.s32 16, 16
      %39 = vsyncadd [#allocation5], %s38
      %s41 = sshll.u32 [#allocation4], 4
      %s42 = int_to_ptr.vmem [resolvable:$true] %s41
      %44 = dma.hbm_to_vmem [thread:$0]  %s2, 16, %s42, [#allocation5]
    $region13: #{xin_multimodal_forward.3} parent=1 // pred_fallthru
      _
    // Predicated region
    $region14: #{xin_multimodal_forward.3} parent=1 // pred_check
      _
    $region15: #{xin_multimodal_forward.3} parent=1 // pred_check_branch
      %46 = sbr.rel (0) target = $region17
    $region16: #{xin_multimodal_forward.3} parent=1 // pred_region
      %s48 = ssub.s32 147456, 147456
      %49 = vsyncadd [#allocation5], %s48
      %s50 = sshll.u32 [#allocation6], 4
      %s51 = int_to_ptr.vmem [resolvable:$true] %s50
      %56 = dma.hbm_to_vmem [thread:$0]  %s3, 147456, %s51, [#allocation5], 768, 768, 48
    $region17: #{xin_multimodal_forward.3} parent=1 // pred_fallthru
      _
    // Predicated region
    $region18: #{xin_multimodal_forward.3} parent=1 // pred_check
      _
    $region19: #{xin_multimodal_forward.3} parent=1 // pred_check_branch
      %58 = sbr.rel (0) target = $region21
    $region20: #{xin_multimodal_forward.3} parent=1 // pred_region
      %s60 = ssub.s32 192, 192
      %61 = vsyncadd [#allocation8], %s60
      %s63 = sshll.u32 [#allocation7], 4
      %s64 = int_to_ptr.vmem [resolvable:$true] %s63
      %66 = dma.hbm_to_vmem [thread:$0]  %s4, 192, %s64, [#allocation8]
    $region21: #{xin_multimodal_forward.3} parent=1 // pred_fallthru
      _
    // Predicated region
    $region22: #{xin_multimodal_forward.3} parent=1 // pred_check
      _
    $region23: #{xin_multimodal_forward.3} parent=1 // pred_check_branch
      %68 = sbr.rel (0) target = $region25
    $region24: #{xin_multimodal_forward.3} parent=1 // pred_region
      %s70 = ssub.s32 192, 192
      %71 = vsyncadd [#allocation8], %s70
      %s73 = sshll.u32 [#allocation9], 4
      %s74 = int_to_ptr.vmem [resolvable:$true] %s73
      %76 = dma.hbm_to_vmem [thread:$0]  %s5, 192, %s74, [#allocation8]
    $region25: #{xin_multimodal_forward.3} parent=1 // pred_fallthru
      _
    // Predicated region
    $region26: #{xin_multimodal_forward.3} parent=1 // pred_check
      _
    $region27: #{xin_multimodal_forward.3} parent=1 // pred_check_branch
      %78 = sbr.rel (0) target = $region29
    $region28: #{xin_multimodal_forward.3} parent=1 // pred_region
      %s80 = ssub.s32 192, 192
      %81 = vsyncadd [#allocation11], %s80
      %s83 = sshll.u32 [#allocation10], 4
      %s84 = int_to_ptr.vmem [resolvable:$true] %s83
      %86 = dma.hbm_to_vmem [thread:$0]  %s6, 192, %s84, [#allocation11]
    $region29: #{xin_multimodal_forward.3} parent=1 // pred_fallthru
      _
    // Predicated region
    $region30: #{xin_multimodal_forward.3} parent=1 // pred_check
      _
    $region31: #{xin_multimodal_forward.3} parent=1 // pred_check_branch
      %88 = sbr.rel (0) target = $region33
    $region32: #{xin_multimodal_forward.3} parent=1 // pred_region
      %s90 = ssub.s32 12288, 12288
      %91 = vsyncadd [#allocation11], %s90
      %s92 = sshll.u32 [#allocation12], 4
      %s93 = int_to_ptr.vmem [resolvable:$true] %s92
      %98 = dma.hbm_to_vmem [thread:$0]  %s7, 12288, %s93, [#allocation11], 64, 64, 4
    $region33: #{xin_multimodal_forward.3} parent=1 // pred_fallthru
      _
    // Predicated region
    $region34: #{xin_multimodal_forward.3} parent=1 // pred_check
      _
    $region35: #{xin_multimodal_forward.3} parent=1 // pred_check_branch
      %100 = sbr.rel (0) target = $region37
    $region36: #{xin_multimodal_forward.3} parent=1 // pred_region
      %s102 = ssub.s32 16, 16
      %103 = vsyncadd [#allocation14], %s102
      %s105 = sshll.u32 [#allocation13], 4
      %s106 = int_to_ptr.vmem [resolvable:$true] %s105
      %108 = dma.hbm_to_vmem [thread:$0]  %s8, 16, %s106, [#allocation14]
    $region37: #{xin_multimodal_forward.3} parent=1 // pred_fallthru
      _
    // Predicated region
    $region38: #{xin_multimodal_forward.3} parent=1 // pred_check
      _
    $region39: #{xin_multimodal_forward.3} parent=1 // pred_check_branch
      %110 = sbr.rel (0) target = $region41
    $region40: #{xin_multimodal_forward.3} parent=1 // pred_region
      %111 = dma.done [#allocation3], 6144
    $region41: #{xin_multimodal_forward.3} parent=1 // pred_fallthru
      _
    // Predicated region
    $region42: #{xin_multimodal_forward.3} parent=1 // pred_check
      _
    $region43: #{xin_multimodal_forward.3} parent=1 // pred_check_branch
      %113 = sbr.rel (0) target = $region45
    $region44: #{xin_multimodal_forward.3} parent=1 // pred_region
      %114 = dma.done [#allocation5], 16
    $region45: #{xin_multimodal_forward.3} parent=1 // pred_fallthru
      _
    // Predicated region
    $region46: #{xin_multimodal_forward.3} parent=1 // pred_check
      _
    $region47: #{xin_multimodal_forward.3} parent=1 // pred_check_branch
      %116 = sbr.rel (0) target = $region49
    $region48: #{xin_multimodal_forward.3} parent=1 // pred_region
      %117 = dma.done [#allocation5], 147456
    $region49: #{xin_multimodal_forward.3} parent=1 // pred_fallthru
      _
    // Predicated region
    $region50: #{xin_multimodal_forward.3} parent=1 // pred_check
      _
    $region51: #{xin_multimodal_forward.3} parent=1 // pred_check_branch
      %119 = sbr.rel (0) target = $region53
    $region52: #{xin_multimodal_forward.3} parent=1 // pred_region
      %120 = dma.done [#allocation8], 192
    $region53: #{xin_multimodal_forward.3} parent=1 // pred_fallthru
      _
    // Predicated region
    $region54: #{xin_multimodal_forward.3} parent=1 // pred_check
      _
    $region55: #{xin_multimodal_forward.3} parent=1 // pred_check_branch
      %122 = sbr.rel (0) target = $region57
    $region56: #{xin_multimodal_forward.3} parent=1 // pred_region
      %123 = dma.done [#allocation8], 192
    $region57: #{xin_multimodal_forward.3} parent=1 // pred_fallthru
      _
    // Predicated region
    $region58: #{xin_multimodal_forward.3} parent=1 // pred_check
      _
    $region59: #{xin_multimodal_forward.3} parent=1 // pred_check_branch
      %125 = sbr.rel (0) target = $region61
    $region60: #{xin_multimodal_forward.3} parent=1 // pred_region
      %126 = dma.done [#allocation11], 192
    $region61: #{xin_multimodal_forward.3} parent=1 // pred_fallthru
      _
    // Predicated region
    $region62: #{xin_multimodal_forward.3} parent=1 // pred_check
      _
    $region63: #{xin_multimodal_forward.3} parent=1 // pred_check_branch
      %128 = sbr.rel (0) target = $region65
    $region64: #{xin_multimodal_forward.3} parent=1 // pred_region
      %129 = dma.done [#allocation11], 12288
    $region65: #{xin_multimodal_forward.3} parent=1 // pred_fallthru
      _
    // Predicated region
    $region66: #{xin_multimodal_forward.3} parent=1 // pred_check
      _
    $region67: #{xin_multimodal_forward.3} parent=1 // pred_check_branch
      %131 = sbr.rel (0) target = $region69
    $region68: #{xin_multimodal_forward.3} parent=1 // pred_region
      %132 = dma.done [#allocation14], 16
    $region69: #{xin_multimodal_forward.3} parent=1 // pred_fallthru
      _
    %v134 = vld [vmem:[%s0] sm:$0xff]
    %v135 = vld [vmem:[%s0 + $0x8] sm:$0xff]
    %v136 = vld [vmem:[%s0 + $0x10] sm:$0xff]
    %v137 = vld [vmem:[%s0 + $0x18] sm:$0xff]
    %v138 = vld [vmem:[%s0 + $0x20] sm:$0xff]
    %v139 = vld [vmem:[%s0 + $0x28] sm:$0xff]
    %v140 = vld [vmem:[%s0 + $0x30] sm:$0xff]
    %v141 = vld [vmem:[%s0 + $0x38] sm:$0xff]
    %v142 = vld [vmem:[%s0 + $0x40] sm:$0xff]
    %v143 = vld [vmem:[%s0 + $0x48] sm:$0xff]
    %v144 = vld [vmem:[%s0 + $0x50] sm:$0xff]
    %v145 = vld [vmem:[%s0 + $0x58] sm:$0xff]
    %v146 = vpack.c.bf16 %v140, %v134
    %v147 = vpack.c.bf16 %v141, %v135
    %v148 = vpack.c.bf16 %v142, %v136
    %v149 = vpack.c.bf16 %v143, %v137
    %v150 = vpack.c.bf16 %v144, %v138
    %v151 = vpack.c.bf16 %v145, %v139
    %v152 = vld [vmem:[#allocation2] sm:$0xf]
    %v153 = vld [vmem:[#allocation2 + $0x4] sm:$0xf]
    %v154 = vld [vmem:[#allocation2 + $0x8] sm:$0xf]
    %v155 = vld [vmem:[#allocation2 + $0xc] sm:$0xf]
    %v156 = vld [vmem:[#allocation2 + $0x10] sm:$0xf]
    %v157 = vld [vmem:[#allocation2 + $0x14] sm:$0xf]
    %v158 = vld [vmem:[#allocation2 + $0x18] sm:$0xf]
    %v159 = vld [vmem:[#allocation2 + $0x1c] sm:$0xf]
    %v160 = vld [vmem:[#allocation2 + $0x20] sm:$0xf]
    %v161 = vld [vmem:[#allocation2 + $0x24] sm:$0xf]
    %v162 = vld [vmem:[#allocation2 + $0x28] sm:$0xf]
    %v163 = vld [vmem:[#allocation2 + $0x2c] sm:$0xf]
    %v164 = vld [vmem:[#allocation2 + $0x30] sm:$0xf]
    %v165 = vld [vmem:[#allocation2 + $0x34] sm:$0xf]
    %v166 = vld [vmem:[#allocation2 + $0x38] sm:$0xf]
    %v167 = vld [vmem:[#allocation2 + $0x3c] sm:$0xf]
    %v168 = vld [vmem:[#allocation2 + $0x40] sm:$0xf]
    %v169 = vld [vmem:[#allocation2 + $0x44] sm:$0xf]
    %v170 = vld [vmem:[#allocation2 + $0x48] sm:$0xf]
    %v171 = vld [vmem:[#allocation2 + $0x4c] sm:$0xf]
    %v172 = vld [vmem:[#allocation2 + $0x50] sm:$0xf]
    %v173 = vld [vmem:[#allocation2 + $0x54] sm:$0xf]
    %v174 = vld [vmem:[#allocation2 + $0x58] sm:$0xf]
    %v175 = vld [vmem:[#allocation2 + $0x5c] sm:$0xf]
    %v176 = vld [vmem:[#allocation2 + $0x60] sm:$0xf]
    %v177 = vld [vmem:[#allocation2 + $0x64] sm:$0xf]
    %v178 = vld [vmem:[#allocation2 + $0x68] sm:$0xf]
    %v179 = vld [vmem:[#allocation2 + $0x6c] sm:$0xf]
    %v180 = vld [vmem:[#allocation2 + $0x70] sm:$0xf]
    %v181 = vld [vmem:[#allocation2 + $0x74] sm:$0xf]
    %v182 = vld [vmem:[#allocation2 + $0x78] sm:$0xf]
    %v183 = vld [vmem:[#allocation2 + $0x7c] sm:$0xf]
    %v184 = vld [vmem:[#allocation2 + $0x80] sm:$0xf]
    %v185 = vld [vmem:[#allocation2 + $0x84] sm:$0xf]
    %v186 = vld [vmem:[#allocation2 + $0x88] sm:$0xf]
    %v187 = vld [vmem:[#allocation2 + $0x8c] sm:$0xf]
    %v188 = vld [vmem:[#allocation2 + $0x90] sm:$0xf]
    %v189 = vld [vmem:[#allocation2 + $0x94] sm:$0xf]
    %v190 = vld [vmem:[#allocation2 + $0x98] sm:$0xf]
    %v191 = vld [vmem:[#allocation2 + $0x9c] sm:$0xf]
    %v192 = vld [vmem:[#allocation2 + $0xa0] sm:$0xf]
    %v193 = vld [vmem:[#allocation2 + $0xa4] sm:$0xf]
    %v194 = vld [vmem:[#allocation2 + $0xa8] sm:$0xf]
    %v195 = vld [vmem:[#allocation2 + $0xac] sm:$0xf]
    %v196 = vld [vmem:[#allocation2 + $0xb0] sm:$0xf]
    %v197 = vld [vmem:[#allocation2 + $0xb4] sm:$0xf]
    %v198 = vld [vmem:[#allocation2 + $0xb8] sm:$0xf]
    %v199 = vld [vmem:[#allocation2 + $0xbc] sm:$0xf]
    %v200 = vld [vmem:[#allocation2 + $0xc0] sm:$0xf]
    %v201 = vld [vmem:[#allocation2 + $0xc4] sm:$0xf]
    %v202 = vld [vmem:[#allocation2 + $0xc8] sm:$0xf]
    %v203 = vld [vmem:[#allocation2 + $0xcc] sm:$0xf]
    %v204 = vld [vmem:[#allocation2 + $0xd0] sm:$0xf]
    %v205 = vld [vmem:[#allocation2 + $0xd4] sm:$0xf]
    %v206 = vld [vmem:[#allocation2 + $0xd8] sm:$0xf]
    %v207 = vld [vmem:[#allocation2 + $0xdc] sm:$0xf]
    %v208 = vld [vmem:[#allocation2 + $0xe0] sm:$0xf]
    %v209 = vld [vmem:[#allocation2 + $0xe4] sm:$0xf]
    %v210 = vld [vmem:[#allocation2 + $0xe8] sm:$0xf]
    %v211 = vld [vmem:[#allocation2 + $0xec] sm:$0xf]
    %v212 = vld [vmem:[#allocation2 + $0xf0] sm:$0xf]
    %v213 = vld [vmem:[#allocation2 + $0xf4] sm:$0xf]
    %v214 = vld [vmem:[#allocation2 + $0xf8] sm:$0xf]
    %v215 = vld [vmem:[#allocation2 + $0xfc] sm:$0xf]
    %v216 = vld [vmem:[#allocation2 + $0x100] sm:$0xf]
    %v217 = vld [vmem:[#allocation2 + $0x104] sm:$0xf]
    %v218 = vld [vmem:[#allocation2 + $0x108] sm:$0xf]
    %v219 = vld [vmem:[#allocation2 + $0x10c] sm:$0xf]
    %v220 = vld [vmem:[#allocation2 + $0x110] sm:$0xf]
    %v221 = vld [vmem:[#allocation2 + $0x114] sm:$0xf]
    %v222 = vld [vmem:[#allocation2 + $0x118] sm:$0xf]
    %v223 = vld [vmem:[#allocation2 + $0x11c] sm:$0xf]
    %v224 = vld [vmem:[#allocation2 + $0x120] sm:$0xf]
    %v225 = vld [vmem:[#allocation2 + $0x124] sm:$0xf]
    %v226 = vld [vmem:[#allocation2 + $0x128] sm:$0xf]
    %v227 = vld [vmem:[#allocation2 + $0x12c] sm:$0xf]
    %v228 = vld [vmem:[#allocation2 + $0x130] sm:$0xf]
    %v229 = vld [vmem:[#allocation2 + $0x134] sm:$0xf]
    %v230 = vld [vmem:[#allocation2 + $0x138] sm:$0xf]
    %v231 = vld [vmem:[#allocation2 + $0x13c] sm:$0xf]
    %v232 = vld [vmem:[#allocation2 + $0x140] sm:$0xf]
    %v233 = vld [vmem:[#allocation2 + $0x144] sm:$0xf]
    %v234 = vld [vmem:[#allocation2 + $0x148] sm:$0xf]
    %v235 = vld [vmem:[#allocation2 + $0x14c] sm:$0xf]
    %v236 = vld [vmem:[#allocation2 + $0x150] sm:$0xf]
    %v237 = vld [vmem:[#allocation2 + $0x154] sm:$0xf]
    %v238 = vld [vmem:[#allocation2 + $0x158] sm:$0xf]
    %v239 = vld [vmem:[#allocation2 + $0x15c] sm:$0xf]
    %v240 = vld [vmem:[#allocation2 + $0x160] sm:$0xf]
    %v241 = vld [vmem:[#allocation2 + $0x164] sm:$0xf]
    %v242 = vld [vmem:[#allocation2 + $0x168] sm:$0xf]
    %v243 = vld [vmem:[#allocation2 + $0x16c] sm:$0xf]
    %v244 = vld [vmem:[#allocation2 + $0x170] sm:$0xf]
    %v245 = vld [vmem:[#allocation2 + $0x174] sm:$0xf]
    %v246 = vld [vmem:[#allocation2 + $0x178] sm:$0xf]
    %v247 = vld [vmem:[#allocation2 + $0x17c] sm:$0xf]
    %v248 = vld [vmem:[#allocation4] sm:$0x1]
    %v250 = vlaneseq
    %v251 = vshrl.u32 %v250, 7
    %v252 = vsub.s32 0, %v251
    %v253 = vrot.slane %v248, %v252
    %v351 = vunpack.c.l.b16 %v152
    %v352 = vunpack.c.l.b16 %v153
    %v353 = vunpack.c.l.b16 %v154
    %v354 = vunpack.c.l.b16 %v155
    %v355 = vunpack.c.l.b16 %v156
    %v356 = vunpack.c.l.b16 %v157
    %v357 = vunpack.c.l.b16 %v158
    %v358 = vunpack.c.l.b16 %v159
    %v359 = vunpack.c.l.b16 %v160
    %v360 = vunpack.c.l.b16 %v161
    %v361 = vunpack.c.l.b16 %v162
    %v362 = vunpack.c.l.b16 %v163
    %v363 = vunpack.c.l.b16 %v164
    %v364 = vunpack.c.l.b16 %v165
    %v365 = vunpack.c.l.b16 %v166
    %v366 = vunpack.c.l.b16 %v167
    %v367 = vunpack.c.l.b16 %v168
    %v368 = vunpack.c.l.b16 %v169
    %v369 = vunpack.c.l.b16 %v170
    %v370 = vunpack.c.l.b16 %v171
    %v371 = vunpack.c.l.b16 %v172
    %v372 = vunpack.c.l.b16 %v173
    %v373 = vunpack.c.l.b16 %v174
    %v374 = vunpack.c.l.b16 %v175
    %v375 = vunpack.c.l.b16 %v176
    %v376 = vunpack.c.l.b16 %v177
    %v377 = vunpack.c.l.b16 %v178
    %v378 = vunpack.c.l.b16 %v179
    %v379 = vunpack.c.l.b16 %v180
    %v380 = vunpack.c.l.b16 %v181
    %v381 = vunpack.c.l.b16 %v182
    %v382 = vunpack.c.l.b16 %v183
    %v383 = vunpack.c.l.b16 %v184
    %v384 = vunpack.c.l.b16 %v185
    %v385 = vunpack.c.l.b16 %v186
    %v386 = vunpack.c.l.b16 %v187
    %v387 = vunpack.c.l.b16 %v188
    %v388 = vunpack.c.l.b16 %v189
    %v389 = vunpack.c.l.b16 %v190
    %v390 = vunpack.c.l.b16 %v191
    %v391 = vunpack.c.l.b16 %v192
    %v392 = vunpack.c.l.b16 %v193
    %v393 = vunpack.c.l.b16 %v194
    %v394 = vunpack.c.l.b16 %v195
    %v395 = vunpack.c.l.b16 %v196
    %v396 = vunpack.c.l.b16 %v197
    %v397 = vunpack.c.l.b16 %v198
    %v398 = vunpack.c.l.b16 %v199
    %v399 = vunpack.c.l.b16 %v200
    %v400 = vunpack.c.l.b16 %v201
    %v401 = vunpack.c.l.b16 %v202
    %v402 = vunpack.c.l.b16 %v203
    %v403 = vunpack.c.l.b16 %v204
    %v404 = vunpack.c.l.b16 %v205
    %v405 = vunpack.c.l.b16 %v206
    %v406 = vunpack.c.l.b16 %v207
    %v407 = vunpack.c.l.b16 %v208
    %v408 = vunpack.c.l.b16 %v209
    %v409 = vunpack.c.l.b16 %v210
    %v410 = vunpack.c.l.b16 %v211
    %v411 = vunpack.c.l.b16 %v212
    %v412 = vunpack.c.l.b16 %v213
    %v413 = vunpack.c.l.b16 %v214
    %v414 = vunpack.c.l.b16 %v215
    %v415 = vunpack.c.l.b16 %v216
    %v416 = vunpack.c.l.b16 %v217
    %v417 = vunpack.c.l.b16 %v218
    %v418 = vunpack.c.l.b16 %v219
    %v419 = vunpack.c.l.b16 %v220
    %v420 = vunpack.c.l.b16 %v221
    %v421 = vunpack.c.l.b16 %v222
    %v422 = vunpack.c.l.b16 %v223
    %v423 = vunpack.c.l.b16 %v224
    %v424 = vunpack.c.l.b16 %v225
    %v425 = vunpack.c.l.b16 %v226
    %v426 = vunpack.c.l.b16 %v227
    %v427 = vunpack.c.l.b16 %v228
    %v428 = vunpack.c.l.b16 %v229
    %v429 = vunpack.c.l.b16 %v230
    %v430 = vunpack.c.l.b16 %v231
    %v431 = vunpack.c.l.b16 %v232
    %v432 = vunpack.c.l.b16 %v233
    %v433 = vunpack.c.l.b16 %v234
    %v434 = vunpack.c.l.b16 %v235
    %v435 = vunpack.c.l.b16 %v236
    %v436 = vunpack.c.l.b16 %v237
    %v437 = vunpack.c.l.b16 %v238
    %v438 = vunpack.c.l.b16 %v239
    %v439 = vunpack.c.l.b16 %v240
    %v440 = vunpack.c.l.b16 %v241
    %v441 = vunpack.c.l.b16 %v242
    %v442 = vunpack.c.l.b16 %v243
    %v443 = vunpack.c.l.b16 %v244
    %v444 = vunpack.c.l.b16 %v245
    %v445 = vunpack.c.l.b16 %v246
    %v446 = vunpack.c.l.b16 %v247
    %v447 = vpack.c.b16 %v352, %v351
    %v448 = vpack.c.b16 %v354, %v353
    %v449 = vpack.c.b16 %v356, %v355
    %v450 = vpack.c.b16 %v358, %v357
    %v451 = vpack.c.b16 %v360, %v359
    %v452 = vpack.c.b16 %v362, %v361
    %v453 = vpack.c.b16 %v364, %v363
    %v454 = vpack.c.b16 %v366, %v365
    %v455 = vpack.c.b16 %v368, %v367
    %v456 = vpack.c.b16 %v370, %v369
    %v457 = vpack.c.b16 %v372, %v371
    %v458 = vpack.c.b16 %v374, %v373
    %v459 = vpack.c.b16 %v376, %v375
    %v460 = vpack.c.b16 %v378, %v377
    %v461 = vpack.c.b16 %v380, %v379
    %v462 = vpack.c.b16 %v382, %v381
    %v463 = vpack.c.b16 %v384, %v383
    %v464 = vpack.c.b16 %v386, %v385
    %v465 = vpack.c.b16 %v388, %v387
    %v466 = vpack.c.b16 %v390, %v389
    %v467 = vpack.c.b16 %v392, %v391
    %v468 = vpack.c.b16 %v394, %v393
    %v469 = vpack.c.b16 %v396, %v395
    %v470 = vpack.c.b16 %v398, %v397
    %v471 = vpack.c.b16 %v400, %v399
    %v472 = vpack.c.b16 %v402, %v401
    %v473 = vpack.c.b16 %v404, %v403
    %v474 = vpack.c.b16 %v406, %v405
    %v475 = vpack.c.b16 %v408, %v407
    %v476 = vpack.c.b16 %v410, %v409
    %v477 = vpack.c.b16 %v412, %v411
    %v478 = vpack.c.b16 %v414, %v413
    %v479 = vpack.c.b16 %v416, %v415
    %v480 = vpack.c.b16 %v418, %v417
    %v481 = vpack.c.b16 %v420, %v419
    %v482 = vpack.c.b16 %v422, %v421
    %v483 = vpack.c.b16 %v424, %v423
    %v484 = vpack.c.b16 %v426, %v425
    %v485 = vpack.c.b16 %v428, %v427
    %v486 = vpack.c.b16 %v430, %v429
    %v487 = vpack.c.b16 %v432, %v431
    %v488 = vpack.c.b16 %v434, %v433
    %v489 = vpack.c.b16 %v436, %v435
    %v490 = vpack.c.b16 %v438, %v437
    %v491 = vpack.c.b16 %v440, %v439
    %v492 = vpack.c.b16 %v442, %v441
    %v493 = vpack.c.b16 %v444, %v443
    %v494 = vpack.c.b16 %v446, %v445
    %543 = vmatprep.subr.bf16.mxu0 0
    %544 = vmatpush1.bf16.msra.mxu0 %v447
    %545 = vmatprep.subr.bf16.mxu0 0
    %546 = vmatpush1.bf16.msra.mxu0 %v448
    %547 = vmatprep.subr.bf16.mxu0 0
    %548 = vmatpush1.bf16.msra.mxu0 %v449
    %549 = vmatprep.subr.bf16.mxu0 0
    %550 = vmatpush1.bf16.msra.mxu0 %v450
    %551 = vmatprep.subr.bf16.mxu0 0
    %552 = vmatpush1.bf16.msra.mxu0 %v451
    %553 = vmatprep.subr.bf16.mxu0 0
    %554 = vmatpush1.bf16.msra.mxu0 %v452
    %555 = vmatprep.subr.bf16.mxu0 0
    %556 = vmatpush1.bf16.msra.mxu0 %v453
    %557 = vmatprep.subr.bf16.mxu0 0
    %558 = vmatpush1.bf16.msra.mxu0 %v454
    %559 = vmatprep.subr.bf16.mxu0 0
    %560 = vmatpush1.bf16.msra.mxu0 %v455
    %561 = vmatprep.subr.bf16.mxu0 0
    %562 = vmatpush1.bf16.msra.mxu0 %v456
    %563 = vmatprep.subr.bf16.mxu0 0
    %564 = vmatpush1.bf16.msra.mxu0 %v457
    %565 = vmatprep.subr.bf16.mxu0 0
    %566 = vmatpush1.bf16.msra.mxu0 %v458
    %567 = vmatprep.subr.bf16.mxu0 0
    %568 = vmatpush1.bf16.msra.mxu0 %v459
    %569 = vmatprep.subr.bf16.mxu0 0
    %570 = vmatpush1.bf16.msra.mxu0 %v460
    %571 = vmatprep.subr.bf16.mxu0 0
    %572 = vmatpush1.bf16.msra.mxu0 %v461
    %573 = vmatprep.subr.bf16.mxu0 0
    %574 = vmatpush1.bf16.msra.mxu0 %v462
    %575 = vmatprep.mubr.bf16.mxu0 %v147
    %576 = vmatmul.mubr.bf16.gmra.mrb[0].mxu0 %v146
    %v577 = vpop.f32.mrb[0].mxu0
    %v578 = vadd.f32 %v253, %v577
    %v579 = vpop.f32.mrb[0].mxu0
    %v580 = vpop.f32.mrb[0].mxu0
    %v581 = vadd.f32 %v253, %v580
    %v582 = vpop.f32.mrb[0].mxu0
    %583 = vdwg.mxu0
    %584 = vmatprep.subr.bf16.mxu0 0
    %585 = vmatpush1.bf16.msra.mxu0 %v463
    %586 = vmatprep.subr.bf16.mxu0 0
    %587 = vmatpush1.bf16.msra.mxu0 %v464
    %588 = vmatprep.subr.bf16.mxu0 0
    %589 = vmatpush1.bf16.msra.mxu0 %v465
    %590 = vmatprep.subr.bf16.mxu0 0
    %591 = vmatpush1.bf16.msra.mxu0 %v466
    %592 = vmatprep.subr.bf16.mxu0 0
    %593 = vmatpush1.bf16.msra.mxu0 %v467
    %594 = vmatprep.subr.bf16.mxu0 0
    %595 = vmatpush1.bf16.msra.mxu0 %v468
    %596 = vmatprep.subr.bf16.mxu0 0
    %597 = vmatpush1.bf16.msra.mxu0 %v469
    %598 = vmatprep.subr.bf16.mxu0 0
    %599 = vmatpush1.bf16.msra.mxu0 %v470
    %600 = vmatprep.subr.bf16.mxu0 0
    %601 = vmatpush1.bf16.msra.mxu0 %v471
    %602 = vmatprep.subr.bf16.mxu0 0
    %603 = vmatpush1.bf16.msra.mxu0 %v472
    %604 = vmatprep.subr.bf16.mxu0 0
    %605 = vmatpush1.bf16.msra.mxu0 %v473
    %606 = vmatprep.subr.bf16.mxu0 0
    %607 = vmatpush1.bf16.msra.mxu0 %v474
    %608 = vmatprep.subr.bf16.mxu0 0
    %609 = vmatpush1.bf16.msra.mxu0 %v475
    %610 = vmatprep.subr.bf16.mxu0 0
    %611 = vmatpush1.bf16.msra.mxu0 %v476
    %612 = vmatprep.subr.bf16.mxu0 0
    %613 = vmatpush1.bf16.msra.mxu0 %v477
    %614 = vmatprep.subr.bf16.mxu0 0
    %615 = vmatpush1.bf16.msra.mxu0 %v478
    %616 = vmatprep.mubr.bf16.mxu0 %v149
    %617 = vmatmul.mubr.bf16.gmra.mrb[0].mxu0 %v148
    %v618 = vpop.f32.mrb[0].mxu0
    %v619 = vadd.f32 %v578, %v618
    %v620 = vpop.f32.mrb[0].mxu0
    %v621 = vpop.f32.mrb[0].mxu0
    %v622 = vadd.f32 %v581, %v621
    %v623 = vpop.f32.mrb[0].mxu0
    %624 = vdwg.mxu0
    %625 = vmatprep.subr.bf16.mxu0 0
    %626 = vmatpush1.bf16.msra.mxu0 %v479
    %627 = vmatprep.subr.bf16.mxu0 0
    %628 = vmatpush1.bf16.msra.mxu0 %v480
    %629 = vmatprep.subr.bf16.mxu0 0
    %630 = vmatpush1.bf16.msra.mxu0 %v481
    %631 = vmatprep.subr.bf16.mxu0 0
    %632 = vmatpush1.bf16.msra.mxu0 %v482
    %633 = vmatprep.subr.bf16.mxu0 0
    %634 = vmatpush1.bf16.msra.mxu0 %v483
    %635 = vmatprep.subr.bf16.mxu0 0
    %636 = vmatpush1.bf16.msra.mxu0 %v484
    %637 = vmatprep.subr.bf16.mxu0 0
    %638 = vmatpush1.bf16.msra.mxu0 %v485
    %639 = vmatprep.subr.bf16.mxu0 0
    %640 = vmatpush1.bf16.msra.mxu0 %v486
    %641 = vmatprep.subr.bf16.mxu0 0
    %642 = vmatpush1.bf16.msra.mxu0 %v487
    %643 = vmatprep.subr.bf16.mxu0 0
    %644 = vmatpush1.bf16.msra.mxu0 %v488
    %645 = vmatprep.subr.bf16.mxu0 0
    %646 = vmatpush1.bf16.msra.mxu0 %v489
    %647 = vmatprep.subr.bf16.mxu0 0
    %648 = vmatpush1.bf16.msra.mxu0 %v490
    %649 = vmatprep.subr.bf16.mxu0 0
    %650 = vmatpush1.bf16.msra.mxu0 %v491
    %651 = vmatprep.subr.bf16.mxu0 0
    %652 = vmatpush1.bf16.msra.mxu0 %v492
    %653 = vmatprep.subr.bf16.mxu0 0
    %654 = vmatpush1.bf16.msra.mxu0 %v493
    %655 = vmatprep.subr.bf16.mxu0 0
    %656 = vmatpush1.bf16.msra.mxu0 %v494
    %657 = vmatprep.mubr.bf16.mxu0 %v151
    %658 = vmatmul.mubr.bf16.gmra.mrb[0].mxu0 %v150
    %v659 = vpop.f32.mrb[0].mxu0
    %v660 = vadd.f32 %v619, %v659
    %v661 = vpop.f32.mrb[0].mxu0
    %v662 = vpop.f32.mrb[0].mxu0
    %v663 = vadd.f32 %v622, %v662
    %v664 = vpop.f32.mrb[0].mxu0
    %665 = vdwg.mxu0
    %666 = vst [vmem:[%s9] sm:$0xff] %v660
    %667 = vst [vmem:[%s9 + $0x8] sm:$0xff] %v663
    %v668 = vpack.c.bf16 %v134, %v134
    %v669 = vpack.c.bf16 %v135, %v135
    %v670 = vpack.c.bf16 %v136, %v136
    %v671 = vpack.c.bf16 %v137, %v137
    %v672 = vpack.c.bf16 %v138, %v138
    %v673 = vpack.c.bf16 %v139, %v139
    %v674 = vld [vmem:[#allocation6] sm:$0xff]
    %v675 = vld [vmem:[#allocation6 + $0x8] sm:$0xff]
    %v676 = vld [vmem:[#allocation6 + $0x10] sm:$0xff]
    %v677 = vld [vmem:[#allocation6 + $0x18] sm:$0xff]
    %v678 = vld [vmem:[#allocation6 + $0x20] sm:$0xff]
    %v679 = vld [vmem:[#allocation6 + $0x28] sm:$0xff]
    %v680 = vld [vmem:[#allocation6 + $0x30] sm:$0xff]
    %v681 = vld [vmem:[#allocation6 + $0x38] sm:$0xff]
    %v682 = vld [vmem:[#allocation6 + $0x40] sm:$0xff]
    %v683 = vld [vmem:[#allocation6 + $0x48] sm:$0xff]
    %v684 = vld [vmem:[#allocation6 + $0x50] sm:$0xff]
    %v685 = vld [vmem:[#allocation6 + $0x58] sm:$0xff]
    %v686 = vld [vmem:[#allocation6 + $0x60] sm:$0xff]
    %v687 = vld [vmem:[#allocation6 + $0x68] sm:$0xff]
    %v688 = vld [vmem:[#allocation6 + $0x70] sm:$0xff]
    %v689 = vld [vmem:[#allocation6 + $0x78] sm:$0xff]
    %v690 = vld [vmem:[#allocation6 + $0x80] sm:$0xff]
    %v691 = vld [vmem:[#allocation6 + $0x88] sm:$0xff]
    %v692 = vld [vmem:[#allocation6 + $0x90] sm:$0xff]
    %v693 = vld [vmem:[#allocation6 + $0x98] sm:$0xff]
    %v694 = vld [vmem:[#allocation6 + $0xa0] sm:$0xff]
    %v695 = vld [vmem:[#allocation6 + $0xa8] sm:$0xff]
    %v696 = vld [vmem:[#allocation6 + $0xb0] sm:$0xff]
    %v697 = vld [vmem:[#allocation6 + $0xb8] sm:$0xff]
    %v698 = vld [vmem:[#allocation6 + $0xc0] sm:$0xff]
    %v699 = vld [vmem:[#allocation6 + $0xc8] sm:$0xff]
    %v700 = vld [vmem:[#allocation6 + $0xd0] sm:$0xff]
    %v701 = vld [vmem:[#allocation6 + $0xd8] sm:$0xff]
    %v702 = vld [vmem:[#allocation6 + $0xe0] sm:$0xff]
    %v703 = vld [vmem:[#allocation6 + $0xe8] sm:$0xff]
    %v704 = vld [vmem:[#allocation6 + $0xf0] sm:$0xff]
    %v705 = vld [vmem:[#allocation6 + $0xf8] sm:$0xff]
    %v706 = vld [vmem:[#allocation6 + $0x100] sm:$0xff]
    %v707 = vld [vmem:[#allocation6 + $0x108] sm:$0xff]
    %v708 = vld [vmem:[#allocation6 + $0x110] sm:$0xff]
    %v709 = vld [vmem:[#allocation6 + $0x118] sm:$0xff]
    %v710 = vld [vmem:[#allocation6 + $0x120] sm:$0xff]
    %v711 = vld [vmem:[#allocation6 + $0x128] sm:$0xff]
    %v712 = vld [vmem:[#allocation6 + $0x130] sm:$0xff]
    %v713 = vld [vmem:[#allocation6 + $0x138] sm:$0xff]
    %v714 = vld [vmem:[#allocation6 + $0x140] sm:$0xff]
    %v715 = vld [vmem:[#allocation6 + $0x148] sm:$0xff]
    %v716 = vld [vmem:[#allocation6 + $0x150] sm:$0xff]
    %v717 = vld [vmem:[#allocation6 + $0x158] sm:$0xff]
    %v718 = vld [vmem:[#allocation6 + $0x160] sm:$0xff]
    %v719 = vld [vmem:[#allocation6 + $0x168] sm:$0xff]
    %v720 = vld [vmem:[#allocation6 + $0x170] sm:$0xff]
    %v721 = vld [vmem:[#allocation6 + $0x178] sm:$0xff]
    %v722 = vld [vmem:[#allocation6 + $0x180] sm:$0xff]
    %v723 = vld [vmem:[#allocation6 + $0x188] sm:$0xff]
    %v724 = vld [vmem:[#allocation6 + $0x190] sm:$0xff]
    %v725 = vld [vmem:[#allocation6 + $0x198] sm:$0xff]
    %v726 = vld [vmem:[#allocation6 + $0x1a0] sm:$0xff]
    %v727 = vld [vmem:[#allocation6 + $0x1a8] sm:$0xff]
    %v728 = vld [vmem:[#allocation6 + $0x1b0] sm:$0xff]
    %v729 = vld [vmem:[#allocation6 + $0x1b8] sm:$0xff]
    %v730 = vld [vmem:[#allocation6 + $0x1c0] sm:$0xff]
    %v731 = vld [vmem:[#allocation6 + $0x1c8] sm:$0xff]
    %v732 = vld [vmem:[#allocation6 + $0x1d0] sm:$0xff]
    %v733 = vld [vmem:[#allocation6 + $0x1d8] sm:$0xff]
    %v734 = vld [vmem:[#allocation6 + $0x1e0] sm:$0xff]
    %v735 = vld [vmem:[#allocation6 + $0x1e8] sm:$0xff]
    %v736 = vld [vmem:[#allocation6 + $0x1f0] sm:$0xff]
    %v737 = vld [vmem:[#allocation6 + $0x1f8] sm:$0xff]
    %v738 = vld [vmem:[#allocation6 + $0x200] sm:$0xff]
    %v739 = vld [vmem:[#allocation6 + $0x208] sm:$0xff]
    %v740 = vld [vmem:[#allocation6 + $0x210] sm:$0xff]
    %v741 = vld [vmem:[#allocation6 + $0x218] sm:$0xff]
    %v742 = vld [vmem:[#allocation6 + $0x220] sm:$0xff]
    %v743 = vld [vmem:[#allocation6 + $0x228] sm:$0xff]
    %v744 = vld [vmem:[#allocation6 + $0x230] sm:$0xff]
    %v745 = vld [vmem:[#allocation6 + $0x238] sm:$0xff]
    %v746 = vld [vmem:[#allocation6 + $0x240] sm:$0xff]
    %v747 = vld [vmem:[#allocation6 + $0x248] sm:$0xff]
    %v748 = vld [vmem:[#allocation6 + $0x250] sm:$0xff]
    %v749 = vld [vmem:[#allocation6 + $0x258] sm:$0xff]
    %v750 = vld [vmem:[#allocation6 + $0x260] sm:$0xff]
    %v751 = vld [vmem:[#allocation6 + $0x268] sm:$0xff]
    %v752 = vld [vmem:[#allocation6 + $0x270] sm:$0xff]
    %v753 = vld [vmem:[#allocation6 + $0x278] sm:$0xff]
    %v754 = vld [vmem:[#allocation6 + $0x280] sm:$0xff]
    %v755 = vld [vmem:[#allocation6 + $0x288] sm:$0xff]
    %v756 = vld [vmem:[#allocation6 + $0x290] sm:$0xff]
    %v757 = vld [vmem:[#allocation6 + $0x298] sm:$0xff]
    %v758 = vld [vmem:[#allocation6 + $0x2a0] sm:$0xff]
    %v759 = vld [vmem:[#allocation6 + $0x2a8] sm:$0xff]
    %v760 = vld [vmem:[#allocation6 + $0x2b0] sm:$0xff]
    %v761 = vld [vmem:[#allocation6 + $0x2b8] sm:$0xff]
    %v762 = vld [vmem:[#allocation6 + $0x2c0] sm:$0xff]
    %v763 = vld [vmem:[#allocation6 + $0x2c8] sm:$0xff]
    %v764 = vld [vmem:[#allocation6 + $0x2d0] sm:$0xff]
    %v765 = vld [vmem:[#allocation6 + $0x2d8] sm:$0xff]
    %v766 = vld [vmem:[#allocation6 + $0x2e0] sm:$0xff]
    %v767 = vld [vmem:[#allocation6 + $0x2e8] sm:$0xff]
    %v768 = vld [vmem:[#allocation6 + $0x2f0] sm:$0xff]
    %v769 = vld [vmem:[#allocation6 + $0x2f8] sm:$0xff]
    %v770 = vld [vmem:[#allocation6 + $0x300] sm:$0xff]
    %v771 = vld [vmem:[#allocation6 + $0x308] sm:$0xff]
    %v772 = vld [vmem:[#allocation6 + $0x310] sm:$0xff]
    %v773 = vld [vmem:[#allocation6 + $0x318] sm:$0xff]
    %v774 = vld [vmem:[#allocation6 + $0x320] sm:$0xff]
    %v775 = vld [vmem:[#allocation6 + $0x328] sm:$0xff]
    %v776 = vld [vmem:[#allocation6 + $0x330] sm:$0xff]
    %v777 = vld [vmem:[#allocation6 + $0x338] sm:$0xff]
    %v778 = vld [vmem:[#allocation6 + $0x340] sm:$0xff]
    %v779 = vld [vmem:[#allocation6 + $0x348] sm:$0xff]
    %v780 = vld [vmem:[#allocation6 + $0x350] sm:$0xff]
    %v781 = vld [vmem:[#allocation6 + $0x358] sm:$0xff]
    %v782 = vld [vmem:[#allocation6 + $0x360] sm:$0xff]
    %v783 = vld [vmem:[#allocation6 + $0x368] sm:$0xff]
    %v784 = vld [vmem:[#allocation6 + $0x370] sm:$0xff]
    %v785 = vld [vmem:[#allocation6 + $0x378] sm:$0xff]
    %v786 = vld [vmem:[#allocation6 + $0x380] sm:$0xff]
    %v787 = vld [vmem:[#allocation6 + $0x388] sm:$0xff]
    %v788 = vld [vmem:[#allocation6 + $0x390] sm:$0xff]
    %v789 = vld [vmem:[#allocation6 + $0x398] sm:$0xff]
    %v790 = vld [vmem:[#allocation6 + $0x3a0] sm:$0xff]
    %v791 = vld [vmem:[#allocation6 + $0x3a8] sm:$0xff]
    %v792 = vld [vmem:[#allocation6 + $0x3b0] sm:$0xff]
    %v793 = vld [vmem:[#allocation6 + $0x3b8] sm:$0xff]
    %v794 = vld [vmem:[#allocation6 + $0x3c0] sm:$0xff]
    %v795 = vld [vmem:[#allocation6 + $0x3c8] sm:$0xff]
    %v796 = vld [vmem:[#allocation6 + $0x3d0] sm:$0xff]
    %v797 = vld [vmem:[#allocation6 + $0x3d8] sm:$0xff]
    %v798 = vld [vmem:[#allocation6 + $0x3e0] sm:$0xff]
    %v799 = vld [vmem:[#allocation6 + $0x3e8] sm:$0xff]
    %v800 = vld [vmem:[#allocation6 + $0x3f0] sm:$0xff]
    %v801 = vld [vmem:[#allocation6 + $0x3f8] sm:$0xff]
    %v802 = vld [vmem:[#allocation6 + $0x400] sm:$0xff]
    %v803 = vld [vmem:[#allocation6 + $0x408] sm:$0xff]
    %v804 = vld [vmem:[#allocation6 + $0x410] sm:$0xff]
    %v805 = vld [vmem:[#allocation6 + $0x418] sm:$0xff]
    %v806 = vld [vmem:[#allocation6 + $0x420] sm:$0xff]
    %v807 = vld [vmem:[#allocation6 + $0x428] sm:$0xff]
    %v808 = vld [vmem:[#allocation6 + $0x430] sm:$0xff]
    %v809 = vld [vmem:[#allocation6 + $0x438] sm:$0xff]
    %v810 = vld [vmem:[#allocation6 + $0x440] sm:$0xff]
    %v811 = vld [vmem:[#allocation6 + $0x448] sm:$0xff]
    %v812 = vld [vmem:[#allocation6 + $0x450] sm:$0xff]
    %v813 = vld [vmem:[#allocation6 + $0x458] sm:$0xff]
    %v814 = vld [vmem:[#allocation6 + $0x460] sm:$0xff]
    %v815 = vld [vmem:[#allocation6 + $0x468] sm:$0xff]
    %v816 = vld [vmem:[#allocation6 + $0x470] sm:$0xff]
    %v817 = vld [vmem:[#allocation6 + $0x478] sm:$0xff]
    %v818 = vld [vmem:[#allocation6 + $0x480] sm:$0xff]
    %v819 = vld [vmem:[#allocation6 + $0x488] sm:$0xff]
    %v820 = vld [vmem:[#allocation6 + $0x490] sm:$0xff]
    %v821 = vld [vmem:[#allocation6 + $0x498] sm:$0xff]
    %v822 = vld [vmem:[#allocation6 + $0x4a0] sm:$0xff]
    %v823 = vld [vmem:[#allocation6 + $0x4a8] sm:$0xff]
    %v824 = vld [vmem:[#allocation6 + $0x4b0] sm:$0xff]
    %v825 = vld [vmem:[#allocation6 + $0x4b8] sm:$0xff]
    %v826 = vld [vmem:[#allocation6 + $0x4c0] sm:$0xff]
    %v827 = vld [vmem:[#allocation6 + $0x4c8] sm:$0xff]
    %v828 = vld [vmem:[#allocation6 + $0x4d0] sm:$0xff]
    %v829 = vld [vmem:[#allocation6 + $0x4d8] sm:$0xff]
    %v830 = vld [vmem:[#allocation6 + $0x4e0] sm:$0xff]
    %v831 = vld [vmem:[#allocation6 + $0x4e8] sm:$0xff]
    %v832 = vld [vmem:[#allocation6 + $0x4f0] sm:$0xff]
    %v833 = vld [vmem:[#allocation6 + $0x4f8] sm:$0xff]
    %v834 = vld [vmem:[#allocation6 + $0x500] sm:$0xff]
    %v835 = vld [vmem:[#allocation6 + $0x508] sm:$0xff]
    %v836 = vld [vmem:[#allocation6 + $0x510] sm:$0xff]
    %v837 = vld [vmem:[#allocation6 + $0x518] sm:$0xff]
    %v838 = vld [vmem:[#allocation6 + $0x520] sm:$0xff]
    %v839 = vld [vmem:[#allocation6 + $0x528] sm:$0xff]
    %v840 = vld [vmem:[#allocation6 + $0x530] sm:$0xff]
    %v841 = vld [vmem:[#allocation6 + $0x538] sm:$0xff]
    %v842 = vld [vmem:[#allocation6 + $0x540] sm:$0xff]
    %v843 = vld [vmem:[#allocation6 + $0x548] sm:$0xff]
    %v844 = vld [vmem:[#allocation6 + $0x550] sm:$0xff]
    %v845 = vld [vmem:[#allocation6 + $0x558] sm:$0xff]
    %v846 = vld [vmem:[#allocation6 + $0x560] sm:$0xff]
    %v847 = vld [vmem:[#allocation6 + $0x568] sm:$0xff]
    %v848 = vld [vmem:[#allocation6 + $0x570] sm:$0xff]
    %v849 = vld [vmem:[#allocation6 + $0x578] sm:$0xff]
    %v850 = vld [vmem:[#allocation6 + $0x580] sm:$0xff]
    %v851 = vld [vmem:[#allocation6 + $0x588] sm:$0xff]
    %v852 = vld [vmem:[#allocation6 + $0x590] sm:$0xff]
    %v853 = vld [vmem:[#allocation6 + $0x598] sm:$0xff]
    %v854 = vld [vmem:[#allocation6 + $0x5a0] sm:$0xff]
    %v855 = vld [vmem:[#allocation6 + $0x5a8] sm:$0xff]
    %v856 = vld [vmem:[#allocation6 + $0x5b0] sm:$0xff]
    %v857 = vld [vmem:[#allocation6 + $0x5b8] sm:$0xff]
    %v858 = vld [vmem:[#allocation6 + $0x5c0] sm:$0xff]
    %v859 = vld [vmem:[#allocation6 + $0x5c8] sm:$0xff]
    %v860 = vld [vmem:[#allocation6 + $0x5d0] sm:$0xff]
    %v861 = vld [vmem:[#allocation6 + $0x5d8] sm:$0xff]
    %v862 = vld [vmem:[#allocation6 + $0x5e0] sm:$0xff]
    %v863 = vld [vmem:[#allocation6 + $0x5e8] sm:$0xff]
    %v864 = vld [vmem:[#allocation6 + $0x5f0] sm:$0xff]
    %v865 = vld [vmem:[#allocation6 + $0x5f8] sm:$0xff]
    %v866 = vld [vmem:[#allocation6 + $0x600] sm:$0xff]
    %v867 = vld [vmem:[#allocation6 + $0x608] sm:$0xff]
    %v868 = vld [vmem:[#allocation6 + $0x610] sm:$0xff]
    %v869 = vld [vmem:[#allocation6 + $0x618] sm:$0xff]
    %v870 = vld [vmem:[#allocation6 + $0x620] sm:$0xff]
    %v871 = vld [vmem:[#allocation6 + $0x628] sm:$0xff]
    %v872 = vld [vmem:[#allocation6 + $0x630] sm:$0xff]
    %v873 = vld [vmem:[#allocation6 + $0x638] sm:$0xff]
    %v874 = vld [vmem:[#allocation6 + $0x640] sm:$0xff]
    %v875 = vld [vmem:[#allocation6 + $0x648] sm:$0xff]
    %v876 = vld [vmem:[#allocation6 + $0x650] sm:$0xff]
    %v877 = vld [vmem:[#allocation6 + $0x658] sm:$0xff]
    %v878 = vld [vmem:[#allocation6 + $0x660] sm:$0xff]
    %v879 = vld [vmem:[#allocation6 + $0x668] sm:$0xff]
    %v880 = vld [vmem:[#allocation6 + $0x670] sm:$0xff]
    %v881 = vld [vmem:[#allocation6 + $0x678] sm:$0xff]
    %v882 = vld [vmem:[#allocation6 + $0x680] sm:$0xff]
    %v883 = vld [vmem:[#allocation6 + $0x688] sm:$0xff]
    %v884 = vld [vmem:[#allocation6 + $0x690] sm:$0xff]
    %v885 = vld [vmem:[#allocation6 + $0x698] sm:$0xff]
    %v886 = vld [vmem:[#allocation6 + $0x6a0] sm:$0xff]
    %v887 = vld [vmem:[#allocation6 + $0x6a8] sm:$0xff]
    %v888 = vld [vmem:[#allocation6 + $0x6b0] sm:$0xff]
    %v889 = vld [vmem:[#allocation6 + $0x6b8] sm:$0xff]
    %v890 = vld [vmem:[#allocation6 + $0x6c0] sm:$0xff]
    %v891 = vld [vmem:[#allocation6 + $0x6c8] sm:$0xff]
    %v892 = vld [vmem:[#allocation6 + $0x6d0] sm:$0xff]
    %v893 = vld [vmem:[#allocation6 + $0x6d8] sm:$0xff]
    %v894 = vld [vmem:[#allocation6 + $0x6e0] sm:$0xff]
    %v895 = vld [vmem:[#allocation6 + $0x6e8] sm:$0xff]
    %v896 = vld [vmem:[#allocation6 + $0x6f0] sm:$0xff]
    %v897 = vld [vmem:[#allocation6 + $0x6f8] sm:$0xff]
    %v898 = vld [vmem:[#allocation6 + $0x700] sm:$0xff]
    %v899 = vld [vmem:[#allocation6 + $0x708] sm:$0xff]
    %v900 = vld [vmem:[#allocation6 + $0x710] sm:$0xff]
    %v901 = vld [vmem:[#allocation6 + $0x718] sm:$0xff]
    %v902 = vld [vmem:[#allocation6 + $0x720] sm:$0xff]
    %v903 = vld [vmem:[#allocation6 + $0x728] sm:$0xff]
    %v904 = vld [vmem:[#allocation6 + $0x730] sm:$0xff]
    %v905 = vld [vmem:[#allocation6 + $0x738] sm:$0xff]
    %v906 = vld [vmem:[#allocation6 + $0x740] sm:$0xff]
    %v907 = vld [vmem:[#allocation6 + $0x748] sm:$0xff]
    %v908 = vld [vmem:[#allocation6 + $0x750] sm:$0xff]
    %v909 = vld [vmem:[#allocation6 + $0x758] sm:$0xff]
    %v910 = vld [vmem:[#allocation6 + $0x760] sm:$0xff]
    %v911 = vld [vmem:[#allocation6 + $0x768] sm:$0xff]
    %v912 = vld [vmem:[#allocation6 + $0x770] sm:$0xff]
    %v913 = vld [vmem:[#allocation6 + $0x778] sm:$0xff]
    %v914 = vld [vmem:[#allocation6 + $0x780] sm:$0xff]
    %v915 = vld [vmem:[#allocation6 + $0x788] sm:$0xff]
    %v916 = vld [vmem:[#allocation6 + $0x790] sm:$0xff]
    %v917 = vld [vmem:[#allocation6 + $0x798] sm:$0xff]
    %v918 = vld [vmem:[#allocation6 + $0x7a0] sm:$0xff]
    %v919 = vld [vmem:[#allocation6 + $0x7a8] sm:$0xff]
    %v920 = vld [vmem:[#allocation6 + $0x7b0] sm:$0xff]
    %v921 = vld [vmem:[#allocation6 + $0x7b8] sm:$0xff]
    %v922 = vld [vmem:[#allocation6 + $0x7c0] sm:$0xff]
    %v923 = vld [vmem:[#allocation6 + $0x7c8] sm:$0xff]
    %v924 = vld [vmem:[#allocation6 + $0x7d0] sm:$0xff]
    %v925 = vld [vmem:[#allocation6 + $0x7d8] sm:$0xff]
    %v926 = vld [vmem:[#allocation6 + $0x7e0] sm:$0xff]
    %v927 = vld [vmem:[#allocation6 + $0x7e8] sm:$0xff]
    %v928 = vld [vmem:[#allocation6 + $0x7f0] sm:$0xff]
    %v929 = vld [vmem:[#allocation6 + $0x7f8] sm:$0xff]
    %v930 = vld [vmem:[#allocation6 + $0x800] sm:$0xff]
    %v931 = vld [vmem:[#allocation6 + $0x808] sm:$0xff]
    %v932 = vld [vmem:[#allocation6 + $0x810] sm:$0xff]
    %v933 = vld [vmem:[#allocation6 + $0x818] sm:$0xff]
    %v934 = vld [vmem:[#allocation6 + $0x820] sm:$0xff]
    %v935 = vld [vmem:[#allocation6 + $0x828] sm:$0xff]
    %v936 = vld [vmem:[#allocation6 + $0x830] sm:$0xff]
    %v937 = vld [vmem:[#allocation6 + $0x838] sm:$0xff]
    %v938 = vld [vmem:[#allocation6 + $0x840] sm:$0xff]
    %v939 = vld [vmem:[#allocation6 + $0x848] sm:$0xff]
    %v940 = vld [vmem:[#allocation6 + $0x850] sm:$0xff]
    %v941 = vld [vmem:[#allocation6 + $0x858] sm:$0xff]
    %v942 = vld [vmem:[#allocation6 + $0x860] sm:$0xff]
    %v943 = vld [vmem:[#allocation6 + $0x868] sm:$0xff]
    %v944 = vld [vmem:[#allocation6 + $0x870] sm:$0xff]
    %v945 = vld [vmem:[#allocation6 + $0x878] sm:$0xff]
    %v946 = vld [vmem:[#allocation6 + $0x880] sm:$0xff]
    %v947 = vld [vmem:[#allocation6 + $0x888] sm:$0xff]
    %v948 = vld [vmem:[#allocation6 + $0x890] sm:$0xff]
    %v949 = vld [vmem:[#allocation6 + $0x898] sm:$0xff]
    %v950 = vld [vmem:[#allocation6 + $0x8a0] sm:$0xff]
    %v951 = vld [vmem:[#allocation6 + $0x8a8] sm:$0xff]
    %v952 = vld [vmem:[#allocation6 + $0x8b0] sm:$0xff]
    %v953 = vld [vmem:[#allocation6 + $0x8b8] sm:$0xff]
    %v954 = vld [vmem:[#allocation6 + $0x8c0] sm:$0xff]
    %v955 = vld [vmem:[#allocation6 + $0x8c8] sm:$0xff]
    %v956 = vld [vmem:[#allocation6 + $0x8d0] sm:$0xff]
    %v957 = vld [vmem:[#allocation6 + $0x8d8] sm:$0xff]
    %v958 = vld [vmem:[#allocation6 + $0x8e0] sm:$0xff]
    %v959 = vld [vmem:[#allocation6 + $0x8e8] sm:$0xff]
    %v960 = vld [vmem:[#allocation6 + $0x8f0] sm:$0xff]
    %v961 = vld [vmem:[#allocation6 + $0x8f8] sm:$0xff]
    %v962 = vld [vmem:[#allocation6 + $0x900] sm:$0xff]
    %v963 = vld [vmem:[#allocation6 + $0x908] sm:$0xff]
    %v964 = vld [vmem:[#allocation6 + $0x910] sm:$0xff]
    %v965 = vld [vmem:[#allocation6 + $0x918] sm:$0xff]
    %v966 = vld [vmem:[#allocation6 + $0x920] sm:$0xff]
    %v967 = vld [vmem:[#allocation6 + $0x928] sm:$0xff]
    %v968 = vld [vmem:[#allocation6 + $0x930] sm:$0xff]
    %v969 = vld [vmem:[#allocation6 + $0x938] sm:$0xff]
    %v970 = vld [vmem:[#allocation6 + $0x940] sm:$0xff]
    %v971 = vld [vmem:[#allocation6 + $0x948] sm:$0xff]
    %v972 = vld [vmem:[#allocation6 + $0x950] sm:$0xff]
    %v973 = vld [vmem:[#allocation6 + $0x958] sm:$0xff]
    %v974 = vld [vmem:[#allocation6 + $0x960] sm:$0xff]
    %v975 = vld [vmem:[#allocation6 + $0x968] sm:$0xff]
    %v976 = vld [vmem:[#allocation6 + $0x970] sm:$0xff]
    %v977 = vld [vmem:[#allocation6 + $0x978] sm:$0xff]
    %v978 = vld [vmem:[#allocation6 + $0x980] sm:$0xff]
    %v979 = vld [vmem:[#allocation6 + $0x988] sm:$0xff]
    %v980 = vld [vmem:[#allocation6 + $0x990] sm:$0xff]
    %v981 = vld [vmem:[#allocation6 + $0x998] sm:$0xff]
    %v982 = vld [vmem:[#allocation6 + $0x9a0] sm:$0xff]
    %v983 = vld [vmem:[#allocation6 + $0x9a8] sm:$0xff]
    %v984 = vld [vmem:[#allocation6 + $0x9b0] sm:$0xff]
    %v985 = vld [vmem:[#allocation6 + $0x9b8] sm:$0xff]
    %v986 = vld [vmem:[#allocation6 + $0x9c0] sm:$0xff]
    %v987 = vld [vmem:[#allocation6 + $0x9c8] sm:$0xff]
    %v988 = vld [vmem:[#allocation6 + $0x9d0] sm:$0xff]
    %v989 = vld [vmem:[#allocation6 + $0x9d8] sm:$0xff]
    %v990 = vld [vmem:[#allocation6 + $0x9e0] sm:$0xff]
    %v991 = vld [vmem:[#allocation6 + $0x9e8] sm:$0xff]
    %v992 = vld [vmem:[#allocation6 + $0x9f0] sm:$0xff]
    %v993 = vld [vmem:[#allocation6 + $0x9f8] sm:$0xff]
    %v994 = vld [vmem:[#allocation6 + $0xa00] sm:$0xff]
    %v995 = vld [vmem:[#allocation6 + $0xa08] sm:$0xff]
    %v996 = vld [vmem:[#allocation6 + $0xa10] sm:$0xff]
    %v997 = vld [vmem:[#allocation6 + $0xa18] sm:$0xff]
    %v998 = vld [vmem:[#allocation6 + $0xa20] sm:$0xff]
    %v999 = vld [vmem:[#allocation6 + $0xa28] sm:$0xff]
    %v1000 = vld [vmem:[#allocation6 + $0xa30] sm:$0xff]
    %v1001 = vld [vmem:[#allocation6 + $0xa38] sm:$0xff]
    %v1002 = vld [vmem:[#allocation6 + $0xa40] sm:$0xff]
    %v1003 = vld [vmem:[#allocation6 + $0xa48] sm:$0xff]
    %v1004 = vld [vmem:[#allocation6 + $0xa50] sm:$0xff]
    %v1005 = vld [vmem:[#allocation6 + $0xa58] sm:$0xff]
    %v1006 = vld [vmem:[#allocation6 + $0xa60] sm:$0xff]
    %v1007 = vld [vmem:[#allocation6 + $0xa68] sm:$0xff]
    %v1008 = vld [vmem:[#allocation6 + $0xa70] sm:$0xff]
    %v1009 = vld [vmem:[#allocation6 + $0xa78] sm:$0xff]
    %v1010 = vld [vmem:[#allocation6 + $0xa80] sm:$0xff]
    %v1011 = vld [vmem:[#allocation6 + $0xa88] sm:$0xff]
    %v1012 = vld [vmem:[#allocation6 + $0xa90] sm:$0xff]
    %v1013 = vld [vmem:[#allocation6 + $0xa98] sm:$0xff]
    %v1014 = vld [vmem:[#allocation6 + $0xaa0] sm:$0xff]
    %v1015 = vld [vmem:[#allocation6 + $0xaa8] sm:$0xff]
    %v1016 = vld [vmem:[#allocation6 + $0xab0] sm:$0xff]
    %v1017 = vld [vmem:[#allocation6 + $0xab8] sm:$0xff]
    %v1018 = vld [vmem:[#allocation6 + $0xac0] sm:$0xff]
    %v1019 = vld [vmem:[#allocation6 + $0xac8] sm:$0xff]
    %v1020 = vld [vmem:[#allocation6 + $0xad0] sm:$0xff]
    %v1021 = vld [vmem:[#allocation6 + $0xad8] sm:$0xff]
    %v1022 = vld [vmem:[#allocation6 + $0xae0] sm:$0xff]
    %v1023 = vld [vmem:[#allocation6 + $0xae8] sm:$0xff]
    %v1024 = vld [vmem:[#allocation6 + $0xaf0] sm:$0xff]
    %v1025 = vld [vmem:[#allocation6 + $0xaf8] sm:$0xff]
    %v1026 = vld [vmem:[#allocation6 + $0xb00] sm:$0xff]
    %v1027 = vld [vmem:[#allocation6 + $0xb08] sm:$0xff]
    %v1028 = vld [vmem:[#allocation6 + $0xb10] sm:$0xff]
    %v1029 = vld [vmem:[#allocation6 + $0xb18] sm:$0xff]
    %v1030 = vld [vmem:[#allocation6 + $0xb20] sm:$0xff]
    %v1031 = vld [vmem:[#allocation6 + $0xb28] sm:$0xff]
    %v1032 = vld [vmem:[#allocation6 + $0xb30] sm:$0xff]
    %v1033 = vld [vmem:[#allocation6 + $0xb38] sm:$0xff]
    %v1034 = vld [vmem:[#allocation6 + $0xb40] sm:$0xff]
    %v1035 = vld [vmem:[#allocation6 + $0xb48] sm:$0xff]
    %v1036 = vld [vmem:[#allocation6 + $0xb50] sm:$0xff]
    %v1037 = vld [vmem:[#allocation6 + $0xb58] sm:$0xff]
    %v1038 = vld [vmem:[#allocation6 + $0xb60] sm:$0xff]
    %v1039 = vld [vmem:[#allocation6 + $0xb68] sm:$0xff]
    %v1040 = vld [vmem:[#allocation6 + $0xb70] sm:$0xff]
    %v1041 = vld [vmem:[#allocation6 + $0xb78] sm:$0xff]
    %v1042 = vld [vmem:[#allocation6 + $0xb80] sm:$0xff]
    %v1043 = vld [vmem:[#allocation6 + $0xb88] sm:$0xff]
    %v1044 = vld [vmem:[#allocation6 + $0xb90] sm:$0xff]
    %v1045 = vld [vmem:[#allocation6 + $0xb98] sm:$0xff]
    %v1046 = vld [vmem:[#allocation6 + $0xba0] sm:$0xff]
    %v1047 = vld [vmem:[#allocation6 + $0xba8] sm:$0xff]
    %v1048 = vld [vmem:[#allocation6 + $0xbb0] sm:$0xff]
    %v1049 = vld [vmem:[#allocation6 + $0xbb8] sm:$0xff]
    %v1050 = vld [vmem:[#allocation6 + $0xbc0] sm:$0xff]
    %v1051 = vld [vmem:[#allocation6 + $0xbc8] sm:$0xff]
    %v1052 = vld [vmem:[#allocation6 + $0xbd0] sm:$0xff]
    %v1053 = vld [vmem:[#allocation6 + $0xbd8] sm:$0xff]
    %v1054 = vld [vmem:[#allocation6 + $0xbe0] sm:$0xff]
    %v1055 = vld [vmem:[#allocation6 + $0xbe8] sm:$0xff]
    %v1056 = vld [vmem:[#allocation6 + $0xbf0] sm:$0xff]
    %v1057 = vld [vmem:[#allocation6 + $0xbf8] sm:$0xff]
    %v1058 = vld [vmem:[#allocation6 + $0xc00] sm:$0xff]
    %v1059 = vld [vmem:[#allocation6 + $0xc08] sm:$0xff]
    %v1060 = vld [vmem:[#allocation6 + $0xc10] sm:$0xff]
    %v1061 = vld [vmem:[#allocation6 + $0xc18] sm:$0xff]
    %v1062 = vld [vmem:[#allocation6 + $0xc20] sm:$0xff]
    %v1063 = vld [vmem:[#allocation6 + $0xc28] sm:$0xff]
    %v1064 = vld [vmem:[#allocation6 + $0xc30] sm:$0xff]
    %v1065 = vld [vmem:[#allocation6 + $0xc38] sm:$0xff]
    %v1066 = vld [vmem:[#allocation6 + $0xc40] sm:$0xff]
    %v1067 = vld [vmem:[#allocation6 + $0xc48] sm:$0xff]
    %v1068 = vld [vmem:[#allocation6 + $0xc50] sm:$0xff]
    %v1069 = vld [vmem:[#allocation6 + $0xc58] sm:$0xff]
    %v1070 = vld [vmem:[#allocation6 + $0xc60] sm:$0xff]
    %v1071 = vld [vmem:[#allocation6 + $0xc68] sm:$0xff]
    %v1072 = vld [vmem:[#allocation6 + $0xc70] sm:$0xff]
    %v1073 = vld [vmem:[#allocation6 + $0xc78] sm:$0xff]
    %v1074 = vld [vmem:[#allocation6 + $0xc80] sm:$0xff]
    %v1075 = vld [vmem:[#allocation6 + $0xc88] sm:$0xff]
    %v1076 = vld [vmem:[#allocation6 + $0xc90] sm:$0xff]
    %v1077 = vld [vmem:[#allocation6 + $0xc98] sm:$0xff]
    %v1078 = vld [vmem:[#allocation6 + $0xca0] sm:$0xff]
    %v1079 = vld [vmem:[#allocation6 + $0xca8] sm:$0xff]
    %v1080 = vld [vmem:[#allocation6 + $0xcb0] sm:$0xff]
    %v1081 = vld [vmem:[#allocation6 + $0xcb8] sm:$0xff]
    %v1082 = vld [vmem:[#allocation6 + $0xcc0] sm:$0xff]
    %v1083 = vld [vmem:[#allocation6 + $0xcc8] sm:$0xff]
    %v1084 = vld [vmem:[#allocation6 + $0xcd0] sm:$0xff]
    %v1085 = vld [vmem:[#allocation6 + $0xcd8] sm:$0xff]
    %v1086 = vld [vmem:[#allocation6 + $0xce0] sm:$0xff]
    %v1087 = vld [vmem:[#allocation6 + $0xce8] sm:$0xff]
    %v1088 = vld [vmem:[#allocation6 + $0xcf0] sm:$0xff]
    %v1089 = vld [vmem:[#allocation6 + $0xcf8] sm:$0xff]
    %v1090 = vld [vmem:[#allocation6 + $0xd00] sm:$0xff]
    %v1091 = vld [vmem:[#allocation6 + $0xd08] sm:$0xff]
    %v1092 = vld [vmem:[#allocation6 + $0xd10] sm:$0xff]
    %v1093 = vld [vmem:[#allocation6 + $0xd18] sm:$0xff]
    %v1094 = vld [vmem:[#allocation6 + $0xd20] sm:$0xff]
    %v1095 = vld [vmem:[#allocation6 + $0xd28] sm:$0xff]
    %v1096 = vld [vmem:[#allocation6 + $0xd30] sm:$0xff]
    %v1097 = vld [vmem:[#allocation6 + $0xd38] sm:$0xff]
    %v1098 = vld [vmem:[#allocation6 + $0xd40] sm:$0xff]
    %v1099 = vld [vmem:[#allocation6 + $0xd48] sm:$0xff]
    %v1100 = vld [vmem:[#allocation6 + $0xd50] sm:$0xff]
    %v1101 = vld [vmem:[#allocation6 + $0xd58] sm:$0xff]
    %v1102 = vld [vmem:[#allocation6 + $0xd60] sm:$0xff]
    %v1103 = vld [vmem:[#allocation6 + $0xd68] sm:$0xff]
    %v1104 = vld [vmem:[#allocation6 + $0xd70] sm:$0xff]
    %v1105 = vld [vmem:[#allocation6 + $0xd78] sm:$0xff]
    %v1106 = vld [vmem:[#allocation6 + $0xd80] sm:$0xff]
    %v1107 = vld [vmem:[#allocation6 + $0xd88] sm:$0xff]
    %v1108 = vld [vmem:[#allocation6 + $0xd90] sm:$0xff]
    %v1109 = vld [vmem:[#allocation6 + $0xd98] sm:$0xff]
    %v1110 = vld [vmem:[#allocation6 + $0xda0] sm:$0xff]
    %v1111 = vld [vmem:[#allocation6 + $0xda8] sm:$0xff]
    %v1112 = vld [vmem:[#allocation6 + $0xdb0] sm:$0xff]
    %v1113 = vld [vmem:[#allocation6 + $0xdb8] sm:$0xff]
    %v1114 = vld [vmem:[#allocation6 + $0xdc0] sm:$0xff]
    %v1115 = vld [vmem:[#allocation6 + $0xdc8] sm:$0xff]
    %v1116 = vld [vmem:[#allocation6 + $0xdd0] sm:$0xff]
    %v1117 = vld [vmem:[#allocation6 + $0xdd8] sm:$0xff]
    %v1118 = vld [vmem:[#allocation6 + $0xde0] sm:$0xff]
    %v1119 = vld [vmem:[#allocation6 + $0xde8] sm:$0xff]
    %v1120 = vld [vmem:[#allocation6 + $0xdf0] sm:$0xff]
    %v1121 = vld [vmem:[#allocation6 + $0xdf8] sm:$0xff]
    %v1122 = vld [vmem:[#allocation6 + $0xe00] sm:$0xff]
    %v1123 = vld [vmem:[#allocation6 + $0xe08] sm:$0xff]
    %v1124 = vld [vmem:[#allocation6 + $0xe10] sm:$0xff]
    %v1125 = vld [vmem:[#allocation6 + $0xe18] sm:$0xff]
    %v1126 = vld [vmem:[#allocation6 + $0xe20] sm:$0xff]
    %v1127 = vld [vmem:[#allocation6 + $0xe28] sm:$0xff]
    %v1128 = vld [vmem:[#allocation6 + $0xe30] sm:$0xff]
    %v1129 = vld [vmem:[#allocation6 + $0xe38] sm:$0xff]
    %v1130 = vld [vmem:[#allocation6 + $0xe40] sm:$0xff]
    %v1131 = vld [vmem:[#allocation6 + $0xe48] sm:$0xff]
    %v1132 = vld [vmem:[#allocation6 + $0xe50] sm:$0xff]
    %v1133 = vld [vmem:[#allocation6 + $0xe58] sm:$0xff]
    %v1134 = vld [vmem:[#allocation6 + $0xe60] sm:$0xff]
    %v1135 = vld [vmem:[#allocation6 + $0xe68] sm:$0xff]
    %v1136 = vld [vmem:[#allocation6 + $0xe70] sm:$0xff]
    %v1137 = vld [vmem:[#allocation6 + $0xe78] sm:$0xff]
    %v1138 = vld [vmem:[#allocation6 + $0xe80] sm:$0xff]
    %v1139 = vld [vmem:[#allocation6 + $0xe88] sm:$0xff]
    %v1140 = vld [vmem:[#allocation6 + $0xe90] sm:$0xff]
    %v1141 = vld [vmem:[#allocation6 + $0xe98] sm:$0xff]
    %v1142 = vld [vmem:[#allocation6 + $0xea0] sm:$0xff]
    %v1143 = vld [vmem:[#allocation6 + $0xea8] sm:$0xff]
    %v1144 = vld [vmem:[#allocation6 + $0xeb0] sm:$0xff]
    %v1145 = vld [vmem:[#allocation6 + $0xeb8] sm:$0xff]
    %v1146 = vld [vmem:[#allocation6 + $0xec0] sm:$0xff]
    %v1147 = vld [vmem:[#allocation6 + $0xec8] sm:$0xff]
    %v1148 = vld [vmem:[#allocation6 + $0xed0] sm:$0xff]
    %v1149 = vld [vmem:[#allocation6 + $0xed8] sm:$0xff]
    %v1150 = vld [vmem:[#allocation6 + $0xee0] sm:$0xff]
    %v1151 = vld [vmem:[#allocation6 + $0xee8] sm:$0xff]
    %v1152 = vld [vmem:[#allocation6 + $0xef0] sm:$0xff]
    %v1153 = vld [vmem:[#allocation6 + $0xef8] sm:$0xff]
    %v1154 = vld [vmem:[#allocation6 + $0xf00] sm:$0xff]
    %v1155 = vld [vmem:[#allocation6 + $0xf08] sm:$0xff]
    %v1156 = vld [vmem:[#allocation6 + $0xf10] sm:$0xff]
    %v1157 = vld [vmem:[#allocation6 + $0xf18] sm:$0xff]
    %v1158 = vld [vmem:[#allocation6 + $0xf20] sm:$0xff]
    %v1159 = vld [vmem:[#allocation6 + $0xf28] sm:$0xff]
    %v1160 = vld [vmem:[#allocation6 + $0xf30] sm:$0xff]
    %v1161 = vld [vmem:[#allocation6 + $0xf38] sm:$0xff]
    %v1162 = vld [vmem:[#allocation6 + $0xf40] sm:$0xff]
    %v1163 = vld [vmem:[#allocation6 + $0xf48] sm:$0xff]
    %v1164 = vld [vmem:[#allocation6 + $0xf50] sm:$0xff]
    %v1165 = vld [vmem:[#allocation6 + $0xf58] sm:$0xff]
    %v1166 = vld [vmem:[#allocation6 + $0xf60] sm:$0xff]
    %v1167 = vld [vmem:[#allocation6 + $0xf68] sm:$0xff]
    %v1168 = vld [vmem:[#allocation6 + $0xf70] sm:$0xff]
    %v1169 = vld [vmem:[#allocation6 + $0xf78] sm:$0xff]
    %v1170 = vld [vmem:[#allocation6 + $0xf80] sm:$0xff]
    %v1171 = vld [vmem:[#allocation6 + $0xf88] sm:$0xff]
    %v1172 = vld [vmem:[#allocation6 + $0xf90] sm:$0xff]
    %v1173 = vld [vmem:[#allocation6 + $0xf98] sm:$0xff]
    %v1174 = vld [vmem:[#allocation6 + $0xfa0] sm:$0xff]
    %v1175 = vld [vmem:[#allocation6 + $0xfa8] sm:$0xff]
    %v1176 = vld [vmem:[#allocation6 + $0xfb0] sm:$0xff]
    %v1177 = vld [vmem:[#allocation6 + $0xfb8] sm:$0xff]
    %v1178 = vld [vmem:[#allocation6 + $0xfc0] sm:$0xff]
    %v1179 = vld [vmem:[#allocation6 + $0xfc8] sm:$0xff]
    %v1180 = vld [vmem:[#allocation6 + $0xfd0] sm:$0xff]
    %v1181 = vld [vmem:[#allocation6 + $0xfd8] sm:$0xff]
    %v1182 = vld [vmem:[#allocation6 + $0xfe0] sm:$0xff]
    %v1183 = vld [vmem:[#allocation6 + $0xfe8] sm:$0xff]
    %v1184 = vld [vmem:[#allocation6 + $0xff0] sm:$0xff]
    %v1185 = vld [vmem:[#allocation6 + $0xff8] sm:$0xff]
    %v1186 = vld [vmem:[#allocation6 + $0x1000] sm:$0xff]
    %v1187 = vld [vmem:[#allocation6 + $0x1008] sm:$0xff]
    %v1188 = vld [vmem:[#allocation6 + $0x1010] sm:$0xff]
    %v1189 = vld [vmem:[#allocation6 + $0x1018] sm:$0xff]
    %v1190 = vld [vmem:[#allocation6 + $0x1020] sm:$0xff]
    %v1191 = vld [vmem:[#allocation6 + $0x1028] sm:$0xff]
    %v1192 = vld [vmem:[#allocation6 + $0x1030] sm:$0xff]
    %v1193 = vld [vmem:[#allocation6 + $0x1038] sm:$0xff]
    %v1194 = vld [vmem:[#allocation6 + $0x1040] sm:$0xff]
    %v1195 = vld [vmem:[#allocation6 + $0x1048] sm:$0xff]
    %v1196 = vld [vmem:[#allocation6 + $0x1050] sm:$0xff]
    %v1197 = vld [vmem:[#allocation6 + $0x1058] sm:$0xff]
    %v1198 = vld [vmem:[#allocation6 + $0x1060] sm:$0xff]
    %v1199 = vld [vmem:[#allocation6 + $0x1068] sm:$0xff]
    %v1200 = vld [vmem:[#allocation6 + $0x1070] sm:$0xff]
    %v1201 = vld [vmem:[#allocation6 + $0x1078] sm:$0xff]
    %v1202 = vld [vmem:[#allocation6 + $0x1080] sm:$0xff]
    %v1203 = vld [vmem:[#allocation6 + $0x1088] sm:$0xff]
    %v1204 = vld [vmem:[#allocation6 + $0x1090] sm:$0xff]
    %v1205 = vld [vmem:[#allocation6 + $0x1098] sm:$0xff]
    %v1206 = vld [vmem:[#allocation6 + $0x10a0] sm:$0xff]
    %v1207 = vld [vmem:[#allocation6 + $0x10a8] sm:$0xff]
    %v1208 = vld [vmem:[#allocation6 + $0x10b0] sm:$0xff]
    %v1209 = vld [vmem:[#allocation6 + $0x10b8] sm:$0xff]
    %v1210 = vld [vmem:[#allocation6 + $0x10c0] sm:$0xff]
    %v1211 = vld [vmem:[#allocation6 + $0x10c8] sm:$0xff]
    %v1212 = vld [vmem:[#allocation6 + $0x10d0] sm:$0xff]
    %v1213 = vld [vmem:[#allocation6 + $0x10d8] sm:$0xff]
    %v1214 = vld [vmem:[#allocation6 + $0x10e0] sm:$0xff]
    %v1215 = vld [vmem:[#allocation6 + $0x10e8] sm:$0xff]
    %v1216 = vld [vmem:[#allocation6 + $0x10f0] sm:$0xff]
    %v1217 = vld [vmem:[#allocation6 + $0x10f8] sm:$0xff]
    %v1218 = vld [vmem:[#allocation6 + $0x1100] sm:$0xff]
    %v1219 = vld [vmem:[#allocation6 + $0x1108] sm:$0xff]
    %v1220 = vld [vmem:[#allocation6 + $0x1110] sm:$0xff]
    %v1221 = vld [vmem:[#allocation6 + $0x1118] sm:$0xff]
    %v1222 = vld [vmem:[#allocation6 + $0x1120] sm:$0xff]
    %v1223 = vld [vmem:[#allocation6 + $0x1128] sm:$0xff]
    %v1224 = vld [vmem:[#allocation6 + $0x1130] sm:$0xff]
    %v1225 = vld [vmem:[#allocation6 + $0x1138] sm:$0xff]
    %v1226 = vld [vmem:[#allocation6 + $0x1140] sm:$0xff]
    %v1227 = vld [vmem:[#allocation6 + $0x1148] sm:$0xff]
    %v1228 = vld [vmem:[#allocation6 + $0x1150] sm:$0xff]
    %v1229 = vld [vmem:[#allocation6 + $0x1158] sm:$0xff]
    %v1230 = vld [vmem:[#allocation6 + $0x1160] sm:$0xff]
    %v1231 = vld [vmem:[#allocation6 + $0x1168] sm:$0xff]
    %v1232 = vld [vmem:[#allocation6 + $0x1170] sm:$0xff]
    %v1233 = vld [vmem:[#allocation6 + $0x1178] sm:$0xff]
    %v1234 = vld [vmem:[#allocation6 + $0x1180] sm:$0xff]
    %v1235 = vld [vmem:[#allocation6 + $0x1188] sm:$0xff]
    %v1236 = vld [vmem:[#allocation6 + $0x1190] sm:$0xff]
    %v1237 = vld [vmem:[#allocation6 + $0x1198] sm:$0xff]
    %v1238 = vld [vmem:[#allocation6 + $0x11a0] sm:$0xff]
    %v1239 = vld [vmem:[#allocation6 + $0x11a8] sm:$0xff]
    %v1240 = vld [vmem:[#allocation6 + $0x11b0] sm:$0xff]
    %v1241 = vld [vmem:[#allocation6 + $0x11b8] sm:$0xff]
    %v1242 = vld [vmem:[#allocation6 + $0x11c0] sm:$0xff]
    %v1243 = vld [vmem:[#allocation6 + $0x11c8] sm:$0xff]
    %v1244 = vld [vmem:[#allocation6 + $0x11d0] sm:$0xff]
    %v1245 = vld [vmem:[#allocation6 + $0x11d8] sm:$0xff]
    %v1246 = vld [vmem:[#allocation6 + $0x11e0] sm:$0xff]
    %v1247 = vld [vmem:[#allocation6 + $0x11e8] sm:$0xff]
    %v1248 = vld [vmem:[#allocation6 + $0x11f0] sm:$0xff]
    %v1249 = vld [vmem:[#allocation6 + $0x11f8] sm:$0xff]
    %v1250 = vpack.c.bf16 %v140, %v140
    %v1251 = vpack.c.bf16 %v141, %v141
    %v1252 = vpack.c.bf16 %v142, %v142
    %v1253 = vpack.c.bf16 %v143, %v143
    %v1254 = vpack.c.bf16 %v144, %v144
    %v1255 = vpack.c.bf16 %v145, %v145
    %s1256 = scalar_lea.vmem [#allocation6], 4608
    %v1257 = vld [vmem:[%s1256] sm:$0xff]
    %v1258 = vld [vmem:[%s1256 + $0x8] sm:$0xff]
    %v1259 = vld [vmem:[%s1256 + $0x10] sm:$0xff]
    %v1260 = vld [vmem:[%s1256 + $0x18] sm:$0xff]
    %v1261 = vld [vmem:[%s1256 + $0x20] sm:$0xff]
    %v1262 = vld [vmem:[%s1256 + $0x28] sm:$0xff]
    %v1263 = vld [vmem:[%s1256 + $0x30] sm:$0xff]
    %v1264 = vld [vmem:[%s1256 + $0x38] sm:$0xff]
    %v1265 = vld [vmem:[%s1256 + $0x40] sm:$0xff]
    %v1266 = vld [vmem:[%s1256 + $0x48] sm:$0xff]
    %v1267 = vld [vmem:[%s1256 + $0x50] sm:$0xff]
    %v1268 = vld [vmem:[%s1256 + $0x58] sm:$0xff]
    %v1269 = vld [vmem:[%s1256 + $0x60] sm:$0xff]
    %v1270 = vld [vmem:[%s1256 + $0x68] sm:$0xff]
    %v1271 = vld [vmem:[%s1256 + $0x70] sm:$0xff]
    %v1272 = vld [vmem:[%s1256 + $0x78] sm:$0xff]
    %v1273 = vld [vmem:[%s1256 + $0x80] sm:$0xff]
    %v1274 = vld [vmem:[%s1256 + $0x88] sm:$0xff]
    %v1275 = vld [vmem:[%s1256 + $0x90] sm:$0xff]
    %v1276 = vld [vmem:[%s1256 + $0x98] sm:$0xff]
    %v1277 = vld [vmem:[%s1256 + $0xa0] sm:$0xff]
    %v1278 = vld [vmem:[%s1256 + $0xa8] sm:$0xff]
    %v1279 = vld [vmem:[%s1256 + $0xb0] sm:$0xff]
    %v1280 = vld [vmem:[%s1256 + $0xb8] sm:$0xff]
    %v1281 = vld [vmem:[%s1256 + $0xc0] sm:$0xff]
    %v1282 = vld [vmem:[%s1256 + $0xc8] sm:$0xff]
    %v1283 = vld [vmem:[%s1256 + $0xd0] sm:$0xff]
    %v1284 = vld [vmem:[%s1256 + $0xd8] sm:$0xff]
    %v1285 = vld [vmem:[%s1256 + $0xe0] sm:$0xff]
    %v1286 = vld [vmem:[%s1256 + $0xe8] sm:$0xff]
    %v1287 = vld [vmem:[%s1256 + $0xf0] sm:$0xff]
    %v1288 = vld [vmem:[%s1256 + $0xf8] sm:$0xff]
    %v1289 = vld [vmem:[%s1256 + $0x100] sm:$0xff]
    %v1290 = vld [vmem:[%s1256 + $0x108] sm:$0xff]
    %v1291 = vld [vmem:[%s1256 + $0x110] sm:$0xff]
    %v1292 = vld [vmem:[%s1256 + $0x118] sm:$0xff]
    %v1293 = vld [vmem:[%s1256 + $0x120] sm:$0xff]
    %v1294 = vld [vmem:[%s1256 + $0x128] sm:$0xff]
    %v1295 = vld [vmem:[%s1256 + $0x130] sm:$0xff]
    %v1296 = vld [vmem:[%s1256 + $0x138] sm:$0xff]
    %v1297 = vld [vmem:[%s1256 + $0x140] sm:$0xff]
    %v1298 = vld [vmem:[%s1256 + $0x148] sm:$0xff]
    %v1299 = vld [vmem:[%s1256 + $0x150] sm:$0xff]
    %v1300 = vld [vmem:[%s1256 + $0x158] sm:$0xff]
    %v1301 = vld [vmem:[%s1256 + $0x160] sm:$0xff]
    %v1302 = vld [vmem:[%s1256 + $0x168] sm:$0xff]
    %v1303 = vld [vmem:[%s1256 + $0x170] sm:$0xff]
    %v1304 = vld [vmem:[%s1256 + $0x178] sm:$0xff]
    %v1305 = vld [vmem:[%s1256 + $0x180] sm:$0xff]
    %v1306 = vld [vmem:[%s1256 + $0x188] sm:$0xff]
    %v1307 = vld [vmem:[%s1256 + $0x190] sm:$0xff]
    %v1308 = vld [vmem:[%s1256 + $0x198] sm:$0xff]
    %v1309 = vld [vmem:[%s1256 + $0x1a0] sm:$0xff]
    %v1310 = vld [vmem:[%s1256 + $0x1a8] sm:$0xff]
    %v1311 = vld [vmem:[%s1256 + $0x1b0] sm:$0xff]
    %v1312 = vld [vmem:[%s1256 + $0x1b8] sm:$0xff]
    %v1313 = vld [vmem:[%s1256 + $0x1c0] sm:$0xff]
    %v1314 = vld [vmem:[%s1256 + $0x1c8] sm:$0xff]
    %v1315 = vld [vmem:[%s1256 + $0x1d0] sm:$0xff]
    %v1316 = vld [vmem:[%s1256 + $0x1d8] sm:$0xff]
    %v1317 = vld [vmem:[%s1256 + $0x1e0] sm:$0xff]
    %v1318 = vld [vmem:[%s1256 + $0x1e8] sm:$0xff]
    %v1319 = vld [vmem:[%s1256 + $0x1f0] sm:$0xff]
    %v1320 = vld [vmem:[%s1256 + $0x1f8] sm:$0xff]
    %v1321 = vld [vmem:[%s1256 + $0x200] sm:$0xff]
    %v1322 = vld [vmem:[%s1256 + $0x208] sm:$0xff]
    %v1323 = vld [vmem:[%s1256 + $0x210] sm:$0xff]
    %v1324 = vld [vmem:[%s1256 + $0x218] sm:$0xff]
    %v1325 = vld [vmem:[%s1256 + $0x220] sm:$0xff]
    %v1326 = vld [vmem:[%s1256 + $0x228] sm:$0xff]
    %v1327 = vld [vmem:[%s1256 + $0x230] sm:$0xff]
    %v1328 = vld [vmem:[%s1256 + $0x238] sm:$0xff]
    %v1329 = vld [vmem:[%s1256 + $0x240] sm:$0xff]
    %v1330 = vld [vmem:[%s1256 + $0x248] sm:$0xff]
    %v1331 = vld [vmem:[%s1256 + $0x250] sm:$0xff]
    %v1332 = vld [vmem:[%s1256 + $0x258] sm:$0xff]
    %v1333 = vld [vmem:[%s1256 + $0x260] sm:$0xff]
    %v1334 = vld [vmem:[%s1256 + $0x268] sm:$0xff]
    %v1335 = vld [vmem:[%s1256 + $0x270] sm:$0xff]
    %v1336 = vld [vmem:[%s1256 + $0x278] sm:$0xff]
    %v1337 = vld [vmem:[%s1256 + $0x280] sm:$0xff]
    %v1338 = vld [vmem:[%s1256 + $0x288] sm:$0xff]
    %v1339 = vld [vmem:[%s1256 + $0x290] sm:$0xff]
    %v1340 = vld [vmem:[%s1256 + $0x298] sm:$0xff]
    %v1341 = vld [vmem:[%s1256 + $0x2a0] sm:$0xff]
    %v1342 = vld [vmem:[%s1256 + $0x2a8] sm:$0xff]
    %v1343 = vld [vmem:[%s1256 + $0x2b0] sm:$0xff]
    %v1344 = vld [vmem:[%s1256 + $0x2b8] sm:$0xff]
    %v1345 = vld [vmem:[%s1256 + $0x2c0] sm:$0xff]
    %v1346 = vld [vmem:[%s1256 + $0x2c8] sm:$0xff]
    %v1347 = vld [vmem:[%s1256 + $0x2d0] sm:$0xff]
    %v1348 = vld [vmem:[%s1256 + $0x2d8] sm:$0xff]
    %v1349 = vld [vmem:[%s1256 + $0x2e0] sm:$0xff]
    %v1350 = vld [vmem:[%s1256 + $0x2e8] sm:$0xff]
    %v1351 = vld [vmem:[%s1256 + $0x2f0] sm:$0xff]
    %v1352 = vld [vmem:[%s1256 + $0x2f8] sm:$0xff]
    %v1353 = vld [vmem:[%s1256 + $0x300] sm:$0xff]
    %v1354 = vld [vmem:[%s1256 + $0x308] sm:$0xff]
    %v1355 = vld [vmem:[%s1256 + $0x310] sm:$0xff]
    %v1356 = vld [vmem:[%s1256 + $0x318] sm:$0xff]
    %v1357 = vld [vmem:[%s1256 + $0x320] sm:$0xff]
    %v1358 = vld [vmem:[%s1256 + $0x328] sm:$0xff]
    %v1359 = vld [vmem:[%s1256 + $0x330] sm:$0xff]
    %v1360 = vld [vmem:[%s1256 + $0x338] sm:$0xff]
    %v1361 = vld [vmem:[%s1256 + $0x340] sm:$0xff]
    %v1362 = vld [vmem:[%s1256 + $0x348] sm:$0xff]
    %v1363 = vld [vmem:[%s1256 + $0x350] sm:$0xff]
    %v1364 = vld [vmem:[%s1256 + $0x358] sm:$0xff]
    %v1365 = vld [vmem:[%s1256 + $0x360] sm:$0xff]
    %v1366 = vld [vmem:[%s1256 + $0x368] sm:$0xff]
    %v1367 = vld [vmem:[%s1256 + $0x370] sm:$0xff]
    %v1368 = vld [vmem:[%s1256 + $0x378] sm:$0xff]
    %v1369 = vld [vmem:[%s1256 + $0x380] sm:$0xff]
    %v1370 = vld [vmem:[%s1256 + $0x388] sm:$0xff]
    %v1371 = vld [vmem:[%s1256 + $0x390] sm:$0xff]
    %v1372 = vld [vmem:[%s1256 + $0x398] sm:$0xff]
    %v1373 = vld [vmem:[%s1256 + $0x3a0] sm:$0xff]
    %v1374 = vld [vmem:[%s1256 + $0x3a8] sm:$0xff]
    %v1375 = vld [vmem:[%s1256 + $0x3b0] sm:$0xff]
    %v1376 = vld [vmem:[%s1256 + $0x3b8] sm:$0xff]
    %v1377 = vld [vmem:[%s1256 + $0x3c0] sm:$0xff]
    %v1378 = vld [vmem:[%s1256 + $0x3c8] sm:$0xff]
    %v1379 = vld [vmem:[%s1256 + $0x3d0] sm:$0xff]
    %v1380 = vld [vmem:[%s1256 + $0x3d8] sm:$0xff]
    %v1381 = vld [vmem:[%s1256 + $0x3e0] sm:$0xff]
    %v1382 = vld [vmem:[%s1256 + $0x3e8] sm:$0xff]
    %v1383 = vld [vmem:[%s1256 + $0x3f0] sm:$0xff]
    %v1384 = vld [vmem:[%s1256 + $0x3f8] sm:$0xff]
    %v1385 = vld [vmem:[%s1256 + $0x400] sm:$0xff]
    %v1386 = vld [vmem:[%s1256 + $0x408] sm:$0xff]
    %v1387 = vld [vmem:[%s1256 + $0x410] sm:$0xff]
    %v1388 = vld [vmem:[%s1256 + $0x418] sm:$0xff]
    %v1389 = vld [vmem:[%s1256 + $0x420] sm:$0xff]
    %v1390 = vld [vmem:[%s1256 + $0x428] sm:$0xff]
    %v1391 = vld [vmem:[%s1256 + $0x430] sm:$0xff]
    %v1392 = vld [vmem:[%s1256 + $0x438] sm:$0xff]
    %v1393 = vld [vmem:[%s1256 + $0x440] sm:$0xff]
    %v1394 = vld [vmem:[%s1256 + $0x448] sm:$0xff]
    %v1395 = vld [vmem:[%s1256 + $0x450] sm:$0xff]
    %v1396 = vld [vmem:[%s1256 + $0x458] sm:$0xff]
    %v1397 = vld [vmem:[%s1256 + $0x460] sm:$0xff]
    %v1398 = vld [vmem:[%s1256 + $0x468] sm:$0xff]
    %v1399 = vld [vmem:[%s1256 + $0x470] sm:$0xff]
    %v1400 = vld [vmem:[%s1256 + $0x478] sm:$0xff]
    %v1401 = vld [vmem:[%s1256 + $0x480] sm:$0xff]
    %v1402 = vld [vmem:[%s1256 + $0x488] sm:$0xff]
    %v1403 = vld [vmem:[%s1256 + $0x490] sm:$0xff]
    %v1404 = vld [vmem:[%s1256 + $0x498] sm:$0xff]
    %v1405 = vld [vmem:[%s1256 + $0x4a0] sm:$0xff]
    %v1406 = vld [vmem:[%s1256 + $0x4a8] sm:$0xff]
    %v1407 = vld [vmem:[%s1256 + $0x4b0] sm:$0xff]
    %v1408 = vld [vmem:[%s1256 + $0x4b8] sm:$0xff]
    %v1409 = vld [vmem:[%s1256 + $0x4c0] sm:$0xff]
    %v1410 = vld [vmem:[%s1256 + $0x4c8] sm:$0xff]
    %v1411 = vld [vmem:[%s1256 + $0x4d0] sm:$0xff]
    %v1412 = vld [vmem:[%s1256 + $0x4d8] sm:$0xff]
    %v1413 = vld [vmem:[%s1256 + $0x4e0] sm:$0xff]
    %v1414 = vld [vmem:[%s1256 + $0x4e8] sm:$0xff]
    %v1415 = vld [vmem:[%s1256 + $0x4f0] sm:$0xff]
    %v1416 = vld [vmem:[%s1256 + $0x4f8] sm:$0xff]
    %v1417 = vld [vmem:[%s1256 + $0x500] sm:$0xff]
    %v1418 = vld [vmem:[%s1256 + $0x508] sm:$0xff]
    %v1419 = vld [vmem:[%s1256 + $0x510] sm:$0xff]
    %v1420 = vld [vmem:[%s1256 + $0x518] sm:$0xff]
    %v1421 = vld [vmem:[%s1256 + $0x520] sm:$0xff]
    %v1422 = vld [vmem:[%s1256 + $0x528] sm:$0xff]
    %v1423 = vld [vmem:[%s1256 + $0x530] sm:$0xff]
    %v1424 = vld [vmem:[%s1256 + $0x538] sm:$0xff]
    %v1425 = vld [vmem:[%s1256 + $0x540] sm:$0xff]
    %v1426 = vld [vmem:[%s1256 + $0x548] sm:$0xff]
    %v1427 = vld [vmem:[%s1256 + $0x550] sm:$0xff]
    %v1428 = vld [vmem:[%s1256 + $0x558] sm:$0xff]
    %v1429 = vld [vmem:[%s1256 + $0x560] sm:$0xff]
    %v1430 = vld [vmem:[%s1256 + $0x568] sm:$0xff]
    %v1431 = vld [vmem:[%s1256 + $0x570] sm:$0xff]
    %v1432 = vld [vmem:[%s1256 + $0x578] sm:$0xff]
    %v1433 = vld [vmem:[%s1256 + $0x580] sm:$0xff]
    %v1434 = vld [vmem:[%s1256 + $0x588] sm:$0xff]
    %v1435 = vld [vmem:[%s1256 + $0x590] sm:$0xff]
    %v1436 = vld [vmem:[%s1256 + $0x598] sm:$0xff]
    %v1437 = vld [vmem:[%s1256 + $0x5a0] sm:$0xff]
    %v1438 = vld [vmem:[%s1256 + $0x5a8] sm:$0xff]
    %v1439 = vld [vmem:[%s1256 + $0x5b0] sm:$0xff]
    %v1440 = vld [vmem:[%s1256 + $0x5b8] sm:$0xff]
    %v1441 = vld [vmem:[%s1256 + $0x5c0] sm:$0xff]
    %v1442 = vld [vmem:[%s1256 + $0x5c8] sm:$0xff]
    %v1443 = vld [vmem:[%s1256 + $0x5d0] sm:$0xff]
    %v1444 = vld [vmem:[%s1256 + $0x5d8] sm:$0xff]
    %v1445 = vld [vmem:[%s1256 + $0x5e0] sm:$0xff]
    %v1446 = vld [vmem:[%s1256 + $0x5e8] sm:$0xff]
    %v1447 = vld [vmem:[%s1256 + $0x5f0] sm:$0xff]
    %v1448 = vld [vmem:[%s1256 + $0x5f8] sm:$0xff]
    %v1449 = vld [vmem:[%s1256 + $0x600] sm:$0xff]
    %v1450 = vld [vmem:[%s1256 + $0x608] sm:$0xff]
    %v1451 = vld [vmem:[%s1256 + $0x610] sm:$0xff]
    %v1452 = vld [vmem:[%s1256 + $0x618] sm:$0xff]
    %v1453 = vld [vmem:[%s1256 + $0x620] sm:$0xff]
    %v1454 = vld [vmem:[%s1256 + $0x628] sm:$0xff]
    %v1455 = vld [vmem:[%s1256 + $0x630] sm:$0xff]
    %v1456 = vld [vmem:[%s1256 + $0x638] sm:$0xff]
    %v1457 = vld [vmem:[%s1256 + $0x640] sm:$0xff]
    %v1458 = vld [vmem:[%s1256 + $0x648] sm:$0xff]
    %v1459 = vld [vmem:[%s1256 + $0x650] sm:$0xff]
    %v1460 = vld [vmem:[%s1256 + $0x658] sm:$0xff]
    %v1461 = vld [vmem:[%s1256 + $0x660] sm:$0xff]
    %v1462 = vld [vmem:[%s1256 + $0x668] sm:$0xff]
    %v1463 = vld [vmem:[%s1256 + $0x670] sm:$0xff]
    %v1464 = vld [vmem:[%s1256 + $0x678] sm:$0xff]
    %v1465 = vld [vmem:[%s1256 + $0x680] sm:$0xff]
    %v1466 = vld [vmem:[%s1256 + $0x688] sm:$0xff]
    %v1467 = vld [vmem:[%s1256 + $0x690] sm:$0xff]
    %v1468 = vld [vmem:[%s1256 + $0x698] sm:$0xff]
    %v1469 = vld [vmem:[%s1256 + $0x6a0] sm:$0xff]
    %v1470 = vld [vmem:[%s1256 + $0x6a8] sm:$0xff]
    %v1471 = vld [vmem:[%s1256 + $0x6b0] sm:$0xff]
    %v1472 = vld [vmem:[%s1256 + $0x6b8] sm:$0xff]
    %v1473 = vld [vmem:[%s1256 + $0x6c0] sm:$0xff]
    %v1474 = vld [vmem:[%s1256 + $0x6c8] sm:$0xff]
    %v1475 = vld [vmem:[%s1256 + $0x6d0] sm:$0xff]
    %v1476 = vld [vmem:[%s1256 + $0x6d8] sm:$0xff]
    %v1477 = vld [vmem:[%s1256 + $0x6e0] sm:$0xff]
    %v1478 = vld [vmem:[%s1256 + $0x6e8] sm:$0xff]
    %v1479 = vld [vmem:[%s1256 + $0x6f0] sm:$0xff]
    %v1480 = vld [vmem:[%s1256 + $0x6f8] sm:$0xff]
    %v1481 = vld [vmem:[%s1256 + $0x700] sm:$0xff]
    %v1482 = vld [vmem:[%s1256 + $0x708] sm:$0xff]
    %v1483 = vld [vmem:[%s1256 + $0x710] sm:$0xff]
    %v1484 = vld [vmem:[%s1256 + $0x718] sm:$0xff]
    %v1485 = vld [vmem:[%s1256 + $0x720] sm:$0xff]
    %v1486 = vld [vmem:[%s1256 + $0x728] sm:$0xff]
    %v1487 = vld [vmem:[%s1256 + $0x730] sm:$0xff]
    %v1488 = vld [vmem:[%s1256 + $0x738] sm:$0xff]
    %v1489 = vld [vmem:[%s1256 + $0x740] sm:$0xff]
    %v1490 = vld [vmem:[%s1256 + $0x748] sm:$0xff]
    %v1491 = vld [vmem:[%s1256 + $0x750] sm:$0xff]
    %v1492 = vld [vmem:[%s1256 + $0x758] sm:$0xff]
    %v1493 = vld [vmem:[%s1256 + $0x760] sm:$0xff]
    %v1494 = vld [vmem:[%s1256 + $0x768] sm:$0xff]
    %v1495 = vld [vmem:[%s1256 + $0x770] sm:$0xff]
    %v1496 = vld [vmem:[%s1256 + $0x778] sm:$0xff]
    %v1497 = vld [vmem:[%s1256 + $0x780] sm:$0xff]
    %v1498 = vld [vmem:[%s1256 + $0x788] sm:$0xff]
    %v1499 = vld [vmem:[%s1256 + $0x790] sm:$0xff]
    %v1500 = vld [vmem:[%s1256 + $0x798] sm:$0xff]
    %v1501 = vld [vmem:[%s1256 + $0x7a0] sm:$0xff]
    %v1502 = vld [vmem:[%s1256 + $0x7a8] sm:$0xff]
    %v1503 = vld [vmem:[%s1256 + $0x7b0] sm:$0xff]
    %v1504 = vld [vmem:[%s1256 + $0x7b8] sm:$0xff]
    %v1505 = vld [vmem:[%s1256 + $0x7c0] sm:$0xff]
    %v1506 = vld [vmem:[%s1256 + $0x7c8] sm:$0xff]
    %v1507 = vld [vmem:[%s1256 + $0x7d0] sm:$0xff]
    %v1508 = vld [vmem:[%s1256 + $0x7d8] sm:$0xff]
    %v1509 = vld [vmem:[%s1256 + $0x7e0] sm:$0xff]
    %v1510 = vld [vmem:[%s1256 + $0x7e8] sm:$0xff]
    %v1511 = vld [vmem:[%s1256 + $0x7f0] sm:$0xff]
    %v1512 = vld [vmem:[%s1256 + $0x7f8] sm:$0xff]
    %v1513 = vld [vmem:[%s1256 + $0x800] sm:$0xff]
    %v1514 = vld [vmem:[%s1256 + $0x808] sm:$0xff]
    %v1515 = vld [vmem:[%s1256 + $0x810] sm:$0xff]
    %v1516 = vld [vmem:[%s1256 + $0x818] sm:$0xff]
    %v1517 = vld [vmem:[%s1256 + $0x820] sm:$0xff]
    %v1518 = vld [vmem:[%s1256 + $0x828] sm:$0xff]
    %v1519 = vld [vmem:[%s1256 + $0x830] sm:$0xff]
    %v1520 = vld [vmem:[%s1256 + $0x838] sm:$0xff]
    %v1521 = vld [vmem:[%s1256 + $0x840] sm:$0xff]
    %v1522 = vld [vmem:[%s1256 + $0x848] sm:$0xff]
    %v1523 = vld [vmem:[%s1256 + $0x850] sm:$0xff]
    %v1524 = vld [vmem:[%s1256 + $0x858] sm:$0xff]
    %v1525 = vld [vmem:[%s1256 + $0x860] sm:$0xff]
    %v1526 = vld [vmem:[%s1256 + $0x868] sm:$0xff]
    %v1527 = vld [vmem:[%s1256 + $0x870] sm:$0xff]
    %v1528 = vld [vmem:[%s1256 + $0x878] sm:$0xff]
    %v1529 = vld [vmem:[%s1256 + $0x880] sm:$0xff]
    %v1530 = vld [vmem:[%s1256 + $0x888] sm:$0xff]
    %v1531 = vld [vmem:[%s1256 + $0x890] sm:$0xff]
    %v1532 = vld [vmem:[%s1256 + $0x898] sm:$0xff]
    %v1533 = vld [vmem:[%s1256 + $0x8a0] sm:$0xff]
    %v1534 = vld [vmem:[%s1256 + $0x8a8] sm:$0xff]
    %v1535 = vld [vmem:[%s1256 + $0x8b0] sm:$0xff]
    %v1536 = vld [vmem:[%s1256 + $0x8b8] sm:$0xff]
    %v1537 = vld [vmem:[%s1256 + $0x8c0] sm:$0xff]
    %v1538 = vld [vmem:[%s1256 + $0x8c8] sm:$0xff]
    %v1539 = vld [vmem:[%s1256 + $0x8d0] sm:$0xff]
    %v1540 = vld [vmem:[%s1256 + $0x8d8] sm:$0xff]
    %v1541 = vld [vmem:[%s1256 + $0x8e0] sm:$0xff]
    %v1542 = vld [vmem:[%s1256 + $0x8e8] sm:$0xff]
    %v1543 = vld [vmem:[%s1256 + $0x8f0] sm:$0xff]
    %v1544 = vld [vmem:[%s1256 + $0x8f8] sm:$0xff]
    %v1545 = vld [vmem:[%s1256 + $0x900] sm:$0xff]
    %v1546 = vld [vmem:[%s1256 + $0x908] sm:$0xff]
    %v1547 = vld [vmem:[%s1256 + $0x910] sm:$0xff]
    %v1548 = vld [vmem:[%s1256 + $0x918] sm:$0xff]
    %v1549 = vld [vmem:[%s1256 + $0x920] sm:$0xff]
    %v1550 = vld [vmem:[%s1256 + $0x928] sm:$0xff]
    %v1551 = vld [vmem:[%s1256 + $0x930] sm:$0xff]
    %v1552 = vld [vmem:[%s1256 + $0x938] sm:$0xff]
    %v1553 = vld [vmem:[%s1256 + $0x940] sm:$0xff]
    %v1554 = vld [vmem:[%s1256 + $0x948] sm:$0xff]
    %v1555 = vld [vmem:[%s1256 + $0x950] sm:$0xff]
    %v1556 = vld [vmem:[%s1256 + $0x958] sm:$0xff]
    %v1557 = vld [vmem:[%s1256 + $0x960] sm:$0xff]
    %v1558 = vld [vmem:[%s1256 + $0x968] sm:$0xff]
    %v1559 = vld [vmem:[%s1256 + $0x970] sm:$0xff]
    %v1560 = vld [vmem:[%s1256 + $0x978] sm:$0xff]
    %v1561 = vld [vmem:[%s1256 + $0x980] sm:$0xff]
    %v1562 = vld [vmem:[%s1256 + $0x988] sm:$0xff]
    %v1563 = vld [vmem:[%s1256 + $0x990] sm:$0xff]
    %v1564 = vld [vmem:[%s1256 + $0x998] sm:$0xff]
    %v1565 = vld [vmem:[%s1256 + $0x9a0] sm:$0xff]
    %v1566 = vld [vmem:[%s1256 + $0x9a8] sm:$0xff]
    %v1567 = vld [vmem:[%s1256 + $0x9b0] sm:$0xff]
    %v1568 = vld [vmem:[%s1256 + $0x9b8] sm:$0xff]
    %v1569 = vld [vmem:[%s1256 + $0x9c0] sm:$0xff]
    %v1570 = vld [vmem:[%s1256 + $0x9c8] sm:$0xff]
    %v1571 = vld [vmem:[%s1256 + $0x9d0] sm:$0xff]
    %v1572 = vld [vmem:[%s1256 + $0x9d8] sm:$0xff]
    %v1573 = vld [vmem:[%s1256 + $0x9e0] sm:$0xff]
    %v1574 = vld [vmem:[%s1256 + $0x9e8] sm:$0xff]
    %v1575 = vld [vmem:[%s1256 + $0x9f0] sm:$0xff]
    %v1576 = vld [vmem:[%s1256 + $0x9f8] sm:$0xff]
    %v1577 = vld [vmem:[%s1256 + $0xa00] sm:$0xff]
    %v1578 = vld [vmem:[%s1256 + $0xa08] sm:$0xff]
    %v1579 = vld [vmem:[%s1256 + $0xa10] sm:$0xff]
    %v1580 = vld [vmem:[%s1256 + $0xa18] sm:$0xff]
    %v1581 = vld [vmem:[%s1256 + $0xa20] sm:$0xff]
    %v1582 = vld [vmem:[%s1256 + $0xa28] sm:$0xff]
    %v1583 = vld [vmem:[%s1256 + $0xa30] sm:$0xff]
    %v1584 = vld [vmem:[%s1256 + $0xa38] sm:$0xff]
    %v1585 = vld [vmem:[%s1256 + $0xa40] sm:$0xff]
    %v1586 = vld [vmem:[%s1256 + $0xa48] sm:$0xff]
    %v1587 = vld [vmem:[%s1256 + $0xa50] sm:$0xff]
    %v1588 = vld [vmem:[%s1256 + $0xa58] sm:$0xff]
    %v1589 = vld [vmem:[%s1256 + $0xa60] sm:$0xff]
    %v1590 = vld [vmem:[%s1256 + $0xa68] sm:$0xff]
    %v1591 = vld [vmem:[%s1256 + $0xa70] sm:$0xff]
    %v1592 = vld [vmem:[%s1256 + $0xa78] sm:$0xff]
    %v1593 = vld [vmem:[%s1256 + $0xa80] sm:$0xff]
    %v1594 = vld [vmem:[%s1256 + $0xa88] sm:$0xff]
    %v1595 = vld [vmem:[%s1256 + $0xa90] sm:$0xff]
    %v1596 = vld [vmem:[%s1256 + $0xa98] sm:$0xff]
    %v1597 = vld [vmem:[%s1256 + $0xaa0] sm:$0xff]
    %v1598 = vld [vmem:[%s1256 + $0xaa8] sm:$0xff]
    %v1599 = vld [vmem:[%s1256 + $0xab0] sm:$0xff]
    %v1600 = vld [vmem:[%s1256 + $0xab8] sm:$0xff]
    %v1601 = vld [vmem:[%s1256 + $0xac0] sm:$0xff]
    %v1602 = vld [vmem:[%s1256 + $0xac8] sm:$0xff]
    %v1603 = vld [vmem:[%s1256 + $0xad0] sm:$0xff]
    %v1604 = vld [vmem:[%s1256 + $0xad8] sm:$0xff]
    %v1605 = vld [vmem:[%s1256 + $0xae0] sm:$0xff]
    %v1606 = vld [vmem:[%s1256 + $0xae8] sm:$0xff]
    %v1607 = vld [vmem:[%s1256 + $0xaf0] sm:$0xff]
    %v1608 = vld [vmem:[%s1256 + $0xaf8] sm:$0xff]
    %v1609 = vld [vmem:[%s1256 + $0xb00] sm:$0xff]
    %v1610 = vld [vmem:[%s1256 + $0xb08] sm:$0xff]
    %v1611 = vld [vmem:[%s1256 + $0xb10] sm:$0xff]
    %v1612 = vld [vmem:[%s1256 + $0xb18] sm:$0xff]
    %v1613 = vld [vmem:[%s1256 + $0xb20] sm:$0xff]
    %v1614 = vld [vmem:[%s1256 + $0xb28] sm:$0xff]
    %v1615 = vld [vmem:[%s1256 + $0xb30] sm:$0xff]
    %v1616 = vld [vmem:[%s1256 + $0xb38] sm:$0xff]
    %v1617 = vld [vmem:[%s1256 + $0xb40] sm:$0xff]
    %v1618 = vld [vmem:[%s1256 + $0xb48] sm:$0xff]
    %v1619 = vld [vmem:[%s1256 + $0xb50] sm:$0xff]
    %v1620 = vld [vmem:[%s1256 + $0xb58] sm:$0xff]
    %v1621 = vld [vmem:[%s1256 + $0xb60] sm:$0xff]
    %v1622 = vld [vmem:[%s1256 + $0xb68] sm:$0xff]
    %v1623 = vld [vmem:[%s1256 + $0xb70] sm:$0xff]
    %v1624 = vld [vmem:[%s1256 + $0xb78] sm:$0xff]
    %v1625 = vld [vmem:[%s1256 + $0xb80] sm:$0xff]
    %v1626 = vld [vmem:[%s1256 + $0xb88] sm:$0xff]
    %v1627 = vld [vmem:[%s1256 + $0xb90] sm:$0xff]
    %v1628 = vld [vmem:[%s1256 + $0xb98] sm:$0xff]
    %v1629 = vld [vmem:[%s1256 + $0xba0] sm:$0xff]
    %v1630 = vld [vmem:[%s1256 + $0xba8] sm:$0xff]
    %v1631 = vld [vmem:[%s1256 + $0xbb0] sm:$0xff]
    %v1632 = vld [vmem:[%s1256 + $0xbb8] sm:$0xff]
    %v1633 = vld [vmem:[%s1256 + $0xbc0] sm:$0xff]
    %v1634 = vld [vmem:[%s1256 + $0xbc8] sm:$0xff]
    %v1635 = vld [vmem:[%s1256 + $0xbd0] sm:$0xff]
    %v1636 = vld [vmem:[%s1256 + $0xbd8] sm:$0xff]
    %v1637 = vld [vmem:[%s1256 + $0xbe0] sm:$0xff]
    %v1638 = vld [vmem:[%s1256 + $0xbe8] sm:$0xff]
    %v1639 = vld [vmem:[%s1256 + $0xbf0] sm:$0xff]
    %v1640 = vld [vmem:[%s1256 + $0xbf8] sm:$0xff]
    %v1641 = vld [vmem:[%s1256 + $0xc00] sm:$0xff]
    %v1642 = vld [vmem:[%s1256 + $0xc08] sm:$0xff]
    %v1643 = vld [vmem:[%s1256 + $0xc10] sm:$0xff]
    %v1644 = vld [vmem:[%s1256 + $0xc18] sm:$0xff]
    %v1645 = vld [vmem:[%s1256 + $0xc20] sm:$0xff]
    %v1646 = vld [vmem:[%s1256 + $0xc28] sm:$0xff]
    %v1647 = vld [vmem:[%s1256 + $0xc30] sm:$0xff]
    %v1648 = vld [vmem:[%s1256 + $0xc38] sm:$0xff]
    %v1649 = vld [vmem:[%s1256 + $0xc40] sm:$0xff]
    %v1650 = vld [vmem:[%s1256 + $0xc48] sm:$0xff]
    %v1651 = vld [vmem:[%s1256 + $0xc50] sm:$0xff]
    %v1652 = vld [vmem:[%s1256 + $0xc58] sm:$0xff]
    %v1653 = vld [vmem:[%s1256 + $0xc60] sm:$0xff]
    %v1654 = vld [vmem:[%s1256 + $0xc68] sm:$0xff]
    %v1655 = vld [vmem:[%s1256 + $0xc70] sm:$0xff]
    %v1656 = vld [vmem:[%s1256 + $0xc78] sm:$0xff]
    %v1657 = vld [vmem:[%s1256 + $0xc80] sm:$0xff]
    %v1658 = vld [vmem:[%s1256 + $0xc88] sm:$0xff]
    %v1659 = vld [vmem:[%s1256 + $0xc90] sm:$0xff]
    %v1660 = vld [vmem:[%s1256 + $0xc98] sm:$0xff]
    %v1661 = vld [vmem:[%s1256 + $0xca0] sm:$0xff]
    %v1662 = vld [vmem:[%s1256 + $0xca8] sm:$0xff]
    %v1663 = vld [vmem:[%s1256 + $0xcb0] sm:$0xff]
    %v1664 = vld [vmem:[%s1256 + $0xcb8] sm:$0xff]
    %v1665 = vld [vmem:[%s1256 + $0xcc0] sm:$0xff]
    %v1666 = vld [vmem:[%s1256 + $0xcc8] sm:$0xff]
    %v1667 = vld [vmem:[%s1256 + $0xcd0] sm:$0xff]
    %v1668 = vld [vmem:[%s1256 + $0xcd8] sm:$0xff]
    %v1669 = vld [vmem:[%s1256 + $0xce0] sm:$0xff]
    %v1670 = vld [vmem:[%s1256 + $0xce8] sm:$0xff]
    %v1671 = vld [vmem:[%s1256 + $0xcf0] sm:$0xff]
    %v1672 = vld [vmem:[%s1256 + $0xcf8] sm:$0xff]
    %v1673 = vld [vmem:[%s1256 + $0xd00] sm:$0xff]
    %v1674 = vld [vmem:[%s1256 + $0xd08] sm:$0xff]
    %v1675 = vld [vmem:[%s1256 + $0xd10] sm:$0xff]
    %v1676 = vld [vmem:[%s1256 + $0xd18] sm:$0xff]
    %v1677 = vld [vmem:[%s1256 + $0xd20] sm:$0xff]
    %v1678 = vld [vmem:[%s1256 + $0xd28] sm:$0xff]
    %v1679 = vld [vmem:[%s1256 + $0xd30] sm:$0xff]
    %v1680 = vld [vmem:[%s1256 + $0xd38] sm:$0xff]
    %v1681 = vld [vmem:[%s1256 + $0xd40] sm:$0xff]
    %v1682 = vld [vmem:[%s1256 + $0xd48] sm:$0xff]
    %v1683 = vld [vmem:[%s1256 + $0xd50] sm:$0xff]
    %v1684 = vld [vmem:[%s1256 + $0xd58] sm:$0xff]
    %v1685 = vld [vmem:[%s1256 + $0xd60] sm:$0xff]
    %v1686 = vld [vmem:[%s1256 + $0xd68] sm:$0xff]
    %v1687 = vld [vmem:[%s1256 + $0xd70] sm:$0xff]
    %v1688 = vld [vmem:[%s1256 + $0xd78] sm:$0xff]
    %v1689 = vld [vmem:[%s1256 + $0xd80] sm:$0xff]
    %v1690 = vld [vmem:[%s1256 + $0xd88] sm:$0xff]
    %v1691 = vld [vmem:[%s1256 + $0xd90] sm:$0xff]
    %v1692 = vld [vmem:[%s1256 + $0xd98] sm:$0xff]
    %v1693 = vld [vmem:[%s1256 + $0xda0] sm:$0xff]
    %v1694 = vld [vmem:[%s1256 + $0xda8] sm:$0xff]
    %v1695 = vld [vmem:[%s1256 + $0xdb0] sm:$0xff]
    %v1696 = vld [vmem:[%s1256 + $0xdb8] sm:$0xff]
    %v1697 = vld [vmem:[%s1256 + $0xdc0] sm:$0xff]
    %v1698 = vld [vmem:[%s1256 + $0xdc8] sm:$0xff]
    %v1699 = vld [vmem:[%s1256 + $0xdd0] sm:$0xff]
    %v1700 = vld [vmem:[%s1256 + $0xdd8] sm:$0xff]
    %v1701 = vld [vmem:[%s1256 + $0xde0] sm:$0xff]
    %v1702 = vld [vmem:[%s1256 + $0xde8] sm:$0xff]
    %v1703 = vld [vmem:[%s1256 + $0xdf0] sm:$0xff]
    %v1704 = vld [vmem:[%s1256 + $0xdf8] sm:$0xff]
    %v1705 = vld [vmem:[%s1256 + $0xe00] sm:$0xff]
    %v1706 = vld [vmem:[%s1256 + $0xe08] sm:$0xff]
    %v1707 = vld [vmem:[%s1256 + $0xe10] sm:$0xff]
    %v1708 = vld [vmem:[%s1256 + $0xe18] sm:$0xff]
    %v1709 = vld [vmem:[%s1256 + $0xe20] sm:$0xff]
    %v1710 = vld [vmem:[%s1256 + $0xe28] sm:$0xff]
    %v1711 = vld [vmem:[%s1256 + $0xe30] sm:$0xff]
    %v1712 = vld [vmem:[%s1256 + $0xe38] sm:$0xff]
    %v1713 = vld [vmem:[%s1256 + $0xe40] sm:$0xff]
    %v1714 = vld [vmem:[%s1256 + $0xe48] sm:$0xff]
    %v1715 = vld [vmem:[%s1256 + $0xe50] sm:$0xff]
    %v1716 = vld [vmem:[%s1256 + $0xe58] sm:$0xff]
    %v1717 = vld [vmem:[%s1256 + $0xe60] sm:$0xff]
    %v1718 = vld [vmem:[%s1256 + $0xe68] sm:$0xff]
    %v1719 = vld [vmem:[%s1256 + $0xe70] sm:$0xff]
    %v1720 = vld [vmem:[%s1256 + $0xe78] sm:$0xff]
    %v1721 = vld [vmem:[%s1256 + $0xe80] sm:$0xff]
    %v1722 = vld [vmem:[%s1256 + $0xe88] sm:$0xff]
    %v1723 = vld [vmem:[%s1256 + $0xe90] sm:$0xff]
    %v1724 = vld [vmem:[%s1256 + $0xe98] sm:$0xff]
    %v1725 = vld [vmem:[%s1256 + $0xea0] sm:$0xff]
    %v1726 = vld [vmem:[%s1256 + $0xea8] sm:$0xff]
    %v1727 = vld [vmem:[%s1256 + $0xeb0] sm:$0xff]
    %v1728 = vld [vmem:[%s1256 + $0xeb8] sm:$0xff]
    %v1729 = vld [vmem:[%s1256 + $0xec0] sm:$0xff]
    %v1730 = vld [vmem:[%s1256 + $0xec8] sm:$0xff]
    %v1731 = vld [vmem:[%s1256 + $0xed0] sm:$0xff]
    %v1732 = vld [vmem:[%s1256 + $0xed8] sm:$0xff]
    %v1733 = vld [vmem:[%s1256 + $0xee0] sm:$0xff]
    %v1734 = vld [vmem:[%s1256 + $0xee8] sm:$0xff]
    %v1735 = vld [vmem:[%s1256 + $0xef0] sm:$0xff]
    %v1736 = vld [vmem:[%s1256 + $0xef8] sm:$0xff]
    %v1737 = vld [vmem:[%s1256 + $0xf00] sm:$0xff]
    %v1738 = vld [vmem:[%s1256 + $0xf08] sm:$0xff]
    %v1739 = vld [vmem:[%s1256 + $0xf10] sm:$0xff]
    %v1740 = vld [vmem:[%s1256 + $0xf18] sm:$0xff]
    %v1741 = vld [vmem:[%s1256 + $0xf20] sm:$0xff]
    %v1742 = vld [vmem:[%s1256 + $0xf28] sm:$0xff]
    %v1743 = vld [vmem:[%s1256 + $0xf30] sm:$0xff]
    %v1744 = vld [vmem:[%s1256 + $0xf38] sm:$0xff]
    %v1745 = vld [vmem:[%s1256 + $0xf40] sm:$0xff]
    %v1746 = vld [vmem:[%s1256 + $0xf48] sm:$0xff]
    %v1747 = vld [vmem:[%s1256 + $0xf50] sm:$0xff]
    %v1748 = vld [vmem:[%s1256 + $0xf58] sm:$0xff]
    %v1749 = vld [vmem:[%s1256 + $0xf60] sm:$0xff]
    %v1750 = vld [vmem:[%s1256 + $0xf68] sm:$0xff]
    %v1751 = vld [vmem:[%s1256 + $0xf70] sm:$0xff]
    %v1752 = vld [vmem:[%s1256 + $0xf78] sm:$0xff]
    %v1753 = vld [vmem:[%s1256 + $0xf80] sm:$0xff]
    %v1754 = vld [vmem:[%s1256 + $0xf88] sm:$0xff]
    %v1755 = vld [vmem:[%s1256 + $0xf90] sm:$0xff]
    %v1756 = vld [vmem:[%s1256 + $0xf98] sm:$0xff]
    %v1757 = vld [vmem:[%s1256 + $0xfa0] sm:$0xff]
    %v1758 = vld [vmem:[%s1256 + $0xfa8] sm:$0xff]
    %v1759 = vld [vmem:[%s1256 + $0xfb0] sm:$0xff]
    %v1760 = vld [vmem:[%s1256 + $0xfb8] sm:$0xff]
    %v1761 = vld [vmem:[%s1256 + $0xfc0] sm:$0xff]
    %v1762 = vld [vmem:[%s1256 + $0xfc8] sm:$0xff]
    %v1763 = vld [vmem:[%s1256 + $0xfd0] sm:$0xff]
    %v1764 = vld [vmem:[%s1256 + $0xfd8] sm:$0xff]
    %v1765 = vld [vmem:[%s1256 + $0xfe0] sm:$0xff]
    %v1766 = vld [vmem:[%s1256 + $0xfe8] sm:$0xff]
    %v1767 = vld [vmem:[%s1256 + $0xff0] sm:$0xff]
    %v1768 = vld [vmem:[%s1256 + $0xff8] sm:$0xff]
    %v1769 = vld [vmem:[%s1256 + $0x1000] sm:$0xff]
    %v1770 = vld [vmem:[%s1256 + $0x1008] sm:$0xff]
    %v1771 = vld [vmem:[%s1256 + $0x1010] sm:$0xff]
    %v1772 = vld [vmem:[%s1256 + $0x1018] sm:$0xff]
    %v1773 = vld [vmem:[%s1256 + $0x1020] sm:$0xff]
    %v1774 = vld [vmem:[%s1256 + $0x1028] sm:$0xff]
    %v1775 = vld [vmem:[%s1256 + $0x1030] sm:$0xff]
    %v1776 = vld [vmem:[%s1256 + $0x1038] sm:$0xff]
    %v1777 = vld [vmem:[%s1256 + $0x1040] sm:$0xff]
    %v1778 = vld [vmem:[%s1256 + $0x1048] sm:$0xff]
    %v1779 = vld [vmem:[%s1256 + $0x1050] sm:$0xff]
    %v1780 = vld [vmem:[%s1256 + $0x1058] sm:$0xff]
    %v1781 = vld [vmem:[%s1256 + $0x1060] sm:$0xff]
    %v1782 = vld [vmem:[%s1256 + $0x1068] sm:$0xff]
    %v1783 = vld [vmem:[%s1256 + $0x1070] sm:$0xff]
    %v1784 = vld [vmem:[%s1256 + $0x1078] sm:$0xff]
    %v1785 = vld [vmem:[%s1256 + $0x1080] sm:$0xff]
    %v1786 = vld [vmem:[%s1256 + $0x1088] sm:$0xff]
    %v1787 = vld [vmem:[%s1256 + $0x1090] sm:$0xff]
    %v1788 = vld [vmem:[%s1256 + $0x1098] sm:$0xff]
    %v1789 = vld [vmem:[%s1256 + $0x10a0] sm:$0xff]
    %v1790 = vld [vmem:[%s1256 + $0x10a8] sm:$0xff]
    %v1791 = vld [vmem:[%s1256 + $0x10b0] sm:$0xff]
    %v1792 = vld [vmem:[%s1256 + $0x10b8] sm:$0xff]
    %v1793 = vld [vmem:[%s1256 + $0x10c0] sm:$0xff]
    %v1794 = vld [vmem:[%s1256 + $0x10c8] sm:$0xff]
    %v1795 = vld [vmem:[%s1256 + $0x10d0] sm:$0xff]
    %v1796 = vld [vmem:[%s1256 + $0x10d8] sm:$0xff]
    %v1797 = vld [vmem:[%s1256 + $0x10e0] sm:$0xff]
    %v1798 = vld [vmem:[%s1256 + $0x10e8] sm:$0xff]
    %v1799 = vld [vmem:[%s1256 + $0x10f0] sm:$0xff]
    %v1800 = vld [vmem:[%s1256 + $0x10f8] sm:$0xff]
    %v1801 = vld [vmem:[%s1256 + $0x1100] sm:$0xff]
    %v1802 = vld [vmem:[%s1256 + $0x1108] sm:$0xff]
    %v1803 = vld [vmem:[%s1256 + $0x1110] sm:$0xff]
    %v1804 = vld [vmem:[%s1256 + $0x1118] sm:$0xff]
    %v1805 = vld [vmem:[%s1256 + $0x1120] sm:$0xff]
    %v1806 = vld [vmem:[%s1256 + $0x1128] sm:$0xff]
    %v1807 = vld [vmem:[%s1256 + $0x1130] sm:$0xff]
    %v1808 = vld [vmem:[%s1256 + $0x1138] sm:$0xff]
    %v1809 = vld [vmem:[%s1256 + $0x1140] sm:$0xff]
    %v1810 = vld [vmem:[%s1256 + $0x1148] sm:$0xff]
    %v1811 = vld [vmem:[%s1256 + $0x1150] sm:$0xff]
    %v1812 = vld [vmem:[%s1256 + $0x1158] sm:$0xff]
    %v1813 = vld [vmem:[%s1256 + $0x1160] sm:$0xff]
    %v1814 = vld [vmem:[%s1256 + $0x1168] sm:$0xff]
    %v1815 = vld [vmem:[%s1256 + $0x1170] sm:$0xff]
    %v1816 = vld [vmem:[%s1256 + $0x1178] sm:$0xff]
    %v1817 = vld [vmem:[%s1256 + $0x1180] sm:$0xff]
    %v1818 = vld [vmem:[%s1256 + $0x1188] sm:$0xff]
    %v1819 = vld [vmem:[%s1256 + $0x1190] sm:$0xff]
    %v1820 = vld [vmem:[%s1256 + $0x1198] sm:$0xff]
    %v1821 = vld [vmem:[%s1256 + $0x11a0] sm:$0xff]
    %v1822 = vld [vmem:[%s1256 + $0x11a8] sm:$0xff]
    %v1823 = vld [vmem:[%s1256 + $0x11b0] sm:$0xff]
    %v1824 = vld [vmem:[%s1256 + $0x11b8] sm:$0xff]
    %v1825 = vld [vmem:[%s1256 + $0x11c0] sm:$0xff]
    %v1826 = vld [vmem:[%s1256 + $0x11c8] sm:$0xff]
    %v1827 = vld [vmem:[%s1256 + $0x11d0] sm:$0xff]
    %v1828 = vld [vmem:[%s1256 + $0x11d8] sm:$0xff]
    %v1829 = vld [vmem:[%s1256 + $0x11e0] sm:$0xff]
    %v1830 = vld [vmem:[%s1256 + $0x11e8] sm:$0xff]
    %v1831 = vld [vmem:[%s1256 + $0x11f0] sm:$0xff]
    %v1832 = vld [vmem:[%s1256 + $0x11f8] sm:$0xff]
    %v2409 = vunpack.c.l.b16 %v1257
    %v2410 = vunpack.c.h.b16 %v1257
    %v2411 = vunpack.c.l.b16 %v1258
    %v2412 = vunpack.c.h.b16 %v1258
    %v2413 = vunpack.c.l.b16 %v1259
    %v2414 = vunpack.c.h.b16 %v1259
    %v2415 = vunpack.c.l.b16 %v1260
    %v2416 = vunpack.c.h.b16 %v1260
    %v2417 = vunpack.c.l.b16 %v1261
    %v2418 = vunpack.c.h.b16 %v1261
    %v2419 = vunpack.c.l.b16 %v1262
    %v2420 = vunpack.c.h.b16 %v1262
    %v2421 = vunpack.c.l.b16 %v1263
    %v2422 = vunpack.c.h.b16 %v1263
    %v2423 = vunpack.c.l.b16 %v1264
    %v2424 = vunpack.c.h.b16 %v1264
    %v2425 = vunpack.c.l.b16 %v1265
    %v2426 = vunpack.c.h.b16 %v1265
    %v2427 = vunpack.c.l.b16 %v1266
    %v2428 = vunpack.c.h.b16 %v1266
    %v2429 = vunpack.c.l.b16 %v1267
    %v2430 = vunpack.c.h.b16 %v1267
    %v2431 = vunpack.c.l.b16 %v1268
    %v2432 = vunpack.c.h.b16 %v1268
    %v2433 = vunpack.c.l.b16 %v1269
    %v2434 = vunpack.c.h.b16 %v1269
    %v2435 = vunpack.c.l.b16 %v1270
    %v2436 = vunpack.c.h.b16 %v1270
    %v2437 = vunpack.c.l.b16 %v1271
    %v2438 = vunpack.c.h.b16 %v1271
    %v2439 = vunpack.c.l.b16 %v1272
    %v2440 = vunpack.c.h.b16 %v1272
    %v2441 = vunpack.c.l.b16 %v1273
    %v2442 = vunpack.c.h.b16 %v1273
    %v2443 = vunpack.c.l.b16 %v1274
    %v2444 = vunpack.c.h.b16 %v1274
    %v2445 = vunpack.c.l.b16 %v1275
    %v2446 = vunpack.c.h.b16 %v1275
    %v2447 = vunpack.c.l.b16 %v1276
    %v2448 = vunpack.c.h.b16 %v1276
    %v2449 = vunpack.c.l.b16 %v1277
    %v2450 = vunpack.c.h.b16 %v1277
    %v2451 = vunpack.c.l.b16 %v1278
    %v2452 = vunpack.c.h.b16 %v1278
    %v2453 = vunpack.c.l.b16 %v1279
    %v2454 = vunpack.c.h.b16 %v1279
    %v2455 = vunpack.c.l.b16 %v1280
    %v2456 = vunpack.c.h.b16 %v1280
    %v2457 = vunpack.c.l.b16 %v1281
    %v2458 = vunpack.c.h.b16 %v1281
    %v2459 = vunpack.c.l.b16 %v1282
    %v2460 = vunpack.c.h.b16 %v1282
    %v2461 = vunpack.c.l.b16 %v1283
    %v2462 = vunpack.c.h.b16 %v1283
    %v2463 = vunpack.c.l.b16 %v1284
    %v2464 = vunpack.c.h.b16 %v1284
    %v2465 = vunpack.c.l.b16 %v1285
    %v2466 = vunpack.c.h.b16 %v1285
    %v2467 = vunpack.c.l.b16 %v1286
    %v2468 = vunpack.c.h.b16 %v1286
    %v2469 = vunpack.c.l.b16 %v1287
    %v2470 = vunpack.c.h.b16 %v1287
    %v2471 = vunpack.c.l.b16 %v1288
    %v2472 = vunpack.c.h.b16 %v1288
    %v2473 = vunpack.c.l.b16 %v1289
    %v2474 = vunpack.c.h.b16 %v1289
    %v2475 = vunpack.c.l.b16 %v1290
    %v2476 = vunpack.c.h.b16 %v1290
    %v2477 = vunpack.c.l.b16 %v1291
    %v2478 = vunpack.c.h.b16 %v1291
    %v2479 = vunpack.c.l.b16 %v1292
    %v2480 = vunpack.c.h.b16 %v1292
    %v2481 = vunpack.c.l.b16 %v1293
    %v2482 = vunpack.c.h.b16 %v1293
    %v2483 = vunpack.c.l.b16 %v1294
    %v2484 = vunpack.c.h.b16 %v1294
    %v2485 = vunpack.c.l.b16 %v1295
    %v2486 = vunpack.c.h.b16 %v1295
    %v2487 = vunpack.c.l.b16 %v1296
    %v2488 = vunpack.c.h.b16 %v1296
    %v2489 = vunpack.c.l.b16 %v1297
    %v2490 = vunpack.c.h.b16 %v1297
    %v2491 = vunpack.c.l.b16 %v1298
    %v2492 = vunpack.c.h.b16 %v1298
    %v2493 = vunpack.c.l.b16 %v1299
    %v2494 = vunpack.c.h.b16 %v1299
    %v2495 = vunpack.c.l.b16 %v1300
    %v2496 = vunpack.c.h.b16 %v1300
    %v2497 = vunpack.c.l.b16 %v1301
    %v2498 = vunpack.c.h.b16 %v1301
    %v2499 = vunpack.c.l.b16 %v1302
    %v2500 = vunpack.c.h.b16 %v1302
    %v2501 = vunpack.c.l.b16 %v1303
    %v2502 = vunpack.c.h.b16 %v1303
    %v2503 = vunpack.c.l.b16 %v1304
    %v2504 = vunpack.c.h.b16 %v1304
    %v2505 = vunpack.c.l.b16 %v1305
    %v2506 = vunpack.c.h.b16 %v1305
    %v2507 = vunpack.c.l.b16 %v1306
    %v2508 = vunpack.c.h.b16 %v1306
    %v2509 = vunpack.c.l.b16 %v1307
    %v2510 = vunpack.c.h.b16 %v1307
    %v2511 = vunpack.c.l.b16 %v1308
    %v2512 = vunpack.c.h.b16 %v1308
    %v2513 = vunpack.c.l.b16 %v1309
    %v2514 = vunpack.c.h.b16 %v1309
    %v2515 = vunpack.c.l.b16 %v1310
    %v2516 = vunpack.c.h.b16 %v1310
    %v2517 = vunpack.c.l.b16 %v1311
    %v2518 = vunpack.c.h.b16 %v1311
    %v2519 = vunpack.c.l.b16 %v1312
    %v2520 = vunpack.c.h.b16 %v1312
    %v2521 = vunpack.c.l.b16 %v1313
    %v2522 = vunpack.c.h.b16 %v1313
    %v2523 = vunpack.c.l.b16 %v1314
    %v2524 = vunpack.c.h.b16 %v1314
    %v2525 = vunpack.c.l.b16 %v1315
    %v2526 = vunpack.c.h.b16 %v1315
    %v2527 = vunpack.c.l.b16 %v1316
    %v2528 = vunpack.c.h.b16 %v1316
    %v2529 = vunpack.c.l.b16 %v1317
    %v2530 = vunpack.c.h.b16 %v1317
    %v2531 = vunpack.c.l.b16 %v1318
    %v2532 = vunpack.c.h.b16 %v1318
    %v2533 = vunpack.c.l.b16 %v1319
    %v2534 = vunpack.c.h.b16 %v1319
    %v2535 = vunpack.c.l.b16 %v1320
    %v2536 = vunpack.c.h.b16 %v1320
    %v2537 = vunpack.c.l.b16 %v1321
    %v2538 = vunpack.c.h.b16 %v1321
    %v2539 = vunpack.c.l.b16 %v1322
    %v2540 = vunpack.c.h.b16 %v1322
    %v2541 = vunpack.c.l.b16 %v1323
    %v2542 = vunpack.c.h.b16 %v1323
    %v2543 = vunpack.c.l.b16 %v1324
    %v2544 = vunpack.c.h.b16 %v1324
    %v2545 = vunpack.c.l.b16 %v1325
    %v2546 = vunpack.c.h.b16 %v1325
    %v2547 = vunpack.c.l.b16 %v1326
    %v2548 = vunpack.c.h.b16 %v1326
    %v2549 = vunpack.c.l.b16 %v1327
    %v2550 = vunpack.c.h.b16 %v1327
    %v2551 = vunpack.c.l.b16 %v1328
    %v2552 = vunpack.c.h.b16 %v1328
    %v2553 = vunpack.c.l.b16 %v1329
    %v2554 = vunpack.c.h.b16 %v1329
    %v2555 = vunpack.c.l.b16 %v1330
    %v2556 = vunpack.c.h.b16 %v1330
    %v2557 = vunpack.c.l.b16 %v1331
    %v2558 = vunpack.c.h.b16 %v1331
    %v2559 = vunpack.c.l.b16 %v1332
    %v2560 = vunpack.c.h.b16 %v1332
    %v2561 = vunpack.c.l.b16 %v1333
    %v2562 = vunpack.c.h.b16 %v1333
    %v2563 = vunpack.c.l.b16 %v1334
    %v2564 = vunpack.c.h.b16 %v1334
    %v2565 = vunpack.c.l.b16 %v1335
    %v2566 = vunpack.c.h.b16 %v1335
    %v2567 = vunpack.c.l.b16 %v1336
    %v2568 = vunpack.c.h.b16 %v1336
    %v2569 = vunpack.c.l.b16 %v1337
    %v2570 = vunpack.c.h.b16 %v1337
    %v2571 = vunpack.c.l.b16 %v1338
    %v2572 = vunpack.c.h.b16 %v1338
    %v2573 = vunpack.c.l.b16 %v1339
    %v2574 = vunpack.c.h.b16 %v1339
    %v2575 = vunpack.c.l.b16 %v1340
    %v2576 = vunpack.c.h.b16 %v1340
    %v2577 = vunpack.c.l.b16 %v1341
    %v2578 = vunpack.c.h.b16 %v1341
    %v2579 = vunpack.c.l.b16 %v1342
    %v2580 = vunpack.c.h.b16 %v1342
    %v2581 = vunpack.c.l.b16 %v1343
    %v2582 = vunpack.c.h.b16 %v1343
    %v2583 = vunpack.c.l.b16 %v1344
    %v2584 = vunpack.c.h.b16 %v1344
    %v2585 = vunpack.c.l.b16 %v1345
    %v2586 = vunpack.c.h.b16 %v1345
    %v2587 = vunpack.c.l.b16 %v1346
    %v2588 = vunpack.c.h.b16 %v1346
    %v2589 = vunpack.c.l.b16 %v1347
    %v2590 = vunpack.c.h.b16 %v1347
    %v2591 = vunpack.c.l.b16 %v1348
    %v2592 = vunpack.c.h.b16 %v1348
    %v2593 = vunpack.c.l.b16 %v1349
    %v2594 = vunpack.c.h.b16 %v1349
    %v2595 = vunpack.c.l.b16 %v1350
    %v2596 = vunpack.c.h.b16 %v1350
    %v2597 = vunpack.c.l.b16 %v1351
    %v2598 = vunpack.c.h.b16 %v1351
    %v2599 = vunpack.c.l.b16 %v1352
    %v2600 = vunpack.c.h.b16 %v1352
    %v2601 = vunpack.c.l.b16 %v1353
    %v2602 = vunpack.c.h.b16 %v1353
    %v2603 = vunpack.c.l.b16 %v1354
    %v2604 = vunpack.c.h.b16 %v1354
    %v2605 = vunpack.c.l.b16 %v1355
    %v2606 = vunpack.c.h.b16 %v1355
    %v2607 = vunpack.c.l.b16 %v1356
    %v2608 = vunpack.c.h.b16 %v1356
    %v2609 = vunpack.c.l.b16 %v1357
    %v2610 = vunpack.c.h.b16 %v1357
    %v2611 = vunpack.c.l.b16 %v1358
    %v2612 = vunpack.c.h.b16 %v1358
    %v2613 = vunpack.c.l.b16 %v1359
    %v2614 = vunpack.c.h.b16 %v1359
    %v2615 = vunpack.c.l.b16 %v1360
    %v2616 = vunpack.c.h.b16 %v1360
    %v2617 = vunpack.c.l.b16 %v1361
    %v2618 = vunpack.c.h.b16 %v1361
    %v2619 = vunpack.c.l.b16 %v1362
    %v2620 = vunpack.c.h.b16 %v1362
    %v2621 = vunpack.c.l.b16 %v1363
    %v2622 = vunpack.c.h.b16 %v1363
    %v2623 = vunpack.c.l.b16 %v1364
    %v2624 = vunpack.c.h.b16 %v1364
    %v2625 = vunpack.c.l.b16 %v1365
    %v2626 = vunpack.c.h.b16 %v1365
    %v2627 = vunpack.c.l.b16 %v1366
    %v2628 = vunpack.c.h.b16 %v1366
    %v2629 = vunpack.c.l.b16 %v1367
    %v2630 = vunpack.c.h.b16 %v1367
    %v2631 = vunpack.c.l.b16 %v1368
    %v2632 = vunpack.c.h.b16 %v1368
    %v2633 = vunpack.c.l.b16 %v1369
    %v2634 = vunpack.c.h.b16 %v1369
    %v2635 = vunpack.c.l.b16 %v1370
    %v2636 = vunpack.c.h.b16 %v1370
    %v2637 = vunpack.c.l.b16 %v1371
    %v2638 = vunpack.c.h.b16 %v1371
    %v2639 = vunpack.c.l.b16 %v1372
    %v2640 = vunpack.c.h.b16 %v1372
    %v2641 = vunpack.c.l.b16 %v1373
    %v2642 = vunpack.c.h.b16 %v1373
    %v2643 = vunpack.c.l.b16 %v1374
    %v2644 = vunpack.c.h.b16 %v1374
    %v2645 = vunpack.c.l.b16 %v1375
    %v2646 = vunpack.c.h.b16 %v1375
    %v2647 = vunpack.c.l.b16 %v1376
    %v2648 = vunpack.c.h.b16 %v1376
    %v2649 = vunpack.c.l.b16 %v1377
    %v2650 = vunpack.c.h.b16 %v1377
    %v2651 = vunpack.c.l.b16 %v1378
    %v2652 = vunpack.c.h.b16 %v1378
    %v2653 = vunpack.c.l.b16 %v1379
    %v2654 = vunpack.c.h.b16 %v1379
    %v2655 = vunpack.c.l.b16 %v1380
    %v2656 = vunpack.c.h.b16 %v1380
    %v2657 = vunpack.c.l.b16 %v1381
    %v2658 = vunpack.c.h.b16 %v1381
    %v2659 = vunpack.c.l.b16 %v1382
    %v2660 = vunpack.c.h.b16 %v1382
    %v2661 = vunpack.c.l.b16 %v1383
    %v2662 = vunpack.c.h.b16 %v1383
    %v2663 = vunpack.c.l.b16 %v1384
    %v2664 = vunpack.c.h.b16 %v1384
    %v2665 = vunpack.c.l.b16 %v1385
    %v2666 = vunpack.c.h.b16 %v1385
    %v2667 = vunpack.c.l.b16 %v1386
    %v2668 = vunpack.c.h.b16 %v1386
    %v2669 = vunpack.c.l.b16 %v1387
    %v2670 = vunpack.c.h.b16 %v1387
    %v2671 = vunpack.c.l.b16 %v1388
    %v2672 = vunpack.c.h.b16 %v1388
    %v2673 = vunpack.c.l.b16 %v1389
    %v2674 = vunpack.c.h.b16 %v1389
    %v2675 = vunpack.c.l.b16 %v1390
    %v2676 = vunpack.c.h.b16 %v1390
    %v2677 = vunpack.c.l.b16 %v1391
    %v2678 = vunpack.c.h.b16 %v1391
    %v2679 = vunpack.c.l.b16 %v1392
    %v2680 = vunpack.c.h.b16 %v1392
    %v2681 = vunpack.c.l.b16 %v1393
    %v2682 = vunpack.c.h.b16 %v1393
    %v2683 = vunpack.c.l.b16 %v1394
    %v2684 = vunpack.c.h.b16 %v1394
    %v2685 = vunpack.c.l.b16 %v1395
    %v2686 = vunpack.c.h.b16 %v1395
    %v2687 = vunpack.c.l.b16 %v1396
    %v2688 = vunpack.c.h.b16 %v1396
    %v2689 = vunpack.c.l.b16 %v1397
    %v2690 = vunpack.c.h.b16 %v1397
    %v2691 = vunpack.c.l.b16 %v1398
    %v2692 = vunpack.c.h.b16 %v1398
    %v2693 = vunpack.c.l.b16 %v1399
    %v2694 = vunpack.c.h.b16 %v1399
    %v2695 = vunpack.c.l.b16 %v1400
    %v2696 = vunpack.c.h.b16 %v1400
    %v2697 = vunpack.c.l.b16 %v1401
    %v2698 = vunpack.c.h.b16 %v1401
    %v2699 = vunpack.c.l.b16 %v1402
    %v2700 = vunpack.c.h.b16 %v1402
    %v2701 = vunpack.c.l.b16 %v1403
    %v2702 = vunpack.c.h.b16 %v1403
    %v2703 = vunpack.c.l.b16 %v1404
    %v2704 = vunpack.c.h.b16 %v1404
    %v2705 = vunpack.c.l.b16 %v1405
    %v2706 = vunpack.c.h.b16 %v1405
    %v2707 = vunpack.c.l.b16 %v1406
    %v2708 = vunpack.c.h.b16 %v1406
    %v2709 = vunpack.c.l.b16 %v1407
    %v2710 = vunpack.c.h.b16 %v1407
    %v2711 = vunpack.c.l.b16 %v1408
    %v2712 = vunpack.c.h.b16 %v1408
    %v2713 = vunpack.c.l.b16 %v1409
    %v2714 = vunpack.c.h.b16 %v1409
    %v2715 = vunpack.c.l.b16 %v1410
    %v2716 = vunpack.c.h.b16 %v1410
    %v2717 = vunpack.c.l.b16 %v1411
    %v2718 = vunpack.c.h.b16 %v1411
    %v2719 = vunpack.c.l.b16 %v1412
    %v2720 = vunpack.c.h.b16 %v1412
    %v2721 = vunpack.c.l.b16 %v1413
    %v2722 = vunpack.c.h.b16 %v1413
    %v2723 = vunpack.c.l.b16 %v1414
    %v2724 = vunpack.c.h.b16 %v1414
    %v2725 = vunpack.c.l.b16 %v1415
    %v2726 = vunpack.c.h.b16 %v1415
    %v2727 = vunpack.c.l.b16 %v1416
    %v2728 = vunpack.c.h.b16 %v1416
    %v2729 = vunpack.c.l.b16 %v1417
    %v2730 = vunpack.c.h.b16 %v1417
    %v2731 = vunpack.c.l.b16 %v1418
    %v2732 = vunpack.c.h.b16 %v1418
    %v2733 = vunpack.c.l.b16 %v1419
    %v2734 = vunpack.c.h.b16 %v1419
    %v2735 = vunpack.c.l.b16 %v1420
    %v2736 = vunpack.c.h.b16 %v1420
    %v2737 = vunpack.c.l.b16 %v1421
    %v2738 = vunpack.c.h.b16 %v1421
    %v2739 = vunpack.c.l.b16 %v1422
    %v2740 = vunpack.c.h.b16 %v1422
    %v2741 = vunpack.c.l.b16 %v1423
    %v2742 = vunpack.c.h.b16 %v1423
    %v2743 = vunpack.c.l.b16 %v1424
    %v2744 = vunpack.c.h.b16 %v1424
    %v2745 = vunpack.c.l.b16 %v1425
    %v2746 = vunpack.c.h.b16 %v1425
    %v2747 = vunpack.c.l.b16 %v1426
    %v2748 = vunpack.c.h.b16 %v1426
    %v2749 = vunpack.c.l.b16 %v1427
    %v2750 = vunpack.c.h.b16 %v1427
    %v2751 = vunpack.c.l.b16 %v1428
    %v2752 = vunpack.c.h.b16 %v1428
    %v2753 = vunpack.c.l.b16 %v1429
    %v2754 = vunpack.c.h.b16 %v1429
    %v2755 = vunpack.c.l.b16 %v1430
    %v2756 = vunpack.c.h.b16 %v1430
    %v2757 = vunpack.c.l.b16 %v1431
    %v2758 = vunpack.c.h.b16 %v1431
    %v2759 = vunpack.c.l.b16 %v1432
    %v2760 = vunpack.c.h.b16 %v1432
    %v2761 = vunpack.c.l.b16 %v1433
    %v2762 = vunpack.c.h.b16 %v1433
    %v2763 = vunpack.c.l.b16 %v1434
    %v2764 = vunpack.c.h.b16 %v1434
    %v2765 = vunpack.c.l.b16 %v1435
    %v2766 = vunpack.c.h.b16 %v1435
    %v2767 = vunpack.c.l.b16 %v1436
    %v2768 = vunpack.c.h.b16 %v1436
    %v2769 = vunpack.c.l.b16 %v1437
    %v2770 = vunpack.c.h.b16 %v1437
    %v2771 = vunpack.c.l.b16 %v1438
    %v2772 = vunpack.c.h.b16 %v1438
    %v2773 = vunpack.c.l.b16 %v1439
    %v2774 = vunpack.c.h.b16 %v1439
    %v2775 = vunpack.c.l.b16 %v1440
    %v2776 = vunpack.c.h.b16 %v1440
    %v2777 = vunpack.c.l.b16 %v1441
    %v2778 = vunpack.c.h.b16 %v1441
    %v2779 = vunpack.c.l.b16 %v1442
    %v2780 = vunpack.c.h.b16 %v1442
    %v2781 = vunpack.c.l.b16 %v1443
    %v2782 = vunpack.c.h.b16 %v1443
    %v2783 = vunpack.c.l.b16 %v1444
    %v2784 = vunpack.c.h.b16 %v1444
    %v2785 = vunpack.c.l.b16 %v1445
    %v2786 = vunpack.c.h.b16 %v1445
    %v2787 = vunpack.c.l.b16 %v1446
    %v2788 = vunpack.c.h.b16 %v1446
    %v2789 = vunpack.c.l.b16 %v1447
    %v2790 = vunpack.c.h.b16 %v1447
    %v2791 = vunpack.c.l.b16 %v1448
    %v2792 = vunpack.c.h.b16 %v1448
    %v2793 = vunpack.c.l.b16 %v1449
    %v2794 = vunpack.c.h.b16 %v1449
    %v2795 = vunpack.c.l.b16 %v1450
    %v2796 = vunpack.c.h.b16 %v1450
    %v2797 = vunpack.c.l.b16 %v1451
    %v2798 = vunpack.c.h.b16 %v1451
    %v2799 = vunpack.c.l.b16 %v1452
    %v2800 = vunpack.c.h.b16 %v1452
    %v2801 = vunpack.c.l.b16 %v1453
    %v2802 = vunpack.c.h.b16 %v1453
    %v2803 = vunpack.c.l.b16 %v1454
    %v2804 = vunpack.c.h.b16 %v1454
    %v2805 = vunpack.c.l.b16 %v1455
    %v2806 = vunpack.c.h.b16 %v1455
    %v2807 = vunpack.c.l.b16 %v1456
    %v2808 = vunpack.c.h.b16 %v1456
    %v2809 = vunpack.c.l.b16 %v1457
    %v2810 = vunpack.c.h.b16 %v1457
    %v2811 = vunpack.c.l.b16 %v1458
    %v2812 = vunpack.c.h.b16 %v1458
    %v2813 = vunpack.c.l.b16 %v1459
    %v2814 = vunpack.c.h.b16 %v1459
    %v2815 = vunpack.c.l.b16 %v1460
    %v2816 = vunpack.c.h.b16 %v1460
    %v2817 = vunpack.c.l.b16 %v1461
    %v2818 = vunpack.c.h.b16 %v1461
    %v2819 = vunpack.c.l.b16 %v1462
    %v2820 = vunpack.c.h.b16 %v1462
    %v2821 = vunpack.c.l.b16 %v1463
    %v2822 = vunpack.c.h.b16 %v1463
    %v2823 = vunpack.c.l.b16 %v1464
    %v2824 = vunpack.c.h.b16 %v1464
    %v2825 = vunpack.c.l.b16 %v1465
    %v2826 = vunpack.c.h.b16 %v1465
    %v2827 = vunpack.c.l.b16 %v1466
    %v2828 = vunpack.c.h.b16 %v1466
    %v2829 = vunpack.c.l.b16 %v1467
    %v2830 = vunpack.c.h.b16 %v1467
    %v2831 = vunpack.c.l.b16 %v1468
    %v2832 = vunpack.c.h.b16 %v1468
    %v2833 = vunpack.c.l.b16 %v1469
    %v2834 = vunpack.c.h.b16 %v1469
    %v2835 = vunpack.c.l.b16 %v1470
    %v2836 = vunpack.c.h.b16 %v1470
    %v2837 = vunpack.c.l.b16 %v1471
    %v2838 = vunpack.c.h.b16 %v1471
    %v2839 = vunpack.c.l.b16 %v1472
    %v2840 = vunpack.c.h.b16 %v1472
    %v2841 = vunpack.c.l.b16 %v1473
    %v2842 = vunpack.c.h.b16 %v1473
    %v2843 = vunpack.c.l.b16 %v1474
    %v2844 = vunpack.c.h.b16 %v1474
    %v2845 = vunpack.c.l.b16 %v1475
    %v2846 = vunpack.c.h.b16 %v1475
    %v2847 = vunpack.c.l.b16 %v1476
    %v2848 = vunpack.c.h.b16 %v1476
    %v2849 = vunpack.c.l.b16 %v1477
    %v2850 = vunpack.c.h.b16 %v1477
    %v2851 = vunpack.c.l.b16 %v1478
    %v2852 = vunpack.c.h.b16 %v1478
    %v2853 = vunpack.c.l.b16 %v1479
    %v2854 = vunpack.c.h.b16 %v1479
    %v2855 = vunpack.c.l.b16 %v1480
    %v2856 = vunpack.c.h.b16 %v1480
    %v2857 = vunpack.c.l.b16 %v1481
    %v2858 = vunpack.c.h.b16 %v1481
    %v2859 = vunpack.c.l.b16 %v1482
    %v2860 = vunpack.c.h.b16 %v1482
    %v2861 = vunpack.c.l.b16 %v1483
    %v2862 = vunpack.c.h.b16 %v1483
    %v2863 = vunpack.c.l.b16 %v1484
    %v2864 = vunpack.c.h.b16 %v1484
    %v2865 = vunpack.c.l.b16 %v1485
    %v2866 = vunpack.c.h.b16 %v1485
    %v2867 = vunpack.c.l.b16 %v1486
    %v2868 = vunpack.c.h.b16 %v1486
    %v2869 = vunpack.c.l.b16 %v1487
    %v2870 = vunpack.c.h.b16 %v1487
    %v2871 = vunpack.c.l.b16 %v1488
    %v2872 = vunpack.c.h.b16 %v1488
    %v2873 = vunpack.c.l.b16 %v1489
    %v2874 = vunpack.c.h.b16 %v1489
    %v2875 = vunpack.c.l.b16 %v1490
    %v2876 = vunpack.c.h.b16 %v1490
    %v2877 = vunpack.c.l.b16 %v1491
    %v2878 = vunpack.c.h.b16 %v1491
    %v2879 = vunpack.c.l.b16 %v1492
    %v2880 = vunpack.c.h.b16 %v1492
    %v2881 = vunpack.c.l.b16 %v1493
    %v2882 = vunpack.c.h.b16 %v1493
    %v2883 = vunpack.c.l.b16 %v1494
    %v2884 = vunpack.c.h.b16 %v1494
    %v2885 = vunpack.c.l.b16 %v1495
    %v2886 = vunpack.c.h.b16 %v1495
    %v2887 = vunpack.c.l.b16 %v1496
    %v2888 = vunpack.c.h.b16 %v1496
    %v2889 = vunpack.c.l.b16 %v1497
    %v2890 = vunpack.c.h.b16 %v1497
    %v2891 = vunpack.c.l.b16 %v1498
    %v2892 = vunpack.c.h.b16 %v1498
    %v2893 = vunpack.c.l.b16 %v1499
    %v2894 = vunpack.c.h.b16 %v1499
    %v2895 = vunpack.c.l.b16 %v1500
    %v2896 = vunpack.c.h.b16 %v1500
    %v2897 = vunpack.c.l.b16 %v1501
    %v2898 = vunpack.c.h.b16 %v1501
    %v2899 = vunpack.c.l.b16 %v1502
    %v2900 = vunpack.c.h.b16 %v1502
    %v2901 = vunpack.c.l.b16 %v1503
    %v2902 = vunpack.c.h.b16 %v1503
    %v2903 = vunpack.c.l.b16 %v1504
    %v2904 = vunpack.c.h.b16 %v1504
    %v2905 = vunpack.c.l.b16 %v1505
    %v2906 = vunpack.c.h.b16 %v1505
    %v2907 = vunpack.c.l.b16 %v1506
    %v2908 = vunpack.c.h.b16 %v1506
    %v2909 = vunpack.c.l.b16 %v1507
    %v2910 = vunpack.c.h.b16 %v1507
    %v2911 = vunpack.c.l.b16 %v1508
    %v2912 = vunpack.c.h.b16 %v1508
    %v2913 = vunpack.c.l.b16 %v1509
    %v2914 = vunpack.c.h.b16 %v1509
    %v2915 = vunpack.c.l.b16 %v1510
    %v2916 = vunpack.c.h.b16 %v1510
    %v2917 = vunpack.c.l.b16 %v1511
    %v2918 = vunpack.c.h.b16 %v1511
    %v2919 = vunpack.c.l.b16 %v1512
    %v2920 = vunpack.c.h.b16 %v1512
    %v2921 = vunpack.c.l.b16 %v1513
    %v2922 = vunpack.c.h.b16 %v1513
    %v2923 = vunpack.c.l.b16 %v1514
    %v2924 = vunpack.c.h.b16 %v1514
    %v2925 = vunpack.c.l.b16 %v1515
    %v2926 = vunpack.c.h.b16 %v1515
    %v2927 = vunpack.c.l.b16 %v1516
    %v2928 = vunpack.c.h.b16 %v1516
    %v2929 = vunpack.c.l.b16 %v1517
    %v2930 = vunpack.c.h.b16 %v1517
    %v2931 = vunpack.c.l.b16 %v1518
    %v2932 = vunpack.c.h.b16 %v1518
    %v2933 = vunpack.c.l.b16 %v1519
    %v2934 = vunpack.c.h.b16 %v1519
    %v2935 = vunpack.c.l.b16 %v1520
    %v2936 = vunpack.c.h.b16 %v1520
    %v2937 = vunpack.c.l.b16 %v1521
    %v2938 = vunpack.c.h.b16 %v1521
    %v2939 = vunpack.c.l.b16 %v1522
    %v2940 = vunpack.c.h.b16 %v1522
    %v2941 = vunpack.c.l.b16 %v1523
    %v2942 = vunpack.c.h.b16 %v1523
    %v2943 = vunpack.c.l.b16 %v1524
    %v2944 = vunpack.c.h.b16 %v1524
    %v2945 = vunpack.c.l.b16 %v1525
    %v2946 = vunpack.c.h.b16 %v1525
    %v2947 = vunpack.c.l.b16 %v1526
    %v2948 = vunpack.c.h.b16 %v1526
    %v2949 = vunpack.c.l.b16 %v1527
    %v2950 = vunpack.c.h.b16 %v1527
    %v2951 = vunpack.c.l.b16 %v1528
    %v2952 = vunpack.c.h.b16 %v1528
    %v2953 = vunpack.c.l.b16 %v1529
    %v2954 = vunpack.c.h.b16 %v1529
    %v2955 = vunpack.c.l.b16 %v1530
    %v2956 = vunpack.c.h.b16 %v1530
    %v2957 = vunpack.c.l.b16 %v1531
    %v2958 = vunpack.c.h.b16 %v1531
    %v2959 = vunpack.c.l.b16 %v1532
    %v2960 = vunpack.c.h.b16 %v1532
    %v2961 = vunpack.c.l.b16 %v1533
    %v2962 = vunpack.c.h.b16 %v1533
    %v2963 = vunpack.c.l.b16 %v1534
    %v2964 = vunpack.c.h.b16 %v1534
    %v2965 = vunpack.c.l.b16 %v1535
    %v2966 = vunpack.c.h.b16 %v1535
    %v2967 = vunpack.c.l.b16 %v1536
    %v2968 = vunpack.c.h.b16 %v1536
    %v2969 = vunpack.c.l.b16 %v1537
    %v2970 = vunpack.c.h.b16 %v1537
    %v2971 = vunpack.c.l.b16 %v1538
    %v2972 = vunpack.c.h.b16 %v1538
    %v2973 = vunpack.c.l.b16 %v1539
    %v2974 = vunpack.c.h.b16 %v1539
    %v2975 = vunpack.c.l.b16 %v1540
    %v2976 = vunpack.c.h.b16 %v1540
    %v2977 = vunpack.c.l.b16 %v1541
    %v2978 = vunpack.c.h.b16 %v1541
    %v2979 = vunpack.c.l.b16 %v1542
    %v2980 = vunpack.c.h.b16 %v1542
    %v2981 = vunpack.c.l.b16 %v1543
    %v2982 = vunpack.c.h.b16 %v1543
    %v2983 = vunpack.c.l.b16 %v1544
    %v2984 = vunpack.c.h.b16 %v1544
    %v2985 = vunpack.c.l.b16 %v1545
    %v2986 = vunpack.c.h.b16 %v1545
    %v2987 = vunpack.c.l.b16 %v1546
    %v2988 = vunpack.c.h.b16 %v1546
    %v2989 = vunpack.c.l.b16 %v1547
    %v2990 = vunpack.c.h.b16 %v1547
    %v2991 = vunpack.c.l.b16 %v1548
    %v2992 = vunpack.c.h.b16 %v1548
    %v2993 = vunpack.c.l.b16 %v1549
    %v2994 = vunpack.c.h.b16 %v1549
    %v2995 = vunpack.c.l.b16 %v1550
    %v2996 = vunpack.c.h.b16 %v1550
    %v2997 = vunpack.c.l.b16 %v1551
    %v2998 = vunpack.c.h.b16 %v1551
    %v2999 = vunpack.c.l.b16 %v1552
    %v3000 = vunpack.c.h.b16 %v1552
    %v3001 = vunpack.c.l.b16 %v1553
    %v3002 = vunpack.c.h.b16 %v1553
    %v3003 = vunpack.c.l.b16 %v1554
    %v3004 = vunpack.c.h.b16 %v1554
    %v3005 = vunpack.c.l.b16 %v1555
    %v3006 = vunpack.c.h.b16 %v1555
    %v3007 = vunpack.c.l.b16 %v1556
    %v3008 = vunpack.c.h.b16 %v1556
    %v3009 = vunpack.c.l.b16 %v1557
    %v3010 = vunpack.c.h.b16 %v1557
    %v3011 = vunpack.c.l.b16 %v1558
    %v3012 = vunpack.c.h.b16 %v1558
    %v3013 = vunpack.c.l.b16 %v1559
    %v3014 = vunpack.c.h.b16 %v1559
    %v3015 = vunpack.c.l.b16 %v1560
    %v3016 = vunpack.c.h.b16 %v1560
    %v3017 = vunpack.c.l.b16 %v1561
    %v3018 = vunpack.c.h.b16 %v1561
    %v3019 = vunpack.c.l.b16 %v1562
    %v3020 = vunpack.c.h.b16 %v1562
    %v3021 = vunpack.c.l.b16 %v1563
    %v3022 = vunpack.c.h.b16 %v1563
    %v3023 = vunpack.c.l.b16 %v1564
    %v3024 = vunpack.c.h.b16 %v1564
    %v3025 = vunpack.c.l.b16 %v1565
    %v3026 = vunpack.c.h.b16 %v1565
    %v3027 = vunpack.c.l.b16 %v1566
    %v3028 = vunpack.c.h.b16 %v1566
    %v3029 = vunpack.c.l.b16 %v1567
    %v3030 = vunpack.c.h.b16 %v1567
    %v3031 = vunpack.c.l.b16 %v1568
    %v3032 = vunpack.c.h.b16 %v1568
    %v3033 = vunpack.c.l.b16 %v1569
    %v3034 = vunpack.c.h.b16 %v1569
    %v3035 = vunpack.c.l.b16 %v1570
    %v3036 = vunpack.c.h.b16 %v1570
    %v3037 = vunpack.c.l.b16 %v1571
    %v3038 = vunpack.c.h.b16 %v1571
    %v3039 = vunpack.c.l.b16 %v1572
    %v3040 = vunpack.c.h.b16 %v1572
    %v3041 = vunpack.c.l.b16 %v1573
    %v3042 = vunpack.c.h.b16 %v1573
    %v3043 = vunpack.c.l.b16 %v1574
    %v3044 = vunpack.c.h.b16 %v1574
    %v3045 = vunpack.c.l.b16 %v1575
    %v3046 = vunpack.c.h.b16 %v1575
    %v3047 = vunpack.c.l.b16 %v1576
    %v3048 = vunpack.c.h.b16 %v1576
    %v3049 = vunpack.c.l.b16 %v1577
    %v3050 = vunpack.c.h.b16 %v1577
    %v3051 = vunpack.c.l.b16 %v1578
    %v3052 = vunpack.c.h.b16 %v1578
    %v3053 = vunpack.c.l.b16 %v1579
    %v3054 = vunpack.c.h.b16 %v1579
    %v3055 = vunpack.c.l.b16 %v1580
    %v3056 = vunpack.c.h.b16 %v1580
    %v3057 = vunpack.c.l.b16 %v1581
    %v3058 = vunpack.c.h.b16 %v1581
    %v3059 = vunpack.c.l.b16 %v1582
    %v3060 = vunpack.c.h.b16 %v1582
    %v3061 = vunpack.c.l.b16 %v1583
    %v3062 = vunpack.c.h.b16 %v1583
    %v3063 = vunpack.c.l.b16 %v1584
    %v3064 = vunpack.c.h.b16 %v1584
    %v3065 = vunpack.c.l.b16 %v1585
    %v3066 = vunpack.c.h.b16 %v1585
    %v3067 = vunpack.c.l.b16 %v1586
    %v3068 = vunpack.c.h.b16 %v1586
    %v3069 = vunpack.c.l.b16 %v1587
    %v3070 = vunpack.c.h.b16 %v1587
    %v3071 = vunpack.c.l.b16 %v1588
    %v3072 = vunpack.c.h.b16 %v1588
    %v3073 = vunpack.c.l.b16 %v1589
    %v3074 = vunpack.c.h.b16 %v1589
    %v3075 = vunpack.c.l.b16 %v1590
    %v3076 = vunpack.c.h.b16 %v1590
    %v3077 = vunpack.c.l.b16 %v1591
    %v3078 = vunpack.c.h.b16 %v1591
    %v3079 = vunpack.c.l.b16 %v1592
    %v3080 = vunpack.c.h.b16 %v1592
    %v3081 = vunpack.c.l.b16 %v1593
    %v3082 = vunpack.c.h.b16 %v1593
    %v3083 = vunpack.c.l.b16 %v1594
    %v3084 = vunpack.c.h.b16 %v1594
    %v3085 = vunpack.c.l.b16 %v1595
    %v3086 = vunpack.c.h.b16 %v1595
    %v3087 = vunpack.c.l.b16 %v1596
    %v3088 = vunpack.c.h.b16 %v1596
    %v3089 = vunpack.c.l.b16 %v1597
    %v3090 = vunpack.c.h.b16 %v1597
    %v3091 = vunpack.c.l.b16 %v1598
    %v3092 = vunpack.c.h.b16 %v1598
    %v3093 = vunpack.c.l.b16 %v1599
    %v3094 = vunpack.c.h.b16 %v1599
    %v3095 = vunpack.c.l.b16 %v1600
    %v3096 = vunpack.c.h.b16 %v1600
    %v3097 = vunpack.c.l.b16 %v1601
    %v3098 = vunpack.c.h.b16 %v1601
    %v3099 = vunpack.c.l.b16 %v1602
    %v3100 = vunpack.c.h.b16 %v1602
    %v3101 = vunpack.c.l.b16 %v1603
    %v3102 = vunpack.c.h.b16 %v1603
    %v3103 = vunpack.c.l.b16 %v1604
    %v3104 = vunpack.c.h.b16 %v1604
    %v3105 = vunpack.c.l.b16 %v1605
    %v3106 = vunpack.c.h.b16 %v1605
    %v3107 = vunpack.c.l.b16 %v1606
    %v3108 = vunpack.c.h.b16 %v1606
    %v3109 = vunpack.c.l.b16 %v1607
    %v3110 = vunpack.c.h.b16 %v1607
    %v3111 = vunpack.c.l.b16 %v1608
    %v3112 = vunpack.c.h.b16 %v1608
    %v3113 = vunpack.c.l.b16 %v1609
    %v3114 = vunpack.c.h.b16 %v1609
    %v3115 = vunpack.c.l.b16 %v1610
    %v3116 = vunpack.c.h.b16 %v1610
    %v3117 = vunpack.c.l.b16 %v1611
    %v3118 = vunpack.c.h.b16 %v1611
    %v3119 = vunpack.c.l.b16 %v1612
    %v3120 = vunpack.c.h.b16 %v1612
    %v3121 = vunpack.c.l.b16 %v1613
    %v3122 = vunpack.c.h.b16 %v1613
    %v3123 = vunpack.c.l.b16 %v1614
    %v3124 = vunpack.c.h.b16 %v1614
    %v3125 = vunpack.c.l.b16 %v1615
    %v3126 = vunpack.c.h.b16 %v1615
    %v3127 = vunpack.c.l.b16 %v1616
    %v3128 = vunpack.c.h.b16 %v1616
    %v3129 = vunpack.c.l.b16 %v1617
    %v3130 = vunpack.c.h.b16 %v1617
    %v3131 = vunpack.c.l.b16 %v1618
    %v3132 = vunpack.c.h.b16 %v1618
    %v3133 = vunpack.c.l.b16 %v1619
    %v3134 = vunpack.c.h.b16 %v1619
    %v3135 = vunpack.c.l.b16 %v1620
    %v3136 = vunpack.c.h.b16 %v1620
    %v3137 = vunpack.c.l.b16 %v1621
    %v3138 = vunpack.c.h.b16 %v1621
    %v3139 = vunpack.c.l.b16 %v1622
    %v3140 = vunpack.c.h.b16 %v1622
    %v3141 = vunpack.c.l.b16 %v1623
    %v3142 = vunpack.c.h.b16 %v1623
    %v3143 = vunpack.c.l.b16 %v1624
    %v3144 = vunpack.c.h.b16 %v1624
    %v3145 = vunpack.c.l.b16 %v1625
    %v3146 = vunpack.c.h.b16 %v1625
    %v3147 = vunpack.c.l.b16 %v1626
    %v3148 = vunpack.c.h.b16 %v1626
    %v3149 = vunpack.c.l.b16 %v1627
    %v3150 = vunpack.c.h.b16 %v1627
    %v3151 = vunpack.c.l.b16 %v1628
    %v3152 = vunpack.c.h.b16 %v1628
    %v3153 = vunpack.c.l.b16 %v1629
    %v3154 = vunpack.c.h.b16 %v1629
    %v3155 = vunpack.c.l.b16 %v1630
    %v3156 = vunpack.c.h.b16 %v1630
    %v3157 = vunpack.c.l.b16 %v1631
    %v3158 = vunpack.c.h.b16 %v1631
    %v3159 = vunpack.c.l.b16 %v1632
    %v3160 = vunpack.c.h.b16 %v1632
    %v3161 = vunpack.c.l.b16 %v1633
    %v3162 = vunpack.c.h.b16 %v1633
    %v3163 = vunpack.c.l.b16 %v1634
    %v3164 = vunpack.c.h.b16 %v1634
    %v3165 = vunpack.c.l.b16 %v1635
    %v3166 = vunpack.c.h.b16 %v1635
    %v3167 = vunpack.c.l.b16 %v1636
    %v3168 = vunpack.c.h.b16 %v1636
    %v3169 = vunpack.c.l.b16 %v1637
    %v3170 = vunpack.c.h.b16 %v1637
    %v3171 = vunpack.c.l.b16 %v1638
    %v3172 = vunpack.c.h.b16 %v1638
    %v3173 = vunpack.c.l.b16 %v1639
    %v3174 = vunpack.c.h.b16 %v1639
    %v3175 = vunpack.c.l.b16 %v1640
    %v3176 = vunpack.c.h.b16 %v1640
    %v3177 = vunpack.c.l.b16 %v1641
    %v3178 = vunpack.c.h.b16 %v1641
    %v3179 = vunpack.c.l.b16 %v1642
    %v3180 = vunpack.c.h.b16 %v1642
    %v3181 = vunpack.c.l.b16 %v1643
    %v3182 = vunpack.c.h.b16 %v1643
    %v3183 = vunpack.c.l.b16 %v1644
    %v3184 = vunpack.c.h.b16 %v1644
    %v3185 = vunpack.c.l.b16 %v1645
    %v3186 = vunpack.c.h.b16 %v1645
    %v3187 = vunpack.c.l.b16 %v1646
    %v3188 = vunpack.c.h.b16 %v1646
    %v3189 = vunpack.c.l.b16 %v1647
    %v3190 = vunpack.c.h.b16 %v1647
    %v3191 = vunpack.c.l.b16 %v1648
    %v3192 = vunpack.c.h.b16 %v1648
    %v3193 = vunpack.c.l.b16 %v1649
    %v3194 = vunpack.c.h.b16 %v1649
    %v3195 = vunpack.c.l.b16 %v1650
    %v3196 = vunpack.c.h.b16 %v1650
    %v3197 = vunpack.c.l.b16 %v1651
    %v3198 = vunpack.c.h.b16 %v1651
    %v3199 = vunpack.c.l.b16 %v1652
    %v3200 = vunpack.c.h.b16 %v1652
    %v3201 = vunpack.c.l.b16 %v1653
    %v3202 = vunpack.c.h.b16 %v1653
    %v3203 = vunpack.c.l.b16 %v1654
    %v3204 = vunpack.c.h.b16 %v1654
    %v3205 = vunpack.c.l.b16 %v1655
    %v3206 = vunpack.c.h.b16 %v1655
    %v3207 = vunpack.c.l.b16 %v1656
    %v3208 = vunpack.c.h.b16 %v1656
    %v3209 = vunpack.c.l.b16 %v1657
    %v3210 = vunpack.c.h.b16 %v1657
    %v3211 = vunpack.c.l.b16 %v1658
    %v3212 = vunpack.c.h.b16 %v1658
    %v3213 = vunpack.c.l.b16 %v1659
    %v3214 = vunpack.c.h.b16 %v1659
    %v3215 = vunpack.c.l.b16 %v1660
    %v3216 = vunpack.c.h.b16 %v1660
    %v3217 = vunpack.c.l.b16 %v1661
    %v3218 = vunpack.c.h.b16 %v1661
    %v3219 = vunpack.c.l.b16 %v1662
    %v3220 = vunpack.c.h.b16 %v1662
    %v3221 = vunpack.c.l.b16 %v1663
    %v3222 = vunpack.c.h.b16 %v1663
    %v3223 = vunpack.c.l.b16 %v1664
    %v3224 = vunpack.c.h.b16 %v1664
    %v3225 = vunpack.c.l.b16 %v1665
    %v3226 = vunpack.c.h.b16 %v1665
    %v3227 = vunpack.c.l.b16 %v1666
    %v3228 = vunpack.c.h.b16 %v1666
    %v3229 = vunpack.c.l.b16 %v1667
    %v3230 = vunpack.c.h.b16 %v1667
    %v3231 = vunpack.c.l.b16 %v1668
    %v3232 = vunpack.c.h.b16 %v1668
    %v3233 = vunpack.c.l.b16 %v1669
    %v3234 = vunpack.c.h.b16 %v1669
    %v3235 = vunpack.c.l.b16 %v1670
    %v3236 = vunpack.c.h.b16 %v1670
    %v3237 = vunpack.c.l.b16 %v1671
    %v3238 = vunpack.c.h.b16 %v1671
    %v3239 = vunpack.c.l.b16 %v1672
    %v3240 = vunpack.c.h.b16 %v1672
    %v3241 = vunpack.c.l.b16 %v1673
    %v3242 = vunpack.c.h.b16 %v1673
    %v3243 = vunpack.c.l.b16 %v1674
    %v3244 = vunpack.c.h.b16 %v1674
    %v3245 = vunpack.c.l.b16 %v1675
    %v3246 = vunpack.c.h.b16 %v1675
    %v3247 = vunpack.c.l.b16 %v1676
    %v3248 = vunpack.c.h.b16 %v1676
    %v3249 = vunpack.c.l.b16 %v1677
    %v3250 = vunpack.c.h.b16 %v1677
    %v3251 = vunpack.c.l.b16 %v1678
    %v3252 = vunpack.c.h.b16 %v1678
    %v3253 = vunpack.c.l.b16 %v1679
    %v3254 = vunpack.c.h.b16 %v1679
    %v3255 = vunpack.c.l.b16 %v1680
    %v3256 = vunpack.c.h.b16 %v1680
    %v3257 = vunpack.c.l.b16 %v1681
    %v3258 = vunpack.c.h.b16 %v1681
    %v3259 = vunpack.c.l.b16 %v1682
    %v3260 = vunpack.c.h.b16 %v1682
    %v3261 = vunpack.c.l.b16 %v1683
    %v3262 = vunpack.c.h.b16 %v1683
    %v3263 = vunpack.c.l.b16 %v1684
    %v3264 = vunpack.c.h.b16 %v1684
    %v3265 = vunpack.c.l.b16 %v1685
    %v3266 = vunpack.c.h.b16 %v1685
    %v3267 = vunpack.c.l.b16 %v1686
    %v3268 = vunpack.c.h.b16 %v1686
    %v3269 = vunpack.c.l.b16 %v1687
    %v3270 = vunpack.c.h.b16 %v1687
    %v3271 = vunpack.c.l.b16 %v1688
    %v3272 = vunpack.c.h.b16 %v1688
    %v3273 = vunpack.c.l.b16 %v1689
    %v3274 = vunpack.c.h.b16 %v1689
    %v3275 = vunpack.c.l.b16 %v1690
    %v3276 = vunpack.c.h.b16 %v1690
    %v3277 = vunpack.c.l.b16 %v1691
    %v3278 = vunpack.c.h.b16 %v1691
    %v3279 = vunpack.c.l.b16 %v1692
    %v3280 = vunpack.c.h.b16 %v1692
    %v3281 = vunpack.c.l.b16 %v1693
    %v3282 = vunpack.c.h.b16 %v1693
    %v3283 = vunpack.c.l.b16 %v1694
    %v3284 = vunpack.c.h.b16 %v1694
    %v3285 = vunpack.c.l.b16 %v1695
    %v3286 = vunpack.c.h.b16 %v1695
    %v3287 = vunpack.c.l.b16 %v1696
    %v3288 = vunpack.c.h.b16 %v1696
    %v3289 = vunpack.c.l.b16 %v1697
    %v3290 = vunpack.c.h.b16 %v1697
    %v3291 = vunpack.c.l.b16 %v1698
    %v3292 = vunpack.c.h.b16 %v1698
    %v3293 = vunpack.c.l.b16 %v1699
    %v3294 = vunpack.c.h.b16 %v1699
    %v3295 = vunpack.c.l.b16 %v1700
    %v3296 = vunpack.c.h.b16 %v1700
    %v3297 = vunpack.c.l.b16 %v1701
    %v3298 = vunpack.c.h.b16 %v1701
    %v3299 = vunpack.c.l.b16 %v1702
    %v3300 = vunpack.c.h.b16 %v1702
    %v3301 = vunpack.c.l.b16 %v1703
    %v3302 = vunpack.c.h.b16 %v1703
    %v3303 = vunpack.c.l.b16 %v1704
    %v3304 = vunpack.c.h.b16 %v1704
    %v3305 = vunpack.c.l.b16 %v1705
    %v3306 = vunpack.c.h.b16 %v1705
    %v3307 = vunpack.c.l.b16 %v1706
    %v3308 = vunpack.c.h.b16 %v1706
    %v3309 = vunpack.c.l.b16 %v1707
    %v3310 = vunpack.c.h.b16 %v1707
    %v3311 = vunpack.c.l.b16 %v1708
    %v3312 = vunpack.c.h.b16 %v1708
    %v3313 = vunpack.c.l.b16 %v1709
    %v3314 = vunpack.c.h.b16 %v1709
    %v3315 = vunpack.c.l.b16 %v1710
    %v3316 = vunpack.c.h.b16 %v1710
    %v3317 = vunpack.c.l.b16 %v1711
    %v3318 = vunpack.c.h.b16 %v1711
    %v3319 = vunpack.c.l.b16 %v1712
    %v3320 = vunpack.c.h.b16 %v1712
    %v3321 = vunpack.c.l.b16 %v1713
    %v3322 = vunpack.c.h.b16 %v1713
    %v3323 = vunpack.c.l.b16 %v1714
    %v3324 = vunpack.c.h.b16 %v1714
    %v3325 = vunpack.c.l.b16 %v1715
    %v3326 = vunpack.c.h.b16 %v1715
    %v3327 = vunpack.c.l.b16 %v1716
    %v3328 = vunpack.c.h.b16 %v1716
    %v3329 = vunpack.c.l.b16 %v1717
    %v3330 = vunpack.c.h.b16 %v1717
    %v3331 = vunpack.c.l.b16 %v1718
    %v3332 = vunpack.c.h.b16 %v1718
    %v3333 = vunpack.c.l.b16 %v1719
    %v3334 = vunpack.c.h.b16 %v1719
    %v3335 = vunpack.c.l.b16 %v1720
    %v3336 = vunpack.c.h.b16 %v1720
    %v3337 = vunpack.c.l.b16 %v1721
    %v3338 = vunpack.c.h.b16 %v1721
    %v3339 = vunpack.c.l.b16 %v1722
    %v3340 = vunpack.c.h.b16 %v1722
    %v3341 = vunpack.c.l.b16 %v1723
    %v3342 = vunpack.c.h.b16 %v1723
    %v3343 = vunpack.c.l.b16 %v1724
    %v3344 = vunpack.c.h.b16 %v1724
    %v3345 = vunpack.c.l.b16 %v1725
    %v3346 = vunpack.c.h.b16 %v1725
    %v3347 = vunpack.c.l.b16 %v1726
    %v3348 = vunpack.c.h.b16 %v1726
    %v3349 = vunpack.c.l.b16 %v1727
    %v3350 = vunpack.c.h.b16 %v1727
    %v3351 = vunpack.c.l.b16 %v1728
    %v3352 = vunpack.c.h.b16 %v1728
    %v3353 = vunpack.c.l.b16 %v1729
    %v3354 = vunpack.c.h.b16 %v1729
    %v3355 = vunpack.c.l.b16 %v1730
    %v3356 = vunpack.c.h.b16 %v1730
    %v3357 = vunpack.c.l.b16 %v1731
    %v3358 = vunpack.c.h.b16 %v1731
    %v3359 = vunpack.c.l.b16 %v1732
    %v3360 = vunpack.c.h.b16 %v1732
    %v3361 = vunpack.c.l.b16 %v1733
    %v3362 = vunpack.c.h.b16 %v1733
    %v3363 = vunpack.c.l.b16 %v1734
    %v3364 = vunpack.c.h.b16 %v1734
    %v3365 = vunpack.c.l.b16 %v1735
    %v3366 = vunpack.c.h.b16 %v1735
    %v3367 = vunpack.c.l.b16 %v1736
    %v3368 = vunpack.c.h.b16 %v1736
    %v3369 = vunpack.c.l.b16 %v1737
    %v3370 = vunpack.c.h.b16 %v1737
    %v3371 = vunpack.c.l.b16 %v1738
    %v3372 = vunpack.c.h.b16 %v1738
    %v3373 = vunpack.c.l.b16 %v1739
    %v3374 = vunpack.c.h.b16 %v1739
    %v3375 = vunpack.c.l.b16 %v1740
    %v3376 = vunpack.c.h.b16 %v1740
    %v3377 = vunpack.c.l.b16 %v1741
    %v3378 = vunpack.c.h.b16 %v1741
    %v3379 = vunpack.c.l.b16 %v1742
    %v3380 = vunpack.c.h.b16 %v1742
    %v3381 = vunpack.c.l.b16 %v1743
    %v3382 = vunpack.c.h.b16 %v1743
    %v3383 = vunpack.c.l.b16 %v1744
    %v3384 = vunpack.c.h.b16 %v1744
    %v3385 = vunpack.c.l.b16 %v1745
    %v3386 = vunpack.c.h.b16 %v1745
    %v3387 = vunpack.c.l.b16 %v1746
    %v3388 = vunpack.c.h.b16 %v1746
    %v3389 = vunpack.c.l.b16 %v1747
    %v3390 = vunpack.c.h.b16 %v1747
    %v3391 = vunpack.c.l.b16 %v1748
    %v3392 = vunpack.c.h.b16 %v1748
    %v3393 = vunpack.c.l.b16 %v1749
    %v3394 = vunpack.c.h.b16 %v1749
    %v3395 = vunpack.c.l.b16 %v1750
    %v3396 = vunpack.c.h.b16 %v1750
    %v3397 = vunpack.c.l.b16 %v1751
    %v3398 = vunpack.c.h.b16 %v1751
    %v3399 = vunpack.c.l.b16 %v1752
    %v3400 = vunpack.c.h.b16 %v1752
    %v3401 = vunpack.c.l.b16 %v1753
    %v3402 = vunpack.c.h.b16 %v1753
    %v3403 = vunpack.c.l.b16 %v1754
    %v3404 = vunpack.c.h.b16 %v1754
    %v3405 = vunpack.c.l.b16 %v1755
    %v3406 = vunpack.c.h.b16 %v1755
    %v3407 = vunpack.c.l.b16 %v1756
    %v3408 = vunpack.c.h.b16 %v1756
    %v3409 = vunpack.c.l.b16 %v1757
    %v3410 = vunpack.c.h.b16 %v1757
    %v3411 = vunpack.c.l.b16 %v1758
    %v3412 = vunpack.c.h.b16 %v1758
    %v3413 = vunpack.c.l.b16 %v1759
    %v3414 = vunpack.c.h.b16 %v1759
    %v3415 = vunpack.c.l.b16 %v1760
    %v3416 = vunpack.c.h.b16 %v1760
    %v3417 = vunpack.c.l.b16 %v1761
    %v3418 = vunpack.c.h.b16 %v1761
    %v3419 = vunpack.c.l.b16 %v1762
    %v3420 = vunpack.c.h.b16 %v1762
    %v3421 = vunpack.c.l.b16 %v1763
    %v3422 = vunpack.c.h.b16 %v1763
    %v3423 = vunpack.c.l.b16 %v1764
    %v3424 = vunpack.c.h.b16 %v1764
    %v3425 = vunpack.c.l.b16 %v1765
    %v3426 = vunpack.c.h.b16 %v1765
    %v3427 = vunpack.c.l.b16 %v1766
    %v3428 = vunpack.c.h.b16 %v1766
    %v3429 = vunpack.c.l.b16 %v1767
    %v3430 = vunpack.c.h.b16 %v1767
    %v3431 = vunpack.c.l.b16 %v1768
    %v3432 = vunpack.c.h.b16 %v1768
    %v3433 = vunpack.c.l.b16 %v1769
    %v3434 = vunpack.c.h.b16 %v1769
    %v3435 = vunpack.c.l.b16 %v1770
    %v3436 = vunpack.c.h.b16 %v1770
    %v3437 = vunpack.c.l.b16 %v1771
    %v3438 = vunpack.c.h.b16 %v1771
    %v3439 = vunpack.c.l.b16 %v1772
    %v3440 = vunpack.c.h.b16 %v1772
    %v3441 = vunpack.c.l.b16 %v1773
    %v3442 = vunpack.c.h.b16 %v1773
    %v3443 = vunpack.c.l.b16 %v1774
    %v3444 = vunpack.c.h.b16 %v1774
    %v3445 = vunpack.c.l.b16 %v1775
    %v3446 = vunpack.c.h.b16 %v1775
    %v3447 = vunpack.c.l.b16 %v1776
    %v3448 = vunpack.c.h.b16 %v1776
    %v3449 = vunpack.c.l.b16 %v1777
    %v3450 = vunpack.c.h.b16 %v1777
    %v3451 = vunpack.c.l.b16 %v1778
    %v3452 = vunpack.c.h.b16 %v1778
    %v3453 = vunpack.c.l.b16 %v1779
    %v3454 = vunpack.c.h.b16 %v1779
    %v3455 = vunpack.c.l.b16 %v1780
    %v3456 = vunpack.c.h.b16 %v1780
    %v3457 = vunpack.c.l.b16 %v1781
    %v3458 = vunpack.c.h.b16 %v1781
    %v3459 = vunpack.c.l.b16 %v1782
    %v3460 = vunpack.c.h.b16 %v1782
    %v3461 = vunpack.c.l.b16 %v1783
    %v3462 = vunpack.c.h.b16 %v1783
    %v3463 = vunpack.c.l.b16 %v1784
    %v3464 = vunpack.c.h.b16 %v1784
    %v3465 = vunpack.c.l.b16 %v1785
    %v3466 = vunpack.c.h.b16 %v1785
    %v3467 = vunpack.c.l.b16 %v1786
    %v3468 = vunpack.c.h.b16 %v1786
    %v3469 = vunpack.c.l.b16 %v1787
    %v3470 = vunpack.c.h.b16 %v1787
    %v3471 = vunpack.c.l.b16 %v1788
    %v3472 = vunpack.c.h.b16 %v1788
    %v3473 = vunpack.c.l.b16 %v1789
    %v3474 = vunpack.c.h.b16 %v1789
    %v3475 = vunpack.c.l.b16 %v1790
    %v3476 = vunpack.c.h.b16 %v1790
    %v3477 = vunpack.c.l.b16 %v1791
    %v3478 = vunpack.c.h.b16 %v1791
    %v3479 = vunpack.c.l.b16 %v1792
    %v3480 = vunpack.c.h.b16 %v1792
    %v3481 = vunpack.c.l.b16 %v1793
    %v3482 = vunpack.c.h.b16 %v1793
    %v3483 = vunpack.c.l.b16 %v1794
    %v3484 = vunpack.c.h.b16 %v1794
    %v3485 = vunpack.c.l.b16 %v1795
    %v3486 = vunpack.c.h.b16 %v1795
    %v3487 = vunpack.c.l.b16 %v1796
    %v3488 = vunpack.c.h.b16 %v1796
    %v3489 = vunpack.c.l.b16 %v1797
    %v3490 = vunpack.c.h.b16 %v1797
    %v3491 = vunpack.c.l.b16 %v1798
    %v3492 = vunpack.c.h.b16 %v1798
    %v3493 = vunpack.c.l.b16 %v1799
    %v3494 = vunpack.c.h.b16 %v1799
    %v3495 = vunpack.c.l.b16 %v1800
    %v3496 = vunpack.c.h.b16 %v1800
    %v3497 = vunpack.c.l.b16 %v1801
    %v3498 = vunpack.c.h.b16 %v1801
    %v3499 = vunpack.c.l.b16 %v1802
    %v3500 = vunpack.c.h.b16 %v1802
    %v3501 = vunpack.c.l.b16 %v1803
    %v3502 = vunpack.c.h.b16 %v1803
    %v3503 = vunpack.c.l.b16 %v1804
    %v3504 = vunpack.c.h.b16 %v1804
    %v3505 = vunpack.c.l.b16 %v1805
    %v3506 = vunpack.c.h.b16 %v1805
    %v3507 = vunpack.c.l.b16 %v1806
    %v3508 = vunpack.c.h.b16 %v1806
    %v3509 = vunpack.c.l.b16 %v1807
    %v3510 = vunpack.c.h.b16 %v1807
    %v3511 = vunpack.c.l.b16 %v1808
    %v3512 = vunpack.c.h.b16 %v1808
    %v3513 = vunpack.c.l.b16 %v1809
    %v3514 = vunpack.c.h.b16 %v1809
    %v3515 = vunpack.c.l.b16 %v1810
    %v3516 = vunpack.c.h.b16 %v1810
    %v3517 = vunpack.c.l.b16 %v1811
    %v3518 = vunpack.c.h.b16 %v1811
    %v3519 = vunpack.c.l.b16 %v1812
    %v3520 = vunpack.c.h.b16 %v1812
    %v3521 = vunpack.c.l.b16 %v1813
    %v3522 = vunpack.c.h.b16 %v1813
    %v3523 = vunpack.c.l.b16 %v1814
    %v3524 = vunpack.c.h.b16 %v1814
    %v3525 = vunpack.c.l.b16 %v1815
    %v3526 = vunpack.c.h.b16 %v1815
    %v3527 = vunpack.c.l.b16 %v1816
    %v3528 = vunpack.c.h.b16 %v1816
    %v3529 = vunpack.c.l.b16 %v1817
    %v3530 = vunpack.c.h.b16 %v1817
    %v3531 = vunpack.c.l.b16 %v1818
    %v3532 = vunpack.c.h.b16 %v1818
    %v3533 = vunpack.c.l.b16 %v1819
    %v3534 = vunpack.c.h.b16 %v1819
    %v3535 = vunpack.c.l.b16 %v1820
    %v3536 = vunpack.c.h.b16 %v1820
    %v3537 = vunpack.c.l.b16 %v1821
    %v3538 = vunpack.c.h.b16 %v1821
    %v3539 = vunpack.c.l.b16 %v1822
    %v3540 = vunpack.c.h.b16 %v1822
    %v3541 = vunpack.c.l.b16 %v1823
    %v3542 = vunpack.c.h.b16 %v1823
    %v3543 = vunpack.c.l.b16 %v1824
    %v3544 = vunpack.c.h.b16 %v1824
    %v3545 = vunpack.c.l.b16 %v1825
    %v3546 = vunpack.c.h.b16 %v1825
    %v3547 = vunpack.c.l.b16 %v1826
    %v3548 = vunpack.c.h.b16 %v1826
    %v3549 = vunpack.c.l.b16 %v1827
    %v3550 = vunpack.c.h.b16 %v1827
    %v3551 = vunpack.c.l.b16 %v1828
    %v3552 = vunpack.c.h.b16 %v1828
    %v3553 = vunpack.c.l.b16 %v1829
    %v3554 = vunpack.c.h.b16 %v1829
    %v3555 = vunpack.c.l.b16 %v1830
    %v3556 = vunpack.c.h.b16 %v1830
    %v3557 = vunpack.c.l.b16 %v1831
    %v3558 = vunpack.c.h.b16 %v1831
    %v3559 = vunpack.c.l.b16 %v1832
    %v3560 = vunpack.c.h.b16 %v1832
    %v3561 = vpack.c.b16 %v2421, %v2409
    %v3562 = vpack.c.b16 %v2422, %v2410
    %v3563 = vpack.c.b16 %v2423, %v2411
    %v3564 = vpack.c.b16 %v2424, %v2412
    %v3565 = vpack.c.b16 %v2425, %v2413
    %v3566 = vpack.c.b16 %v2426, %v2414
    %v3567 = vpack.c.b16 %v2427, %v2415
    %v3568 = vpack.c.b16 %v2428, %v2416
    %v3569 = vpack.c.b16 %v2429, %v2417
    %v3570 = vpack.c.b16 %v2430, %v2418
    %v3571 = vpack.c.b16 %v2431, %v2419
    %v3572 = vpack.c.b16 %v2432, %v2420
    %v3573 = vpack.c.b16 %v2445, %v2433
    %v3574 = vpack.c.b16 %v2446, %v2434
    %v3575 = vpack.c.b16 %v2447, %v2435
    %v3576 = vpack.c.b16 %v2448, %v2436
    %v3577 = vpack.c.b16 %v2449, %v2437
    %v3578 = vpack.c.b16 %v2450, %v2438
    %v3579 = vpack.c.b16 %v2451, %v2439
    %v3580 = vpack.c.b16 %v2452, %v2440
    %v3581 = vpack.c.b16 %v2453, %v2441
    %v3582 = vpack.c.b16 %v2454, %v2442
    %v3583 = vpack.c.b16 %v2455, %v2443
    %v3584 = vpack.c.b16 %v2456, %v2444
    %v3585 = vpack.c.b16 %v2469, %v2457
    %v3586 = vpack.c.b16 %v2470, %v2458
    %v3587 = vpack.c.b16 %v2471, %v2459
    %v3588 = vpack.c.b16 %v2472, %v2460
    %v3589 = vpack.c.b16 %v2473, %v2461
    %v3590 = vpack.c.b16 %v2474, %v2462
    %v3591 = vpack.c.b16 %v2475, %v2463
    %v3592 = vpack.c.b16 %v2476, %v2464
    %v3593 = vpack.c.b16 %v2477, %v2465
    %v3594 = vpack.c.b16 %v2478, %v2466
    %v3595 = vpack.c.b16 %v2479, %v2467
    %v3596 = vpack.c.b16 %v2480, %v2468
    %v3597 = vpack.c.b16 %v2493, %v2481
    %v3598 = vpack.c.b16 %v2494, %v2482
    %v3599 = vpack.c.b16 %v2495, %v2483
    %v3600 = vpack.c.b16 %v2496, %v2484
    %v3601 = vpack.c.b16 %v2497, %v2485
    %v3602 = vpack.c.b16 %v2498, %v2486
    %v3603 = vpack.c.b16 %v2499, %v2487
    %v3604 = vpack.c.b16 %v2500, %v2488
    %v3605 = vpack.c.b16 %v2501, %v2489
    %v3606 = vpack.c.b16 %v2502, %v2490
    %v3607 = vpack.c.b16 %v2503, %v2491
    %v3608 = vpack.c.b16 %v2504, %v2492
    %v3609 = vpack.c.b16 %v2517, %v2505
    %v3610 = vpack.c.b16 %v2518, %v2506
    %v3611 = vpack.c.b16 %v2519, %v2507
    %v3612 = vpack.c.b16 %v2520, %v2508
    %v3613 = vpack.c.b16 %v2521, %v2509
    %v3614 = vpack.c.b16 %v2522, %v2510
    %v3615 = vpack.c.b16 %v2523, %v2511
    %v3616 = vpack.c.b16 %v2524, %v2512
    %v3617 = vpack.c.b16 %v2525, %v2513
    %v3618 = vpack.c.b16 %v2526, %v2514
    %v3619 = vpack.c.b16 %v2527, %v2515
    %v3620 = vpack.c.b16 %v2528, %v2516
    %v3621 = vpack.c.b16 %v2541, %v2529
    %v3622 = vpack.c.b16 %v2542, %v2530
    %v3623 = vpack.c.b16 %v2543, %v2531
    %v3624 = vpack.c.b16 %v2544, %v2532
    %v3625 = vpack.c.b16 %v2545, %v2533
    %v3626 = vpack.c.b16 %v2546, %v2534
    %v3627 = vpack.c.b16 %v2547, %v2535
    %v3628 = vpack.c.b16 %v2548, %v2536
    %v3629 = vpack.c.b16 %v2549, %v2537
    %v3630 = vpack.c.b16 %v2550, %v2538
    %v3631 = vpack.c.b16 %v2551, %v2539
    %v3632 = vpack.c.b16 %v2552, %v2540
    %v3633 = vpack.c.b16 %v2565, %v2553
    %v3634 = vpack.c.b16 %v2566, %v2554
    %v3635 = vpack.c.b16 %v2567, %v2555
    %v3636 = vpack.c.b16 %v2568, %v2556
    %v3637 = vpack.c.b16 %v2569, %v2557
    %v3638 = vpack.c.b16 %v2570, %v2558
    %v3639 = vpack.c.b16 %v2571, %v2559
    %v3640 = vpack.c.b16 %v2572, %v2560
    %v3641 = vpack.c.b16 %v2573, %v2561
    %v3642 = vpack.c.b16 %v2574, %v2562
    %v3643 = vpack.c.b16 %v2575, %v2563
    %v3644 = vpack.c.b16 %v2576, %v2564
    %v3645 = vpack.c.b16 %v2589, %v2577
    %v3646 = vpack.c.b16 %v2590, %v2578
    %v3647 = vpack.c.b16 %v2591, %v2579
    %v3648 = vpack.c.b16 %v2592, %v2580
    %v3649 = vpack.c.b16 %v2593, %v2581
    %v3650 = vpack.c.b16 %v2594, %v2582
    %v3651 = vpack.c.b16 %v2595, %v2583
    %v3652 = vpack.c.b16 %v2596, %v2584
    %v3653 = vpack.c.b16 %v2597, %v2585
    %v3654 = vpack.c.b16 %v2598, %v2586
    %v3655 = vpack.c.b16 %v2599, %v2587
    %v3656 = vpack.c.b16 %v2600, %v2588
    %v3657 = vpack.c.b16 %v2613, %v2601
    %v3658 = vpack.c.b16 %v2614, %v2602
    %v3659 = vpack.c.b16 %v2615, %v2603
    %v3660 = vpack.c.b16 %v2616, %v2604
    %v3661 = vpack.c.b16 %v2617, %v2605
    %v3662 = vpack.c.b16 %v2618, %v2606
    %v3663 = vpack.c.b16 %v2619, %v2607
    %v3664 = vpack.c.b16 %v2620, %v2608
    %v3665 = vpack.c.b16 %v2621, %v2609
    %v3666 = vpack.c.b16 %v2622, %v2610
    %v3667 = vpack.c.b16 %v2623, %v2611
    %v3668 = vpack.c.b16 %v2624, %v2612
    %v3669 = vpack.c.b16 %v2637, %v2625
    %v3670 = vpack.c.b16 %v2638, %v2626
    %v3671 = vpack.c.b16 %v2639, %v2627
    %v3672 = vpack.c.b16 %v2640, %v2628
    %v3673 = vpack.c.b16 %v2641, %v2629
    %v3674 = vpack.c.b16 %v2642, %v2630
    %v3675 = vpack.c.b16 %v2643, %v2631
    %v3676 = vpack.c.b16 %v2644, %v2632
    %v3677 = vpack.c.b16 %v2645, %v2633
    %v3678 = vpack.c.b16 %v2646, %v2634
    %v3679 = vpack.c.b16 %v2647, %v2635
    %v3680 = vpack.c.b16 %v2648, %v2636
    %v3681 = vpack.c.b16 %v2661, %v2649
    %v3682 = vpack.c.b16 %v2662, %v2650
    %v3683 = vpack.c.b16 %v2663, %v2651
    %v3684 = vpack.c.b16 %v2664, %v2652
    %v3685 = vpack.c.b16 %v2665, %v2653
    %v3686 = vpack.c.b16 %v2666, %v2654
    %v3687 = vpack.c.b16 %v2667, %v2655
    %v3688 = vpack.c.b16 %v2668, %v2656
    %v3689 = vpack.c.b16 %v2669, %v2657
    %v3690 = vpack.c.b16 %v2670, %v2658
    %v3691 = vpack.c.b16 %v2671, %v2659
    %v3692 = vpack.c.b16 %v2672, %v2660
    %v3693 = vpack.c.b16 %v2685, %v2673
    %v3694 = vpack.c.b16 %v2686, %v2674
    %v3695 = vpack.c.b16 %v2687, %v2675
    %v3696 = vpack.c.b16 %v2688, %v2676
    %v3697 = vpack.c.b16 %v2689, %v2677
    %v3698 = vpack.c.b16 %v2690, %v2678
    %v3699 = vpack.c.b16 %v2691, %v2679
    %v3700 = vpack.c.b16 %v2692, %v2680
    %v3701 = vpack.c.b16 %v2693, %v2681
    %v3702 = vpack.c.b16 %v2694, %v2682
    %v3703 = vpack.c.b16 %v2695, %v2683
    %v3704 = vpack.c.b16 %v2696, %v2684
    %v3705 = vpack.c.b16 %v2709, %v2697
    %v3706 = vpack.c.b16 %v2710, %v2698
    %v3707 = vpack.c.b16 %v2711, %v2699
    %v3708 = vpack.c.b16 %v2712, %v2700
    %v3709 = vpack.c.b16 %v2713, %v2701
    %v3710 = vpack.c.b16 %v2714, %v2702
    %v3711 = vpack.c.b16 %v2715, %v2703
    %v3712 = vpack.c.b16 %v2716, %v2704
    %v3713 = vpack.c.b16 %v2717, %v2705
    %v3714 = vpack.c.b16 %v2718, %v2706
    %v3715 = vpack.c.b16 %v2719, %v2707
    %v3716 = vpack.c.b16 %v2720, %v2708
    %v3717 = vpack.c.b16 %v2733, %v2721
    %v3718 = vpack.c.b16 %v2734, %v2722
    %v3719 = vpack.c.b16 %v2735, %v2723
    %v3720 = vpack.c.b16 %v2736, %v2724
    %v3721 = vpack.c.b16 %v2737, %v2725
    %v3722 = vpack.c.b16 %v2738, %v2726
    %v3723 = vpack.c.b16 %v2739, %v2727
    %v3724 = vpack.c.b16 %v2740, %v2728
    %v3725 = vpack.c.b16 %v2741, %v2729
    %v3726 = vpack.c.b16 %v2742, %v2730
    %v3727 = vpack.c.b16 %v2743, %v2731
    %v3728 = vpack.c.b16 %v2744, %v2732
    %v3729 = vpack.c.b16 %v2757, %v2745
    %v3730 = vpack.c.b16 %v2758, %v2746
    %v3731 = vpack.c.b16 %v2759, %v2747
    %v3732 = vpack.c.b16 %v2760, %v2748
    %v3733 = vpack.c.b16 %v2761, %v2749
    %v3734 = vpack.c.b16 %v2762, %v2750
    %v3735 = vpack.c.b16 %v2763, %v2751
    %v3736 = vpack.c.b16 %v2764, %v2752
    %v3737 = vpack.c.b16 %v2765, %v2753
    %v3738 = vpack.c.b16 %v2766, %v2754
    %v3739 = vpack.c.b16 %v2767, %v2755
    %v3740 = vpack.c.b16 %v2768, %v2756
    %v3741 = vpack.c.b16 %v2781, %v2769
    %v3742 = vpack.c.b16 %v2782, %v2770
    %v3743 = vpack.c.b16 %v2783, %v2771
    %v3744 = vpack.c.b16 %v2784, %v2772
    %v3745 = vpack.c.b16 %v2785, %v2773
    %v3746 = vpack.c.b16 %v2786, %v2774
    %v3747 = vpack.c.b16 %v2787, %v2775
    %v3748 = vpack.c.b16 %v2788, %v2776
    %v3749 = vpack.c.b16 %v2789, %v2777
    %v3750 = vpack.c.b16 %v2790, %v2778
    %v3751 = vpack.c.b16 %v2791, %v2779
    %v3752 = vpack.c.b16 %v2792, %v2780
    %v3753 = vpack.c.b16 %v2805, %v2793
    %v3754 = vpack.c.b16 %v2806, %v2794
    %v3755 = vpack.c.b16 %v2807, %v2795
    %v3756 = vpack.c.b16 %v2808, %v2796
    %v3757 = vpack.c.b16 %v2809, %v2797
    %v3758 = vpack.c.b16 %v2810, %v2798
    %v3759 = vpack.c.b16 %v2811, %v2799
    %v3760 = vpack.c.b16 %v2812, %v2800
    %v3761 = vpack.c.b16 %v2813, %v2801
    %v3762 = vpack.c.b16 %v2814, %v2802
    %v3763 = vpack.c.b16 %v2815, %v2803
    %v3764 = vpack.c.b16 %v2816, %v2804
    %v3765 = vpack.c.b16 %v2829, %v2817
    %v3766 = vpack.c.b16 %v2830, %v2818
    %v3767 = vpack.c.b16 %v2831, %v2819
    %v3768 = vpack.c.b16 %v2832, %v2820
    %v3769 = vpack.c.b16 %v2833, %v2821
    %v3770 = vpack.c.b16 %v2834, %v2822
    %v3771 = vpack.c.b16 %v2835, %v2823
    %v3772 = vpack.c.b16 %v2836, %v2824
    %v3773 = vpack.c.b16 %v2837, %v2825
    %v3774 = vpack.c.b16 %v2838, %v2826
    %v3775 = vpack.c.b16 %v2839, %v2827
    %v3776 = vpack.c.b16 %v2840, %v2828
    %v3777 = vpack.c.b16 %v2853, %v2841
    %v3778 = vpack.c.b16 %v2854, %v2842
    %v3779 = vpack.c.b16 %v2855, %v2843
    %v3780 = vpack.c.b16 %v2856, %v2844
    %v3781 = vpack.c.b16 %v2857, %v2845
    %v3782 = vpack.c.b16 %v2858, %v2846
    %v3783 = vpack.c.b16 %v2859, %v2847
    %v3784 = vpack.c.b16 %v2860, %v2848
    %v3785 = vpack.c.b16 %v2861, %v2849
    %v3786 = vpack.c.b16 %v2862, %v2850
    %v3787 = vpack.c.b16 %v2863, %v2851
    %v3788 = vpack.c.b16 %v2864, %v2852
    %v3789 = vpack.c.b16 %v2877, %v2865
    %v3790 = vpack.c.b16 %v2878, %v2866
    %v3791 = vpack.c.b16 %v2879, %v2867
    %v3792 = vpack.c.b16 %v2880, %v2868
    %v3793 = vpack.c.b16 %v2881, %v2869
    %v3794 = vpack.c.b16 %v2882, %v2870
    %v3795 = vpack.c.b16 %v2883, %v2871
    %v3796 = vpack.c.b16 %v2884, %v2872
    %v3797 = vpack.c.b16 %v2885, %v2873
    %v3798 = vpack.c.b16 %v2886, %v2874
    %v3799 = vpack.c.b16 %v2887, %v2875
    %v3800 = vpack.c.b16 %v2888, %v2876
    %v3801 = vpack.c.b16 %v2901, %v2889
    %v3802 = vpack.c.b16 %v2902, %v2890
    %v3803 = vpack.c.b16 %v2903, %v2891
    %v3804 = vpack.c.b16 %v2904, %v2892
    %v3805 = vpack.c.b16 %v2905, %v2893
    %v3806 = vpack.c.b16 %v2906, %v2894
    %v3807 = vpack.c.b16 %v2907, %v2895
    %v3808 = vpack.c.b16 %v2908, %v2896
    %v3809 = vpack.c.b16 %v2909, %v2897
    %v3810 = vpack.c.b16 %v2910, %v2898
    %v3811 = vpack.c.b16 %v2911, %v2899
    %v3812 = vpack.c.b16 %v2912, %v2900
    %v3813 = vpack.c.b16 %v2925, %v2913
    %v3814 = vpack.c.b16 %v2926, %v2914
    %v3815 = vpack.c.b16 %v2927, %v2915
    %v3816 = vpack.c.b16 %v2928, %v2916
    %v3817 = vpack.c.b16 %v2929, %v2917
    %v3818 = vpack.c.b16 %v2930, %v2918
    %v3819 = vpack.c.b16 %v2931, %v2919
    %v3820 = vpack.c.b16 %v2932, %v2920
    %v3821 = vpack.c.b16 %v2933, %v2921
    %v3822 = vpack.c.b16 %v2934, %v2922
    %v3823 = vpack.c.b16 %v2935, %v2923
    %v3824 = vpack.c.b16 %v2936, %v2924
    %v3825 = vpack.c.b16 %v2949, %v2937
    %v3826 = vpack.c.b16 %v2950, %v2938
    %v3827 = vpack.c.b16 %v2951, %v2939
    %v3828 = vpack.c.b16 %v2952, %v2940
    %v3829 = vpack.c.b16 %v2953, %v2941
    %v3830 = vpack.c.b16 %v2954, %v2942
    %v3831 = vpack.c.b16 %v2955, %v2943
    %v3832 = vpack.c.b16 %v2956, %v2944
    %v3833 = vpack.c.b16 %v2957, %v2945
    %v3834 = vpack.c.b16 %v2958, %v2946
    %v3835 = vpack.c.b16 %v2959, %v2947
    %v3836 = vpack.c.b16 %v2960, %v2948
    %v3837 = vpack.c.b16 %v2973, %v2961
    %v3838 = vpack.c.b16 %v2974, %v2962
    %v3839 = vpack.c.b16 %v2975, %v2963
    %v3840 = vpack.c.b16 %v2976, %v2964
    %v3841 = vpack.c.b16 %v2977, %v2965
    %v3842 = vpack.c.b16 %v2978, %v2966
    %v3843 = vpack.c.b16 %v2979, %v2967
    %v3844 = vpack.c.b16 %v2980, %v2968
    %v3845 = vpack.c.b16 %v2981, %v2969
    %v3846 = vpack.c.b16 %v2982, %v2970
    %v3847 = vpack.c.b16 %v2983, %v2971
    %v3848 = vpack.c.b16 %v2984, %v2972
    %v3849 = vpack.c.b16 %v2997, %v2985
    %v3850 = vpack.c.b16 %v2998, %v2986
    %v3851 = vpack.c.b16 %v2999, %v2987
    %v3852 = vpack.c.b16 %v3000, %v2988
    %v3853 = vpack.c.b16 %v3001, %v2989
    %v3854 = vpack.c.b16 %v3002, %v2990
    %v3855 = vpack.c.b16 %v3003, %v2991
    %v3856 = vpack.c.b16 %v3004, %v2992
    %v3857 = vpack.c.b16 %v3005, %v2993
    %v3858 = vpack.c.b16 %v3006, %v2994
    %v3859 = vpack.c.b16 %v3007, %v2995
    %v3860 = vpack.c.b16 %v3008, %v2996
    %v3861 = vpack.c.b16 %v3021, %v3009
    %v3862 = vpack.c.b16 %v3022, %v3010
    %v3863 = vpack.c.b16 %v3023, %v3011
    %v3864 = vpack.c.b16 %v3024, %v3012
    %v3865 = vpack.c.b16 %v3025, %v3013
    %v3866 = vpack.c.b16 %v3026, %v3014
    %v3867 = vpack.c.b16 %v3027, %v3015
    %v3868 = vpack.c.b16 %v3028, %v3016
    %v3869 = vpack.c.b16 %v3029, %v3017
    %v3870 = vpack.c.b16 %v3030, %v3018
    %v3871 = vpack.c.b16 %v3031, %v3019
    %v3872 = vpack.c.b16 %v3032, %v3020
    %v3873 = vpack.c.b16 %v3045, %v3033
    %v3874 = vpack.c.b16 %v3046, %v3034
    %v3875 = vpack.c.b16 %v3047, %v3035
    %v3876 = vpack.c.b16 %v3048, %v3036
    %v3877 = vpack.c.b16 %v3049, %v3037
    %v3878 = vpack.c.b16 %v3050, %v3038
    %v3879 = vpack.c.b16 %v3051, %v3039
    %v3880 = vpack.c.b16 %v3052, %v3040
    %v3881 = vpack.c.b16 %v3053, %v3041
    %v3882 = vpack.c.b16 %v3054, %v3042
    %v3883 = vpack.c.b16 %v3055, %v3043
    %v3884 = vpack.c.b16 %v3056, %v3044
    %v3885 = vpack.c.b16 %v3069, %v3057
    %v3886 = vpack.c.b16 %v3070, %v3058
    %v3887 = vpack.c.b16 %v3071, %v3059
    %v3888 = vpack.c.b16 %v3072, %v3060
    %v3889 = vpack.c.b16 %v3073, %v3061
    %v3890 = vpack.c.b16 %v3074, %v3062
    %v3891 = vpack.c.b16 %v3075, %v3063
    %v3892 = vpack.c.b16 %v3076, %v3064
    %v3893 = vpack.c.b16 %v3077, %v3065
    %v3894 = vpack.c.b16 %v3078, %v3066
    %v3895 = vpack.c.b16 %v3079, %v3067
    %v3896 = vpack.c.b16 %v3080, %v3068
    %v3897 = vpack.c.b16 %v3093, %v3081
    %v3898 = vpack.c.b16 %v3094, %v3082
    %v3899 = vpack.c.b16 %v3095, %v3083
    %v3900 = vpack.c.b16 %v3096, %v3084
    %v3901 = vpack.c.b16 %v3097, %v3085
    %v3902 = vpack.c.b16 %v3098, %v3086
    %v3903 = vpack.c.b16 %v3099, %v3087
    %v3904 = vpack.c.b16 %v3100, %v3088
    %v3905 = vpack.c.b16 %v3101, %v3089
    %v3906 = vpack.c.b16 %v3102, %v3090
    %v3907 = vpack.c.b16 %v3103, %v3091
    %v3908 = vpack.c.b16 %v3104, %v3092
    %v3909 = vpack.c.b16 %v3117, %v3105
    %v3910 = vpack.c.b16 %v3118, %v3106
    %v3911 = vpack.c.b16 %v3119, %v3107
    %v3912 = vpack.c.b16 %v3120, %v3108
    %v3913 = vpack.c.b16 %v3121, %v3109
    %v3914 = vpack.c.b16 %v3122, %v3110
    %v3915 = vpack.c.b16 %v3123, %v3111
    %v3916 = vpack.c.b16 %v3124, %v3112
    %v3917 = vpack.c.b16 %v3125, %v3113
    %v3918 = vpack.c.b16 %v3126, %v3114
    %v3919 = vpack.c.b16 %v3127, %v3115
    %v3920 = vpack.c.b16 %v3128, %v3116
    %v3921 = vpack.c.b16 %v3141, %v3129
    %v3922 = vpack.c.b16 %v3142, %v3130
    %v3923 = vpack.c.b16 %v3143, %v3131
    %v3924 = vpack.c.b16 %v3144, %v3132
    %v3925 = vpack.c.b16 %v3145, %v3133
    %v3926 = vpack.c.b16 %v3146, %v3134
    %v3927 = vpack.c.b16 %v3147, %v3135
    %v3928 = vpack.c.b16 %v3148, %v3136
    %v3929 = vpack.c.b16 %v3149, %v3137
    %v3930 = vpack.c.b16 %v3150, %v3138
    %v3931 = vpack.c.b16 %v3151, %v3139
    %v3932 = vpack.c.b16 %v3152, %v3140
    %v3933 = vpack.c.b16 %v3165, %v3153
    %v3934 = vpack.c.b16 %v3166, %v3154
    %v3935 = vpack.c.b16 %v3167, %v3155
    %v3936 = vpack.c.b16 %v3168, %v3156
    %v3937 = vpack.c.b16 %v3169, %v3157
    %v3938 = vpack.c.b16 %v3170, %v3158
    %v3939 = vpack.c.b16 %v3171, %v3159
    %v3940 = vpack.c.b16 %v3172, %v3160
    %v3941 = vpack.c.b16 %v3173, %v3161
    %v3942 = vpack.c.b16 %v3174, %v3162
    %v3943 = vpack.c.b16 %v3175, %v3163
    %v3944 = vpack.c.b16 %v3176, %v3164
    %v3945 = vpack.c.b16 %v3189, %v3177
    %v3946 = vpack.c.b16 %v3190, %v3178
    %v3947 = vpack.c.b16 %v3191, %v3179
    %v3948 = vpack.c.b16 %v3192, %v3180
    %v3949 = vpack.c.b16 %v3193, %v3181
    %v3950 = vpack.c.b16 %v3194, %v3182
    %v3951 = vpack.c.b16 %v3195, %v3183
    %v3952 = vpack.c.b16 %v3196, %v3184
    %v3953 = vpack.c.b16 %v3197, %v3185
    %v3954 = vpack.c.b16 %v3198, %v3186
    %v3955 = vpack.c.b16 %v3199, %v3187
    %v3956 = vpack.c.b16 %v3200, %v3188
    %v3957 = vpack.c.b16 %v3213, %v3201
    %v3958 = vpack.c.b16 %v3214, %v3202
    %v3959 = vpack.c.b16 %v3215, %v3203
    %v3960 = vpack.c.b16 %v3216, %v3204
    %v3961 = vpack.c.b16 %v3217, %v3205
    %v3962 = vpack.c.b16 %v3218, %v3206
    %v3963 = vpack.c.b16 %v3219, %v3207
    %v3964 = vpack.c.b16 %v3220, %v3208
    %v3965 = vpack.c.b16 %v3221, %v3209
    %v3966 = vpack.c.b16 %v3222, %v3210
    %v3967 = vpack.c.b16 %v3223, %v3211
    %v3968 = vpack.c.b16 %v3224, %v3212
    %v3969 = vpack.c.b16 %v3237, %v3225
    %v3970 = vpack.c.b16 %v3238, %v3226
    %v3971 = vpack.c.b16 %v3239, %v3227
    %v3972 = vpack.c.b16 %v3240, %v3228
    %v3973 = vpack.c.b16 %v3241, %v3229
    %v3974 = vpack.c.b16 %v3242, %v3230
    %v3975 = vpack.c.b16 %v3243, %v3231
    %v3976 = vpack.c.b16 %v3244, %v3232
    %v3977 = vpack.c.b16 %v3245, %v3233
    %v3978 = vpack.c.b16 %v3246, %v3234
    %v3979 = vpack.c.b16 %v3247, %v3235
    %v3980 = vpack.c.b16 %v3248, %v3236
    %v3981 = vpack.c.b16 %v3261, %v3249
    %v3982 = vpack.c.b16 %v3262, %v3250
    %v3983 = vpack.c.b16 %v3263, %v3251
    %v3984 = vpack.c.b16 %v3264, %v3252
    %v3985 = vpack.c.b16 %v3265, %v3253
    %v3986 = vpack.c.b16 %v3266, %v3254
    %v3987 = vpack.c.b16 %v3267, %v3255
    %v3988 = vpack.c.b16 %v3268, %v3256
    %v3989 = vpack.c.b16 %v3269, %v3257
    %v3990 = vpack.c.b16 %v3270, %v3258
    %v3991 = vpack.c.b16 %v3271, %v3259
    %v3992 = vpack.c.b16 %v3272, %v3260
    %v3993 = vpack.c.b16 %v3285, %v3273
    %v3994 = vpack.c.b16 %v3286, %v3274
    %v3995 = vpack.c.b16 %v3287, %v3275
    %v3996 = vpack.c.b16 %v3288, %v3276
    %v3997 = vpack.c.b16 %v3289, %v3277
    %v3998 = vpack.c.b16 %v3290, %v3278
    %v3999 = vpack.c.b16 %v3291, %v3279
    %v4000 = vpack.c.b16 %v3292, %v3280
    %v4001 = vpack.c.b16 %v3293, %v3281
    %v4002 = vpack.c.b16 %v3294, %v3282
    %v4003 = vpack.c.b16 %v3295, %v3283
    %v4004 = vpack.c.b16 %v3296, %v3284
    %v4005 = vpack.c.b16 %v3309, %v3297
    %v4006 = vpack.c.b16 %v3310, %v3298
    %v4007 = vpack.c.b16 %v3311, %v3299
    %v4008 = vpack.c.b16 %v3312, %v3300
    %v4009 = vpack.c.b16 %v3313, %v3301
    %v4010 = vpack.c.b16 %v3314, %v3302
    %v4011 = vpack.c.b16 %v3315, %v3303
    %v4012 = vpack.c.b16 %v3316, %v3304
    %v4013 = vpack.c.b16 %v3317, %v3305
    %v4014 = vpack.c.b16 %v3318, %v3306
    %v4015 = vpack.c.b16 %v3319, %v3307
    %v4016 = vpack.c.b16 %v3320, %v3308
    %v4017 = vpack.c.b16 %v3333, %v3321
    %v4018 = vpack.c.b16 %v3334, %v3322
    %v4019 = vpack.c.b16 %v3335, %v3323
    %v4020 = vpack.c.b16 %v3336, %v3324
    %v4021 = vpack.c.b16 %v3337, %v3325
    %v4022 = vpack.c.b16 %v3338, %v3326
    %v4023 = vpack.c.b16 %v3339, %v3327
    %v4024 = vpack.c.b16 %v3340, %v3328
    %v4025 = vpack.c.b16 %v3341, %v3329
    %v4026 = vpack.c.b16 %v3342, %v3330
    %v4027 = vpack.c.b16 %v3343, %v3331
    %v4028 = vpack.c.b16 %v3344, %v3332
    %v4029 = vpack.c.b16 %v3357, %v3345
    %v4030 = vpack.c.b16 %v3358, %v3346
    %v4031 = vpack.c.b16 %v3359, %v3347
    %v4032 = vpack.c.b16 %v3360, %v3348
    %v4033 = vpack.c.b16 %v3361, %v3349
    %v4034 = vpack.c.b16 %v3362, %v3350
    %v4035 = vpack.c.b16 %v3363, %v3351
    %v4036 = vpack.c.b16 %v3364, %v3352
    %v4037 = vpack.c.b16 %v3365, %v3353
    %v4038 = vpack.c.b16 %v3366, %v3354
    %v4039 = vpack.c.b16 %v3367, %v3355
    %v4040 = vpack.c.b16 %v3368, %v3356
    %v4041 = vpack.c.b16 %v3381, %v3369
    %v4042 = vpack.c.b16 %v3382, %v3370
    %v4043 = vpack.c.b16 %v3383, %v3371
    %v4044 = vpack.c.b16 %v3384, %v3372
    %v4045 = vpack.c.b16 %v3385, %v3373
    %v4046 = vpack.c.b16 %v3386, %v3374
    %v4047 = vpack.c.b16 %v3387, %v3375
    %v4048 = vpack.c.b16 %v3388, %v3376
    %v4049 = vpack.c.b16 %v3389, %v3377
    %v4050 = vpack.c.b16 %v3390, %v3378
    %v4051 = vpack.c.b16 %v3391, %v3379
    %v4052 = vpack.c.b16 %v3392, %v3380
    %v4053 = vpack.c.b16 %v3405, %v3393
    %v4054 = vpack.c.b16 %v3406, %v3394
    %v4055 = vpack.c.b16 %v3407, %v3395
    %v4056 = vpack.c.b16 %v3408, %v3396
    %v4057 = vpack.c.b16 %v3409, %v3397
    %v4058 = vpack.c.b16 %v3410, %v3398
    %v4059 = vpack.c.b16 %v3411, %v3399
    %v4060 = vpack.c.b16 %v3412, %v3400
    %v4061 = vpack.c.b16 %v3413, %v3401
    %v4062 = vpack.c.b16 %v3414, %v3402
    %v4063 = vpack.c.b16 %v3415, %v3403
    %v4064 = vpack.c.b16 %v3416, %v3404
    %v4065 = vpack.c.b16 %v3429, %v3417
    %v4066 = vpack.c.b16 %v3430, %v3418
    %v4067 = vpack.c.b16 %v3431, %v3419
    %v4068 = vpack.c.b16 %v3432, %v3420
    %v4069 = vpack.c.b16 %v3433, %v3421
    %v4070 = vpack.c.b16 %v3434, %v3422
    %v4071 = vpack.c.b16 %v3435, %v3423
    %v4072 = vpack.c.b16 %v3436, %v3424
    %v4073 = vpack.c.b16 %v3437, %v3425
    %v4074 = vpack.c.b16 %v3438, %v3426
    %v4075 = vpack.c.b16 %v3439, %v3427
    %v4076 = vpack.c.b16 %v3440, %v3428
    %v4077 = vpack.c.b16 %v3453, %v3441
    %v4078 = vpack.c.b16 %v3454, %v3442
    %v4079 = vpack.c.b16 %v3455, %v3443
    %v4080 = vpack.c.b16 %v3456, %v3444
    %v4081 = vpack.c.b16 %v3457, %v3445
    %v4082 = vpack.c.b16 %v3458, %v3446
    %v4083 = vpack.c.b16 %v3459, %v3447
    %v4084 = vpack.c.b16 %v3460, %v3448
    %v4085 = vpack.c.b16 %v3461, %v3449
    %v4086 = vpack.c.b16 %v3462, %v3450
    %v4087 = vpack.c.b16 %v3463, %v3451
    %v4088 = vpack.c.b16 %v3464, %v3452
    %v4089 = vpack.c.b16 %v3477, %v3465
    %v4090 = vpack.c.b16 %v3478, %v3466
    %v4091 = vpack.c.b16 %v3479, %v3467
    %v4092 = vpack.c.b16 %v3480, %v3468
    %v4093 = vpack.c.b16 %v3481, %v3469
    %v4094 = vpack.c.b16 %v3482, %v3470
    %v4095 = vpack.c.b16 %v3483, %v3471
    %v4096 = vpack.c.b16 %v3484, %v3472
    %v4097 = vpack.c.b16 %v3485, %v3473
    %v4098 = vpack.c.b16 %v3486, %v3474
    %v4099 = vpack.c.b16 %v3487, %v3475
    %v4100 = vpack.c.b16 %v3488, %v3476
    %v4101 = vpack.c.b16 %v3501, %v3489
    %v4102 = vpack.c.b16 %v3502, %v3490
    %v4103 = vpack.c.b16 %v3503, %v3491
    %v4104 = vpack.c.b16 %v3504, %v3492
    %v4105 = vpack.c.b16 %v3505, %v3493
    %v4106 = vpack.c.b16 %v3506, %v3494
    %v4107 = vpack.c.b16 %v3507, %v3495
    %v4108 = vpack.c.b16 %v3508, %v3496
    %v4109 = vpack.c.b16 %v3509, %v3497
    %v4110 = vpack.c.b16 %v3510, %v3498
    %v4111 = vpack.c.b16 %v3511, %v3499
    %v4112 = vpack.c.b16 %v3512, %v3500
    %v4113 = vpack.c.b16 %v3525, %v3513
    %v4114 = vpack.c.b16 %v3526, %v3514
    %v4115 = vpack.c.b16 %v3527, %v3515
    %v4116 = vpack.c.b16 %v3528, %v3516
    %v4117 = vpack.c.b16 %v3529, %v3517
    %v4118 = vpack.c.b16 %v3530, %v3518
    %v4119 = vpack.c.b16 %v3531, %v3519
    %v4120 = vpack.c.b16 %v3532, %v3520
    %v4121 = vpack.c.b16 %v3533, %v3521
    %v4122 = vpack.c.b16 %v3534, %v3522
    %v4123 = vpack.c.b16 %v3535, %v3523
    %v4124 = vpack.c.b16 %v3536, %v3524
    %v4125 = vpack.c.b16 %v3549, %v3537
    %v4126 = vpack.c.b16 %v3550, %v3538
    %v4127 = vpack.c.b16 %v3551, %v3539
    %v4128 = vpack.c.b16 %v3552, %v3540
    %v4129 = vpack.c.b16 %v3553, %v3541
    %v4130 = vpack.c.b16 %v3554, %v3542
    %v4131 = vpack.c.b16 %v3555, %v3543
    %v4132 = vpack.c.b16 %v3556, %v3544
    %v4133 = vpack.c.b16 %v3557, %v3545
    %v4134 = vpack.c.b16 %v3558, %v3546
    %v4135 = vpack.c.b16 %v3559, %v3547
    %v4136 = vpack.c.b16 %v3560, %v3548
    %4713 = vmatprep.subr.bf16.mxu0 %v3562
    %4714 = vmatpush1.bf16.msra.mxu0 %v3561
    %4715 = vmatprep.subr.bf16.mxu0 %v3574
    %4716 = vmatpush1.bf16.msra.mxu0 %v3573
    %4717 = vmatprep.subr.bf16.mxu0 %v3586
    %4718 = vmatpush1.bf16.msra.mxu0 %v3585
    %4719 = vmatprep.subr.bf16.mxu0 %v3598
    %4720 = vmatpush1.bf16.msra.mxu0 %v3597
    %4721 = vmatprep.subr.bf16.mxu0 %v3610
    %4722 = vmatpush1.bf16.msra.mxu0 %v3609
    %4723 = vmatprep.subr.bf16.mxu0 %v3622
    %4724 = vmatpush1.bf16.msra.mxu0 %v3621
    %4725 = vmatprep.subr.bf16.mxu0 %v3634
    %4726 = vmatpush1.bf16.msra.mxu0 %v3633
    %4727 = vmatprep.subr.bf16.mxu0 %v3646
    %4728 = vmatpush1.bf16.msra.mxu0 %v3645
    %4729 = vmatprep.subr.bf16.mxu0 %v3658
    %4730 = vmatpush1.bf16.msra.mxu0 %v3657
    %4731 = vmatprep.subr.bf16.mxu0 %v3670
    %4732 = vmatpush1.bf16.msra.mxu0 %v3669
    %4733 = vmatprep.subr.bf16.mxu0 %v3682
    %4734 = vmatpush1.bf16.msra.mxu0 %v3681
    %4735 = vmatprep.subr.bf16.mxu0 %v3694
    %4736 = vmatpush1.bf16.msra.mxu0 %v3693
    %4737 = vmatprep.subr.bf16.mxu0 %v3706
    %4738 = vmatpush1.bf16.msra.mxu0 %v3705
    %4739 = vmatprep.subr.bf16.mxu0 %v3718
    %4740 = vmatpush1.bf16.msra.mxu0 %v3717
    %4741 = vmatprep.subr.bf16.mxu0 %v3730
    %4742 = vmatpush1.bf16.msra.mxu0 %v3729
    %4743 = vmatprep.subr.bf16.mxu0 %v3742
    %4744 = vmatpush1.bf16.msra.mxu0 %v3741
    %4745 = vmatprep.mubr.bf16.mxu0 %v1251
    %4746 = vmatmul.mubr.bf16.gmra.mrb[0].mxu0 %v1250
    %v4747 = vpop.f32.mrb[0].mxu0
    %v4748 = vadd.f32 0.0, %v4747
    %v4749 = vpop.f32.mrb[0].mxu0
    %v4750 = vadd.f32 0.0, %v4749
    %v4751 = vpop.f32.mrb[0].mxu0
    %v4752 = vpop.f32.mrb[0].mxu0
    %4753 = vdwg.mxu0
    %4754 = vmatprep.subr.bf16.mxu0 %v3754
    %4755 = vmatpush1.bf16.msra.mxu0 %v3753
    %4756 = vmatprep.subr.bf16.mxu0 %v3766
    %4757 = vmatpush1.bf16.msra.mxu0 %v3765
    %4758 = vmatprep.subr.bf16.mxu0 %v3778
    %4759 = vmatpush1.bf16.msra.mxu0 %v3777
    %4760 = vmatprep.subr.bf16.mxu0 %v3790
    %4761 = vmatpush1.bf16.msra.mxu0 %v3789
    %4762 = vmatprep.subr.bf16.mxu0 %v3802
    %4763 = vmatpush1.bf16.msra.mxu0 %v3801
    %4764 = vmatprep.subr.bf16.mxu0 %v3814
    %4765 = vmatpush1.bf16.msra.mxu0 %v3813
    %4766 = vmatprep.subr.bf16.mxu0 %v3826
    %4767 = vmatpush1.bf16.msra.mxu0 %v3825
    %4768 = vmatprep.subr.bf16.mxu0 %v3838
    %4769 = vmatpush1.bf16.msra.mxu0 %v3837
    %4770 = vmatprep.subr.bf16.mxu0 %v3850
    %4771 = vmatpush1.bf16.msra.mxu0 %v3849
    %4772 = vmatprep.subr.bf16.mxu0 %v3862
    %4773 = vmatpush1.bf16.msra.mxu0 %v3861
    %4774 = vmatprep.subr.bf16.mxu0 %v3874
    %4775 = vmatpush1.bf16.msra.mxu0 %v3873
    %4776 = vmatprep.subr.bf16.mxu0 %v3886
    %4777 = vmatpush1.bf16.msra.mxu0 %v3885
    %4778 = vmatprep.subr.bf16.mxu0 %v3898
    %4779 = vmatpush1.bf16.msra.mxu0 %v3897
    %4780 = vmatprep.subr.bf16.mxu0 %v3910
    %4781 = vmatpush1.bf16.msra.mxu0 %v3909
    %4782 = vmatprep.subr.bf16.mxu0 %v3922
    %4783 = vmatpush1.bf16.msra.mxu0 %v3921
    %4784 = vmatprep.subr.bf16.mxu0 %v3934
    %4785 = vmatpush1.bf16.msra.mxu0 %v3933
    %4786 = vmatprep.mubr.bf16.mxu0 %v1253
    %4787 = vmatmul.mubr.bf16.gmra.mrb[0].mxu0 %v1252
    %v4788 = vpop.f32.mrb[0].mxu0
    %v4789 = vadd.f32 %v4748, %v4788
    %v4790 = vpop.f32.mrb[0].mxu0
    %v4791 = vadd.f32 %v4750, %v4790
    %v4792 = vpop.f32.mrb[0].mxu0
    %v4793 = vpop.f32.mrb[0].mxu0
    %4794 = vdwg.mxu0
    %4795 = vmatprep.subr.bf16.mxu0 %v3946
    %4796 = vmatpush1.bf16.msra.mxu0 %v3945
    %4797 = vmatprep.subr.bf16.mxu0 %v3958
    %4798 = vmatpush1.bf16.msra.mxu0 %v3957
    %4799 = vmatprep.subr.bf16.mxu0 %v3970
    %4800 = vmatpush1.bf16.msra.mxu0 %v3969
    %4801 = vmatprep.subr.bf16.mxu0 %v3982
    %4802 = vmatpush1.bf16.msra.mxu0 %v3981
    %4803 = vmatprep.subr.bf16.mxu0 %v3994
    %4804 = vmatpush1.bf16.msra.mxu0 %v3993
    %4805 = vmatprep.subr.bf16.mxu0 %v4006
    %4806 = vmatpush1.bf16.msra.mxu0 %v4005
    %4807 = vmatprep.subr.bf16.mxu0 %v4018
    %4808 = vmatpush1.bf16.msra.mxu0 %v4017
    %4809 = vmatprep.subr.bf16.mxu0 %v4030
    %4810 = vmatpush1.bf16.msra.mxu0 %v4029
    %4811 = vmatprep.subr.bf16.mxu0 %v4042
    %4812 = vmatpush1.bf16.msra.mxu0 %v4041
    %4813 = vmatprep.subr.bf16.mxu0 %v4054
    %4814 = vmatpush1.bf16.msra.mxu0 %v4053
    %4815 = vmatprep.subr.bf16.mxu0 %v4066
    %4816 = vmatpush1.bf16.msra.mxu0 %v4065
    %4817 = vmatprep.subr.bf16.mxu0 %v4078
    %4818 = vmatpush1.bf16.msra.mxu0 %v4077
    %4819 = vmatprep.subr.bf16.mxu0 %v4090
    %4820 = vmatpush1.bf16.msra.mxu0 %v4089
    %4821 = vmatprep.subr.bf16.mxu0 %v4102
    %4822 = vmatpush1.bf16.msra.mxu0 %v4101
    %4823 = vmatprep.subr.bf16.mxu0 %v4114
    %4824 = vmatpush1.bf16.msra.mxu0 %v4113
    %4825 = vmatprep.subr.bf16.mxu0 %v4126
    %4826 = vmatpush1.bf16.msra.mxu0 %v4125
    %4827 = vmatprep.mubr.bf16.mxu0 %v1255
    %4828 = vmatmul.mubr.bf16.gmra.mrb[0].mxu0 %v1254
    %v4829 = vpop.f32.mrb[0].mxu0
    %v4830 = vadd.f32 %v4789, %v4829
    %v4831 = vpop.f32.mrb[0].mxu0
    %v4832 = vadd.f32 %v4791, %v4831
    %v4833 = vpop.f32.mrb[0].mxu0
    %v4834 = vpop.f32.mrb[0].mxu0
    %4835 = vdwg.mxu0
    %4836 = vmatprep.subr.bf16.mxu0 %v3564
    %4837 = vmatpush1.bf16.msra.mxu0 %v3563
    %4838 = vmatprep.subr.bf16.mxu0 %v3576
    %4839 = vmatpush1.bf16.msra.mxu0 %v3575
    %4840 = vmatprep.subr.bf16.mxu0 %v3588
    %4841 = vmatpush1.bf16.msra.mxu0 %v3587
    %4842 = vmatprep.subr.bf16.mxu0 %v3600
    %4843 = vmatpush1.bf16.msra.mxu0 %v3599
    %4844 = vmatprep.subr.bf16.mxu0 %v3612
    %4845 = vmatpush1.bf16.msra.mxu0 %v3611
    %4846 = vmatprep.subr.bf16.mxu0 %v3624
    %4847 = vmatpush1.bf16.msra.mxu0 %v3623
    %4848 = vmatprep.subr.bf16.mxu0 %v3636
    %4849 = vmatpush1.bf16.msra.mxu0 %v3635
    %4850 = vmatprep.subr.bf16.mxu0 %v3648
    %4851 = vmatpush1.bf16.msra.mxu0 %v3647
    %4852 = vmatprep.subr.bf16.mxu0 %v3660
    %4853 = vmatpush1.bf16.msra.mxu0 %v3659
    %4854 = vmatprep.subr.bf16.mxu0 %v3672
    %4855 = vmatpush1.bf16.msra.mxu0 %v3671
    %4856 = vmatprep.subr.bf16.mxu0 %v3684
    %4857 = vmatpush1.bf16.msra.mxu0 %v3683
    %4858 = vmatprep.subr.bf16.mxu0 %v3696
    %4859 = vmatpush1.bf16.msra.mxu0 %v3695
    %4860 = vmatprep.subr.bf16.mxu0 %v3708
    %4861 = vmatpush1.bf16.msra.mxu0 %v3707
    %4862 = vmatprep.subr.bf16.mxu0 %v3720
    %4863 = vmatpush1.bf16.msra.mxu0 %v3719
    %4864 = vmatprep.subr.bf16.mxu0 %v3732
    %4865 = vmatpush1.bf16.msra.mxu0 %v3731
    %4866 = vmatprep.subr.bf16.mxu0 %v3744
    %4867 = vmatpush1.bf16.msra.mxu0 %v3743
    %4868 = vmatprep.mubr.bf16.mxu0 %v1251
    %4869 = vmatmul.mubr.bf16.gmra.mrb[0].mxu0 %v1250
    %v4870 = vpop.f32.mrb[0].mxu0
    %v4871 = vadd.f32 0.0, %v4870
    %v4872 = vpop.f32.mrb[0].mxu0
    %v4873 = vadd.f32 0.0, %v4872
    %v4874 = vpop.f32.mrb[0].mxu0
    %v4875 = vpop.f32.mrb[0].mxu0
    %4876 = vdwg.mxu0
    %4877 = vmatprep.subr.bf16.mxu0 %v3756
    %4878 = vmatpush1.bf16.msra.mxu0 %v3755
    %4879 = vmatprep.subr.bf16.mxu0 %v3768
    %4880 = vmatpush1.bf16.msra.mxu0 %v3767
    %4881 = vmatprep.subr.bf16.mxu0 %v3780
    %4882 = vmatpush1.bf16.msra.mxu0 %v3779
    %4883 = vmatprep.subr.bf16.mxu0 %v3792
    %4884 = vmatpush1.bf16.msra.mxu0 %v3791
    %4885 = vmatprep.subr.bf16.mxu0 %v3804
    %4886 = vmatpush1.bf16.msra.mxu0 %v3803
    %4887 = vmatprep.subr.bf16.mxu0 %v3816
    %4888 = vmatpush1.bf16.msra.mxu0 %v3815
    %4889 = vmatprep.subr.bf16.mxu0 %v3828
    %4890 = vmatpush1.bf16.msra.mxu0 %v3827
    %4891 = vmatprep.subr.bf16.mxu0 %v3840
    %4892 = vmatpush1.bf16.msra.mxu0 %v3839
    %4893 = vmatprep.subr.bf16.mxu0 %v3852
    %4894 = vmatpush1.bf16.msra.mxu0 %v3851
    %4895 = vmatprep.subr.bf16.mxu0 %v3864
    %4896 = vmatpush1.bf16.msra.mxu0 %v3863
    %4897 = vmatprep.subr.bf16.mxu0 %v3876
    %4898 = vmatpush1.bf16.msra.mxu0 %v3875
    %4899 = vmatprep.subr.bf16.mxu0 %v3888
    %4900 = vmatpush1.bf16.msra.mxu0 %v3887
    %4901 = vmatprep.subr.bf16.mxu0 %v3900
    %4902 = vmatpush1.bf16.msra.mxu0 %v3899
    %4903 = vmatprep.subr.bf16.mxu0 %v3912
    %4904 = vmatpush1.bf16.msra.mxu0 %v3911
    %4905 = vmatprep.subr.bf16.mxu0 %v3924
    %4906 = vmatpush1.bf16.msra.mxu0 %v3923
    %4907 = vmatprep.subr.bf16.mxu0 %v3936
    %4908 = vmatpush1.bf16.msra.mxu0 %v3935
    %4909 = vmatprep.mubr.bf16.mxu0 %v1253
    %4910 = vmatmul.mubr.bf16.gmra.mrb[0].mxu0 %v1252
    %v4911 = vpop.f32.mrb[0].mxu0
    %v4912 = vadd.f32 %v4871, %v4911
    %v4913 = vpop.f32.mrb[0].mxu0
    %v4914 = vadd.f32 %v4873, %v4913
    %v4915 = vpop.f32.mrb[0].mxu0
    %v4916 = vpop.f32.mrb[0].mxu0
    %4917 = vdwg.mxu0
    %4918 = vmatprep.subr.bf16.mxu0 %v3948
    %4919 = vmatpush1.bf16.msra.mxu0 %v3947
    %4920 = vmatprep.subr.bf16.mxu0 %v3960
    %4921 = vmatpush1.bf16.msra.mxu0 %v3959
    %4922 = vmatprep.subr.bf16.mxu0 %v3972
    %4923 = vmatpush1.bf16.msra.mxu0 %v3971
    %4924 = vmatprep.subr.bf16.mxu0 %v3984
    %4925 = vmatpush1.bf16.msra.mxu0 %v3983
    %4926 = vmatprep.subr.bf16.mxu0 %v3996
    %4927 = vmatpush1.bf16.msra.mxu0 %v3995
    %4928 = vmatprep.subr.bf16.mxu0 %v4008
    %4929 = vmatpush1.bf16.msra.mxu0 %v4007
    %4930 = vmatprep.subr.bf16.mxu0 %v4020
    %4931 = vmatpush1.bf16.msra.mxu0 %v4019
    %4932 = vmatprep.subr.bf16.mxu0 %v4032
    %4933 = vmatpush1.bf16.msra.mxu0 %v4031
    %4934 = vmatprep.subr.bf16.mxu0 %v4044
    %4935 = vmatpush1.bf16.msra.mxu0 %v4043
    %4936 = vmatprep.subr.bf16.mxu0 %v4056
    %4937 = vmatpush1.bf16.msra.mxu0 %v4055
    %4938 = vmatprep.subr.bf16.mxu0 %v4068
    %4939 = vmatpush1.bf16.msra.mxu0 %v4067
    %4940 = vmatprep.subr.bf16.mxu0 %v4080
    %4941 = vmatpush1.bf16.msra.mxu0 %v4079
    %4942 = vmatprep.subr.bf16.mxu0 %v4092
    %4943 = vmatpush1.bf16.msra.mxu0 %v4091
    %4944 = vmatprep.subr.bf16.mxu0 %v4104
    %4945 = vmatpush1.bf16.msra.mxu0 %v4103
    %4946 = vmatprep.subr.bf16.mxu0 %v4116
    %4947 = vmatpush1.bf16.msra.mxu0 %v4115
    %4948 = vmatprep.subr.bf16.mxu0 %v4128
    %4949 = vmatpush1.bf16.msra.mxu0 %v4127
    %4950 = vmatprep.mubr.bf16.mxu0 %v1255
    %4951 = vmatmul.mubr.bf16.gmra.mrb[0].mxu0 %v1254
    %v4952 = vpop.f32.mrb[0].mxu0
    %v4953 = vadd.f32 %v4912, %v4952
    %v4954 = vpop.f32.mrb[0].mxu0
    %v4955 = vadd.f32 %v4914, %v4954
    %v4956 = vpop.f32.mrb[0].mxu0
    %v4957 = vpop.f32.mrb[0].mxu0
    %4958 = vdwg.mxu0
    %4959 = vmatprep.subr.bf16.mxu0 %v3566
    %4960 = vmatpush1.bf16.msra.mxu0 %v3565
    %4961 = vmatprep.subr.bf16.mxu0 %v3578
    %4962 = vmatpush1.bf16.msra.mxu0 %v3577
    %4963 = vmatprep.subr.bf16.mxu0 %v3590
    %4964 = vmatpush1.bf16.msra.mxu0 %v3589
    %4965 = vmatprep.subr.bf16.mxu0 %v3602
    %4966 = vmatpush1.bf16.msra.mxu0 %v3601
    %4967 = vmatprep.subr.bf16.mxu0 %v3614
    %4968 = vmatpush1.bf16.msra.mxu0 %v3613
    %4969 = vmatprep.subr.bf16.mxu0 %v3626
    %4970 = vmatpush1.bf16.msra.mxu0 %v3625
    %4971 = vmatprep.subr.bf16.mxu0 %v3638
    %4972 = vmatpush1.bf16.msra.mxu0 %v3637
    %4973 = vmatprep.subr.bf16.mxu0 %v3650
    %4974 = vmatpush1.bf16.msra.mxu0 %v3649
    %4975 = vmatprep.subr.bf16.mxu0 %v3662
    %4976 = vmatpush1.bf16.msra.mxu0 %v3661
    %4977 = vmatprep.subr.bf16.mxu0 %v3674
    %4978 = vmatpush1.bf16.msra.mxu0 %v3673
    %4979 = vmatprep.subr.bf16.mxu0 %v3686
    %4980 = vmatpush1.bf16.msra.mxu0 %v3685
    %4981 = vmatprep.subr.bf16.mxu0 %v3698
    %4982 = vmatpush1.bf16.msra.mxu0 %v3697
    %4983 = vmatprep.subr.bf16.mxu0 %v3710
    %4984 = vmatpush1.bf16.msra.mxu0 %v3709
    %4985 = vmatprep.subr.bf16.mxu0 %v3722
    %4986 = vmatpush1.bf16.msra.mxu0 %v3721
    %4987 = vmatprep.subr.bf16.mxu0 %v3734
    %4988 = vmatpush1.bf16.msra.mxu0 %v3733
    %4989 = vmatprep.subr.bf16.mxu0 %v3746
    %4990 = vmatpush1.bf16.msra.mxu0 %v3745
    %4991 = vmatprep.mubr.bf16.mxu0 %v1251
    %4992 = vmatmul.mubr.bf16.gmra.mrb[0].mxu0 %v1250
    %v4993 = vpop.f32.mrb[0].mxu0
    %v4994 = vadd.f32 0.0, %v4993
    %v4995 = vpop.f32.mrb[0].mxu0
    %v4996 = vadd.f32 0.0, %v4995
    %v4997 = vpop.f32.mrb[0].mxu0
    %v4998 = vpop.f32.mrb[0].mxu0
    %4999 = vdwg.mxu0
    %5000 = vmatprep.subr.bf16.mxu0 %v3758
    %5001 = vmatpush1.bf16.msra.mxu0 %v3757
    %5002 = vmatprep.subr.bf16.mxu0 %v3770
    %5003 = vmatpush1.bf16.msra.mxu0 %v3769
    %5004 = vmatprep.subr.bf16.mxu0 %v3782
    %5005 = vmatpush1.bf16.msra.mxu0 %v3781
    %5006 = vmatprep.subr.bf16.mxu0 %v3794
    %5007 = vmatpush1.bf16.msra.mxu0 %v3793
    %5008 = vmatprep.subr.bf16.mxu0 %v3806
    %5009 = vmatpush1.bf16.msra.mxu0 %v3805
    %5010 = vmatprep.subr.bf16.mxu0 %v3818
    %5011 = vmatpush1.bf16.msra.mxu0 %v3817
    %5012 = vmatprep.subr.bf16.mxu0 %v3830
    %5013 = vmatpush1.bf16.msra.mxu0 %v3829
    %5014 = vmatprep.subr.bf16.mxu0 %v3842
    %5015 = vmatpush1.bf16.msra.mxu0 %v3841
    %5016 = vmatprep.subr.bf16.mxu0 %v3854
    %5017 = vmatpush1.bf16.msra.mxu0 %v3853
    %5018 = vmatprep.subr.bf16.mxu0 %v3866
    %5019 = vmatpush1.bf16.msra.mxu0 %v3865
    %5020 = vmatprep.subr.bf16.mxu0 %v3878
    %5021 = vmatpush1.bf16.msra.mxu0 %v3877
    %5022 = vmatprep.subr.bf16.mxu0 %v3890
    %5023 = vmatpush1.bf16.msra.mxu0 %v3889
    %5024 = vmatprep.subr.bf16.mxu0 %v3902
    %5025 = vmatpush1.bf16.msra.mxu0 %v3901
    %5026 = vmatprep.subr.bf16.mxu0 %v3914
    %5027 = vmatpush1.bf16.msra.mxu0 %v3913
    %5028 = vmatprep.subr.bf16.mxu0 %v3926
    %5029 = vmatpush1.bf16.msra.mxu0 %v3925
    %5030 = vmatprep.subr.bf16.mxu0 %v3938
    %5031 = vmatpush1.bf16.msra.mxu0 %v3937
    %5032 = vmatprep.mubr.bf16.mxu0 %v1253
    %5033 = vmatmul.mubr.bf16.gmra.mrb[0].mxu0 %v1252
    %v5034 = vpop.f32.mrb[0].mxu0
    %v5035 = vadd.f32 %v4994, %v5034
    %v5036 = vpop.f32.mrb[0].mxu0
    %v5037 = vadd.f32 %v4996, %v5036
    %v5038 = vpop.f32.mrb[0].mxu0
    %v5039 = vpop.f32.mrb[0].mxu0
    %5040 = vdwg.mxu0
    %5041 = vmatprep.subr.bf16.mxu0 %v3950
    %5042 = vmatpush1.bf16.msra.mxu0 %v3949
    %5043 = vmatprep.subr.bf16.mxu0 %v3962
    %5044 = vmatpush1.bf16.msra.mxu0 %v3961
    %5045 = vmatprep.subr.bf16.mxu0 %v3974
    %5046 = vmatpush1.bf16.msra.mxu0 %v3973
    %5047 = vmatprep.subr.bf16.mxu0 %v3986
    %5048 = vmatpush1.bf16.msra.mxu0 %v3985
    %5049 = vmatprep.subr.bf16.mxu0 %v3998
    %5050 = vmatpush1.bf16.msra.mxu0 %v3997
    %5051 = vmatprep.subr.bf16.mxu0 %v4010
    %5052 = vmatpush1.bf16.msra.mxu0 %v4009
    %5053 = vmatprep.subr.bf16.mxu0 %v4022
    %5054 = vmatpush1.bf16.msra.mxu0 %v4021
    %5055 = vmatprep.subr.bf16.mxu0 %v4034
    %5056 = vmatpush1.bf16.msra.mxu0 %v4033
    %5057 = vmatprep.subr.bf16.mxu0 %v4046
    %5058 = vmatpush1.bf16.msra.mxu0 %v4045
    %5059 = vmatprep.subr.bf16.mxu0 %v4058
    %5060 = vmatpush1.bf16.msra.mxu0 %v4057
    %5061 = vmatprep.subr.bf16.mxu0 %v4070
    %5062 = vmatpush1.bf16.msra.mxu0 %v4069
    %5063 = vmatprep.subr.bf16.mxu0 %v4082
    %5064 = vmatpush1.bf16.msra.mxu0 %v4081
    %5065 = vmatprep.subr.bf16.mxu0 %v4094
    %5066 = vmatpush1.bf16.msra.mxu0 %v4093
    %5067 = vmatprep.subr.bf16.mxu0 %v4106
    %5068 = vmatpush1.bf16.msra.mxu0 %v4105
    %5069 = vmatprep.subr.bf16.mxu0 %v4118
    %5070 = vmatpush1.bf16.msra.mxu0 %v4117
    %5071 = vmatprep.subr.bf16.mxu0 %v4130
    %5072 = vmatpush1.bf16.msra.mxu0 %v4129
    %5073 = vmatprep.mubr.bf16.mxu0 %v1255
    %5074 = vmatmul.mubr.bf16.gmra.mrb[0].mxu0 %v1254
    %v5075 = vpop.f32.mrb[0].mxu0
    %v5076 = vadd.f32 %v5035, %v5075
    %v5077 = vpop.f32.mrb[0].mxu0
    %v5078 = vadd.f32 %v5037, %v5077
    %v5079 = vpop.f32.mrb[0].mxu0
    %v5080 = vpop.f32.mrb[0].mxu0
    %5081 = vdwg.mxu0
    %5082 = vmatprep.subr.bf16.mxu0 %v3568
    %5083 = vmatpush1.bf16.msra.mxu0 %v3567
    %5084 = vmatprep.subr.bf16.mxu0 %v3580
    %5085 = vmatpush1.bf16.msra.mxu0 %v3579
    %5086 = vmatprep.subr.bf16.mxu0 %v3592
    %5087 = vmatpush1.bf16.msra.mxu0 %v3591
    %5088 = vmatprep.subr.bf16.mxu0 %v3604
    %5089 = vmatpush1.bf16.msra.mxu0 %v3603
    %5090 = vmatprep.subr.bf16.mxu0 %v3616
    %5091 = vmatpush1.bf16.msra.mxu0 %v3615
    %5092 = vmatprep.subr.bf16.mxu0 %v3628
    %5093 = vmatpush1.bf16.msra.mxu0 %v3627
    %5094 = vmatprep.subr.bf16.mxu0 %v3640
    %5095 = vmatpush1.bf16.msra.mxu0 %v3639
    %5096 = vmatprep.subr.bf16.mxu0 %v3652
    %5097 = vmatpush1.bf16.msra.mxu0 %v3651
    %5098 = vmatprep.subr.bf16.mxu0 %v3664
    %5099 = vmatpush1.bf16.msra.mxu0 %v3663
    %5100 = vmatprep.subr.bf16.mxu0 %v3676
    %5101 = vmatpush1.bf16.msra.mxu0 %v3675
    %5102 = vmatprep.subr.bf16.mxu0 %v3688
    %5103 = vmatpush1.bf16.msra.mxu0 %v3687
    %5104 = vmatprep.subr.bf16.mxu0 %v3700
    %5105 = vmatpush1.bf16.msra.mxu0 %v3699
    %5106 = vmatprep.subr.bf16.mxu0 %v3712
    %5107 = vmatpush1.bf16.msra.mxu0 %v3711
    %5108 = vmatprep.subr.bf16.mxu0 %v3724
    %5109 = vmatpush1.bf16.msra.mxu0 %v3723
    %5110 = vmatprep.subr.bf16.mxu0 %v3736
    %5111 = vmatpush1.bf16.msra.mxu0 %v3735
    %5112 = vmatprep.subr.bf16.mxu0 %v3748
    %5113 = vmatpush1.bf16.msra.mxu0 %v3747
    %5114 = vmatprep.mubr.bf16.mxu0 %v1251
    %5115 = vmatmul.mubr.bf16.gmra.mrb[0].mxu0 %v1250
    %v5116 = vpop.f32.mrb[0].mxu0
    %v5117 = vadd.f32 0.0, %v5116
    %v5118 = vpop.f32.mrb[0].mxu0
    %v5119 = vadd.f32 0.0, %v5118
    %v5120 = vpop.f32.mrb[0].mxu0
    %v5121 = vpop.f32.mrb[0].mxu0
    %5122 = vdwg.mxu0
    %5123 = vmatprep.subr.bf16.mxu0 %v3760
    %5124 = vmatpush1.bf16.msra.mxu0 %v3759
    %5125 = vmatprep.subr.bf16.mxu0 %v3772
    %5126 = vmatpush1.bf16.msra.mxu0 %v3771
    %5127 = vmatprep.subr.bf16.mxu0 %v3784
    %5128 = vmatpush1.bf16.msra.mxu0 %v3783
    %5129 = vmatprep.subr.bf16.mxu0 %v3796
    %5130 = vmatpush1.bf16.msra.mxu0 %v3795
    %5131 = vmatprep.subr.bf16.mxu0 %v3808
    %5132 = vmatpush1.bf16.msra.mxu0 %v3807
    %5133 = vmatprep.subr.bf16.mxu0 %v3820
    %5134 = vmatpush1.bf16.msra.mxu0 %v3819
    %5135 = vmatprep.subr.bf16.mxu0 %v3832
    %5136 = vmatpush1.bf16.msra.mxu0 %v3831
    %5137 = vmatprep.subr.bf16.mxu0 %v3844
    %5138 = vmatpush1.bf16.msra.mxu0 %v3843
    %5139 = vmatprep.subr.bf16.mxu0 %v3856
    %5140 = vmatpush1.bf16.msra.mxu0 %v3855
    %5141 = vmatprep.subr.bf16.mxu0 %v3868
    %5142 = vmatpush1.bf16.msra.mxu0 %v3867
    %5143 = vmatprep.subr.bf16.mxu0 %v3880
    %5144 = vmatpush1.bf16.msra.mxu0 %v3879
    %5145 = vmatprep.subr.bf16.mxu0 %v3892
    %5146 = vmatpush1.bf16.msra.mxu0 %v3891
    %5147 = vmatprep.subr.bf16.mxu0 %v3904
    %5148 = vmatpush1.bf16.msra.mxu0 %v3903
    %5149 = vmatprep.subr.bf16.mxu0 %v3916
    %5150 = vmatpush1.bf16.msra.mxu0 %v3915
    %5151 = vmatprep.subr.bf16.mxu0 %v3928
    %5152 = vmatpush1.bf16.msra.mxu0 %v3927
    %5153 = vmatprep.subr.bf16.mxu0 %v3940
    %5154 = vmatpush1.bf16.msra.mxu0 %v3939
    %5155 = vmatprep.mubr.bf16.mxu0 %v1253
    %5156 = vmatmul.mubr.bf16.gmra.mrb[0].mxu0 %v1252
    %v5157 = vpop.f32.mrb[0].mxu0
    %v5158 = vadd.f32 %v5117, %v5157
    %v5159 = vpop.f32.mrb[0].mxu0
    %v5160 = vadd.f32 %v5119, %v5159
    %v5161 = vpop.f32.mrb[0].mxu0
    %v5162 = vpop.f32.mrb[0].mxu0
    %5163 = vdwg.mxu0
    %5164 = vmatprep.subr.bf16.mxu0 %v3952
    %5165 = vmatpush1.bf16.msra.mxu0 %v3951
    %5166 = vmatprep.subr.bf16.mxu0 %v3964
    %5167 = vmatpush1.bf16.msra.mxu0 %v3963
    %5168 = vmatprep.subr.bf16.mxu0 %v3976
    %5169 = vmatpush1.bf16.msra.mxu0 %v3975
    %5170 = vmatprep.subr.bf16.mxu0 %v3988
    %5171 = vmatpush1.bf16.msra.mxu0 %v3987
    %5172 = vmatprep.subr.bf16.mxu0 %v4000
    %5173 = vmatpush1.bf16.msra.mxu0 %v3999
    %5174 = vmatprep.subr.bf16.mxu0 %v4012
    %5175 = vmatpush1.bf16.msra.mxu0 %v4011
    %5176 = vmatprep.subr.bf16.mxu0 %v4024
    %5177 = vmatpush1.bf16.msra.mxu0 %v4023
    %5178 = vmatprep.subr.bf16.mxu0 %v4036
    %5179 = vmatpush1.bf16.msra.mxu0 %v4035
    %5180 = vmatprep.subr.bf16.mxu0 %v4048
    %5181 = vmatpush1.bf16.msra.mxu0 %v4047
    %5182 = vmatprep.subr.bf16.mxu0 %v4060
    %5183 = vmatpush1.bf16.msra.mxu0 %v4059
    %5184 = vmatprep.subr.bf16.mxu0 %v4072
    %5185 = vmatpush1.bf16.msra.mxu0 %v4071
    %5186 = vmatprep.subr.bf16.mxu0 %v4084
    %5187 = vmatpush1.bf16.msra.mxu0 %v4083
    %5188 = vmatprep.subr.bf16.mxu0 %v4096
    %5189 = vmatpush1.bf16.msra.mxu0 %v4095
    %5190 = vmatprep.subr.bf16.mxu0 %v4108
    %5191 = vmatpush1.bf16.msra.mxu0 %v4107
    %5192 = vmatprep.subr.bf16.mxu0 %v4120
    %5193 = vmatpush1.bf16.msra.mxu0 %v4119
    %5194 = vmatprep.subr.bf16.mxu0 %v4132
    %5195 = vmatpush1.bf16.msra.mxu0 %v4131
    %5196 = vmatprep.mubr.bf16.mxu0 %v1255
    %5197 = vmatmul.mubr.bf16.gmra.mrb[0].mxu0 %v1254
    %v5198 = vpop.f32.mrb[0].mxu0
    %v5199 = vadd.f32 %v5158, %v5198
    %v5200 = vpop.f32.mrb[0].mxu0
    %v5201 = vadd.f32 %v5160, %v5200
    %v5202 = vpop.f32.mrb[0].mxu0
    %v5203 = vpop.f32.mrb[0].mxu0
    %5204 = vdwg.mxu0
    %5205 = vmatprep.subr.bf16.mxu0 %v3570
    %5206 = vmatpush1.bf16.msra.mxu0 %v3569
    %5207 = vmatprep.subr.bf16.mxu0 %v3582
    %5208 = vmatpush1.bf16.msra.mxu0 %v3581
    %5209 = vmatprep.subr.bf16.mxu0 %v3594
    %5210 = vmatpush1.bf16.msra.mxu0 %v3593
    %5211 = vmatprep.subr.bf16.mxu0 %v3606
    %5212 = vmatpush1.bf16.msra.mxu0 %v3605
    %5213 = vmatprep.subr.bf16.mxu0 %v3618
    %5214 = vmatpush1.bf16.msra.mxu0 %v3617
    %5215 = vmatprep.subr.bf16.mxu0 %v3630
    %5216 = vmatpush1.bf16.msra.mxu0 %v3629
    %5217 = vmatprep.subr.bf16.mxu0 %v3642
    %5218 = vmatpush1.bf16.msra.mxu0 %v3641
    %5219 = vmatprep.subr.bf16.mxu0 %v3654
    %5220 = vmatpush1.bf16.msra.mxu0 %v3653
    %5221 = vmatprep.subr.bf16.mxu0 %v3666
    %5222 = vmatpush1.bf16.msra.mxu0 %v3665
    %5223 = vmatprep.subr.bf16.mxu0 %v3678
    %5224 = vmatpush1.bf16.msra.mxu0 %v3677
    %5225 = vmatprep.subr.bf16.mxu0 %v3690
    %5226 = vmatpush1.bf16.msra.mxu0 %v3689
    %5227 = vmatprep.subr.bf16.mxu0 %v3702
    %5228 = vmatpush1.bf16.msra.mxu0 %v3701
    %5229 = vmatprep.subr.bf16.mxu0 %v3714
    %5230 = vmatpush1.bf16.msra.mxu0 %v3713
    %5231 = vmatprep.subr.bf16.mxu0 %v3726
    %5232 = vmatpush1.bf16.msra.mxu0 %v3725
    %5233 = vmatprep.subr.bf16.mxu0 %v3738
    %5234 = vmatpush1.bf16.msra.mxu0 %v3737
    %5235 = vmatprep.subr.bf16.mxu0 %v3750
    %5236 = vmatpush1.bf16.msra.mxu0 %v3749
    %5237 = vmatprep.mubr.bf16.mxu0 %v1251
    %5238 = vmatmul.mubr.bf16.gmra.mrb[0].mxu0 %v1250
    %v5239 = vpop.f32.mrb[0].mxu0
    %v5240 = vadd.f32 0.0, %v5239
    %v5241 = vpop.f32.mrb[0].mxu0
    %v5242 = vadd.f32 0.0, %v5241
    %v5243 = vpop.f32.mrb[0].mxu0
    %v5244 = vpop.f32.mrb[0].mxu0
    %5245 = vdwg.mxu0
    %5246 = vmatprep.subr.bf16.mxu0 %v3762
    %5247 = vmatpush1.bf16.msra.mxu0 %v3761
    %5248 = vmatprep.subr.bf16.mxu0 %v3774
    %5249 = vmatpush1.bf16.msra.mxu0 %v3773
    %5250 = vmatprep.subr.bf16.mxu0 %v3786
    %5251 = vmatpush1.bf16.msra.mxu0 %v3785
    %5252 = vmatprep.subr.bf16.mxu0 %v3798
    %5253 = vmatpush1.bf16.msra.mxu0 %v3797
    %5254 = vmatprep.subr.bf16.mxu0 %v3810
    %5255 = vmatpush1.bf16.msra.mxu0 %v3809
    %5256 = vmatprep.subr.bf16.mxu0 %v3822
    %5257 = vmatpush1.bf16.msra.mxu0 %v3821
    %5258 = vmatprep.subr.bf16.mxu0 %v3834
    %5259 = vmatpush1.bf16.msra.mxu0 %v3833
    %5260 = vmatprep.subr.bf16.mxu0 %v3846
    %5261 = vmatpush1.bf16.msra.mxu0 %v3845
    %5262 = vmatprep.subr.bf16.mxu0 %v3858
    %5263 = vmatpush1.bf16.msra.mxu0 %v3857
    %5264 = vmatprep.subr.bf16.mxu0 %v3870
    %5265 = vmatpush1.bf16.msra.mxu0 %v3869
    %5266 = vmatprep.subr.bf16.mxu0 %v3882
    %5267 = vmatpush1.bf16.msra.mxu0 %v3881
    %5268 = vmatprep.subr.bf16.mxu0 %v3894
    %5269 = vmatpush1.bf16.msra.mxu0 %v3893
    %5270 = vmatprep.subr.bf16.mxu0 %v3906
    %5271 = vmatpush1.bf16.msra.mxu0 %v3905
    %5272 = vmatprep.subr.bf16.mxu0 %v3918
    %5273 = vmatpush1.bf16.msra.mxu0 %v3917
    %5274 = vmatprep.subr.bf16.mxu0 %v3930
    %5275 = vmatpush1.bf16.msra.mxu0 %v3929
    %5276 = vmatprep.subr.bf16.mxu0 %v3942
    %5277 = vmatpush1.bf16.msra.mxu0 %v3941
    %5278 = vmatprep.mubr.bf16.mxu0 %v1253
    %5279 = vmatmul.mubr.bf16.gmra.mrb[0].mxu0 %v1252
    %v5280 = vpop.f32.mrb[0].mxu0
    %v5281 = vadd.f32 %v5240, %v5280
    %v5282 = vpop.f32.mrb[0].mxu0
    %v5283 = vadd.f32 %v5242, %v5282
    %v5284 = vpop.f32.mrb[0].mxu0
    %v5285 = vpop.f32.mrb[0].mxu0
    %5286 = vdwg.mxu0
    %5287 = vmatprep.subr.bf16.mxu0 %v3954
    %5288 = vmatpush1.bf16.msra.mxu0 %v3953
    %5289 = vmatprep.subr.bf16.mxu0 %v3966
    %5290 = vmatpush1.bf16.msra.mxu0 %v3965
    %5291 = vmatprep.subr.bf16.mxu0 %v3978
    %5292 = vmatpush1.bf16.msra.mxu0 %v3977
    %5293 = vmatprep.subr.bf16.mxu0 %v3990
    %5294 = vmatpush1.bf16.msra.mxu0 %v3989
    %5295 = vmatprep.subr.bf16.mxu0 %v4002
    %5296 = vmatpush1.bf16.msra.mxu0 %v4001
    %5297 = vmatprep.subr.bf16.mxu0 %v4014
    %5298 = vmatpush1.bf16.msra.mxu0 %v4013
    %5299 = vmatprep.subr.bf16.mxu0 %v4026
    %5300 = vmatpush1.bf16.msra.mxu0 %v4025
    %5301 = vmatprep.subr.bf16.mxu0 %v4038
    %5302 = vmatpush1.bf16.msra.mxu0 %v4037
    %5303 = vmatprep.subr.bf16.mxu0 %v4050
    %5304 = vmatpush1.bf16.msra.mxu0 %v4049
    %5305 = vmatprep.subr.bf16.mxu0 %v4062
    %5306 = vmatpush1.bf16.msra.mxu0 %v4061
    %5307 = vmatprep.subr.bf16.mxu0 %v4074
    %5308 = vmatpush1.bf16.msra.mxu0 %v4073
    %5309 = vmatprep.subr.bf16.mxu0 %v4086
    %5310 = vmatpush1.bf16.msra.mxu0 %v4085
    %5311 = vmatprep.subr.bf16.mxu0 %v4098
    %5312 = vmatpush1.bf16.msra.mxu0 %v4097
    %5313 = vmatprep.subr.bf16.mxu0 %v4110
    %5314 = vmatpush1.bf16.msra.mxu0 %v4109
    %5315 = vmatprep.subr.bf16.mxu0 %v4122
    %5316 = vmatpush1.bf16.msra.mxu0 %v4121
    %5317 = vmatprep.subr.bf16.mxu0 %v4134
    %5318 = vmatpush1.bf16.msra.mxu0 %v4133
    %5319 = vmatprep.mubr.bf16.mxu0 %v1255
    %5320 = vmatmul.mubr.bf16.gmra.mrb[0].mxu0 %v1254
    %v5321 = vpop.f32.mrb[0].mxu0
    %v5322 = vadd.f32 %v5281, %v5321
    %v5323 = vpop.f32.mrb[0].mxu0
    %v5324 = vadd.f32 %v5283, %v5323
    %v5325 = vpop.f32.mrb[0].mxu0
    %v5326 = vpop.f32.mrb[0].mxu0
    %5327 = vdwg.mxu0
    %5328 = vmatprep.subr.bf16.mxu0 %v3572
    %5329 = vmatpush1.bf16.msra.mxu0 %v3571
    %5330 = vmatprep.subr.bf16.mxu0 %v3584
    %5331 = vmatpush1.bf16.msra.mxu0 %v3583
    %5332 = vmatprep.subr.bf16.mxu0 %v3596
    %5333 = vmatpush1.bf16.msra.mxu0 %v3595
    %5334 = vmatprep.subr.bf16.mxu0 %v3608
    %5335 = vmatpush1.bf16.msra.mxu0 %v3607
    %5336 = vmatprep.subr.bf16.mxu0 %v3620
    %5337 = vmatpush1.bf16.msra.mxu0 %v3619
    %5338 = vmatprep.subr.bf16.mxu0 %v3632
    %5339 = vmatpush1.bf16.msra.mxu0 %v3631
    %5340 = vmatprep.subr.bf16.mxu0 %v3644
    %5341 = vmatpush1.bf16.msra.mxu0 %v3643
    %5342 = vmatprep.subr.bf16.mxu0 %v3656
    %5343 = vmatpush1.bf16.msra.mxu0 %v3655
    %5344 = vmatprep.subr.bf16.mxu0 %v3668
    %5345 = vmatpush1.bf16.msra.mxu0 %v3667
    %5346 = vmatprep.subr.bf16.mxu0 %v3680
    %5347 = vmatpush1.bf16.msra.mxu0 %v3679
    %5348 = vmatprep.subr.bf16.mxu0 %v3692
    %5349 = vmatpush1.bf16.msra.mxu0 %v3691
    %5350 = vmatprep.subr.bf16.mxu0 %v3704
    %5351 = vmatpush1.bf16.msra.mxu0 %v3703
    %5352 = vmatprep.subr.bf16.mxu0 %v3716
    %5353 = vmatpush1.bf16.msra.mxu0 %v3715
    %5354 = vmatprep.subr.bf16.mxu0 %v3728
    %5355 = vmatpush1.bf16.msra.mxu0 %v3727
    %5356 = vmatprep.subr.bf16.mxu0 %v3740
    %5357 = vmatpush1.bf16.msra.mxu0 %v3739
    %5358 = vmatprep.subr.bf16.mxu0 %v3752
    %5359 = vmatpush1.bf16.msra.mxu0 %v3751
    %5360 = vmatprep.mubr.bf16.mxu0 %v1251
    %5361 = vmatmul.mubr.bf16.gmra.mrb[0].mxu0 %v1250
    %v5362 = vpop.f32.mrb[0].mxu0
    %v5363 = vadd.f32 0.0, %v5362
    %v5364 = vpop.f32.mrb[0].mxu0
    %v5365 = vadd.f32 0.0, %v5364
    %v5366 = vpop.f32.mrb[0].mxu0
    %v5367 = vpop.f32.mrb[0].mxu0
    %5368 = vdwg.mxu0
    %5369 = vmatprep.subr.bf16.mxu0 %v3764
    %5370 = vmatpush1.bf16.msra.mxu0 %v3763
    %5371 = vmatprep.subr.bf16.mxu0 %v3776
    %5372 = vmatpush1.bf16.msra.mxu0 %v3775
    %5373 = vmatprep.subr.bf16.mxu0 %v3788
    %5374 = vmatpush1.bf16.msra.mxu0 %v3787
    %5375 = vmatprep.subr.bf16.mxu0 %v3800
    %5376 = vmatpush1.bf16.msra.mxu0 %v3799
    %5377 = vmatprep.subr.bf16.mxu0 %v3812
    %5378 = vmatpush1.bf16.msra.mxu0 %v3811
    %5379 = vmatprep.subr.bf16.mxu0 %v3824
    %5380 = vmatpush1.bf16.msra.mxu0 %v3823
    %5381 = vmatprep.subr.bf16.mxu0 %v3836
    %5382 = vmatpush1.bf16.msra.mxu0 %v3835
    %5383 = vmatprep.subr.bf16.mxu0 %v3848
    %5384 = vmatpush1.bf16.msra.mxu0 %v3847
    %5385 = vmatprep.subr.bf16.mxu0 %v3860
    %5386 = vmatpush1.bf16.msra.mxu0 %v3859
    %5387 = vmatprep.subr.bf16.mxu0 %v3872
    %5388 = vmatpush1.bf16.msra.mxu0 %v3871
    %5389 = vmatprep.subr.bf16.mxu0 %v3884
    %5390 = vmatpush1.bf16.msra.mxu0 %v3883
    %5391 = vmatprep.subr.bf16.mxu0 %v3896
    %5392 = vmatpush1.bf16.msra.mxu0 %v3895
    %5393 = vmatprep.subr.bf16.mxu0 %v3908
    %5394 = vmatpush1.bf16.msra.mxu0 %v3907
    %5395 = vmatprep.subr.bf16.mxu0 %v3920
    %5396 = vmatpush1.bf16.msra.mxu0 %v3919
    %5397 = vmatprep.subr.bf16.mxu0 %v3932
    %5398 = vmatpush1.bf16.msra.mxu0 %v3931
    %5399 = vmatprep.subr.bf16.mxu0 %v3944
    %5400 = vmatpush1.bf16.msra.mxu0 %v3943
    %5401 = vmatprep.mubr.bf16.mxu0 %v1253
    %5402 = vmatmul.mubr.bf16.gmra.mrb[0].mxu0 %v1252
    %v5403 = vpop.f32.mrb[0].mxu0
    %v5404 = vadd.f32 %v5363, %v5403
    %v5405 = vpop.f32.mrb[0].mxu0
    %v5406 = vadd.f32 %v5365, %v5405
    %v5407 = vpop.f32.mrb[0].mxu0
    %v5408 = vpop.f32.mrb[0].mxu0
    %5409 = vdwg.mxu0
    %5410 = vmatprep.subr.bf16.mxu0 %v3956
    %5411 = vmatpush1.bf16.msra.mxu0 %v3955
    %5412 = vmatprep.subr.bf16.mxu0 %v3968
    %5413 = vmatpush1.bf16.msra.mxu0 %v3967
    %5414 = vmatprep.subr.bf16.mxu0 %v3980
    %5415 = vmatpush1.bf16.msra.mxu0 %v3979
    %5416 = vmatprep.subr.bf16.mxu0 %v3992
    %5417 = vmatpush1.bf16.msra.mxu0 %v3991
    %5418 = vmatprep.subr.bf16.mxu0 %v4004
    %5419 = vmatpush1.bf16.msra.mxu0 %v4003
    %5420 = vmatprep.subr.bf16.mxu0 %v4016
    %5421 = vmatpush1.bf16.msra.mxu0 %v4015
    %5422 = vmatprep.subr.bf16.mxu0 %v4028
    %5423 = vmatpush1.bf16.msra.mxu0 %v4027
    %5424 = vmatprep.subr.bf16.mxu0 %v4040
    %5425 = vmatpush1.bf16.msra.mxu0 %v4039
    %5426 = vmatprep.subr.bf16.mxu0 %v4052
    %5427 = vmatpush1.bf16.msra.mxu0 %v4051
    %5428 = vmatprep.subr.bf16.mxu0 %v4064
    %5429 = vmatpush1.bf16.msra.mxu0 %v4063
    %5430 = vmatprep.subr.bf16.mxu0 %v4076
    %5431 = vmatpush1.bf16.msra.mxu0 %v4075
    %5432 = vmatprep.subr.bf16.mxu0 %v4088
    %5433 = vmatpush1.bf16.msra.mxu0 %v4087
    %5434 = vmatprep.subr.bf16.mxu0 %v4100
    %5435 = vmatpush1.bf16.msra.mxu0 %v4099
    %5436 = vmatprep.subr.bf16.mxu0 %v4112
    %5437 = vmatpush1.bf16.msra.mxu0 %v4111
    %5438 = vmatprep.subr.bf16.mxu0 %v4124
    %5439 = vmatpush1.bf16.msra.mxu0 %v4123
    %5440 = vmatprep.subr.bf16.mxu0 %v4136
    %5441 = vmatpush1.bf16.msra.mxu0 %v4135
    %5442 = vmatprep.mubr.bf16.mxu0 %v1255
    %5443 = vmatmul.mubr.bf16.gmra.mrb[0].mxu0 %v1254
    %v5444 = vpop.f32.mrb[0].mxu0
    %v5445 = vadd.f32 %v5404, %v5444
    %v5446 = vpop.f32.mrb[0].mxu0
    %v5447 = vadd.f32 %v5406, %v5446
    %v5448 = vpop.f32.mrb[0].mxu0
    %v5449 = vpop.f32.mrb[0].mxu0
    %5450 = vdwg.mxu0
    %v6027 = vunpack.c.l.b16 %v674
    %v6028 = vunpack.c.h.b16 %v674
    %v6029 = vunpack.c.l.b16 %v675
    %v6030 = vunpack.c.h.b16 %v675
    %v6031 = vunpack.c.l.b16 %v676
    %v6032 = vunpack.c.h.b16 %v676
    %v6033 = vunpack.c.l.b16 %v677
    %v6034 = vunpack.c.h.b16 %v677
    %v6035 = vunpack.c.l.b16 %v678
    %v6036 = vunpack.c.h.b16 %v678
    %v6037 = vunpack.c.l.b16 %v679
    %v6038 = vunpack.c.h.b16 %v679
    %v6039 = vunpack.c.l.b16 %v680
    %v6040 = vunpack.c.h.b16 %v680
    %v6041 = vunpack.c.l.b16 %v681
    %v6042 = vunpack.c.h.b16 %v681
    %v6043 = vunpack.c.l.b16 %v682
    %v6044 = vunpack.c.h.b16 %v682
    %v6045 = vunpack.c.l.b16 %v683
    %v6046 = vunpack.c.h.b16 %v683
    %v6047 = vunpack.c.l.b16 %v684
    %v6048 = vunpack.c.h.b16 %v684
    %v6049 = vunpack.c.l.b16 %v685
    %v6050 = vunpack.c.h.b16 %v685
    %v6051 = vunpack.c.l.b16 %v686
    %v6052 = vunpack.c.h.b16 %v686
    %v6053 = vunpack.c.l.b16 %v687
    %v6054 = vunpack.c.h.b16 %v687
    %v6055 = vunpack.c.l.b16 %v688
    %v6056 = vunpack.c.h.b16 %v688
    %v6057 = vunpack.c.l.b16 %v689
    %v6058 = vunpack.c.h.b16 %v689
    %v6059 = vunpack.c.l.b16 %v690
    %v6060 = vunpack.c.h.b16 %v690
    %v6061 = vunpack.c.l.b16 %v691
    %v6062 = vunpack.c.h.b16 %v691
    %v6063 = vunpack.c.l.b16 %v692
    %v6064 = vunpack.c.h.b16 %v692
    %v6065 = vunpack.c.l.b16 %v693
    %v6066 = vunpack.c.h.b16 %v693
    %v6067 = vunpack.c.l.b16 %v694
    %v6068 = vunpack.c.h.b16 %v694
    %v6069 = vunpack.c.l.b16 %v695
    %v6070 = vunpack.c.h.b16 %v695
    %v6071 = vunpack.c.l.b16 %v696
    %v6072 = vunpack.c.h.b16 %v696
    %v6073 = vunpack.c.l.b16 %v697
    %v6074 = vunpack.c.h.b16 %v697
    %v6075 = vunpack.c.l.b16 %v698
    %v6076 = vunpack.c.h.b16 %v698
    %v6077 = vunpack.c.l.b16 %v699
    %v6078 = vunpack.c.h.b16 %v699
    %v6079 = vunpack.c.l.b16 %v700
    %v6080 = vunpack.c.h.b16 %v700
    %v6081 = vunpack.c.l.b16 %v701
    %v6082 = vunpack.c.h.b16 %v701
    %v6083 = vunpack.c.l.b16 %v702
    %v6084 = vunpack.c.h.b16 %v702
    %v6085 = vunpack.c.l.b16 %v703
    %v6086 = vunpack.c.h.b16 %v703
    %v6087 = vunpack.c.l.b16 %v704
    %v6088 = vunpack.c.h.b16 %v704
    %v6089 = vunpack.c.l.b16 %v705
    %v6090 = vunpack.c.h.b16 %v705
    %v6091 = vunpack.c.l.b16 %v706
    %v6092 = vunpack.c.h.b16 %v706
    %v6093 = vunpack.c.l.b16 %v707
    %v6094 = vunpack.c.h.b16 %v707
    %v6095 = vunpack.c.l.b16 %v708
    %v6096 = vunpack.c.h.b16 %v708
    %v6097 = vunpack.c.l.b16 %v709
    %v6098 = vunpack.c.h.b16 %v709
    %v6099 = vunpack.c.l.b16 %v710
    %v6100 = vunpack.c.h.b16 %v710
    %v6101 = vunpack.c.l.b16 %v711
    %v6102 = vunpack.c.h.b16 %v711
    %v6103 = vunpack.c.l.b16 %v712
    %v6104 = vunpack.c.h.b16 %v712
    %v6105 = vunpack.c.l.b16 %v713
    %v6106 = vunpack.c.h.b16 %v713
    %v6107 = vunpack.c.l.b16 %v714
    %v6108 = vunpack.c.h.b16 %v714
    %v6109 = vunpack.c.l.b16 %v715
    %v6110 = vunpack.c.h.b16 %v715
    %v6111 = vunpack.c.l.b16 %v716
    %v6112 = vunpack.c.h.b16 %v716
    %v6113 = vunpack.c.l.b16 %v717
    %v6114 = vunpack.c.h.b16 %v717
    %v6115 = vunpack.c.l.b16 %v718
    %v6116 = vunpack.c.h.b16 %v718
    %v6117 = vunpack.c.l.b16 %v719
    %v6118 = vunpack.c.h.b16 %v719
    %v6119 = vunpack.c.l.b16 %v720
    %v6120 = vunpack.c.h.b16 %v720
    %v6121 = vunpack.c.l.b16 %v721
    %v6122 = vunpack.c.h.b16 %v721
    %v6123 = vunpack.c.l.b16 %v722
    %v6124 = vunpack.c.h.b16 %v722
    %v6125 = vunpack.c.l.b16 %v723
    %v6126 = vunpack.c.h.b16 %v723
    %v6127 = vunpack.c.l.b16 %v724
    %v6128 = vunpack.c.h.b16 %v724
    %v6129 = vunpack.c.l.b16 %v725
    %v6130 = vunpack.c.h.b16 %v725
    %v6131 = vunpack.c.l.b16 %v726
    %v6132 = vunpack.c.h.b16 %v726
    %v6133 = vunpack.c.l.b16 %v727
    %v6134 = vunpack.c.h.b16 %v727
    %v6135 = vunpack.c.l.b16 %v728
    %v6136 = vunpack.c.h.b16 %v728
    %v6137 = vunpack.c.l.b16 %v729
    %v6138 = vunpack.c.h.b16 %v729
    %v6139 = vunpack.c.l.b16 %v730
    %v6140 = vunpack.c.h.b16 %v730
    %v6141 = vunpack.c.l.b16 %v731
    %v6142 = vunpack.c.h.b16 %v731
    %v6143 = vunpack.c.l.b16 %v732
    %v6144 = vunpack.c.h.b16 %v732
    %v6145 = vunpack.c.l.b16 %v733
    %v6146 = vunpack.c.h.b16 %v733
    %v6147 = vunpack.c.l.b16 %v734
    %v6148 = vunpack.c.h.b16 %v734
    %v6149 = vunpack.c.l.b16 %v735
    %v6150 = vunpack.c.h.b16 %v735
    %v6151 = vunpack.c.l.b16 %v736
    %v6152 = vunpack.c.h.b16 %v736
    %v6153 = vunpack.c.l.b16 %v737
    %v6154 = vunpack.c.h.b16 %v737
    %v6155 = vunpack.c.l.b16 %v738
    %v6156 = vunpack.c.h.b16 %v738
    %v6157 = vunpack.c.l.b16 %v739
    %v6158 = vunpack.c.h.b16 %v739
    %v6159 = vunpack.c.l.b16 %v740
    %v6160 = vunpack.c.h.b16 %v740
    %v6161 = vunpack.c.l.b16 %v741
    %v6162 = vunpack.c.h.b16 %v741
    %v6163 = vunpack.c.l.b16 %v742
    %v6164 = vunpack.c.h.b16 %v742
    %v6165 = vunpack.c.l.b16 %v743
    %v6166 = vunpack.c.h.b16 %v743
    %v6167 = vunpack.c.l.b16 %v744
    %v6168 = vunpack.c.h.b16 %v744
    %v6169 = vunpack.c.l.b16 %v745
    %v6170 = vunpack.c.h.b16 %v745
    %v6171 = vunpack.c.l.b16 %v746
    %v6172 = vunpack.c.h.b16 %v746
    %v6173 = vunpack.c.l.b16 %v747
    %v6174 = vunpack.c.h.b16 %v747
    %v6175 = vunpack.c.l.b16 %v748
    %v6176 = vunpack.c.h.b16 %v748
    %v6177 = vunpack.c.l.b16 %v749
    %v6178 = vunpack.c.h.b16 %v749
    %v6179 = vunpack.c.l.b16 %v750
    %v6180 = vunpack.c.h.b16 %v750
    %v6181 = vunpack.c.l.b16 %v751
    %v6182 = vunpack.c.h.b16 %v751
    %v6183 = vunpack.c.l.b16 %v752
    %v6184 = vunpack.c.h.b16 %v752
    %v6185 = vunpack.c.l.b16 %v753
    %v6186 = vunpack.c.h.b16 %v753
    %v6187 = vunpack.c.l.b16 %v754
    %v6188 = vunpack.c.h.b16 %v754
    %v6189 = vunpack.c.l.b16 %v755
    %v6190 = vunpack.c.h.b16 %v755
    %v6191 = vunpack.c.l.b16 %v756
    %v6192 = vunpack.c.h.b16 %v756
    %v6193 = vunpack.c.l.b16 %v757
    %v6194 = vunpack.c.h.b16 %v757
    %v6195 = vunpack.c.l.b16 %v758
    %v6196 = vunpack.c.h.b16 %v758
    %v6197 = vunpack.c.l.b16 %v759
    %v6198 = vunpack.c.h.b16 %v759
    %v6199 = vunpack.c.l.b16 %v760
    %v6200 = vunpack.c.h.b16 %v760
    %v6201 = vunpack.c.l.b16 %v761
    %v6202 = vunpack.c.h.b16 %v761
    %v6203 = vunpack.c.l.b16 %v762
    %v6204 = vunpack.c.h.b16 %v762
    %v6205 = vunpack.c.l.b16 %v763
    %v6206 = vunpack.c.h.b16 %v763
    %v6207 = vunpack.c.l.b16 %v764
    %v6208 = vunpack.c.h.b16 %v764
    %v6209 = vunpack.c.l.b16 %v765
    %v6210 = vunpack.c.h.b16 %v765
    %v6211 = vunpack.c.l.b16 %v766
    %v6212 = vunpack.c.h.b16 %v766
    %v6213 = vunpack.c.l.b16 %v767
    %v6214 = vunpack.c.h.b16 %v767
    %v6215 = vunpack.c.l.b16 %v768
    %v6216 = vunpack.c.h.b16 %v768
    %v6217 = vunpack.c.l.b16 %v769
    %v6218 = vunpack.c.h.b16 %v769
    %v6219 = vunpack.c.l.b16 %v770
    %v6220 = vunpack.c.h.b16 %v770
    %v6221 = vunpack.c.l.b16 %v771
    %v6222 = vunpack.c.h.b16 %v771
    %v6223 = vunpack.c.l.b16 %v772
    %v6224 = vunpack.c.h.b16 %v772
    %v6225 = vunpack.c.l.b16 %v773
    %v6226 = vunpack.c.h.b16 %v773
    %v6227 = vunpack.c.l.b16 %v774
    %v6228 = vunpack.c.h.b16 %v774
    %v6229 = vunpack.c.l.b16 %v775
    %v6230 = vunpack.c.h.b16 %v775
    %v6231 = vunpack.c.l.b16 %v776
    %v6232 = vunpack.c.h.b16 %v776
    %v6233 = vunpack.c.l.b16 %v777
    %v6234 = vunpack.c.h.b16 %v777
    %v6235 = vunpack.c.l.b16 %v778
    %v6236 = vunpack.c.h.b16 %v778
    %v6237 = vunpack.c.l.b16 %v779
    %v6238 = vunpack.c.h.b16 %v779
    %v6239 = vunpack.c.l.b16 %v780
    %v6240 = vunpack.c.h.b16 %v780
    %v6241 = vunpack.c.l.b16 %v781
    %v6242 = vunpack.c.h.b16 %v781
    %v6243 = vunpack.c.l.b16 %v782
    %v6244 = vunpack.c.h.b16 %v782
    %v6245 = vunpack.c.l.b16 %v783
    %v6246 = vunpack.c.h.b16 %v783
    %v6247 = vunpack.c.l.b16 %v784
    %v6248 = vunpack.c.h.b16 %v784
    %v6249 = vunpack.c.l.b16 %v785
    %v6250 = vunpack.c.h.b16 %v785
    %v6251 = vunpack.c.l.b16 %v786
    %v6252 = vunpack.c.h.b16 %v786
    %v6253 = vunpack.c.l.b16 %v787
    %v6254 = vunpack.c.h.b16 %v787
    %v6255 = vunpack.c.l.b16 %v788
    %v6256 = vunpack.c.h.b16 %v788
    %v6257 = vunpack.c.l.b16 %v789
    %v6258 = vunpack.c.h.b16 %v789
    %v6259 = vunpack.c.l.b16 %v790
    %v6260 = vunpack.c.h.b16 %v790
    %v6261 = vunpack.c.l.b16 %v791
    %v6262 = vunpack.c.h.b16 %v791
    %v6263 = vunpack.c.l.b16 %v792
    %v6264 = vunpack.c.h.b16 %v792
    %v6265 = vunpack.c.l.b16 %v793
    %v6266 = vunpack.c.h.b16 %v793
    %v6267 = vunpack.c.l.b16 %v794
    %v6268 = vunpack.c.h.b16 %v794
    %v6269 = vunpack.c.l.b16 %v795
    %v6270 = vunpack.c.h.b16 %v795
    %v6271 = vunpack.c.l.b16 %v796
    %v6272 = vunpack.c.h.b16 %v796
    %v6273 = vunpack.c.l.b16 %v797
    %v6274 = vunpack.c.h.b16 %v797
    %v6275 = vunpack.c.l.b16 %v798
    %v6276 = vunpack.c.h.b16 %v798
    %v6277 = vunpack.c.l.b16 %v799
    %v6278 = vunpack.c.h.b16 %v799
    %v6279 = vunpack.c.l.b16 %v800
    %v6280 = vunpack.c.h.b16 %v800
    %v6281 = vunpack.c.l.b16 %v801
    %v6282 = vunpack.c.h.b16 %v801
    %v6283 = vunpack.c.l.b16 %v802
    %v6284 = vunpack.c.h.b16 %v802
    %v6285 = vunpack.c.l.b16 %v803
    %v6286 = vunpack.c.h.b16 %v803
    %v6287 = vunpack.c.l.b16 %v804
    %v6288 = vunpack.c.h.b16 %v804
    %v6289 = vunpack.c.l.b16 %v805
    %v6290 = vunpack.c.h.b16 %v805
    %v6291 = vunpack.c.l.b16 %v806
    %v6292 = vunpack.c.h.b16 %v806
    %v6293 = vunpack.c.l.b16 %v807
    %v6294 = vunpack.c.h.b16 %v807
    %v6295 = vunpack.c.l.b16 %v808
    %v6296 = vunpack.c.h.b16 %v808
    %v6297 = vunpack.c.l.b16 %v809
    %v6298 = vunpack.c.h.b16 %v809
    %v6299 = vunpack.c.l.b16 %v810
    %v6300 = vunpack.c.h.b16 %v810
    %v6301 = vunpack.c.l.b16 %v811
    %v6302 = vunpack.c.h.b16 %v811
    %v6303 = vunpack.c.l.b16 %v812
    %v6304 = vunpack.c.h.b16 %v812
    %v6305 = vunpack.c.l.b16 %v813
    %v6306 = vunpack.c.h.b16 %v813
    %v6307 = vunpack.c.l.b16 %v814
    %v6308 = vunpack.c.h.b16 %v814
    %v6309 = vunpack.c.l.b16 %v815
    %v6310 = vunpack.c.h.b16 %v815
    %v6311 = vunpack.c.l.b16 %v816
    %v6312 = vunpack.c.h.b16 %v816
    %v6313 = vunpack.c.l.b16 %v817
    %v6314 = vunpack.c.h.b16 %v817
    %v6315 = vunpack.c.l.b16 %v818
    %v6316 = vunpack.c.h.b16 %v818
    %v6317 = vunpack.c.l.b16 %v819
    %v6318 = vunpack.c.h.b16 %v819
    %v6319 = vunpack.c.l.b16 %v820
    %v6320 = vunpack.c.h.b16 %v820
    %v6321 = vunpack.c.l.b16 %v821
    %v6322 = vunpack.c.h.b16 %v821
    %v6323 = vunpack.c.l.b16 %v822
    %v6324 = vunpack.c.h.b16 %v822
    %v6325 = vunpack.c.l.b16 %v823
    %v6326 = vunpack.c.h.b16 %v823
    %v6327 = vunpack.c.l.b16 %v824
    %v6328 = vunpack.c.h.b16 %v824
    %v6329 = vunpack.c.l.b16 %v825
    %v6330 = vunpack.c.h.b16 %v825
    %v6331 = vunpack.c.l.b16 %v826
    %v6332 = vunpack.c.h.b16 %v826
    %v6333 = vunpack.c.l.b16 %v827
    %v6334 = vunpack.c.h.b16 %v827
    %v6335 = vunpack.c.l.b16 %v828
    %v6336 = vunpack.c.h.b16 %v828
    %v6337 = vunpack.c.l.b16 %v829
    %v6338 = vunpack.c.h.b16 %v829
    %v6339 = vunpack.c.l.b16 %v830
    %v6340 = vunpack.c.h.b16 %v830
    %v6341 = vunpack.c.l.b16 %v831
    %v6342 = vunpack.c.h.b16 %v831
    %v6343 = vunpack.c.l.b16 %v832
    %v6344 = vunpack.c.h.b16 %v832
    %v6345 = vunpack.c.l.b16 %v833
    %v6346 = vunpack.c.h.b16 %v833
    %v6347 = vunpack.c.l.b16 %v834
    %v6348 = vunpack.c.h.b16 %v834
    %v6349 = vunpack.c.l.b16 %v835
    %v6350 = vunpack.c.h.b16 %v835
    %v6351 = vunpack.c.l.b16 %v836
    %v6352 = vunpack.c.h.b16 %v836
    %v6353 = vunpack.c.l.b16 %v837
    %v6354 = vunpack.c.h.b16 %v837
    %v6355 = vunpack.c.l.b16 %v838
    %v6356 = vunpack.c.h.b16 %v838
    %v6357 = vunpack.c.l.b16 %v839
    %v6358 = vunpack.c.h.b16 %v839
    %v6359 = vunpack.c.l.b16 %v840
    %v6360 = vunpack.c.h.b16 %v840
    %v6361 = vunpack.c.l.b16 %v841
    %v6362 = vunpack.c.h.b16 %v841
    %v6363 = vunpack.c.l.b16 %v842
    %v6364 = vunpack.c.h.b16 %v842
    %v6365 = vunpack.c.l.b16 %v843
    %v6366 = vunpack.c.h.b16 %v843
    %v6367 = vunpack.c.l.b16 %v844
    %v6368 = vunpack.c.h.b16 %v844
    %v6369 = vunpack.c.l.b16 %v845
    %v6370 = vunpack.c.h.b16 %v845
    %v6371 = vunpack.c.l.b16 %v846
    %v6372 = vunpack.c.h.b16 %v846
    %v6373 = vunpack.c.l.b16 %v847
    %v6374 = vunpack.c.h.b16 %v847
    %v6375 = vunpack.c.l.b16 %v848
    %v6376 = vunpack.c.h.b16 %v848
    %v6377 = vunpack.c.l.b16 %v849
    %v6378 = vunpack.c.h.b16 %v849
    %v6379 = vunpack.c.l.b16 %v850
    %v6380 = vunpack.c.h.b16 %v850
    %v6381 = vunpack.c.l.b16 %v851
    %v6382 = vunpack.c.h.b16 %v851
    %v6383 = vunpack.c.l.b16 %v852
    %v6384 = vunpack.c.h.b16 %v852
    %v6385 = vunpack.c.l.b16 %v853
    %v6386 = vunpack.c.h.b16 %v853
    %v6387 = vunpack.c.l.b16 %v854
    %v6388 = vunpack.c.h.b16 %v854
    %v6389 = vunpack.c.l.b16 %v855
    %v6390 = vunpack.c.h.b16 %v855
    %v6391 = vunpack.c.l.b16 %v856
    %v6392 = vunpack.c.h.b16 %v856
    %v6393 = vunpack.c.l.b16 %v857
    %v6394 = vunpack.c.h.b16 %v857
    %v6395 = vunpack.c.l.b16 %v858
    %v6396 = vunpack.c.h.b16 %v858
    %v6397 = vunpack.c.l.b16 %v859
    %v6398 = vunpack.c.h.b16 %v859
    %v6399 = vunpack.c.l.b16 %v860
    %v6400 = vunpack.c.h.b16 %v860
    %v6401 = vunpack.c.l.b16 %v861
    %v6402 = vunpack.c.h.b16 %v861
    %v6403 = vunpack.c.l.b16 %v862
    %v6404 = vunpack.c.h.b16 %v862
    %v6405 = vunpack.c.l.b16 %v863
    %v6406 = vunpack.c.h.b16 %v863
    %v6407 = vunpack.c.l.b16 %v864
    %v6408 = vunpack.c.h.b16 %v864
    %v6409 = vunpack.c.l.b16 %v865
    %v6410 = vunpack.c.h.b16 %v865
    %v6411 = vunpack.c.l.b16 %v866
    %v6412 = vunpack.c.h.b16 %v866
    %v6413 = vunpack.c.l.b16 %v867
    %v6414 = vunpack.c.h.b16 %v867
    %v6415 = vunpack.c.l.b16 %v868
    %v6416 = vunpack.c.h.b16 %v868
    %v6417 = vunpack.c.l.b16 %v869
    %v6418 = vunpack.c.h.b16 %v869
    %v6419 = vunpack.c.l.b16 %v870
    %v6420 = vunpack.c.h.b16 %v870
    %v6421 = vunpack.c.l.b16 %v871
    %v6422 = vunpack.c.h.b16 %v871
    %v6423 = vunpack.c.l.b16 %v872
    %v6424 = vunpack.c.h.b16 %v872
    %v6425 = vunpack.c.l.b16 %v873
    %v6426 = vunpack.c.h.b16 %v873
    %v6427 = vunpack.c.l.b16 %v874
    %v6428 = vunpack.c.h.b16 %v874
    %v6429 = vunpack.c.l.b16 %v875
    %v6430 = vunpack.c.h.b16 %v875
    %v6431 = vunpack.c.l.b16 %v876
    %v6432 = vunpack.c.h.b16 %v876
    %v6433 = vunpack.c.l.b16 %v877
    %v6434 = vunpack.c.h.b16 %v877
    %v6435 = vunpack.c.l.b16 %v878
    %v6436 = vunpack.c.h.b16 %v878
    %v6437 = vunpack.c.l.b16 %v879
    %v6438 = vunpack.c.h.b16 %v879
    %v6439 = vunpack.c.l.b16 %v880
    %v6440 = vunpack.c.h.b16 %v880
    %v6441 = vunpack.c.l.b16 %v881
    %v6442 = vunpack.c.h.b16 %v881
    %v6443 = vunpack.c.l.b16 %v882
    %v6444 = vunpack.c.h.b16 %v882
    %v6445 = vunpack.c.l.b16 %v883
    %v6446 = vunpack.c.h.b16 %v883
    %v6447 = vunpack.c.l.b16 %v884
    %v6448 = vunpack.c.h.b16 %v884
    %v6449 = vunpack.c.l.b16 %v885
    %v6450 = vunpack.c.h.b16 %v885
    %v6451 = vunpack.c.l.b16 %v886
    %v6452 = vunpack.c.h.b16 %v886
    %v6453 = vunpack.c.l.b16 %v887
    %v6454 = vunpack.c.h.b16 %v887
    %v6455 = vunpack.c.l.b16 %v888
    %v6456 = vunpack.c.h.b16 %v888
    %v6457 = vunpack.c.l.b16 %v889
    %v6458 = vunpack.c.h.b16 %v889
    %v6459 = vunpack.c.l.b16 %v890
    %v6460 = vunpack.c.h.b16 %v890
    %v6461 = vunpack.c.l.b16 %v891
    %v6462 = vunpack.c.h.b16 %v891
    %v6463 = vunpack.c.l.b16 %v892
    %v6464 = vunpack.c.h.b16 %v892
    %v6465 = vunpack.c.l.b16 %v893
    %v6466 = vunpack.c.h.b16 %v893
    %v6467 = vunpack.c.l.b16 %v894
    %v6468 = vunpack.c.h.b16 %v894
    %v6469 = vunpack.c.l.b16 %v895
    %v6470 = vunpack.c.h.b16 %v895
    %v6471 = vunpack.c.l.b16 %v896
    %v6472 = vunpack.c.h.b16 %v896
    %v6473 = vunpack.c.l.b16 %v897
    %v6474 = vunpack.c.h.b16 %v897
    %v6475 = vunpack.c.l.b16 %v898
    %v6476 = vunpack.c.h.b16 %v898
    %v6477 = vunpack.c.l.b16 %v899
    %v6478 = vunpack.c.h.b16 %v899
    %v6479 = vunpack.c.l.b16 %v900
    %v6480 = vunpack.c.h.b16 %v900
    %v6481 = vunpack.c.l.b16 %v901
    %v6482 = vunpack.c.h.b16 %v901
    %v6483 = vunpack.c.l.b16 %v902
    %v6484 = vunpack.c.h.b16 %v902
    %v6485 = vunpack.c.l.b16 %v903
    %v6486 = vunpack.c.h.b16 %v903
    %v6487 = vunpack.c.l.b16 %v904
    %v6488 = vunpack.c.h.b16 %v904
    %v6489 = vunpack.c.l.b16 %v905
    %v6490 = vunpack.c.h.b16 %v905
    %v6491 = vunpack.c.l.b16 %v906
    %v6492 = vunpack.c.h.b16 %v906
    %v6493 = vunpack.c.l.b16 %v907
    %v6494 = vunpack.c.h.b16 %v907
    %v6495 = vunpack.c.l.b16 %v908
    %v6496 = vunpack.c.h.b16 %v908
    %v6497 = vunpack.c.l.b16 %v909
    %v6498 = vunpack.c.h.b16 %v909
    %v6499 = vunpack.c.l.b16 %v910
    %v6500 = vunpack.c.h.b16 %v910
    %v6501 = vunpack.c.l.b16 %v911
    %v6502 = vunpack.c.h.b16 %v911
    %v6503 = vunpack.c.l.b16 %v912
    %v6504 = vunpack.c.h.b16 %v912
    %v6505 = vunpack.c.l.b16 %v913
    %v6506 = vunpack.c.h.b16 %v913
    %v6507 = vunpack.c.l.b16 %v914
    %v6508 = vunpack.c.h.b16 %v914
    %v6509 = vunpack.c.l.b16 %v915
    %v6510 = vunpack.c.h.b16 %v915
    %v6511 = vunpack.c.l.b16 %v916
    %v6512 = vunpack.c.h.b16 %v916
    %v6513 = vunpack.c.l.b16 %v917
    %v6514 = vunpack.c.h.b16 %v917
    %v6515 = vunpack.c.l.b16 %v918
    %v6516 = vunpack.c.h.b16 %v918
    %v6517 = vunpack.c.l.b16 %v919
    %v6518 = vunpack.c.h.b16 %v919
    %v6519 = vunpack.c.l.b16 %v920
    %v6520 = vunpack.c.h.b16 %v920
    %v6521 = vunpack.c.l.b16 %v921
    %v6522 = vunpack.c.h.b16 %v921
    %v6523 = vunpack.c.l.b16 %v922
    %v6524 = vunpack.c.h.b16 %v922
    %v6525 = vunpack.c.l.b16 %v923
    %v6526 = vunpack.c.h.b16 %v923
    %v6527 = vunpack.c.l.b16 %v924
    %v6528 = vunpack.c.h.b16 %v924
    %v6529 = vunpack.c.l.b16 %v925
    %v6530 = vunpack.c.h.b16 %v925
    %v6531 = vunpack.c.l.b16 %v926
    %v6532 = vunpack.c.h.b16 %v926
    %v6533 = vunpack.c.l.b16 %v927
    %v6534 = vunpack.c.h.b16 %v927
    %v6535 = vunpack.c.l.b16 %v928
    %v6536 = vunpack.c.h.b16 %v928
    %v6537 = vunpack.c.l.b16 %v929
    %v6538 = vunpack.c.h.b16 %v929
    %v6539 = vunpack.c.l.b16 %v930
    %v6540 = vunpack.c.h.b16 %v930
    %v6541 = vunpack.c.l.b16 %v931
    %v6542 = vunpack.c.h.b16 %v931
    %v6543 = vunpack.c.l.b16 %v932
    %v6544 = vunpack.c.h.b16 %v932
    %v6545 = vunpack.c.l.b16 %v933
    %v6546 = vunpack.c.h.b16 %v933
    %v6547 = vunpack.c.l.b16 %v934
    %v6548 = vunpack.c.h.b16 %v934
    %v6549 = vunpack.c.l.b16 %v935
    %v6550 = vunpack.c.h.b16 %v935
    %v6551 = vunpack.c.l.b16 %v936
    %v6552 = vunpack.c.h.b16 %v936
    %v6553 = vunpack.c.l.b16 %v937
    %v6554 = vunpack.c.h.b16 %v937
    %v6555 = vunpack.c.l.b16 %v938
    %v6556 = vunpack.c.h.b16 %v938
    %v6557 = vunpack.c.l.b16 %v939
    %v6558 = vunpack.c.h.b16 %v939
    %v6559 = vunpack.c.l.b16 %v940
    %v6560 = vunpack.c.h.b16 %v940
    %v6561 = vunpack.c.l.b16 %v941
    %v6562 = vunpack.c.h.b16 %v941
    %v6563 = vunpack.c.l.b16 %v942
    %v6564 = vunpack.c.h.b16 %v942
    %v6565 = vunpack.c.l.b16 %v943
    %v6566 = vunpack.c.h.b16 %v943
    %v6567 = vunpack.c.l.b16 %v944
    %v6568 = vunpack.c.h.b16 %v944
    %v6569 = vunpack.c.l.b16 %v945
    %v6570 = vunpack.c.h.b16 %v945
    %v6571 = vunpack.c.l.b16 %v946
    %v6572 = vunpack.c.h.b16 %v946
    %v6573 = vunpack.c.l.b16 %v947
    %v6574 = vunpack.c.h.b16 %v947
    %v6575 = vunpack.c.l.b16 %v948
    %v6576 = vunpack.c.h.b16 %v948
    %v6577 = vunpack.c.l.b16 %v949
    %v6578 = vunpack.c.h.b16 %v949
    %v6579 = vunpack.c.l.b16 %v950
    %v6580 = vunpack.c.h.b16 %v950
    %v6581 = vunpack.c.l.b16 %v951
    %v6582 = vunpack.c.h.b16 %v951
    %v6583 = vunpack.c.l.b16 %v952
    %v6584 = vunpack.c.h.b16 %v952
    %v6585 = vunpack.c.l.b16 %v953
    %v6586 = vunpack.c.h.b16 %v953
    %v6587 = vunpack.c.l.b16 %v954
    %v6588 = vunpack.c.h.b16 %v954
    %v6589 = vunpack.c.l.b16 %v955
    %v6590 = vunpack.c.h.b16 %v955
    %v6591 = vunpack.c.l.b16 %v956
    %v6592 = vunpack.c.h.b16 %v956
    %v6593 = vunpack.c.l.b16 %v957
    %v6594 = vunpack.c.h.b16 %v957
    %v6595 = vunpack.c.l.b16 %v958
    %v6596 = vunpack.c.h.b16 %v958
    %v6597 = vunpack.c.l.b16 %v959
    %v6598 = vunpack.c.h.b16 %v959
    %v6599 = vunpack.c.l.b16 %v960
    %v6600 = vunpack.c.h.b16 %v960
    %v6601 = vunpack.c.l.b16 %v961
    %v6602 = vunpack.c.h.b16 %v961
    %v6603 = vunpack.c.l.b16 %v962
    %v6604 = vunpack.c.h.b16 %v962
    %v6605 = vunpack.c.l.b16 %v963
    %v6606 = vunpack.c.h.b16 %v963
    %v6607 = vunpack.c.l.b16 %v964
    %v6608 = vunpack.c.h.b16 %v964
    %v6609 = vunpack.c.l.b16 %v965
    %v6610 = vunpack.c.h.b16 %v965
    %v6611 = vunpack.c.l.b16 %v966
    %v6612 = vunpack.c.h.b16 %v966
    %v6613 = vunpack.c.l.b16 %v967
    %v6614 = vunpack.c.h.b16 %v967
    %v6615 = vunpack.c.l.b16 %v968
    %v6616 = vunpack.c.h.b16 %v968
    %v6617 = vunpack.c.l.b16 %v969
    %v6618 = vunpack.c.h.b16 %v969
    %v6619 = vunpack.c.l.b16 %v970
    %v6620 = vunpack.c.h.b16 %v970
    %v6621 = vunpack.c.l.b16 %v971
    %v6622 = vunpack.c.h.b16 %v971
    %v6623 = vunpack.c.l.b16 %v972
    %v6624 = vunpack.c.h.b16 %v972
    %v6625 = vunpack.c.l.b16 %v973
    %v6626 = vunpack.c.h.b16 %v973
    %v6627 = vunpack.c.l.b16 %v974
    %v6628 = vunpack.c.h.b16 %v974
    %v6629 = vunpack.c.l.b16 %v975
    %v6630 = vunpack.c.h.b16 %v975
    %v6631 = vunpack.c.l.b16 %v976
    %v6632 = vunpack.c.h.b16 %v976
    %v6633 = vunpack.c.l.b16 %v977
    %v6634 = vunpack.c.h.b16 %v977
    %v6635 = vunpack.c.l.b16 %v978
    %v6636 = vunpack.c.h.b16 %v978
    %v6637 = vunpack.c.l.b16 %v979
    %v6638 = vunpack.c.h.b16 %v979
    %v6639 = vunpack.c.l.b16 %v980
    %v6640 = vunpack.c.h.b16 %v980
    %v6641 = vunpack.c.l.b16 %v981
    %v6642 = vunpack.c.h.b16 %v981
    %v6643 = vunpack.c.l.b16 %v982
    %v6644 = vunpack.c.h.b16 %v982
    %v6645 = vunpack.c.l.b16 %v983
    %v6646 = vunpack.c.h.b16 %v983
    %v6647 = vunpack.c.l.b16 %v984
    %v6648 = vunpack.c.h.b16 %v984
    %v6649 = vunpack.c.l.b16 %v985
    %v6650 = vunpack.c.h.b16 %v985
    %v6651 = vunpack.c.l.b16 %v986
    %v6652 = vunpack.c.h.b16 %v986
    %v6653 = vunpack.c.l.b16 %v987
    %v6654 = vunpack.c.h.b16 %v987
    %v6655 = vunpack.c.l.b16 %v988
    %v6656 = vunpack.c.h.b16 %v988
    %v6657 = vunpack.c.l.b16 %v989
    %v6658 = vunpack.c.h.b16 %v989
    %v6659 = vunpack.c.l.b16 %v990
    %v6660 = vunpack.c.h.b16 %v990
    %v6661 = vunpack.c.l.b16 %v991
    %v6662 = vunpack.c.h.b16 %v991
    %v6663 = vunpack.c.l.b16 %v992
    %v6664 = vunpack.c.h.b16 %v992
    %v6665 = vunpack.c.l.b16 %v993
    %v6666 = vunpack.c.h.b16 %v993
    %v6667 = vunpack.c.l.b16 %v994
    %v6668 = vunpack.c.h.b16 %v994
    %v6669 = vunpack.c.l.b16 %v995
    %v6670 = vunpack.c.h.b16 %v995
    %v6671 = vunpack.c.l.b16 %v996
    %v6672 = vunpack.c.h.b16 %v996
    %v6673 = vunpack.c.l.b16 %v997
    %v6674 = vunpack.c.h.b16 %v997
    %v6675 = vunpack.c.l.b16 %v998
    %v6676 = vunpack.c.h.b16 %v998
    %v6677 = vunpack.c.l.b16 %v999
    %v6678 = vunpack.c.h.b16 %v999
    %v6679 = vunpack.c.l.b16 %v1000
    %v6680 = vunpack.c.h.b16 %v1000
    %v6681 = vunpack.c.l.b16 %v1001
    %v6682 = vunpack.c.h.b16 %v1001
    %v6683 = vunpack.c.l.b16 %v1002
    %v6684 = vunpack.c.h.b16 %v1002
    %v6685 = vunpack.c.l.b16 %v1003
    %v6686 = vunpack.c.h.b16 %v1003
    %v6687 = vunpack.c.l.b16 %v1004
    %v6688 = vunpack.c.h.b16 %v1004
    %v6689 = vunpack.c.l.b16 %v1005
    %v6690 = vunpack.c.h.b16 %v1005
    %v6691 = vunpack.c.l.b16 %v1006
    %v6692 = vunpack.c.h.b16 %v1006
    %v6693 = vunpack.c.l.b16 %v1007
    %v6694 = vunpack.c.h.b16 %v1007
    %v6695 = vunpack.c.l.b16 %v1008
    %v6696 = vunpack.c.h.b16 %v1008
    %v6697 = vunpack.c.l.b16 %v1009
    %v6698 = vunpack.c.h.b16 %v1009
    %v6699 = vunpack.c.l.b16 %v1010
    %v6700 = vunpack.c.h.b16 %v1010
    %v6701 = vunpack.c.l.b16 %v1011
    %v6702 = vunpack.c.h.b16 %v1011
    %v6703 = vunpack.c.l.b16 %v1012
    %v6704 = vunpack.c.h.b16 %v1012
    %v6705 = vunpack.c.l.b16 %v1013
    %v6706 = vunpack.c.h.b16 %v1013
    %v6707 = vunpack.c.l.b16 %v1014
    %v6708 = vunpack.c.h.b16 %v1014
    %v6709 = vunpack.c.l.b16 %v1015
    %v6710 = vunpack.c.h.b16 %v1015
    %v6711 = vunpack.c.l.b16 %v1016
    %v6712 = vunpack.c.h.b16 %v1016
    %v6713 = vunpack.c.l.b16 %v1017
    %v6714 = vunpack.c.h.b16 %v1017
    %v6715 = vunpack.c.l.b16 %v1018
    %v6716 = vunpack.c.h.b16 %v1018
    %v6717 = vunpack.c.l.b16 %v1019
    %v6718 = vunpack.c.h.b16 %v1019
    %v6719 = vunpack.c.l.b16 %v1020
    %v6720 = vunpack.c.h.b16 %v1020
    %v6721 = vunpack.c.l.b16 %v1021
    %v6722 = vunpack.c.h.b16 %v1021
    %v6723 = vunpack.c.l.b16 %v1022
    %v6724 = vunpack.c.h.b16 %v1022
    %v6725 = vunpack.c.l.b16 %v1023
    %v6726 = vunpack.c.h.b16 %v1023
    %v6727 = vunpack.c.l.b16 %v1024
    %v6728 = vunpack.c.h.b16 %v1024
    %v6729 = vunpack.c.l.b16 %v1025
    %v6730 = vunpack.c.h.b16 %v1025
    %v6731 = vunpack.c.l.b16 %v1026
    %v6732 = vunpack.c.h.b16 %v1026
    %v6733 = vunpack.c.l.b16 %v1027
    %v6734 = vunpack.c.h.b16 %v1027
    %v6735 = vunpack.c.l.b16 %v1028
    %v6736 = vunpack.c.h.b16 %v1028
    %v6737 = vunpack.c.l.b16 %v1029
    %v6738 = vunpack.c.h.b16 %v1029
    %v6739 = vunpack.c.l.b16 %v1030
    %v6740 = vunpack.c.h.b16 %v1030
    %v6741 = vunpack.c.l.b16 %v1031
    %v6742 = vunpack.c.h.b16 %v1031
    %v6743 = vunpack.c.l.b16 %v1032
    %v6744 = vunpack.c.h.b16 %v1032
    %v6745 = vunpack.c.l.b16 %v1033
    %v6746 = vunpack.c.h.b16 %v1033
    %v6747 = vunpack.c.l.b16 %v1034
    %v6748 = vunpack.c.h.b16 %v1034
    %v6749 = vunpack.c.l.b16 %v1035
    %v6750 = vunpack.c.h.b16 %v1035
    %v6751 = vunpack.c.l.b16 %v1036
    %v6752 = vunpack.c.h.b16 %v1036
    %v6753 = vunpack.c.l.b16 %v1037
    %v6754 = vunpack.c.h.b16 %v1037
    %v6755 = vunpack.c.l.b16 %v1038
    %v6756 = vunpack.c.h.b16 %v1038
    %v6757 = vunpack.c.l.b16 %v1039
    %v6758 = vunpack.c.h.b16 %v1039
    %v6759 = vunpack.c.l.b16 %v1040
    %v6760 = vunpack.c.h.b16 %v1040
    %v6761 = vunpack.c.l.b16 %v1041
    %v6762 = vunpack.c.h.b16 %v1041
    %v6763 = vunpack.c.l.b16 %v1042
    %v6764 = vunpack.c.h.b16 %v1042
    %v6765 = vunpack.c.l.b16 %v1043
    %v6766 = vunpack.c.h.b16 %v1043
    %v6767 = vunpack.c.l.b16 %v1044
    %v6768 = vunpack.c.h.b16 %v1044
    %v6769 = vunpack.c.l.b16 %v1045
    %v6770 = vunpack.c.h.b16 %v1045
    %v6771 = vunpack.c.l.b16 %v1046
    %v6772 = vunpack.c.h.b16 %v1046
    %v6773 = vunpack.c.l.b16 %v1047
    %v6774 = vunpack.c.h.b16 %v1047
    %v6775 = vunpack.c.l.b16 %v1048
    %v6776 = vunpack.c.h.b16 %v1048
    %v6777 = vunpack.c.l.b16 %v1049
    %v6778 = vunpack.c.h.b16 %v1049
    %v6779 = vunpack.c.l.b16 %v1050
    %v6780 = vunpack.c.h.b16 %v1050
    %v6781 = vunpack.c.l.b16 %v1051
    %v6782 = vunpack.c.h.b16 %v1051
    %v6783 = vunpack.c.l.b16 %v1052
    %v6784 = vunpack.c.h.b16 %v1052
    %v6785 = vunpack.c.l.b16 %v1053
    %v6786 = vunpack.c.h.b16 %v1053
    %v6787 = vunpack.c.l.b16 %v1054
    %v6788 = vunpack.c.h.b16 %v1054
    %v6789 = vunpack.c.l.b16 %v1055
    %v6790 = vunpack.c.h.b16 %v1055
    %v6791 = vunpack.c.l.b16 %v1056
    %v6792 = vunpack.c.h.b16 %v1056
    %v6793 = vunpack.c.l.b16 %v1057
    %v6794 = vunpack.c.h.b16 %v1057
    %v6795 = vunpack.c.l.b16 %v1058
    %v6796 = vunpack.c.h.b16 %v1058
    %v6797 = vunpack.c.l.b16 %v1059
    %v6798 = vunpack.c.h.b16 %v1059
    %v6799 = vunpack.c.l.b16 %v1060
    %v6800 = vunpack.c.h.b16 %v1060
    %v6801 = vunpack.c.l.b16 %v1061
    %v6802 = vunpack.c.h.b16 %v1061
    %v6803 = vunpack.c.l.b16 %v1062
    %v6804 = vunpack.c.h.b16 %v1062
    %v6805 = vunpack.c.l.b16 %v1063
    %v6806 = vunpack.c.h.b16 %v1063
    %v6807 = vunpack.c.l.b16 %v1064
    %v6808 = vunpack.c.h.b16 %v1064
    %v6809 = vunpack.c.l.b16 %v1065
    %v6810 = vunpack.c.h.b16 %v1065
    %v6811 = vunpack.c.l.b16 %v1066
    %v6812 = vunpack.c.h.b16 %v1066
    %v6813 = vunpack.c.l.b16 %v1067
    %v6814 = vunpack.c.h.b16 %v1067
    %v6815 = vunpack.c.l.b16 %v1068
    %v6816 = vunpack.c.h.b16 %v1068
    %v6817 = vunpack.c.l.b16 %v1069
    %v6818 = vunpack.c.h.b16 %v1069
    %v6819 = vunpack.c.l.b16 %v1070
    %v6820 = vunpack.c.h.b16 %v1070
    %v6821 = vunpack.c.l.b16 %v1071
    %v6822 = vunpack.c.h.b16 %v1071
    %v6823 = vunpack.c.l.b16 %v1072
    %v6824 = vunpack.c.h.b16 %v1072
    %v6825 = vunpack.c.l.b16 %v1073
    %v6826 = vunpack.c.h.b16 %v1073
    %v6827 = vunpack.c.l.b16 %v1074
    %v6828 = vunpack.c.h.b16 %v1074
    %v6829 = vunpack.c.l.b16 %v1075
    %v6830 = vunpack.c.h.b16 %v1075
    %v6831 = vunpack.c.l.b16 %v1076
    %v6832 = vunpack.c.h.b16 %v1076
    %v6833 = vunpack.c.l.b16 %v1077
    %v6834 = vunpack.c.h.b16 %v1077
    %v6835 = vunpack.c.l.b16 %v1078
    %v6836 = vunpack.c.h.b16 %v1078
    %v6837 = vunpack.c.l.b16 %v1079
    %v6838 = vunpack.c.h.b16 %v1079
    %v6839 = vunpack.c.l.b16 %v1080
    %v6840 = vunpack.c.h.b16 %v1080
    %v6841 = vunpack.c.l.b16 %v1081
    %v6842 = vunpack.c.h.b16 %v1081
    %v6843 = vunpack.c.l.b16 %v1082
    %v6844 = vunpack.c.h.b16 %v1082
    %v6845 = vunpack.c.l.b16 %v1083
    %v6846 = vunpack.c.h.b16 %v1083
    %v6847 = vunpack.c.l.b16 %v1084
    %v6848 = vunpack.c.h.b16 %v1084
    %v6849 = vunpack.c.l.b16 %v1085
    %v6850 = vunpack.c.h.b16 %v1085
    %v6851 = vunpack.c.l.b16 %v1086
    %v6852 = vunpack.c.h.b16 %v1086
    %v6853 = vunpack.c.l.b16 %v1087
    %v6854 = vunpack.c.h.b16 %v1087
    %v6855 = vunpack.c.l.b16 %v1088
    %v6856 = vunpack.c.h.b16 %v1088
    %v6857 = vunpack.c.l.b16 %v1089
    %v6858 = vunpack.c.h.b16 %v1089
    %v6859 = vunpack.c.l.b16 %v1090
    %v6860 = vunpack.c.h.b16 %v1090
    %v6861 = vunpack.c.l.b16 %v1091
    %v6862 = vunpack.c.h.b16 %v1091
    %v6863 = vunpack.c.l.b16 %v1092
    %v6864 = vunpack.c.h.b16 %v1092
    %v6865 = vunpack.c.l.b16 %v1093
    %v6866 = vunpack.c.h.b16 %v1093
    %v6867 = vunpack.c.l.b16 %v1094
    %v6868 = vunpack.c.h.b16 %v1094
    %v6869 = vunpack.c.l.b16 %v1095
    %v6870 = vunpack.c.h.b16 %v1095
    %v6871 = vunpack.c.l.b16 %v1096
    %v6872 = vunpack.c.h.b16 %v1096
    %v6873 = vunpack.c.l.b16 %v1097
    %v6874 = vunpack.c.h.b16 %v1097
    %v6875 = vunpack.c.l.b16 %v1098
    %v6876 = vunpack.c.h.b16 %v1098
    %v6877 = vunpack.c.l.b16 %v1099
    %v6878 = vunpack.c.h.b16 %v1099
    %v6879 = vunpack.c.l.b16 %v1100
    %v6880 = vunpack.c.h.b16 %v1100
    %v6881 = vunpack.c.l.b16 %v1101
    %v6882 = vunpack.c.h.b16 %v1101
    %v6883 = vunpack.c.l.b16 %v1102
    %v6884 = vunpack.c.h.b16 %v1102
    %v6885 = vunpack.c.l.b16 %v1103
    %v6886 = vunpack.c.h.b16 %v1103
    %v6887 = vunpack.c.l.b16 %v1104
    %v6888 = vunpack.c.h.b16 %v1104
    %v6889 = vunpack.c.l.b16 %v1105
    %v6890 = vunpack.c.h.b16 %v1105
    %v6891 = vunpack.c.l.b16 %v1106
    %v6892 = vunpack.c.h.b16 %v1106
    %v6893 = vunpack.c.l.b16 %v1107
    %v6894 = vunpack.c.h.b16 %v1107
    %v6895 = vunpack.c.l.b16 %v1108
    %v6896 = vunpack.c.h.b16 %v1108
    %v6897 = vunpack.c.l.b16 %v1109
    %v6898 = vunpack.c.h.b16 %v1109
    %v6899 = vunpack.c.l.b16 %v1110
    %v6900 = vunpack.c.h.b16 %v1110
    %v6901 = vunpack.c.l.b16 %v1111
    %v6902 = vunpack.c.h.b16 %v1111
    %v6903 = vunpack.c.l.b16 %v1112
    %v6904 = vunpack.c.h.b16 %v1112
    %v6905 = vunpack.c.l.b16 %v1113
    %v6906 = vunpack.c.h.b16 %v1113
    %v6907 = vunpack.c.l.b16 %v1114
    %v6908 = vunpack.c.h.b16 %v1114
    %v6909 = vunpack.c.l.b16 %v1115
    %v6910 = vunpack.c.h.b16 %v1115
    %v6911 = vunpack.c.l.b16 %v1116
    %v6912 = vunpack.c.h.b16 %v1116
    %v6913 = vunpack.c.l.b16 %v1117
    %v6914 = vunpack.c.h.b16 %v1117
    %v6915 = vunpack.c.l.b16 %v1118
    %v6916 = vunpack.c.h.b16 %v1118
    %v6917 = vunpack.c.l.b16 %v1119
    %v6918 = vunpack.c.h.b16 %v1119
    %v6919 = vunpack.c.l.b16 %v1120
    %v6920 = vunpack.c.h.b16 %v1120
    %v6921 = vunpack.c.l.b16 %v1121
    %v6922 = vunpack.c.h.b16 %v1121
    %v6923 = vunpack.c.l.b16 %v1122
    %v6924 = vunpack.c.h.b16 %v1122
    %v6925 = vunpack.c.l.b16 %v1123
    %v6926 = vunpack.c.h.b16 %v1123
    %v6927 = vunpack.c.l.b16 %v1124
    %v6928 = vunpack.c.h.b16 %v1124
    %v6929 = vunpack.c.l.b16 %v1125
    %v6930 = vunpack.c.h.b16 %v1125
    %v6931 = vunpack.c.l.b16 %v1126
    %v6932 = vunpack.c.h.b16 %v1126
    %v6933 = vunpack.c.l.b16 %v1127
    %v6934 = vunpack.c.h.b16 %v1127
    %v6935 = vunpack.c.l.b16 %v1128
    %v6936 = vunpack.c.h.b16 %v1128
    %v6937 = vunpack.c.l.b16 %v1129
    %v6938 = vunpack.c.h.b16 %v1129
    %v6939 = vunpack.c.l.b16 %v1130
    %v6940 = vunpack.c.h.b16 %v1130
    %v6941 = vunpack.c.l.b16 %v1131
    %v6942 = vunpack.c.h.b16 %v1131
    %v6943 = vunpack.c.l.b16 %v1132
    %v6944 = vunpack.c.h.b16 %v1132
    %v6945 = vunpack.c.l.b16 %v1133
    %v6946 = vunpack.c.h.b16 %v1133
    %v6947 = vunpack.c.l.b16 %v1134
    %v6948 = vunpack.c.h.b16 %v1134
    %v6949 = vunpack.c.l.b16 %v1135
    %v6950 = vunpack.c.h.b16 %v1135
    %v6951 = vunpack.c.l.b16 %v1136
    %v6952 = vunpack.c.h.b16 %v1136
    %v6953 = vunpack.c.l.b16 %v1137
    %v6954 = vunpack.c.h.b16 %v1137
    %v6955 = vunpack.c.l.b16 %v1138
    %v6956 = vunpack.c.h.b16 %v1138
    %v6957 = vunpack.c.l.b16 %v1139
    %v6958 = vunpack.c.h.b16 %v1139
    %v6959 = vunpack.c.l.b16 %v1140
    %v6960 = vunpack.c.h.b16 %v1140
    %v6961 = vunpack.c.l.b16 %v1141
    %v6962 = vunpack.c.h.b16 %v1141
    %v6963 = vunpack.c.l.b16 %v1142
    %v6964 = vunpack.c.h.b16 %v1142
    %v6965 = vunpack.c.l.b16 %v1143
    %v6966 = vunpack.c.h.b16 %v1143
    %v6967 = vunpack.c.l.b16 %v1144
    %v6968 = vunpack.c.h.b16 %v1144
    %v6969 = vunpack.c.l.b16 %v1145
    %v6970 = vunpack.c.h.b16 %v1145
    %v6971 = vunpack.c.l.b16 %v1146
    %v6972 = vunpack.c.h.b16 %v1146
    %v6973 = vunpack.c.l.b16 %v1147
    %v6974 = vunpack.c.h.b16 %v1147
    %v6975 = vunpack.c.l.b16 %v1148
    %v6976 = vunpack.c.h.b16 %v1148
    %v6977 = vunpack.c.l.b16 %v1149
    %v6978 = vunpack.c.h.b16 %v1149
    %v6979 = vunpack.c.l.b16 %v1150
    %v6980 = vunpack.c.h.b16 %v1150
    %v6981 = vunpack.c.l.b16 %v1151
    %v6982 = vunpack.c.h.b16 %v1151
    %v6983 = vunpack.c.l.b16 %v1152
    %v6984 = vunpack.c.h.b16 %v1152
    %v6985 = vunpack.c.l.b16 %v1153
    %v6986 = vunpack.c.h.b16 %v1153
    %v6987 = vunpack.c.l.b16 %v1154
    %v6988 = vunpack.c.h.b16 %v1154
    %v6989 = vunpack.c.l.b16 %v1155
    %v6990 = vunpack.c.h.b16 %v1155
    %v6991 = vunpack.c.l.b16 %v1156
    %v6992 = vunpack.c.h.b16 %v1156
    %v6993 = vunpack.c.l.b16 %v1157
    %v6994 = vunpack.c.h.b16 %v1157
    %v6995 = vunpack.c.l.b16 %v1158
    %v6996 = vunpack.c.h.b16 %v1158
    %v6997 = vunpack.c.l.b16 %v1159
    %v6998 = vunpack.c.h.b16 %v1159
    %v6999 = vunpack.c.l.b16 %v1160
    %v7000 = vunpack.c.h.b16 %v1160
    %v7001 = vunpack.c.l.b16 %v1161
    %v7002 = vunpack.c.h.b16 %v1161
    %v7003 = vunpack.c.l.b16 %v1162
    %v7004 = vunpack.c.h.b16 %v1162
    %v7005 = vunpack.c.l.b16 %v1163
    %v7006 = vunpack.c.h.b16 %v1163
    %v7007 = vunpack.c.l.b16 %v1164
    %v7008 = vunpack.c.h.b16 %v1164
    %v7009 = vunpack.c.l.b16 %v1165
    %v7010 = vunpack.c.h.b16 %v1165
    %v7011 = vunpack.c.l.b16 %v1166
    %v7012 = vunpack.c.h.b16 %v1166
    %v7013 = vunpack.c.l.b16 %v1167
    %v7014 = vunpack.c.h.b16 %v1167
    %v7015 = vunpack.c.l.b16 %v1168
    %v7016 = vunpack.c.h.b16 %v1168
    %v7017 = vunpack.c.l.b16 %v1169
    %v7018 = vunpack.c.h.b16 %v1169
    %v7019 = vunpack.c.l.b16 %v1170
    %v7020 = vunpack.c.h.b16 %v1170
    %v7021 = vunpack.c.l.b16 %v1171
    %v7022 = vunpack.c.h.b16 %v1171
    %v7023 = vunpack.c.l.b16 %v1172
    %v7024 = vunpack.c.h.b16 %v1172
    %v7025 = vunpack.c.l.b16 %v1173
    %v7026 = vunpack.c.h.b16 %v1173
    %v7027 = vunpack.c.l.b16 %v1174
    %v7028 = vunpack.c.h.b16 %v1174
    %v7029 = vunpack.c.l.b16 %v1175
    %v7030 = vunpack.c.h.b16 %v1175
    %v7031 = vunpack.c.l.b16 %v1176
    %v7032 = vunpack.c.h.b16 %v1176
    %v7033 = vunpack.c.l.b16 %v1177
    %v7034 = vunpack.c.h.b16 %v1177
    %v7035 = vunpack.c.l.b16 %v1178
    %v7036 = vunpack.c.h.b16 %v1178
    %v7037 = vunpack.c.l.b16 %v1179
    %v7038 = vunpack.c.h.b16 %v1179
    %v7039 = vunpack.c.l.b16 %v1180
    %v7040 = vunpack.c.h.b16 %v1180
    %v7041 = vunpack.c.l.b16 %v1181
    %v7042 = vunpack.c.h.b16 %v1181
    %v7043 = vunpack.c.l.b16 %v1182
    %v7044 = vunpack.c.h.b16 %v1182
    %v7045 = vunpack.c.l.b16 %v1183
    %v7046 = vunpack.c.h.b16 %v1183
    %v7047 = vunpack.c.l.b16 %v1184
    %v7048 = vunpack.c.h.b16 %v1184
    %v7049 = vunpack.c.l.b16 %v1185
    %v7050 = vunpack.c.h.b16 %v1185
    %v7051 = vunpack.c.l.b16 %v1186
    %v7052 = vunpack.c.h.b16 %v1186
    %v7053 = vunpack.c.l.b16 %v1187
    %v7054 = vunpack.c.h.b16 %v1187
    %v7055 = vunpack.c.l.b16 %v1188
    %v7056 = vunpack.c.h.b16 %v1188
    %v7057 = vunpack.c.l.b16 %v1189
    %v7058 = vunpack.c.h.b16 %v1189
    %v7059 = vunpack.c.l.b16 %v1190
    %v7060 = vunpack.c.h.b16 %v1190
    %v7061 = vunpack.c.l.b16 %v1191
    %v7062 = vunpack.c.h.b16 %v1191
    %v7063 = vunpack.c.l.b16 %v1192
    %v7064 = vunpack.c.h.b16 %v1192
    %v7065 = vunpack.c.l.b16 %v1193
    %v7066 = vunpack.c.h.b16 %v1193
    %v7067 = vunpack.c.l.b16 %v1194
    %v7068 = vunpack.c.h.b16 %v1194
    %v7069 = vunpack.c.l.b16 %v1195
    %v7070 = vunpack.c.h.b16 %v1195
    %v7071 = vunpack.c.l.b16 %v1196
    %v7072 = vunpack.c.h.b16 %v1196
    %v7073 = vunpack.c.l.b16 %v1197
    %v7074 = vunpack.c.h.b16 %v1197
    %v7075 = vunpack.c.l.b16 %v1198
    %v7076 = vunpack.c.h.b16 %v1198
    %v7077 = vunpack.c.l.b16 %v1199
    %v7078 = vunpack.c.h.b16 %v1199
    %v7079 = vunpack.c.l.b16 %v1200
    %v7080 = vunpack.c.h.b16 %v1200
    %v7081 = vunpack.c.l.b16 %v1201
    %v7082 = vunpack.c.h.b16 %v1201
    %v7083 = vunpack.c.l.b16 %v1202
    %v7084 = vunpack.c.h.b16 %v1202
    %v7085 = vunpack.c.l.b16 %v1203
    %v7086 = vunpack.c.h.b16 %v1203
    %v7087 = vunpack.c.l.b16 %v1204
    %v7088 = vunpack.c.h.b16 %v1204
    %v7089 = vunpack.c.l.b16 %v1205
    %v7090 = vunpack.c.h.b16 %v1205
    %v7091 = vunpack.c.l.b16 %v1206
    %v7092 = vunpack.c.h.b16 %v1206
    %v7093 = vunpack.c.l.b16 %v1207
    %v7094 = vunpack.c.h.b16 %v1207
    %v7095 = vunpack.c.l.b16 %v1208
    %v7096 = vunpack.c.h.b16 %v1208
    %v7097 = vunpack.c.l.b16 %v1209
    %v7098 = vunpack.c.h.b16 %v1209
    %v7099 = vunpack.c.l.b16 %v1210
    %v7100 = vunpack.c.h.b16 %v1210
    %v7101 = vunpack.c.l.b16 %v1211
    %v7102 = vunpack.c.h.b16 %v1211
    %v7103 = vunpack.c.l.b16 %v1212
    %v7104 = vunpack.c.h.b16 %v1212
    %v7105 = vunpack.c.l.b16 %v1213
    %v7106 = vunpack.c.h.b16 %v1213
    %v7107 = vunpack.c.l.b16 %v1214
    %v7108 = vunpack.c.h.b16 %v1214
    %v7109 = vunpack.c.l.b16 %v1215
    %v7110 = vunpack.c.h.b16 %v1215
    %v7111 = vunpack.c.l.b16 %v1216
    %v7112 = vunpack.c.h.b16 %v1216
    %v7113 = vunpack.c.l.b16 %v1217
    %v7114 = vunpack.c.h.b16 %v1217
    %v7115 = vunpack.c.l.b16 %v1218
    %v7116 = vunpack.c.h.b16 %v1218
    %v7117 = vunpack.c.l.b16 %v1219
    %v7118 = vunpack.c.h.b16 %v1219
    %v7119 = vunpack.c.l.b16 %v1220
    %v7120 = vunpack.c.h.b16 %v1220
    %v7121 = vunpack.c.l.b16 %v1221
    %v7122 = vunpack.c.h.b16 %v1221
    %v7123 = vunpack.c.l.b16 %v1222
    %v7124 = vunpack.c.h.b16 %v1222
    %v7125 = vunpack.c.l.b16 %v1223
    %v7126 = vunpack.c.h.b16 %v1223
    %v7127 = vunpack.c.l.b16 %v1224
    %v7128 = vunpack.c.h.b16 %v1224
    %v7129 = vunpack.c.l.b16 %v1225
    %v7130 = vunpack.c.h.b16 %v1225
    %v7131 = vunpack.c.l.b16 %v1226
    %v7132 = vunpack.c.h.b16 %v1226
    %v7133 = vunpack.c.l.b16 %v1227
    %v7134 = vunpack.c.h.b16 %v1227
    %v7135 = vunpack.c.l.b16 %v1228
    %v7136 = vunpack.c.h.b16 %v1228
    %v7137 = vunpack.c.l.b16 %v1229
    %v7138 = vunpack.c.h.b16 %v1229
    %v7139 = vunpack.c.l.b16 %v1230
    %v7140 = vunpack.c.h.b16 %v1230
    %v7141 = vunpack.c.l.b16 %v1231
    %v7142 = vunpack.c.h.b16 %v1231
    %v7143 = vunpack.c.l.b16 %v1232
    %v7144 = vunpack.c.h.b16 %v1232
    %v7145 = vunpack.c.l.b16 %v1233
    %v7146 = vunpack.c.h.b16 %v1233
    %v7147 = vunpack.c.l.b16 %v1234
    %v7148 = vunpack.c.h.b16 %v1234
    %v7149 = vunpack.c.l.b16 %v1235
    %v7150 = vunpack.c.h.b16 %v1235
    %v7151 = vunpack.c.l.b16 %v1236
    %v7152 = vunpack.c.h.b16 %v1236
    %v7153 = vunpack.c.l.b16 %v1237
    %v7154 = vunpack.c.h.b16 %v1237
    %v7155 = vunpack.c.l.b16 %v1238
    %v7156 = vunpack.c.h.b16 %v1238
    %v7157 = vunpack.c.l.b16 %v1239
    %v7158 = vunpack.c.h.b16 %v1239
    %v7159 = vunpack.c.l.b16 %v1240
    %v7160 = vunpack.c.h.b16 %v1240
    %v7161 = vunpack.c.l.b16 %v1241
    %v7162 = vunpack.c.h.b16 %v1241
    %v7163 = vunpack.c.l.b16 %v1242
    %v7164 = vunpack.c.h.b16 %v1242
    %v7165 = vunpack.c.l.b16 %v1243
    %v7166 = vunpack.c.h.b16 %v1243
    %v7167 = vunpack.c.l.b16 %v1244
    %v7168 = vunpack.c.h.b16 %v1244
    %v7169 = vunpack.c.l.b16 %v1245
    %v7170 = vunpack.c.h.b16 %v1245
    %v7171 = vunpack.c.l.b16 %v1246
    %v7172 = vunpack.c.h.b16 %v1246
    %v7173 = vunpack.c.l.b16 %v1247
    %v7174 = vunpack.c.h.b16 %v1247
    %v7175 = vunpack.c.l.b16 %v1248
    %v7176 = vunpack.c.h.b16 %v1248
    %v7177 = vunpack.c.l.b16 %v1249
    %v7178 = vunpack.c.h.b16 %v1249
    %v7179 = vpack.c.b16 %v6039, %v6027
    %v7180 = vpack.c.b16 %v6040, %v6028
    %v7181 = vpack.c.b16 %v6041, %v6029
    %v7182 = vpack.c.b16 %v6042, %v6030
    %v7183 = vpack.c.b16 %v6043, %v6031
    %v7184 = vpack.c.b16 %v6044, %v6032
    %v7185 = vpack.c.b16 %v6045, %v6033
    %v7186 = vpack.c.b16 %v6046, %v6034
    %v7187 = vpack.c.b16 %v6047, %v6035
    %v7188 = vpack.c.b16 %v6048, %v6036
    %v7189 = vpack.c.b16 %v6049, %v6037
    %v7190 = vpack.c.b16 %v6050, %v6038
    %v7191 = vpack.c.b16 %v6063, %v6051
    %v7192 = vpack.c.b16 %v6064, %v6052
    %v7193 = vpack.c.b16 %v6065, %v6053
    %v7194 = vpack.c.b16 %v6066, %v6054
    %v7195 = vpack.c.b16 %v6067, %v6055
    %v7196 = vpack.c.b16 %v6068, %v6056
    %v7197 = vpack.c.b16 %v6069, %v6057
    %v7198 = vpack.c.b16 %v6070, %v6058
    %v7199 = vpack.c.b16 %v6071, %v6059
    %v7200 = vpack.c.b16 %v6072, %v6060
    %v7201 = vpack.c.b16 %v6073, %v6061
    %v7202 = vpack.c.b16 %v6074, %v6062
    %v7203 = vpack.c.b16 %v6087, %v6075
    %v7204 = vpack.c.b16 %v6088, %v6076
    %v7205 = vpack.c.b16 %v6089, %v6077
    %v7206 = vpack.c.b16 %v6090, %v6078
    %v7207 = vpack.c.b16 %v6091, %v6079
    %v7208 = vpack.c.b16 %v6092, %v6080
    %v7209 = vpack.c.b16 %v6093, %v6081
    %v7210 = vpack.c.b16 %v6094, %v6082
    %v7211 = vpack.c.b16 %v6095, %v6083
    %v7212 = vpack.c.b16 %v6096, %v6084
    %v7213 = vpack.c.b16 %v6097, %v6085
    %v7214 = vpack.c.b16 %v6098, %v6086
    %v7215 = vpack.c.b16 %v6111, %v6099
    %v7216 = vpack.c.b16 %v6112, %v6100
    %v7217 = vpack.c.b16 %v6113, %v6101
    %v7218 = vpack.c.b16 %v6114, %v6102
    %v7219 = vpack.c.b16 %v6115, %v6103
    %v7220 = vpack.c.b16 %v6116, %v6104
    %v7221 = vpack.c.b16 %v6117, %v6105
    %v7222 = vpack.c.b16 %v6118, %v6106
    %v7223 = vpack.c.b16 %v6119, %v6107
    %v7224 = vpack.c.b16 %v6120, %v6108
    %v7225 = vpack.c.b16 %v6121, %v6109
    %v7226 = vpack.c.b16 %v6122, %v6110
    %v7227 = vpack.c.b16 %v6135, %v6123
    %v7228 = vpack.c.b16 %v6136, %v6124
    %v7229 = vpack.c.b16 %v6137, %v6125
    %v7230 = vpack.c.b16 %v6138, %v6126
    %v7231 = vpack.c.b16 %v6139, %v6127
    %v7232 = vpack.c.b16 %v6140, %v6128
    %v7233 = vpack.c.b16 %v6141, %v6129
    %v7234 = vpack.c.b16 %v6142, %v6130
    %v7235 = vpack.c.b16 %v6143, %v6131
    %v7236 = vpack.c.b16 %v6144, %v6132
    %v7237 = vpack.c.b16 %v6145, %v6133
    %v7238 = vpack.c.b16 %v6146, %v6134
    %v7239 = vpack.c.b16 %v6159, %v6147
    %v7240 = vpack.c.b16 %v6160, %v6148
    %v7241 = vpack.c.b16 %v6161, %v6149
    %v7242 = vpack.c.b16 %v6162, %v6150
    %v7243 = vpack.c.b16 %v6163, %v6151
    %v7244 = vpack.c.b16 %v6164, %v6152
    %v7245 = vpack.c.b16 %v6165, %v6153
    %v7246 = vpack.c.b16 %v6166, %v6154
    %v7247 = vpack.c.b16 %v6167, %v6155
    %v7248 = vpack.c.b16 %v6168, %v6156
    %v7249 = vpack.c.b16 %v6169, %v6157
    %v7250 = vpack.c.b16 %v6170, %v6158
    %v7251 = vpack.c.b16 %v6183, %v6171
    %v7252 = vpack.c.b16 %v6184, %v6172
    %v7253 = vpack.c.b16 %v6185, %v6173
    %v7254 = vpack.c.b16 %v6186, %v6174
    %v7255 = vpack.c.b16 %v6187, %v6175
    %v7256 = vpack.c.b16 %v6188, %v6176
    %v7257 = vpack.c.b16 %v6189, %v6177
    %v7258 = vpack.c.b16 %v6190, %v6178
    %v7259 = vpack.c.b16 %v6191, %v6179
    %v7260 = vpack.c.b16 %v6192, %v6180
    %v7261 = vpack.c.b16 %v6193, %v6181
    %v7262 = vpack.c.b16 %v6194, %v6182
    %v7263 = vpack.c.b16 %v6207, %v6195
    %v7264 = vpack.c.b16 %v6208, %v6196
    %v7265 = vpack.c.b16 %v6209, %v6197
    %v7266 = vpack.c.b16 %v6210, %v6198
    %v7267 = vpack.c.b16 %v6211, %v6199
    %v7268 = vpack.c.b16 %v6212, %v6200
    %v7269 = vpack.c.b16 %v6213, %v6201
    %v7270 = vpack.c.b16 %v6214, %v6202
    %v7271 = vpack.c.b16 %v6215, %v6203
    %v7272 = vpack.c.b16 %v6216, %v6204
    %v7273 = vpack.c.b16 %v6217, %v6205
    %v7274 = vpack.c.b16 %v6218, %v6206
    %v7275 = vpack.c.b16 %v6231, %v6219
    %v7276 = vpack.c.b16 %v6232, %v6220
    %v7277 = vpack.c.b16 %v6233, %v6221
    %v7278 = vpack.c.b16 %v6234, %v6222
    %v7279 = vpack.c.b16 %v6235, %v6223
    %v7280 = vpack.c.b16 %v6236, %v6224
    %v7281 = vpack.c.b16 %v6237, %v6225
    %v7282 = vpack.c.b16 %v6238, %v6226
    %v7283 = vpack.c.b16 %v6239, %v6227
    %v7284 = vpack.c.b16 %v6240, %v6228
    %v7285 = vpack.c.b16 %v6241, %v6229
    %v7286 = vpack.c.b16 %v6242, %v6230
    %v7287 = vpack.c.b16 %v6255, %v6243
    %v7288 = vpack.c.b16 %v6256, %v6244
    %v7289 = vpack.c.b16 %v6257, %v6245
    %v7290 = vpack.c.b16 %v6258, %v6246
    %v7291 = vpack.c.b16 %v6259, %v6247
    %v7292 = vpack.c.b16 %v6260, %v6248
    %v7293 = vpack.c.b16 %v6261, %v6249
    %v7294 = vpack.c.b16 %v6262, %v6250
    %v7295 = vpack.c.b16 %v6263, %v6251
    %v7296 = vpack.c.b16 %v6264, %v6252
    %v7297 = vpack.c.b16 %v6265, %v6253
    %v7298 = vpack.c.b16 %v6266, %v6254
    %v7299 = vpack.c.b16 %v6279, %v6267
    %v7300 = vpack.c.b16 %v6280, %v6268
    %v7301 = vpack.c.b16 %v6281, %v6269
    %v7302 = vpack.c.b16 %v6282, %v6270
    %v7303 = vpack.c.b16 %v6283, %v6271
    %v7304 = vpack.c.b16 %v6284, %v6272
    %v7305 = vpack.c.b16 %v6285, %v6273
    %v7306 = vpack.c.b16 %v6286, %v6274
    %v7307 = vpack.c.b16 %v6287, %v6275
    %v7308 = vpack.c.b16 %v6288, %v6276
    %v7309 = vpack.c.b16 %v6289, %v6277
    %v7310 = vpack.c.b16 %v6290, %v6278
    %v7311 = vpack.c.b16 %v6303, %v6291
    %v7312 = vpack.c.b16 %v6304, %v6292
    %v7313 = vpack.c.b16 %v6305, %v6293
    %v7314 = vpack.c.b16 %v6306, %v6294
    %v7315 = vpack.c.b16 %v6307, %v6295
    %v7316 = vpack.c.b16 %v6308, %v6296
    %v7317 = vpack.c.b16 %v6309, %v6297
    %v7318 = vpack.c.b16 %v6310, %v6298
    %v7319 = vpack.c.b16 %v6311, %v6299
    %v7320 = vpack.c.b16 %v6312, %v6300
    %v7321 = vpack.c.b16 %v6313, %v6301
    %v7322 = vpack.c.b16 %v6314, %v6302
    %v7323 = vpack.c.b16 %v6327, %v6315
    %v7324 = vpack.c.b16 %v6328, %v6316
    %v7325 = vpack.c.b16 %v6329, %v6317
    %v7326 = vpack.c.b16 %v6330, %v6318
    %v7327 = vpack.c.b16 %v6331, %v6319
    %v7328 = vpack.c.b16 %v6332, %v6320
    %v7329 = vpack.c.b16 %v6333, %v6321
    %v7330 = vpack.c.b16 %v6334, %v6322
    %v7331 = vpack.c.b16 %v6335, %v6323
    %v7332 = vpack.c.b16 %v6336, %v6324
    %v7333 = vpack.c.b16 %v6337, %v6325
    %v7334 = vpack.c.b16 %v6338, %v6326
    %v7335 = vpack.c.b16 %v6351, %v6339
    %v7336 = vpack.c.b16 %v6352, %v6340
    %v7337 = vpack.c.b16 %v6353, %v6341
    %v7338 = vpack.c.b16 %v6354, %v6342
    %v7339 = vpack.c.b16 %v6355, %v6343
    %v7340 = vpack.c.b16 %v6356, %v6344
    %v7341 = vpack.c.b16 %v6357, %v6345
    %v7342 = vpack.c.b16 %v6358, %v6346
    %v7343 = vpack.c.b16 %v6359, %v6347
    %v7344 = vpack.c.b16 %v6360, %v6348
    %v7345 = vpack.c.b16 %v6361, %v6349
    %v7346 = vpack.c.b16 %v6362, %v6350
    %v7347 = vpack.c.b16 %v6375, %v6363
    %v7348 = vpack.c.b16 %v6376, %v6364
    %v7349 = vpack.c.b16 %v6377, %v6365
    %v7350 = vpack.c.b16 %v6378, %v6366
    %v7351 = vpack.c.b16 %v6379, %v6367
    %v7352 = vpack.c.b16 %v6380, %v6368
    %v7353 = vpack.c.b16 %v6381, %v6369
    %v7354 = vpack.c.b16 %v6382, %v6370
    %v7355 = vpack.c.b16 %v6383, %v6371
    %v7356 = vpack.c.b16 %v6384, %v6372
    %v7357 = vpack.c.b16 %v6385, %v6373
    %v7358 = vpack.c.b16 %v6386, %v6374
    %v7359 = vpack.c.b16 %v6399, %v6387
    %v7360 = vpack.c.b16 %v6400, %v6388
    %v7361 = vpack.c.b16 %v6401, %v6389
    %v7362 = vpack.c.b16 %v6402, %v6390
    %v7363 = vpack.c.b16 %v6403, %v6391
    %v7364 = vpack.c.b16 %v6404, %v6392
    %v7365 = vpack.c.b16 %v6405, %v6393
    %v7366 = vpack.c.b16 %v6406, %v6394
    %v7367 = vpack.c.b16 %v6407, %v6395
    %v7368 = vpack.c.b16 %v6408, %v6396
    %v7369 = vpack.c.b16 %v6409, %v6397
    %v7370 = vpack.c.b16 %v6410, %v6398
    %v7371 = vpack.c.b16 %v6423, %v6411
    %v7372 = vpack.c.b16 %v6424, %v6412
    %v7373 = vpack.c.b16 %v6425, %v6413
    %v7374 = vpack.c.b16 %v6426, %v6414
    %v7375 = vpack.c.b16 %v6427, %v6415
    %v7376 = vpack.c.b16 %v6428, %v6416
    %v7377 = vpack.c.b16 %v6429, %v6417
    %v7378 = vpack.c.b16 %v6430, %v6418
    %v7379 = vpack.c.b16 %v6431, %v6419
    %v7380 = vpack.c.b16 %v6432, %v6420
    %v7381 = vpack.c.b16 %v6433, %v6421
    %v7382 = vpack.c.b16 %v6434, %v6422
    %v7383 = vpack.c.b16 %v6447, %v6435
    %v7384 = vpack.c.b16 %v6448, %v6436
    %v7385 = vpack.c.b16 %v6449, %v6437
    %v7386 = vpack.c.b16 %v6450, %v6438
    %v7387 = vpack.c.b16 %v6451, %v6439
    %v7388 = vpack.c.b16 %v6452, %v6440
    %v7389 = vpack.c.b16 %v6453, %v6441
    %v7390 = vpack.c.b16 %v6454, %v6442
    %v7391 = vpack.c.b16 %v6455, %v6443
    %v7392 = vpack.c.b16 %v6456, %v6444
    %v7393 = vpack.c.b16 %v6457, %v6445
    %v7394 = vpack.c.b16 %v6458, %v6446
    %v7395 = vpack.c.b16 %v6471, %v6459
    %v7396 = vpack.c.b16 %v6472, %v6460
    %v7397 = vpack.c.b16 %v6473, %v6461
    %v7398 = vpack.c.b16 %v6474, %v6462
    %v7399 = vpack.c.b16 %v6475, %v6463
    %v7400 = vpack.c.b16 %v6476, %v6464
    %v7401 = vpack.c.b16 %v6477, %v6465
    %v7402 = vpack.c.b16 %v6478, %v6466
    %v7403 = vpack.c.b16 %v6479, %v6467
    %v7404 = vpack.c.b16 %v6480, %v6468
    %v7405 = vpack.c.b16 %v6481, %v6469
    %v7406 = vpack.c.b16 %v6482, %v6470
    %v7407 = vpack.c.b16 %v6495, %v6483
    %v7408 = vpack.c.b16 %v6496, %v6484
    %v7409 = vpack.c.b16 %v6497, %v6485
    %v7410 = vpack.c.b16 %v6498, %v6486
    %v7411 = vpack.c.b16 %v6499, %v6487
    %v7412 = vpack.c.b16 %v6500, %v6488
    %v7413 = vpack.c.b16 %v6501, %v6489
    %v7414 = vpack.c.b16 %v6502, %v6490
    %v7415 = vpack.c.b16 %v6503, %v6491
    %v7416 = vpack.c.b16 %v6504, %v6492
    %v7417 = vpack.c.b16 %v6505, %v6493
    %v7418 = vpack.c.b16 %v6506, %v6494
    %v7419 = vpack.c.b16 %v6519, %v6507
    %v7420 = vpack.c.b16 %v6520, %v6508
    %v7421 = vpack.c.b16 %v6521, %v6509
    %v7422 = vpack.c.b16 %v6522, %v6510
    %v7423 = vpack.c.b16 %v6523, %v6511
    %v7424 = vpack.c.b16 %v6524, %v6512
    %v7425 = vpack.c.b16 %v6525, %v6513
    %v7426 = vpack.c.b16 %v6526, %v6514
    %v7427 = vpack.c.b16 %v6527, %v6515
    %v7428 = vpack.c.b16 %v6528, %v6516
    %v7429 = vpack.c.b16 %v6529, %v6517
    %v7430 = vpack.c.b16 %v6530, %v6518
    %v7431 = vpack.c.b16 %v6543, %v6531
    %v7432 = vpack.c.b16 %v6544, %v6532
    %v7433 = vpack.c.b16 %v6545, %v6533
    %v7434 = vpack.c.b16 %v6546, %v6534
    %v7435 = vpack.c.b16 %v6547, %v6535
    %v7436 = vpack.c.b16 %v6548, %v6536
    %v7437 = vpack.c.b16 %v6549, %v6537
    %v7438 = vpack.c.b16 %v6550, %v6538
    %v7439 = vpack.c.b16 %v6551, %v6539
    %v7440 = vpack.c.b16 %v6552, %v6540
    %v7441 = vpack.c.b16 %v6553, %v6541
    %v7442 = vpack.c.b16 %v6554, %v6542
    %v7443 = vpack.c.b16 %v6567, %v6555
    %v7444 = vpack.c.b16 %v6568, %v6556
    %v7445 = vpack.c.b16 %v6569, %v6557
    %v7446 = vpack.c.b16 %v6570, %v6558
    %v7447 = vpack.c.b16 %v6571, %v6559
    %v7448 = vpack.c.b16 %v6572, %v6560
    %v7449 = vpack.c.b16 %v6573, %v6561
    %v7450 = vpack.c.b16 %v6574, %v6562
    %v7451 = vpack.c.b16 %v6575, %v6563
    %v7452 = vpack.c.b16 %v6576, %v6564
    %v7453 = vpack.c.b16 %v6577, %v6565
    %v7454 = vpack.c.b16 %v6578, %v6566
    %v7455 = vpack.c.b16 %v6591, %v6579
    %v7456 = vpack.c.b16 %v6592, %v6580
    %v7457 = vpack.c.b16 %v6593, %v6581
    %v7458 = vpack.c.b16 %v6594, %v6582
    %v7459 = vpack.c.b16 %v6595, %v6583
    %v7460 = vpack.c.b16 %v6596, %v6584
    %v7461 = vpack.c.b16 %v6597, %v6585
    %v7462 = vpack.c.b16 %v6598, %v6586
    %v7463 = vpack.c.b16 %v6599, %v6587
    %v7464 = vpack.c.b16 %v6600, %v6588
    %v7465 = vpack.c.b16 %v6601, %v6589
    %v7466 = vpack.c.b16 %v6602, %v6590
    %v7467 = vpack.c.b16 %v6615, %v6603
    %v7468 = vpack.c.b16 %v6616, %v6604
    %v7469 = vpack.c.b16 %v6617, %v6605
    %v7470 = vpack.c.b16 %v6618, %v6606
    %v7471 = vpack.c.b16 %v6619, %v6607
    %v7472 = vpack.c.b16 %v6620, %v6608
    %v7473 = vpack.c.b16 %v6621, %v6609
    %v7474 = vpack.c.b16 %v6622, %v6610
    %v7475 = vpack.c.b16 %v6623, %v6611
    %v7476 = vpack.c.b16 %v6624, %v6612
    %v7477 = vpack.c.b16 %v6625, %v6613
    %v7478 = vpack.c.b16 %v6626, %v6614
    %v7479 = vpack.c.b16 %v6639, %v6627
    %v7480 = vpack.c.b16 %v6640, %v6628
    %v7481 = vpack.c.b16 %v6641, %v6629
    %v7482 = vpack.c.b16 %v6642, %v6630
    %v7483 = vpack.c.b16 %v6643, %v6631
    %v7484 = vpack.c.b16 %v6644, %v6632
    %v7485 = vpack.c.b16 %v6645, %v6633
    %v7486 = vpack.c.b16 %v6646, %v6634
    %v7487 = vpack.c.b16 %v6647, %v6635
    %v7488 = vpack.c.b16 %v6648, %v6636
    %v7489 = vpack.c.b16 %v6649, %v6637
    %v7490 = vpack.c.b16 %v6650, %v6638
    %v7491 = vpack.c.b16 %v6663, %v6651
    %v7492 = vpack.c.b16 %v6664, %v6652
    %v7493 = vpack.c.b16 %v6665, %v6653
    %v7494 = vpack.c.b16 %v6666, %v6654
    %v7495 = vpack.c.b16 %v6667, %v6655
    %v7496 = vpack.c.b16 %v6668, %v6656
    %v7497 = vpack.c.b16 %v6669, %v6657
    %v7498 = vpack.c.b16 %v6670, %v6658
    %v7499 = vpack.c.b16 %v6671, %v6659
    %v7500 = vpack.c.b16 %v6672, %v6660
    %v7501 = vpack.c.b16 %v6673, %v6661
    %v7502 = vpack.c.b16 %v6674, %v6662
    %v7503 = vpack.c.b16 %v6687, %v6675
    %v7504 = vpack.c.b16 %v6688, %v6676
    %v7505 = vpack.c.b16 %v6689, %v6677
    %v7506 = vpack.c.b16 %v6690, %v6678
    %v7507 = vpack.c.b16 %v6691, %v6679
    %v7508 = vpack.c.b16 %v6692, %v6680
    %v7509 = vpack.c.b16 %v6693, %v6681
    %v7510 = vpack.c.b16 %v6694, %v6682
    %v7511 = vpack.c.b16 %v6695, %v6683
    %v7512 = vpack.c.b16 %v6696, %v6684
    %v7513 = vpack.c.b16 %v6697, %v6685
    %v7514 = vpack.c.b16 %v6698, %v6686
    %v7515 = vpack.c.b16 %v6711, %v6699
    %v7516 = vpack.c.b16 %v6712, %v6700
    %v7517 = vpack.c.b16 %v6713, %v6701
    %v7518 = vpack.c.b16 %v6714, %v6702
    %v7519 = vpack.c.b16 %v6715, %v6703
    %v7520 = vpack.c.b16 %v6716, %v6704
    %v7521 = vpack.c.b16 %v6717, %v6705
    %v7522 = vpack.c.b16 %v6718, %v6706
    %v7523 = vpack.c.b16 %v6719, %v6707
    %v7524 = vpack.c.b16 %v6720, %v6708
    %v7525 = vpack.c.b16 %v6721, %v6709
    %v7526 = vpack.c.b16 %v6722, %v6710
    %v7527 = vpack.c.b16 %v6735, %v6723
    %v7528 = vpack.c.b16 %v6736, %v6724
    %v7529 = vpack.c.b16 %v6737, %v6725
    %v7530 = vpack.c.b16 %v6738, %v6726
    %v7531 = vpack.c.b16 %v6739, %v6727
    %v7532 = vpack.c.b16 %v6740, %v6728
    %v7533 = vpack.c.b16 %v6741, %v6729
    %v7534 = vpack.c.b16 %v6742, %v6730
    %v7535 = vpack.c.b16 %v6743, %v6731
    %v7536 = vpack.c.b16 %v6744, %v6732
    %v7537 = vpack.c.b16 %v6745, %v6733
    %v7538 = vpack.c.b16 %v6746, %v6734
    %v7539 = vpack.c.b16 %v6759, %v6747
    %v7540 = vpack.c.b16 %v6760, %v6748
    %v7541 = vpack.c.b16 %v6761, %v6749
    %v7542 = vpack.c.b16 %v6762, %v6750
    %v7543 = vpack.c.b16 %v6763, %v6751
    %v7544 = vpack.c.b16 %v6764, %v6752
    %v7545 = vpack.c.b16 %v6765, %v6753
    %v7546 = vpack.c.b16 %v6766, %v6754
    %v7547 = vpack.c.b16 %v6767, %v6755
    %v7548 = vpack.c.b16 %v6768, %v6756
    %v7549 = vpack.c.b16 %v6769, %v6757
    %v7550 = vpack.c.b16 %v6770, %v6758
    %v7551 = vpack.c.b16 %v6783, %v6771
    %v7552 = vpack.c.b16 %v6784, %v6772
    %v7553 = vpack.c.b16 %v6785, %v6773
    %v7554 = vpack.c.b16 %v6786, %v6774
    %v7555 = vpack.c.b16 %v6787, %v6775
    %v7556 = vpack.c.b16 %v6788, %v6776
    %v7557 = vpack.c.b16 %v6789, %v6777
    %v7558 = vpack.c.b16 %v6790, %v6778
    %v7559 = vpack.c.b16 %v6791, %v6779
    %v7560 = vpack.c.b16 %v6792, %v6780
    %v7561 = vpack.c.b16 %v6793, %v6781
    %v7562 = vpack.c.b16 %v6794, %v6782
    %v7563 = vpack.c.b16 %v6807, %v6795
    %v7564 = vpack.c.b16 %v6808, %v6796
    %v7565 = vpack.c.b16 %v6809, %v6797
    %v7566 = vpack.c.b16 %v6810, %v6798
    %v7567 = vpack.c.b16 %v6811, %v6799
    %v7568 = vpack.c.b16 %v6812, %v6800
    %v7569 = vpack.c.b16 %v6813, %v6801
    %v7570 = vpack.c.b16 %v6814, %v6802
    %v7571 = vpack.c.b16 %v6815, %v6803
    %v7572 = vpack.c.b16 %v6816, %v6804
    %v7573 = vpack.c.b16 %v6817, %v6805
    %v7574 = vpack.c.b16 %v6818, %v6806
    %v7575 = vpack.c.b16 %v6831, %v6819
    %v7576 = vpack.c.b16 %v6832, %v6820
    %v7577 = vpack.c.b16 %v6833, %v6821
    %v7578 = vpack.c.b16 %v6834, %v6822
    %v7579 = vpack.c.b16 %v6835, %v6823
    %v7580 = vpack.c.b16 %v6836, %v6824
    %v7581 = vpack.c.b16 %v6837, %v6825
    %v7582 = vpack.c.b16 %v6838, %v6826
    %v7583 = vpack.c.b16 %v6839, %v6827
    %v7584 = vpack.c.b16 %v6840, %v6828
    %v7585 = vpack.c.b16 %v6841, %v6829
    %v7586 = vpack.c.b16 %v6842, %v6830
    %v7587 = vpack.c.b16 %v6855, %v6843
    %v7588 = vpack.c.b16 %v6856, %v6844
    %v7589 = vpack.c.b16 %v6857, %v6845
    %v7590 = vpack.c.b16 %v6858, %v6846
    %v7591 = vpack.c.b16 %v6859, %v6847
    %v7592 = vpack.c.b16 %v6860, %v6848
    %v7593 = vpack.c.b16 %v6861, %v6849
    %v7594 = vpack.c.b16 %v6862, %v6850
    %v7595 = vpack.c.b16 %v6863, %v6851
    %v7596 = vpack.c.b16 %v6864, %v6852
    %v7597 = vpack.c.b16 %v6865, %v6853
    %v7598 = vpack.c.b16 %v6866, %v6854
    %v7599 = vpack.c.b16 %v6879, %v6867
    %v7600 = vpack.c.b16 %v6880, %v6868
    %v7601 = vpack.c.b16 %v6881, %v6869
    %v7602 = vpack.c.b16 %v6882, %v6870
    %v7603 = vpack.c.b16 %v6883, %v6871
    %v7604 = vpack.c.b16 %v6884, %v6872
    %v7605 = vpack.c.b16 %v6885, %v6873
    %v7606 = vpack.c.b16 %v6886, %v6874
    %v7607 = vpack.c.b16 %v6887, %v6875
    %v7608 = vpack.c.b16 %v6888, %v6876
    %v7609 = vpack.c.b16 %v6889, %v6877
    %v7610 = vpack.c.b16 %v6890, %v6878
    %v7611 = vpack.c.b16 %v6903, %v6891
    %v7612 = vpack.c.b16 %v6904, %v6892
    %v7613 = vpack.c.b16 %v6905, %v6893
    %v7614 = vpack.c.b16 %v6906, %v6894
    %v7615 = vpack.c.b16 %v6907, %v6895
    %v7616 = vpack.c.b16 %v6908, %v6896
    %v7617 = vpack.c.b16 %v6909, %v6897
    %v7618 = vpack.c.b16 %v6910, %v6898
    %v7619 = vpack.c.b16 %v6911, %v6899
    %v7620 = vpack.c.b16 %v6912, %v6900
    %v7621 = vpack.c.b16 %v6913, %v6901
    %v7622 = vpack.c.b16 %v6914, %v6902
    %v7623 = vpack.c.b16 %v6927, %v6915
    %v7624 = vpack.c.b16 %v6928, %v6916
    %v7625 = vpack.c.b16 %v6929, %v6917
    %v7626 = vpack.c.b16 %v6930, %v6918
    %v7627 = vpack.c.b16 %v6931, %v6919
    %v7628 = vpack.c.b16 %v6932, %v6920
    %v7629 = vpack.c.b16 %v6933, %v6921
    %v7630 = vpack.c.b16 %v6934, %v6922
    %v7631 = vpack.c.b16 %v6935, %v6923
    %v7632 = vpack.c.b16 %v6936, %v6924
    %v7633 = vpack.c.b16 %v6937, %v6925
    %v7634 = vpack.c.b16 %v6938, %v6926
    %v7635 = vpack.c.b16 %v6951, %v6939
    %v7636 = vpack.c.b16 %v6952, %v6940
    %v7637 = vpack.c.b16 %v6953, %v6941
    %v7638 = vpack.c.b16 %v6954, %v6942
    %v7639 = vpack.c.b16 %v6955, %v6943
    %v7640 = vpack.c.b16 %v6956, %v6944
    %v7641 = vpack.c.b16 %v6957, %v6945
    %v7642 = vpack.c.b16 %v6958, %v6946
    %v7643 = vpack.c.b16 %v6959, %v6947
    %v7644 = vpack.c.b16 %v6960, %v6948
    %v7645 = vpack.c.b16 %v6961, %v6949
    %v7646 = vpack.c.b16 %v6962, %v6950
    %v7647 = vpack.c.b16 %v6975, %v6963
    %v7648 = vpack.c.b16 %v6976, %v6964
    %v7649 = vpack.c.b16 %v6977, %v6965
    %v7650 = vpack.c.b16 %v6978, %v6966
    %v7651 = vpack.c.b16 %v6979, %v6967
    %v7652 = vpack.c.b16 %v6980, %v6968
    %v7653 = vpack.c.b16 %v6981, %v6969
    %v7654 = vpack.c.b16 %v6982, %v6970
    %v7655 = vpack.c.b16 %v6983, %v6971
    %v7656 = vpack.c.b16 %v6984, %v6972
    %v7657 = vpack.c.b16 %v6985, %v6973
    %v7658 = vpack.c.b16 %v6986, %v6974
    %v7659 = vpack.c.b16 %v6999, %v6987
    %v7660 = vpack.c.b16 %v7000, %v6988
    %v7661 = vpack.c.b16 %v7001, %v6989
    %v7662 = vpack.c.b16 %v7002, %v6990
    %v7663 = vpack.c.b16 %v7003, %v6991
    %v7664 = vpack.c.b16 %v7004, %v6992
    %v7665 = vpack.c.b16 %v7005, %v6993
    %v7666 = vpack.c.b16 %v7006, %v6994
    %v7667 = vpack.c.b16 %v7007, %v6995
    %v7668 = vpack.c.b16 %v7008, %v6996
    %v7669 = vpack.c.b16 %v7009, %v6997
    %v7670 = vpack.c.b16 %v7010, %v6998
    %v7671 = vpack.c.b16 %v7023, %v7011
    %v7672 = vpack.c.b16 %v7024, %v7012
    %v7673 = vpack.c.b16 %v7025, %v7013
    %v7674 = vpack.c.b16 %v7026, %v7014
    %v7675 = vpack.c.b16 %v7027, %v7015
    %v7676 = vpack.c.b16 %v7028, %v7016
    %v7677 = vpack.c.b16 %v7029, %v7017
    %v7678 = vpack.c.b16 %v7030, %v7018
    %v7679 = vpack.c.b16 %v7031, %v7019
    %v7680 = vpack.c.b16 %v7032, %v7020
    %v7681 = vpack.c.b16 %v7033, %v7021
    %v7682 = vpack.c.b16 %v7034, %v7022
    %v7683 = vpack.c.b16 %v7047, %v7035
    %v7684 = vpack.c.b16 %v7048, %v7036
    %v7685 = vpack.c.b16 %v7049, %v7037
    %v7686 = vpack.c.b16 %v7050, %v7038
    %v7687 = vpack.c.b16 %v7051, %v7039
    %v7688 = vpack.c.b16 %v7052, %v7040
    %v7689 = vpack.c.b16 %v7053, %v7041
    %v7690 = vpack.c.b16 %v7054, %v7042
    %v7691 = vpack.c.b16 %v7055, %v7043
    %v7692 = vpack.c.b16 %v7056, %v7044
    %v7693 = vpack.c.b16 %v7057, %v7045
    %v7694 = vpack.c.b16 %v7058, %v7046
    %v7695 = vpack.c.b16 %v7071, %v7059
    %v7696 = vpack.c.b16 %v7072, %v7060
    %v7697 = vpack.c.b16 %v7073, %v7061
    %v7698 = vpack.c.b16 %v7074, %v7062
    %v7699 = vpack.c.b16 %v7075, %v7063
    %v7700 = vpack.c.b16 %v7076, %v7064
    %v7701 = vpack.c.b16 %v7077, %v7065
    %v7702 = vpack.c.b16 %v7078, %v7066
    %v7703 = vpack.c.b16 %v7079, %v7067
    %v7704 = vpack.c.b16 %v7080, %v7068
    %v7705 = vpack.c.b16 %v7081, %v7069
    %v7706 = vpack.c.b16 %v7082, %v7070
    %v7707 = vpack.c.b16 %v7095, %v7083
    %v7708 = vpack.c.b16 %v7096, %v7084
    %v7709 = vpack.c.b16 %v7097, %v7085
    %v7710 = vpack.c.b16 %v7098, %v7086
    %v7711 = vpack.c.b16 %v7099, %v7087
    %v7712 = vpack.c.b16 %v7100, %v7088
    %v7713 = vpack.c.b16 %v7101, %v7089
    %v7714 = vpack.c.b16 %v7102, %v7090
    %v7715 = vpack.c.b16 %v7103, %v7091
    %v7716 = vpack.c.b16 %v7104, %v7092
    %v7717 = vpack.c.b16 %v7105, %v7093
    %v7718 = vpack.c.b16 %v7106, %v7094
    %v7719 = vpack.c.b16 %v7119, %v7107
    %v7720 = vpack.c.b16 %v7120, %v7108
    %v7721 = vpack.c.b16 %v7121, %v7109
    %v7722 = vpack.c.b16 %v7122, %v7110
    %v7723 = vpack.c.b16 %v7123, %v7111
    %v7724 = vpack.c.b16 %v7124, %v7112
    %v7725 = vpack.c.b16 %v7125, %v7113
    %v7726 = vpack.c.b16 %v7126, %v7114
    %v7727 = vpack.c.b16 %v7127, %v7115
    %v7728 = vpack.c.b16 %v7128, %v7116
    %v7729 = vpack.c.b16 %v7129, %v7117
    %v7730 = vpack.c.b16 %v7130, %v7118
    %v7731 = vpack.c.b16 %v7143, %v7131
    %v7732 = vpack.c.b16 %v7144, %v7132
    %v7733 = vpack.c.b16 %v7145, %v7133
    %v7734 = vpack.c.b16 %v7146, %v7134
    %v7735 = vpack.c.b16 %v7147, %v7135
    %v7736 = vpack.c.b16 %v7148, %v7136
    %v7737 = vpack.c.b16 %v7149, %v7137
    %v7738 = vpack.c.b16 %v7150, %v7138
    %v7739 = vpack.c.b16 %v7151, %v7139
    %v7740 = vpack.c.b16 %v7152, %v7140
    %v7741 = vpack.c.b16 %v7153, %v7141
    %v7742 = vpack.c.b16 %v7154, %v7142
    %v7743 = vpack.c.b16 %v7167, %v7155
    %v7744 = vpack.c.b16 %v7168, %v7156
    %v7745 = vpack.c.b16 %v7169, %v7157
    %v7746 = vpack.c.b16 %v7170, %v7158
    %v7747 = vpack.c.b16 %v7171, %v7159
    %v7748 = vpack.c.b16 %v7172, %v7160
    %v7749 = vpack.c.b16 %v7173, %v7161
    %v7750 = vpack.c.b16 %v7174, %v7162
    %v7751 = vpack.c.b16 %v7175, %v7163
    %v7752 = vpack.c.b16 %v7176, %v7164
    %v7753 = vpack.c.b16 %v7177, %v7165
    %v7754 = vpack.c.b16 %v7178, %v7166
    %8331 = vmatprep.subr.bf16.mxu0 %v7180
    %8332 = vmatpush1.bf16.msra.mxu0 %v7179
    %8333 = vmatprep.subr.bf16.mxu0 %v7192
    %8334 = vmatpush1.bf16.msra.mxu0 %v7191
    %8335 = vmatprep.subr.bf16.mxu0 %v7204
    %8336 = vmatpush1.bf16.msra.mxu0 %v7203
    %8337 = vmatprep.subr.bf16.mxu0 %v7216
    %8338 = vmatpush1.bf16.msra.mxu0 %v7215
    %8339 = vmatprep.subr.bf16.mxu0 %v7228
    %8340 = vmatpush1.bf16.msra.mxu0 %v7227
    %8341 = vmatprep.subr.bf16.mxu0 %v7240
    %8342 = vmatpush1.bf16.msra.mxu0 %v7239
    %8343 = vmatprep.subr.bf16.mxu0 %v7252
    %8344 = vmatpush1.bf16.msra.mxu0 %v7251
    %8345 = vmatprep.subr.bf16.mxu0 %v7264
    %8346 = vmatpush1.bf16.msra.mxu0 %v7263
    %8347 = vmatprep.subr.bf16.mxu0 %v7276
    %8348 = vmatpush1.bf16.msra.mxu0 %v7275
    %8349 = vmatprep.subr.bf16.mxu0 %v7288
    %8350 = vmatpush1.bf16.msra.mxu0 %v7287
    %8351 = vmatprep.subr.bf16.mxu0 %v7300
    %8352 = vmatpush1.bf16.msra.mxu0 %v7299
    %8353 = vmatprep.subr.bf16.mxu0 %v7312
    %8354 = vmatpush1.bf16.msra.mxu0 %v7311
    %8355 = vmatprep.subr.bf16.mxu0 %v7324
    %8356 = vmatpush1.bf16.msra.mxu0 %v7323
    %8357 = vmatprep.subr.bf16.mxu0 %v7336
    %8358 = vmatpush1.bf16.msra.mxu0 %v7335
    %8359 = vmatprep.subr.bf16.mxu0 %v7348
    %8360 = vmatpush1.bf16.msra.mxu0 %v7347
    %8361 = vmatprep.subr.bf16.mxu0 %v7360
    %8362 = vmatpush1.bf16.msra.mxu0 %v7359
    %8363 = vmatprep.mubr.bf16.mxu0 %v669
    %8364 = vmatmul.mubr.bf16.gmra.mrb[0].mxu0 %v668
    %v8365 = vpop.f32.mrb[0].mxu0
    %v8366 = vadd.f32 %v4830, %v8365
    %v8367 = vpop.f32.mrb[0].mxu0
    %v8368 = vadd.f32 %v4832, %v8367
    %v8369 = vpop.f32.mrb[0].mxu0
    %v8370 = vpop.f32.mrb[0].mxu0
    %8371 = vdwg.mxu0
    %8372 = vmatprep.subr.bf16.mxu0 %v7372
    %8373 = vmatpush1.bf16.msra.mxu0 %v7371
    %8374 = vmatprep.subr.bf16.mxu0 %v7384
    %8375 = vmatpush1.bf16.msra.mxu0 %v7383
    %8376 = vmatprep.subr.bf16.mxu0 %v7396
    %8377 = vmatpush1.bf16.msra.mxu0 %v7395
    %8378 = vmatprep.subr.bf16.mxu0 %v7408
    %8379 = vmatpush1.bf16.msra.mxu0 %v7407
    %8380 = vmatprep.subr.bf16.mxu0 %v7420
    %8381 = vmatpush1.bf16.msra.mxu0 %v7419
    %8382 = vmatprep.subr.bf16.mxu0 %v7432
    %8383 = vmatpush1.bf16.msra.mxu0 %v7431
    %8384 = vmatprep.subr.bf16.mxu0 %v7444
    %8385 = vmatpush1.bf16.msra.mxu0 %v7443
    %8386 = vmatprep.subr.bf16.mxu0 %v7456
    %8387 = vmatpush1.bf16.msra.mxu0 %v7455
    %8388 = vmatprep.subr.bf16.mxu0 %v7468
    %8389 = vmatpush1.bf16.msra.mxu0 %v7467
    %8390 = vmatprep.subr.bf16.mxu0 %v7480
    %8391 = vmatpush1.bf16.msra.mxu0 %v7479
    %8392 = vmatprep.subr.bf16.mxu0 %v7492
    %8393 = vmatpush1.bf16.msra.mxu0 %v7491
    %8394 = vmatprep.subr.bf16.mxu0 %v7504
    %8395 = vmatpush1.bf16.msra.mxu0 %v7503
    %8396 = vmatprep.subr.bf16.mxu0 %v7516
    %8397 = vmatpush1.bf16.msra.mxu0 %v7515
    %8398 = vmatprep.subr.bf16.mxu0 %v7528
    %8399 = vmatpush1.bf16.msra.mxu0 %v7527
    %8400 = vmatprep.subr.bf16.mxu0 %v7540
    %8401 = vmatpush1.bf16.msra.mxu0 %v7539
    %8402 = vmatprep.subr.bf16.mxu0 %v7552
    %8403 = vmatpush1.bf16.msra.mxu0 %v7551
    %8404 = vmatprep.mubr.bf16.mxu0 %v671
    %8405 = vmatmul.mubr.bf16.gmra.mrb[0].mxu0 %v670
    %v8406 = vpop.f32.mrb[0].mxu0
    %v8407 = vadd.f32 %v8366, %v8406
    %v8408 = vpop.f32.mrb[0].mxu0
    %v8409 = vadd.f32 %v8368, %v8408
    %v8410 = vpop.f32.mrb[0].mxu0
    %v8411 = vpop.f32.mrb[0].mxu0
    %8412 = vdwg.mxu0
    %8413 = vmatprep.subr.bf16.mxu0 %v7564
    %8414 = vmatpush1.bf16.msra.mxu0 %v7563
    %8415 = vmatprep.subr.bf16.mxu0 %v7576
    %8416 = vmatpush1.bf16.msra.mxu0 %v7575
    %8417 = vmatprep.subr.bf16.mxu0 %v7588
    %8418 = vmatpush1.bf16.msra.mxu0 %v7587
    %8419 = vmatprep.subr.bf16.mxu0 %v7600
    %8420 = vmatpush1.bf16.msra.mxu0 %v7599
    %8421 = vmatprep.subr.bf16.mxu0 %v7612
    %8422 = vmatpush1.bf16.msra.mxu0 %v7611
    %8423 = vmatprep.subr.bf16.mxu0 %v7624
    %8424 = vmatpush1.bf16.msra.mxu0 %v7623
    %8425 = vmatprep.subr.bf16.mxu0 %v7636
    %8426 = vmatpush1.bf16.msra.mxu0 %v7635
    %8427 = vmatprep.subr.bf16.mxu0 %v7648
    %8428 = vmatpush1.bf16.msra.mxu0 %v7647
    %8429 = vmatprep.subr.bf16.mxu0 %v7660
    %8430 = vmatpush1.bf16.msra.mxu0 %v7659
    %8431 = vmatprep.subr.bf16.mxu0 %v7672
    %8432 = vmatpush1.bf16.msra.mxu0 %v7671
    %8433 = vmatprep.subr.bf16.mxu0 %v7684
    %8434 = vmatpush1.bf16.msra.mxu0 %v7683
    %8435 = vmatprep.subr.bf16.mxu0 %v7696
    %8436 = vmatpush1.bf16.msra.mxu0 %v7695
    %8437 = vmatprep.subr.bf16.mxu0 %v7708
    %8438 = vmatpush1.bf16.msra.mxu0 %v7707
    %8439 = vmatprep.subr.bf16.mxu0 %v7720
    %8440 = vmatpush1.bf16.msra.mxu0 %v7719
    %8441 = vmatprep.subr.bf16.mxu0 %v7732
    %8442 = vmatpush1.bf16.msra.mxu0 %v7731
    %8443 = vmatprep.subr.bf16.mxu0 %v7744
    %8444 = vmatpush1.bf16.msra.mxu0 %v7743
    %8445 = vmatprep.mubr.bf16.mxu0 %v673
    %8446 = vmatmul.mubr.bf16.gmra.mrb[0].mxu0 %v672
    %v8447 = vpop.f32.mrb[0].mxu0
    %v8448 = vadd.f32 %v8407, %v8447
    %v8449 = vpop.f32.mrb[0].mxu0
    %v8450 = vadd.f32 %v8409, %v8449
    %v8451 = vpop.f32.mrb[0].mxu0
    %v8452 = vpop.f32.mrb[0].mxu0
    %8453 = vdwg.mxu0
    %8454 = vmatprep.subr.bf16.mxu0 %v7182
    %8455 = vmatpush1.bf16.msra.mxu0 %v7181
    %8456 = vmatprep.subr.bf16.mxu0 %v7194
    %8457 = vmatpush1.bf16.msra.mxu0 %v7193
    %8458 = vmatprep.subr.bf16.mxu0 %v7206
    %8459 = vmatpush1.bf16.msra.mxu0 %v7205
    %8460 = vmatprep.subr.bf16.mxu0 %v7218
    %8461 = vmatpush1.bf16.msra.mxu0 %v7217
    %8462 = vmatprep.subr.bf16.mxu0 %v7230
    %8463 = vmatpush1.bf16.msra.mxu0 %v7229
    %8464 = vmatprep.subr.bf16.mxu0 %v7242
    %8465 = vmatpush1.bf16.msra.mxu0 %v7241
    %8466 = vmatprep.subr.bf16.mxu0 %v7254
    %8467 = vmatpush1.bf16.msra.mxu0 %v7253
    %8468 = vmatprep.subr.bf16.mxu0 %v7266
    %8469 = vmatpush1.bf16.msra.mxu0 %v7265
    %8470 = vmatprep.subr.bf16.mxu0 %v7278
    %8471 = vmatpush1.bf16.msra.mxu0 %v7277
    %8472 = vmatprep.subr.bf16.mxu0 %v7290
    %8473 = vmatpush1.bf16.msra.mxu0 %v7289
    %8474 = vmatprep.subr.bf16.mxu0 %v7302
    %8475 = vmatpush1.bf16.msra.mxu0 %v7301
    %8476 = vmatprep.subr.bf16.mxu0 %v7314
    %8477 = vmatpush1.bf16.msra.mxu0 %v7313
    %8478 = vmatprep.subr.bf16.mxu0 %v7326
    %8479 = vmatpush1.bf16.msra.mxu0 %v7325
    %8480 = vmatprep.subr.bf16.mxu0 %v7338
    %8481 = vmatpush1.bf16.msra.mxu0 %v7337
    %8482 = vmatprep.subr.bf16.mxu0 %v7350
    %8483 = vmatpush1.bf16.msra.mxu0 %v7349
    %8484 = vmatprep.subr.bf16.mxu0 %v7362
    %8485 = vmatpush1.bf16.msra.mxu0 %v7361
    %8486 = vmatprep.mubr.bf16.mxu0 %v669
    %8487 = vmatmul.mubr.bf16.gmra.mrb[0].mxu0 %v668
    %v8488 = vpop.f32.mrb[0].mxu0
    %v8489 = vadd.f32 %v4953, %v8488
    %v8490 = vpop.f32.mrb[0].mxu0
    %v8491 = vadd.f32 %v4955, %v8490
    %v8492 = vpop.f32.mrb[0].mxu0
    %v8493 = vpop.f32.mrb[0].mxu0
    %8494 = vdwg.mxu0
    %8495 = vmatprep.subr.bf16.mxu0 %v7374
    %8496 = vmatpush1.bf16.msra.mxu0 %v7373
    %8497 = vmatprep.subr.bf16.mxu0 %v7386
    %8498 = vmatpush1.bf16.msra.mxu0 %v7385
    %8499 = vmatprep.subr.bf16.mxu0 %v7398
    %8500 = vmatpush1.bf16.msra.mxu0 %v7397
    %8501 = vmatprep.subr.bf16.mxu0 %v7410
    %8502 = vmatpush1.bf16.msra.mxu0 %v7409
    %8503 = vmatprep.subr.bf16.mxu0 %v7422
    %8504 = vmatpush1.bf16.msra.mxu0 %v7421
    %8505 = vmatprep.subr.bf16.mxu0 %v7434
    %8506 = vmatpush1.bf16.msra.mxu0 %v7433
    %8507 = vmatprep.subr.bf16.mxu0 %v7446
    %8508 = vmatpush1.bf16.msra.mxu0 %v7445
    %8509 = vmatprep.subr.bf16.mxu0 %v7458
    %8510 = vmatpush1.bf16.msra.mxu0 %v7457
    %8511 = vmatprep.subr.bf16.mxu0 %v7470
    %8512 = vmatpush1.bf16.msra.mxu0 %v7469
    %8513 = vmatprep.subr.bf16.mxu0 %v7482
    %8514 = vmatpush1.bf16.msra.mxu0 %v7481
    %8515 = vmatprep.subr.bf16.mxu0 %v7494
    %8516 = vmatpush1.bf16.msra.mxu0 %v7493
    %8517 = vmatprep.subr.bf16.mxu0 %v7506
    %8518 = vmatpush1.bf16.msra.mxu0 %v7505
    %8519 = vmatprep.subr.bf16.mxu0 %v7518
    %8520 = vmatpush1.bf16.msra.mxu0 %v7517
    %8521 = vmatprep.subr.bf16.mxu0 %v7530
    %8522 = vmatpush1.bf16.msra.mxu0 %v7529
    %8523 = vmatprep.subr.bf16.mxu0 %v7542
    %8524 = vmatpush1.bf16.msra.mxu0 %v7541
    %8525 = vmatprep.subr.bf16.mxu0 %v7554
    %8526 = vmatpush1.bf16.msra.mxu0 %v7553
    %8527 = vmatprep.mubr.bf16.mxu0 %v671
    %8528 = vmatmul.mubr.bf16.gmra.mrb[0].mxu0 %v670
    %v8529 = vpop.f32.mrb[0].mxu0
    %v8530 = vadd.f32 %v8489, %v8529
    %v8531 = vpop.f32.mrb[0].mxu0
    %v8532 = vadd.f32 %v8491, %v8531
    %v8533 = vpop.f32.mrb[0].mxu0
    %v8534 = vpop.f32.mrb[0].mxu0
    %8535 = vdwg.mxu0
    %8536 = vmatprep.subr.bf16.mxu0 %v7566
    %8537 = vmatpush1.bf16.msra.mxu0 %v7565
    %8538 = vmatprep.subr.bf16.mxu0 %v7578
    %8539 = vmatpush1.bf16.msra.mxu0 %v7577
    %8540 = vmatprep.subr.bf16.mxu0 %v7590
    %8541 = vmatpush1.bf16.msra.mxu0 %v7589
    %8542 = vmatprep.subr.bf16.mxu0 %v7602
    %8543 = vmatpush1.bf16.msra.mxu0 %v7601
    %8544 = vmatprep.subr.bf16.mxu0 %v7614
    %8545 = vmatpush1.bf16.msra.mxu0 %v7613
    %8546 = vmatprep.subr.bf16.mxu0 %v7626
    %8547 = vmatpush1.bf16.msra.mxu0 %v7625
    %8548 = vmatprep.subr.bf16.mxu0 %v7638
    %8549 = vmatpush1.bf16.msra.mxu0 %v7637
    %8550 = vmatprep.subr.bf16.mxu0 %v7650
    %8551 = vmatpush1.bf16.msra.mxu0 %v7649
    %8552 = vmatprep.subr.bf16.mxu0 %v7662
    %8553 = vmatpush1.bf16.msra.mxu0 %v7661
    %8554 = vmatprep.subr.bf16.mxu0 %v7674
    %8555 = vmatpush1.bf16.msra.mxu0 %v7673
    %8556 = vmatprep.subr.bf16.mxu0 %v7686
    %8557 = vmatpush1.bf16.msra.mxu0 %v7685
    %8558 = vmatprep.subr.bf16.mxu0 %v7698
    %8559 = vmatpush1.bf16.msra.mxu0 %v7697
    %8560 = vmatprep.subr.bf16.mxu0 %v7710
    %8561 = vmatpush1.bf16.msra.mxu0 %v7709
    %8562 = vmatprep.subr.bf16.mxu0 %v7722
    %8563 = vmatpush1.bf16.msra.mxu0 %v7721
    %8564 = vmatprep.subr.bf16.mxu0 %v7734
    %8565 = vmatpush1.bf16.msra.mxu0 %v7733
    %8566 = vmatprep.subr.bf16.mxu0 %v7746
    %8567 = vmatpush1.bf16.msra.mxu0 %v7745
    %8568 = vmatprep.mubr.bf16.mxu0 %v673
    %8569 = vmatmul.mubr.bf16.gmra.mrb[0].mxu0 %v672
    %v8570 = vpop.f32.mrb[0].mxu0
    %v8571 = vadd.f32 %v8530, %v8570
    %v8572 = vpop.f32.mrb[0].mxu0
    %v8573 = vadd.f32 %v8532, %v8572
    %v8574 = vpop.f32.mrb[0].mxu0
    %v8575 = vpop.f32.mrb[0].mxu0
    %8576 = vdwg.mxu0
    %8577 = vmatprep.subr.bf16.mxu0 %v7184
    %8578 = vmatpush1.bf16.msra.mxu0 %v7183
    %8579 = vmatprep.subr.bf16.mxu0 %v7196
    %8580 = vmatpush1.bf16.msra.mxu0 %v7195
    %8581 = vmatprep.subr.bf16.mxu0 %v7208
    %8582 = vmatpush1.bf16.msra.mxu0 %v7207
    %8583 = vmatprep.subr.bf16.mxu0 %v7220
    %8584 = vmatpush1.bf16.msra.mxu0 %v7219
    %8585 = vmatprep.subr.bf16.mxu0 %v7232
    %8586 = vmatpush1.bf16.msra.mxu0 %v7231
    %8587 = vmatprep.subr.bf16.mxu0 %v7244
    %8588 = vmatpush1.bf16.msra.mxu0 %v7243
    %8589 = vmatprep.subr.bf16.mxu0 %v7256
    %8590 = vmatpush1.bf16.msra.mxu0 %v7255
    %8591 = vmatprep.subr.bf16.mxu0 %v7268
    %8592 = vmatpush1.bf16.msra.mxu0 %v7267
    %8593 = vmatprep.subr.bf16.mxu0 %v7280
    %8594 = vmatpush1.bf16.msra.mxu0 %v7279
    %8595 = vmatprep.subr.bf16.mxu0 %v7292
    %8596 = vmatpush1.bf16.msra.mxu0 %v7291
    %8597 = vmatprep.subr.bf16.mxu0 %v7304
    %8598 = vmatpush1.bf16.msra.mxu0 %v7303
    %8599 = vmatprep.subr.bf16.mxu0 %v7316
    %8600 = vmatpush1.bf16.msra.mxu0 %v7315
    %8601 = vmatprep.subr.bf16.mxu0 %v7328
    %8602 = vmatpush1.bf16.msra.mxu0 %v7327
    %8603 = vmatprep.subr.bf16.mxu0 %v7340
    %8604 = vmatpush1.bf16.msra.mxu0 %v7339
    %8605 = vmatprep.subr.bf16.mxu0 %v7352
    %8606 = vmatpush1.bf16.msra.mxu0 %v7351
    %8607 = vmatprep.subr.bf16.mxu0 %v7364
    %8608 = vmatpush1.bf16.msra.mxu0 %v7363
    %8609 = vmatprep.mubr.bf16.mxu0 %v669
    %8610 = vmatmul.mubr.bf16.gmra.mrb[0].mxu0 %v668
    %v8611 = vpop.f32.mrb[0].mxu0
    %v8612 = vadd.f32 %v5076, %v8611
    %v8613 = vpop.f32.mrb[0].mxu0
    %v8614 = vadd.f32 %v5078, %v8613
    %v8615 = vpop.f32.mrb[0].mxu0
    %v8616 = vpop.f32.mrb[0].mxu0
    %8617 = vdwg.mxu0
    %8618 = vmatprep.subr.bf16.mxu0 %v7376
    %8619 = vmatpush1.bf16.msra.mxu0 %v7375
    %8620 = vmatprep.subr.bf16.mxu0 %v7388
    %8621 = vmatpush1.bf16.msra.mxu0 %v7387
    %8622 = vmatprep.subr.bf16.mxu0 %v7400
    %8623 = vmatpush1.bf16.msra.mxu0 %v7399
    %8624 = vmatprep.subr.bf16.mxu0 %v7412
    %8625 = vmatpush1.bf16.msra.mxu0 %v7411
    %8626 = vmatprep.subr.bf16.mxu0 %v7424
    %8627 = vmatpush1.bf16.msra.mxu0 %v7423
    %8628 = vmatprep.subr.bf16.mxu0 %v7436
    %8629 = vmatpush1.bf16.msra.mxu0 %v7435
    %8630 = vmatprep.subr.bf16.mxu0 %v7448
    %8631 = vmatpush1.bf16.msra.mxu0 %v7447
    %8632 = vmatprep.subr.bf16.mxu0 %v7460
    %8633 = vmatpush1.bf16.msra.mxu0 %v7459
    %8634 = vmatprep.subr.bf16.mxu0 %v7472
    %8635 = vmatpush1.bf16.msra.mxu0 %v7471
    %8636 = vmatprep.subr.bf16.mxu0 %v7484
    %8637 = vmatpush1.bf16.msra.mxu0 %v7483
    %8638 = vmatprep.subr.bf16.mxu0 %v7496
    %8639 = vmatpush1.bf16.msra.mxu0 %v7495
    %8640 = vmatprep.subr.bf16.mxu0 %v7508
    %8641 = vmatpush1.bf16.msra.mxu0 %v7507
    %8642 = vmatprep.subr.bf16.mxu0 %v7520
    %8643 = vmatpush1.bf16.msra.mxu0 %v7519
    %8644 = vmatprep.subr.bf16.mxu0 %v7532
    %8645 = vmatpush1.bf16.msra.mxu0 %v7531
    %8646 = vmatprep.subr.bf16.mxu0 %v7544
    %8647 = vmatpush1.bf16.msra.mxu0 %v7543
    %8648 = vmatprep.subr.bf16.mxu0 %v7556
    %8649 = vmatpush1.bf16.msra.mxu0 %v7555
    %8650 = vmatprep.mubr.bf16.mxu0 %v671
    %8651 = vmatmul.mubr.bf16.gmra.mrb[0].mxu0 %v670
    %v8652 = vpop.f32.mrb[0].mxu0
    %v8653 = vadd.f32 %v8612, %v8652
    %v8654 = vpop.f32.mrb[0].mxu0
    %v8655 = vadd.f32 %v8614, %v8654
    %v8656 = vpop.f32.mrb[0].mxu0
    %v8657 = vpop.f32.mrb[0].mxu0
    %8658 = vdwg.mxu0
    %8659 = vmatprep.subr.bf16.mxu0 %v7568
    %8660 = vmatpush1.bf16.msra.mxu0 %v7567
    %8661 = vmatprep.subr.bf16.mxu0 %v7580
    %8662 = vmatpush1.bf16.msra.mxu0 %v7579
    %8663 = vmatprep.subr.bf16.mxu0 %v7592
    %8664 = vmatpush1.bf16.msra.mxu0 %v7591
    %8665 = vmatprep.subr.bf16.mxu0 %v7604
    %8666 = vmatpush1.bf16.msra.mxu0 %v7603
    %8667 = vmatprep.subr.bf16.mxu0 %v7616
    %8668 = vmatpush1.bf16.msra.mxu0 %v7615
    %8669 = vmatprep.subr.bf16.mxu0 %v7628
    %8670 = vmatpush1.bf16.msra.mxu0 %v7627
    %8671 = vmatprep.subr.bf16.mxu0 %v7640
    %8672 = vmatpush1.bf16.msra.mxu0 %v7639
    %8673 = vmatprep.subr.bf16.mxu0 %v7652
    %8674 = vmatpush1.bf16.msra.mxu0 %v7651
    %8675 = vmatprep.subr.bf16.mxu0 %v7664
    %8676 = vmatpush1.bf16.msra.mxu0 %v7663
    %8677 = vmatprep.subr.bf16.mxu0 %v7676
    %8678 = vmatpush1.bf16.msra.mxu0 %v7675
    %8679 = vmatprep.subr.bf16.mxu0 %v7688
    %8680 = vmatpush1.bf16.msra.mxu0 %v7687
    %8681 = vmatprep.subr.bf16.mxu0 %v7700
    %8682 = vmatpush1.bf16.msra.mxu0 %v7699
    %8683 = vmatprep.subr.bf16.mxu0 %v7712
    %8684 = vmatpush1.bf16.msra.mxu0 %v7711
    %8685 = vmatprep.subr.bf16.mxu0 %v7724
    %8686 = vmatpush1.bf16.msra.mxu0 %v7723
    %8687 = vmatprep.subr.bf16.mxu0 %v7736
    %8688 = vmatpush1.bf16.msra.mxu0 %v7735
    %8689 = vmatprep.subr.bf16.mxu0 %v7748
    %8690 = vmatpush1.bf16.msra.mxu0 %v7747
    %8691 = vmatprep.mubr.bf16.mxu0 %v673
    %8692 = vmatmul.mubr.bf16.gmra.mrb[0].mxu0 %v672
    %v8693 = vpop.f32.mrb[0].mxu0
    %v8694 = vadd.f32 %v8653, %v8693
    %v8695 = vpop.f32.mrb[0].mxu0
    %v8696 = vadd.f32 %v8655, %v8695
    %v8697 = vpop.f32.mrb[0].mxu0
    %v8698 = vpop.f32.mrb[0].mxu0
    %8699 = vdwg.mxu0
    %8700 = vmatprep.subr.bf16.mxu0 %v7186
    %8701 = vmatpush1.bf16.msra.mxu0 %v7185
    %8702 = vmatprep.subr.bf16.mxu0 %v7198
    %8703 = vmatpush1.bf16.msra.mxu0 %v7197
    %8704 = vmatprep.subr.bf16.mxu0 %v7210
    %8705 = vmatpush1.bf16.msra.mxu0 %v7209
    %8706 = vmatprep.subr.bf16.mxu0 %v7222
    %8707 = vmatpush1.bf16.msra.mxu0 %v7221
    %8708 = vmatprep.subr.bf16.mxu0 %v7234
    %8709 = vmatpush1.bf16.msra.mxu0 %v7233
    %8710 = vmatprep.subr.bf16.mxu0 %v7246
    %8711 = vmatpush1.bf16.msra.mxu0 %v7245
    %8712 = vmatprep.subr.bf16.mxu0 %v7258
    %8713 = vmatpush1.bf16.msra.mxu0 %v7257
    %8714 = vmatprep.subr.bf16.mxu0 %v7270
    %8715 = vmatpush1.bf16.msra.mxu0 %v7269
    %8716 = vmatprep.subr.bf16.mxu0 %v7282
    %8717 = vmatpush1.bf16.msra.mxu0 %v7281
    %8718 = vmatprep.subr.bf16.mxu0 %v7294
    %8719 = vmatpush1.bf16.msra.mxu0 %v7293
    %8720 = vmatprep.subr.bf16.mxu0 %v7306
    %8721 = vmatpush1.bf16.msra.mxu0 %v7305
    %8722 = vmatprep.subr.bf16.mxu0 %v7318
    %8723 = vmatpush1.bf16.msra.mxu0 %v7317
    %8724 = vmatprep.subr.bf16.mxu0 %v7330
    %8725 = vmatpush1.bf16.msra.mxu0 %v7329
    %8726 = vmatprep.subr.bf16.mxu0 %v7342
    %8727 = vmatpush1.bf16.msra.mxu0 %v7341
    %8728 = vmatprep.subr.bf16.mxu0 %v7354
    %8729 = vmatpush1.bf16.msra.mxu0 %v7353
    %8730 = vmatprep.subr.bf16.mxu0 %v7366
    %8731 = vmatpush1.bf16.msra.mxu0 %v7365
    %8732 = vmatprep.mubr.bf16.mxu0 %v669
    %8733 = vmatmul.mubr.bf16.gmra.mrb[0].mxu0 %v668
    %v8734 = vpop.f32.mrb[0].mxu0
    %v8735 = vadd.f32 %v5199, %v8734
    %v8736 = vpop.f32.mrb[0].mxu0
    %v8737 = vadd.f32 %v5201, %v8736
    %v8738 = vpop.f32.mrb[0].mxu0
    %v8739 = vpop.f32.mrb[0].mxu0
    %8740 = vdwg.mxu0
    %8741 = vmatprep.subr.bf16.mxu0 %v7378
    %8742 = vmatpush1.bf16.msra.mxu0 %v7377
    %8743 = vmatprep.subr.bf16.mxu0 %v7390
    %8744 = vmatpush1.bf16.msra.mxu0 %v7389
    %8745 = vmatprep.subr.bf16.mxu0 %v7402
    %8746 = vmatpush1.bf16.msra.mxu0 %v7401
    %8747 = vmatprep.subr.bf16.mxu0 %v7414
    %8748 = vmatpush1.bf16.msra.mxu0 %v7413
    %8749 = vmatprep.subr.bf16.mxu0 %v7426
    %8750 = vmatpush1.bf16.msra.mxu0 %v7425
    %8751 = vmatprep.subr.bf16.mxu0 %v7438
    %8752 = vmatpush1.bf16.msra.mxu0 %v7437
    %8753 = vmatprep.subr.bf16.mxu0 %v7450
    %8754 = vmatpush1.bf16.msra.mxu0 %v7449
    %8755 = vmatprep.subr.bf16.mxu0 %v7462
    %8756 = vmatpush1.bf16.msra.mxu0 %v7461
    %8757 = vmatprep.subr.bf16.mxu0 %v7474
    %8758 = vmatpush1.bf16.msra.mxu0 %v7473
    %8759 = vmatprep.subr.bf16.mxu0 %v7486
    %8760 = vmatpush1.bf16.msra.mxu0 %v7485
    %8761 = vmatprep.subr.bf16.mxu0 %v7498
    %8762 = vmatpush1.bf16.msra.mxu0 %v7497
    %8763 = vmatprep.subr.bf16.mxu0 %v7510
    %8764 = vmatpush1.bf16.msra.mxu0 %v7509
    %8765 = vmatprep.subr.bf16.mxu0 %v7522
    %8766 = vmatpush1.bf16.msra.mxu0 %v7521
    %8767 = vmatprep.subr.bf16.mxu0 %v7534
    %8768 = vmatpush1.bf16.msra.mxu0 %v7533
    %8769 = vmatprep.subr.bf16.mxu0 %v7546
    %8770 = vmatpush1.bf16.msra.mxu0 %v7545
    %8771 = vmatprep.subr.bf16.mxu0 %v7558
    %8772 = vmatpush1.bf16.msra.mxu0 %v7557
    %8773 = vmatprep.mubr.bf16.mxu0 %v671
    %8774 = vmatmul.mubr.bf16.gmra.mrb[0].mxu0 %v670
    %v8775 = vpop.f32.mrb[0].mxu0
    %v8776 = vadd.f32 %v8735, %v8775
    %v8777 = vpop.f32.mrb[0].mxu0
    %v8778 = vadd.f32 %v8737, %v8777
    %v8779 = vpop.f32.mrb[0].mxu0
    %v8780 = vpop.f32.mrb[0].mxu0
    %8781 = vdwg.mxu0
    %8782 = vmatprep.subr.bf16.mxu0 %v7570
    %8783 = vmatpush1.bf16.msra.mxu0 %v7569
    %8784 = vmatprep.subr.bf16.mxu0 %v7582
    %8785 = vmatpush1.bf16.msra.mxu0 %v7581
    %8786 = vmatprep.subr.bf16.mxu0 %v7594
    %8787 = vmatpush1.bf16.msra.mxu0 %v7593
    %8788 = vmatprep.subr.bf16.mxu0 %v7606
    %8789 = vmatpush1.bf16.msra.mxu0 %v7605
    %8790 = vmatprep.subr.bf16.mxu0 %v7618
    %8791 = vmatpush1.bf16.msra.mxu0 %v7617
    %8792 = vmatprep.subr.bf16.mxu0 %v7630
    %8793 = vmatpush1.bf16.msra.mxu0 %v7629
    %8794 = vmatprep.subr.bf16.mxu0 %v7642
    %8795 = vmatpush1.bf16.msra.mxu0 %v7641
    %8796 = vmatprep.subr.bf16.mxu0 %v7654
    %8797 = vmatpush1.bf16.msra.mxu0 %v7653
    %8798 = vmatprep.subr.bf16.mxu0 %v7666
    %8799 = vmatpush1.bf16.msra.mxu0 %v7665
    %8800 = vmatprep.subr.bf16.mxu0 %v7678
    %8801 = vmatpush1.bf16.msra.mxu0 %v7677
    %8802 = vmatprep.subr.bf16.mxu0 %v7690
    %8803 = vmatpush1.bf16.msra.mxu0 %v7689
    %8804 = vmatprep.subr.bf16.mxu0 %v7702
    %8805 = vmatpush1.bf16.msra.mxu0 %v7701
    %8806 = vmatprep.subr.bf16.mxu0 %v7714
    %8807 = vmatpush1.bf16.msra.mxu0 %v7713
    %8808 = vmatprep.subr.bf16.mxu0 %v7726
    %8809 = vmatpush1.bf16.msra.mxu0 %v7725
    %8810 = vmatprep.subr.bf16.mxu0 %v7738
    %8811 = vmatpush1.bf16.msra.mxu0 %v7737
    %8812 = vmatprep.subr.bf16.mxu0 %v7750
    %8813 = vmatpush1.bf16.msra.mxu0 %v7749
    %8814 = vmatprep.mubr.bf16.mxu0 %v673
    %8815 = vmatmul.mubr.bf16.gmra.mrb[0].mxu0 %v672
    %v8816 = vpop.f32.mrb[0].mxu0
    %v8817 = vadd.f32 %v8776, %v8816
    %v8818 = vpop.f32.mrb[0].mxu0
    %v8819 = vadd.f32 %v8778, %v8818
    %v8820 = vpop.f32.mrb[0].mxu0
    %v8821 = vpop.f32.mrb[0].mxu0
    %8822 = vdwg.mxu0
    %8823 = vmatprep.subr.bf16.mxu0 %v7188
    %8824 = vmatpush1.bf16.msra.mxu0 %v7187
    %8825 = vmatprep.subr.bf16.mxu0 %v7200
    %8826 = vmatpush1.bf16.msra.mxu0 %v7199
    %8827 = vmatprep.subr.bf16.mxu0 %v7212
    %8828 = vmatpush1.bf16.msra.mxu0 %v7211
    %8829 = vmatprep.subr.bf16.mxu0 %v7224
    %8830 = vmatpush1.bf16.msra.mxu0 %v7223
    %8831 = vmatprep.subr.bf16.mxu0 %v7236
    %8832 = vmatpush1.bf16.msra.mxu0 %v7235
    %8833 = vmatprep.subr.bf16.mxu0 %v7248
    %8834 = vmatpush1.bf16.msra.mxu0 %v7247
    %8835 = vmatprep.subr.bf16.mxu0 %v7260
    %8836 = vmatpush1.bf16.msra.mxu0 %v7259
    %8837 = vmatprep.subr.bf16.mxu0 %v7272
    %8838 = vmatpush1.bf16.msra.mxu0 %v7271
    %8839 = vmatprep.subr.bf16.mxu0 %v7284
    %8840 = vmatpush1.bf16.msra.mxu0 %v7283
    %8841 = vmatprep.subr.bf16.mxu0 %v7296
    %8842 = vmatpush1.bf16.msra.mxu0 %v7295
    %8843 = vmatprep.subr.bf16.mxu0 %v7308
    %8844 = vmatpush1.bf16.msra.mxu0 %v7307
    %8845 = vmatprep.subr.bf16.mxu0 %v7320
    %8846 = vmatpush1.bf16.msra.mxu0 %v7319
    %8847 = vmatprep.subr.bf16.mxu0 %v7332
    %8848 = vmatpush1.bf16.msra.mxu0 %v7331
    %8849 = vmatprep.subr.bf16.mxu0 %v7344
    %8850 = vmatpush1.bf16.msra.mxu0 %v7343
    %8851 = vmatprep.subr.bf16.mxu0 %v7356
    %8852 = vmatpush1.bf16.msra.mxu0 %v7355
    %8853 = vmatprep.subr.bf16.mxu0 %v7368
    %8854 = vmatpush1.bf16.msra.mxu0 %v7367
    %8855 = vmatprep.mubr.bf16.mxu0 %v669
    %8856 = vmatmul.mubr.bf16.gmra.mrb[0].mxu0 %v668
    %v8857 = vpop.f32.mrb[0].mxu0
    %v8858 = vadd.f32 %v5322, %v8857
    %v8859 = vpop.f32.mrb[0].mxu0
    %v8860 = vadd.f32 %v5324, %v8859
    %v8861 = vpop.f32.mrb[0].mxu0
    %v8862 = vpop.f32.mrb[0].mxu0
    %8863 = vdwg.mxu0
    %8864 = vmatprep.subr.bf16.mxu0 %v7380
    %8865 = vmatpush1.bf16.msra.mxu0 %v7379
    %8866 = vmatprep.subr.bf16.mxu0 %v7392
    %8867 = vmatpush1.bf16.msra.mxu0 %v7391
    %8868 = vmatprep.subr.bf16.mxu0 %v7404
    %8869 = vmatpush1.bf16.msra.mxu0 %v7403
    %8870 = vmatprep.subr.bf16.mxu0 %v7416
    %8871 = vmatpush1.bf16.msra.mxu0 %v7415
    %8872 = vmatprep.subr.bf16.mxu0 %v7428
    %8873 = vmatpush1.bf16.msra.mxu0 %v7427
    %8874 = vmatprep.subr.bf16.mxu0 %v7440
    %8875 = vmatpush1.bf16.msra.mxu0 %v7439
    %8876 = vmatprep.subr.bf16.mxu0 %v7452
    %8877 = vmatpush1.bf16.msra.mxu0 %v7451
    %8878 = vmatprep.subr.bf16.mxu0 %v7464
    %8879 = vmatpush1.bf16.msra.mxu0 %v7463
    %8880 = vmatprep.subr.bf16.mxu0 %v7476
    %8881 = vmatpush1.bf16.msra.mxu0 %v7475
    %8882 = vmatprep.subr.bf16.mxu0 %v7488
    %8883 = vmatpush1.bf16.msra.mxu0 %v7487
    %8884 = vmatprep.subr.bf16.mxu0 %v7500
    %8885 = vmatpush1.bf16.msra.mxu0 %v7499
    %8886 = vmatprep.subr.bf16.mxu0 %v7512
    %8887 = vmatpush1.bf16.msra.mxu0 %v7511
    %8888 = vmatprep.subr.bf16.mxu0 %v7524
    %8889 = vmatpush1.bf16.msra.mxu0 %v7523
    %8890 = vmatprep.subr.bf16.mxu0 %v7536
    %8891 = vmatpush1.bf16.msra.mxu0 %v7535
    %8892 = vmatprep.subr.bf16.mxu0 %v7548
    %8893 = vmatpush1.bf16.msra.mxu0 %v7547
    %8894 = vmatprep.subr.bf16.mxu0 %v7560
    %8895 = vmatpush1.bf16.msra.mxu0 %v7559
    %8896 = vmatprep.mubr.bf16.mxu0 %v671
    %8897 = vmatmul.mubr.bf16.gmra.mrb[0].mxu0 %v670
    %v8898 = vpop.f32.mrb[0].mxu0
    %v8899 = vadd.f32 %v8858, %v8898
    %v8900 = vpop.f32.mrb[0].mxu0
    %v8901 = vadd.f32 %v8860, %v8900
    %v8902 = vpop.f32.mrb[0].mxu0
    %v8903 = vpop.f32.mrb[0].mxu0
    %8904 = vdwg.mxu0
    %8905 = vmatprep.subr.bf16.mxu0 %v7572
    %8906 = vmatpush1.bf16.msra.mxu0 %v7571
    %8907 = vmatprep.subr.bf16.mxu0 %v7584
    %8908 = vmatpush1.bf16.msra.mxu0 %v7583
    %8909 = vmatprep.subr.bf16.mxu0 %v7596
    %8910 = vmatpush1.bf16.msra.mxu0 %v7595
    %8911 = vmatprep.subr.bf16.mxu0 %v7608
    %8912 = vmatpush1.bf16.msra.mxu0 %v7607
    %8913 = vmatprep.subr.bf16.mxu0 %v7620
    %8914 = vmatpush1.bf16.msra.mxu0 %v7619
    %8915 = vmatprep.subr.bf16.mxu0 %v7632
    %8916 = vmatpush1.bf16.msra.mxu0 %v7631
    %8917 = vmatprep.subr.bf16.mxu0 %v7644
    %8918 = vmatpush1.bf16.msra.mxu0 %v7643
    %8919 = vmatprep.subr.bf16.mxu0 %v7656
    %8920 = vmatpush1.bf16.msra.mxu0 %v7655
    %8921 = vmatprep.subr.bf16.mxu0 %v7668
    %8922 = vmatpush1.bf16.msra.mxu0 %v7667
    %8923 = vmatprep.subr.bf16.mxu0 %v7680
    %8924 = vmatpush1.bf16.msra.mxu0 %v7679
    %8925 = vmatprep.subr.bf16.mxu0 %v7692
    %8926 = vmatpush1.bf16.msra.mxu0 %v7691
    %8927 = vmatprep.subr.bf16.mxu0 %v7704
    %8928 = vmatpush1.bf16.msra.mxu0 %v7703
    %8929 = vmatprep.subr.bf16.mxu0 %v7716
    %8930 = vmatpush1.bf16.msra.mxu0 %v7715
    %8931 = vmatprep.subr.bf16.mxu0 %v7728
    %8932 = vmatpush1.bf16.msra.mxu0 %v7727
    %8933 = vmatprep.subr.bf16.mxu0 %v7740
    %8934 = vmatpush1.bf16.msra.mxu0 %v7739
    %8935 = vmatprep.subr.bf16.mxu0 %v7752
    %8936 = vmatpush1.bf16.msra.mxu0 %v7751
    %8937 = vmatprep.mubr.bf16.mxu0 %v673
    %8938 = vmatmul.mubr.bf16.gmra.mrb[0].mxu0 %v672
    %v8939 = vpop.f32.mrb[0].mxu0
    %v8940 = vadd.f32 %v8899, %v8939
    %v8941 = vpop.f32.mrb[0].mxu0
    %v8942 = vadd.f32 %v8901, %v8941
    %v8943 = vpop.f32.mrb[0].mxu0
    %v8944 = vpop.f32.mrb[0].mxu0
    %8945 = vdwg.mxu0
    %8946 = vmatprep.subr.bf16.mxu0 %v7190
    %8947 = vmatpush1.bf16.msra.mxu0 %v7189
    %8948 = vmatprep.subr.bf16.mxu0 %v7202
    %8949 = vmatpush1.bf16.msra.mxu0 %v7201
    %8950 = vmatprep.subr.bf16.mxu0 %v7214
    %8951 = vmatpush1.bf16.msra.mxu0 %v7213
    %8952 = vmatprep.subr.bf16.mxu0 %v7226
    %8953 = vmatpush1.bf16.msra.mxu0 %v7225
    %8954 = vmatprep.subr.bf16.mxu0 %v7238
    %8955 = vmatpush1.bf16.msra.mxu0 %v7237
    %8956 = vmatprep.subr.bf16.mxu0 %v7250
    %8957 = vmatpush1.bf16.msra.mxu0 %v7249
    %8958 = vmatprep.subr.bf16.mxu0 %v7262
    %8959 = vmatpush1.bf16.msra.mxu0 %v7261
    %8960 = vmatprep.subr.bf16.mxu0 %v7274
    %8961 = vmatpush1.bf16.msra.mxu0 %v7273
    %8962 = vmatprep.subr.bf16.mxu0 %v7286
    %8963 = vmatpush1.bf16.msra.mxu0 %v7285
    %8964 = vmatprep.subr.bf16.mxu0 %v7298
    %8965 = vmatpush1.bf16.msra.mxu0 %v7297
    %8966 = vmatprep.subr.bf16.mxu0 %v7310
    %8967 = vmatpush1.bf16.msra.mxu0 %v7309
    %8968 = vmatprep.subr.bf16.mxu0 %v7322
    %8969 = vmatpush1.bf16.msra.mxu0 %v7321
    %8970 = vmatprep.subr.bf16.mxu0 %v7334
    %8971 = vmatpush1.bf16.msra.mxu0 %v7333
    %8972 = vmatprep.subr.bf16.mxu0 %v7346
    %8973 = vmatpush1.bf16.msra.mxu0 %v7345
    %8974 = vmatprep.subr.bf16.mxu0 %v7358
    %8975 = vmatpush1.bf16.msra.mxu0 %v7357
    %8976 = vmatprep.subr.bf16.mxu0 %v7370
    %8977 = vmatpush1.bf16.msra.mxu0 %v7369
    %8978 = vmatprep.mubr.bf16.mxu0 %v669
    %8979 = vmatmul.mubr.bf16.gmra.mrb[0].mxu0 %v668
    %v8980 = vpop.f32.mrb[0].mxu0
    %v8981 = vadd.f32 %v5445, %v8980
    %v8982 = vpop.f32.mrb[0].mxu0
    %v8983 = vadd.f32 %v5447, %v8982
    %v8984 = vpop.f32.mrb[0].mxu0
    %v8985 = vpop.f32.mrb[0].mxu0
    %8986 = vdwg.mxu0
    %8987 = vmatprep.subr.bf16.mxu0 %v7382
    %8988 = vmatpush1.bf16.msra.mxu0 %v7381
    %8989 = vmatprep.subr.bf16.mxu0 %v7394
    %8990 = vmatpush1.bf16.msra.mxu0 %v7393
    %8991 = vmatprep.subr.bf16.mxu0 %v7406
    %8992 = vmatpush1.bf16.msra.mxu0 %v7405
    %8993 = vmatprep.subr.bf16.mxu0 %v7418
    %8994 = vmatpush1.bf16.msra.mxu0 %v7417
    %8995 = vmatprep.subr.bf16.mxu0 %v7430
    %8996 = vmatpush1.bf16.msra.mxu0 %v7429
    %8997 = vmatprep.subr.bf16.mxu0 %v7442
    %8998 = vmatpush1.bf16.msra.mxu0 %v7441
    %8999 = vmatprep.subr.bf16.mxu0 %v7454
    %9000 = vmatpush1.bf16.msra.mxu0 %v7453
    %9001 = vmatprep.subr.bf16.mxu0 %v7466
    %9002 = vmatpush1.bf16.msra.mxu0 %v7465
    %9003 = vmatprep.subr.bf16.mxu0 %v7478
    %9004 = vmatpush1.bf16.msra.mxu0 %v7477
    %9005 = vmatprep.subr.bf16.mxu0 %v7490
    %9006 = vmatpush1.bf16.msra.mxu0 %v7489
    %9007 = vmatprep.subr.bf16.mxu0 %v7502
    %9008 = vmatpush1.bf16.msra.mxu0 %v7501
    %9009 = vmatprep.subr.bf16.mxu0 %v7514
    %9010 = vmatpush1.bf16.msra.mxu0 %v7513
    %9011 = vmatprep.subr.bf16.mxu0 %v7526
    %9012 = vmatpush1.bf16.msra.mxu0 %v7525
    %9013 = vmatprep.subr.bf16.mxu0 %v7538
    %9014 = vmatpush1.bf16.msra.mxu0 %v7537
    %9015 = vmatprep.subr.bf16.mxu0 %v7550
    %9016 = vmatpush1.bf16.msra.mxu0 %v7549
    %9017 = vmatprep.subr.bf16.mxu0 %v7562
    %9018 = vmatpush1.bf16.msra.mxu0 %v7561
    %9019 = vmatprep.mubr.bf16.mxu0 %v671
    %9020 = vmatmul.mubr.bf16.gmra.mrb[0].mxu0 %v670
    %v9021 = vpop.f32.mrb[0].mxu0
    %v9022 = vadd.f32 %v8981, %v9021
    %v9023 = vpop.f32.mrb[0].mxu0
    %v9024 = vadd.f32 %v8983, %v9023
    %v9025 = vpop.f32.mrb[0].mxu0
    %v9026 = vpop.f32.mrb[0].mxu0
    %9027 = vdwg.mxu0
    %9028 = vmatprep.subr.bf16.mxu0 %v7574
    %9029 = vmatpush1.bf16.msra.mxu0 %v7573
    %9030 = vmatprep.subr.bf16.mxu0 %v7586
    %9031 = vmatpush1.bf16.msra.mxu0 %v7585
    %9032 = vmatprep.subr.bf16.mxu0 %v7598
    %9033 = vmatpush1.bf16.msra.mxu0 %v7597
    %9034 = vmatprep.subr.bf16.mxu0 %v7610
    %9035 = vmatpush1.bf16.msra.mxu0 %v7609
    %9036 = vmatprep.subr.bf16.mxu0 %v7622
    %9037 = vmatpush1.bf16.msra.mxu0 %v7621
    %9038 = vmatprep.subr.bf16.mxu0 %v7634
    %9039 = vmatpush1.bf16.msra.mxu0 %v7633
    %9040 = vmatprep.subr.bf16.mxu0 %v7646
    %9041 = vmatpush1.bf16.msra.mxu0 %v7645
    %9042 = vmatprep.subr.bf16.mxu0 %v7658
    %9043 = vmatpush1.bf16.msra.mxu0 %v7657
    %9044 = vmatprep.subr.bf16.mxu0 %v7670
    %9045 = vmatpush1.bf16.msra.mxu0 %v7669
    %9046 = vmatprep.subr.bf16.mxu0 %v7682
    %9047 = vmatpush1.bf16.msra.mxu0 %v7681
    %9048 = vmatprep.subr.bf16.mxu0 %v7694
    %9049 = vmatpush1.bf16.msra.mxu0 %v7693
    %9050 = vmatprep.subr.bf16.mxu0 %v7706
    %9051 = vmatpush1.bf16.msra.mxu0 %v7705
    %9052 = vmatprep.subr.bf16.mxu0 %v7718
    %9053 = vmatpush1.bf16.msra.mxu0 %v7717
    %9054 = vmatprep.subr.bf16.mxu0 %v7730
    %9055 = vmatpush1.bf16.msra.mxu0 %v7729
    %9056 = vmatprep.subr.bf16.mxu0 %v7742
    %9057 = vmatpush1.bf16.msra.mxu0 %v7741
    %9058 = vmatprep.subr.bf16.mxu0 %v7754
    %9059 = vmatpush1.bf16.msra.mxu0 %v7753
    %9060 = vmatprep.mubr.bf16.mxu0 %v673
    %9061 = vmatmul.mubr.bf16.gmra.mrb[0].mxu0 %v672
    %v9062 = vpop.f32.mrb[0].mxu0
    %v9063 = vadd.f32 %v9022, %v9062
    %v9064 = vpop.f32.mrb[0].mxu0
    %v9065 = vadd.f32 %v9024, %v9064
    %v9066 = vpop.f32.mrb[0].mxu0
    %v9067 = vpop.f32.mrb[0].mxu0
    %9068 = vdwg.mxu0
    %v9069 = vld [vmem:[#allocation7] sm:$0xff]
    %v9070 = vld [vmem:[#allocation7 + $0x8] sm:$0xf]
    %v9073 = vlaneseq
    %v9074 = vshrl.u32 %v9073, 7
    %v9075 = vsub.s32 0, %v9074
    %v9076 = vrot.slane %v9069, %v9075
    %v9077 = vlaneseq
    %v9078 = vshrl.u32 %v9077, 7
    %v9079 = vsub.s32 1, %v9078
    %v9080 = vrot.slane %v9069, %v9079
    %v9081 = vlaneseq
    %v9082 = vshrl.u32 %v9081, 7
    %v9083 = vsub.s32 2, %v9082
    %v9084 = vrot.slane %v9069, %v9083
    %v9085 = vlaneseq
    %v9086 = vshrl.u32 %v9085, 7
    %v9087 = vsub.s32 3, %v9086
    %v9088 = vrot.slane %v9069, %v9087
    %v9089 = vlaneseq
    %v9090 = vshrl.u32 %v9089, 7
    %v9091 = vsub.s32 4, %v9090
    %v9092 = vrot.slane %v9069, %v9091
    %v9093 = vlaneseq
    %v9094 = vshrl.u32 %v9093, 7
    %v9095 = vsub.s32 5, %v9094
    %v9096 = vrot.slane %v9069, %v9095
    %v9097 = vlaneseq
    %v9098 = vshrl.u32 %v9097, 7
    %v9099 = vsub.s32 6, %v9098
    %v9100 = vrot.slane %v9069, %v9099
    %v9101 = vlaneseq
    %v9102 = vshrl.u32 %v9101, 7
    %v9103 = vsub.s32 7, %v9102
    %v9104 = vrot.slane %v9069, %v9103
    %v9105 = vlaneseq
    %v9106 = vshrl.u32 %v9105, 7
    %v9107 = vsub.s32 0, %v9106
    %v9108 = vrot.slane %v9070, %v9107
    %v9109 = vlaneseq
    %v9110 = vshrl.u32 %v9109, 7
    %v9111 = vsub.s32 1, %v9110
    %v9112 = vrot.slane %v9070, %v9111
    %v9113 = vlaneseq
    %v9114 = vshrl.u32 %v9113, 7
    %v9115 = vsub.s32 2, %v9114
    %v9116 = vrot.slane %v9070, %v9115
    %v9117 = vlaneseq
    %v9118 = vshrl.u32 %v9117, 7
    %v9119 = vsub.s32 3, %v9118
    %v9120 = vrot.slane %v9070, %v9119
    %v9133 = vadd.f32 %v8448, %v9076
    %v9134 = vadd.f32 %v8450, %v9080
    %v9135 = vadd.f32 %v8571, %v9084
    %v9136 = vadd.f32 %v8573, %v9088
    %v9137 = vadd.f32 %v8694, %v9092
    %v9138 = vadd.f32 %v8696, %v9096
    %v9139 = vadd.f32 %v8817, %v9100
    %v9140 = vadd.f32 %v8819, %v9104
    %v9141 = vadd.f32 %v8940, %v9108
    %v9142 = vadd.f32 %v8942, %v9112
    %v9143 = vadd.f32 %v9063, %v9116
    %v9144 = vadd.f32 %v9065, %v9120
    %v9145 = vmax.f32 %v9133, 0.0
    %v9146 = vmax.f32 %v9134, 0.0
    %v9147 = vmax.f32 %v9135, 0.0
    %v9148 = vmax.f32 %v9136, 0.0
    %v9149 = vmax.f32 %v9137, 0.0
    %v9150 = vmax.f32 %v9138, 0.0
    %v9151 = vmax.f32 %v9139, 0.0
    %v9152 = vmax.f32 %v9140, 0.0
    %v9153 = vmax.f32 %v9141, 0.0
    %v9154 = vmax.f32 %v9142, 0.0
    %v9155 = vmax.f32 %v9143, 0.0
    %v9156 = vmax.f32 %v9144, 0.0
    %v9157 = vadd.f32 %v9145, %v9146
    %v9158 = vadd.f32 %v9157, %v9147
    %v9159 = vadd.f32 %v9158, %v9148
    %v9160 = vadd.f32 %v9159, %v9149
    %v9161 = vadd.f32 %v9160, %v9150
    %v9162 = vadd.f32 %v9161, %v9151
    %v9163 = vadd.f32 %v9162, %v9152
    %v9164 = vadd.f32 %v9163, %v9153
    %v9165 = vadd.f32 %v9164, %v9154
    %v9166 = vadd.f32 %v9165, %v9155
    %v9167 = vadd.f32 %v9166, %v9156
    %9168 = vadd.xlane.f32.xlu0 %v9167
    %v9169 = vpop.xlane.xlu0 %9168
    %v9170 = vrcp.pop 1536.0
    %v9171 = vmul.f32 %v9169, %v9170
    %v9172 = vsub.f32 %v9145, %v9171
    %v9173 = vsub.f32 %v9146, %v9171
    %v9174 = vsub.f32 %v9147, %v9171
    %v9175 = vsub.f32 %v9148, %v9171
    %v9176 = vsub.f32 %v9149, %v9171
    %v9177 = vsub.f32 %v9150, %v9171
    %v9178 = vsub.f32 %v9151, %v9171
    %v9179 = vsub.f32 %v9152, %v9171
    %v9180 = vsub.f32 %v9153, %v9171
    %v9181 = vsub.f32 %v9154, %v9171
    %v9182 = vsub.f32 %v9155, %v9171
    %v9183 = vsub.f32 %v9156, %v9171
    %v9184 = vmul.f32 %v9172, %v9172
    %v9185 = vmul.f32 %v9173, %v9173
    %v9186 = vmul.f32 %v9174, %v9174
    %v9187 = vmul.f32 %v9175, %v9175
    %v9188 = vmul.f32 %v9176, %v9176
    %v9189 = vmul.f32 %v9177, %v9177
    %v9190 = vmul.f32 %v9178, %v9178
    %v9191 = vmul.f32 %v9179, %v9179
    %v9192 = vmul.f32 %v9180, %v9180
    %v9193 = vmul.f32 %v9181, %v9181
    %v9194 = vmul.f32 %v9182, %v9182
    %v9195 = vmul.f32 %v9183, %v9183
    %v9196 = vadd.f32 %v9184, %v9185
    %v9197 = vadd.f32 %v9196, %v9186
    %v9198 = vadd.f32 %v9197, %v9187
    %v9199 = vadd.f32 %v9198, %v9188
    %v9200 = vadd.f32 %v9199, %v9189
    %v9201 = vadd.f32 %v9200, %v9190
    %v9202 = vadd.f32 %v9201, %v9191
    %v9203 = vadd.f32 %v9202, %v9192
    %v9204 = vadd.f32 %v9203, %v9193
    %v9205 = vadd.f32 %v9204, %v9194
    %v9206 = vadd.f32 %v9205, %v9195
    %9207 = vadd.xlane.f32.xlu0 %v9206
    %v9208 = vpop.xlane.xlu0 %9207
    %v9209 = vmul.f32 %v9208, %v9170
    %v9210 = vadd.f32 %v9209, 1e-05
    %v9211 = vrsqrt.pop %v9210
    %v9212 = vmul.f32 %v9172, %v9211
    %v9213 = vmul.f32 %v9173, %v9211
    %v9214 = vmul.f32 %v9174, %v9211
    %v9215 = vmul.f32 %v9175, %v9211
    %v9216 = vmul.f32 %v9176, %v9211
    %v9217 = vmul.f32 %v9177, %v9211
    %v9218 = vmul.f32 %v9178, %v9211
    %v9219 = vmul.f32 %v9179, %v9211
    %v9220 = vmul.f32 %v9180, %v9211
    %v9221 = vmul.f32 %v9181, %v9211
    %v9222 = vmul.f32 %v9182, %v9211
    %v9223 = vmul.f32 %v9183, %v9211
    %v9224 = vld [vmem:[#allocation9] sm:$0xff]
    %v9225 = vld [vmem:[#allocation9 + $0x8] sm:$0xf]
    %v9228 = vlaneseq
    %v9229 = vshrl.u32 %v9228, 7
    %v9230 = vsub.s32 0, %v9229
    %v9231 = vrot.slane %v9224, %v9230
    %v9232 = vlaneseq
    %v9233 = vshrl.u32 %v9232, 7
    %v9234 = vsub.s32 1, %v9233
    %v9235 = vrot.slane %v9224, %v9234
    %v9236 = vlaneseq
    %v9237 = vshrl.u32 %v9236, 7
    %v9238 = vsub.s32 2, %v9237
    %v9239 = vrot.slane %v9224, %v9238
    %v9240 = vlaneseq
    %v9241 = vshrl.u32 %v9240, 7
    %v9242 = vsub.s32 3, %v9241
    %v9243 = vrot.slane %v9224, %v9242
    %v9244 = vlaneseq
    %v9245 = vshrl.u32 %v9244, 7
    %v9246 = vsub.s32 4, %v9245
    %v9247 = vrot.slane %v9224, %v9246
    %v9248 = vlaneseq
    %v9249 = vshrl.u32 %v9248, 7
    %v9250 = vsub.s32 5, %v9249
    %v9251 = vrot.slane %v9224, %v9250
    %v9252 = vlaneseq
    %v9253 = vshrl.u32 %v9252, 7
    %v9254 = vsub.s32 6, %v9253
    %v9255 = vrot.slane %v9224, %v9254
    %v9256 = vlaneseq
    %v9257 = vshrl.u32 %v9256, 7
    %v9258 = vsub.s32 7, %v9257
    %v9259 = vrot.slane %v9224, %v9258
    %v9260 = vlaneseq
    %v9261 = vshrl.u32 %v9260, 7
    %v9262 = vsub.s32 0, %v9261
    %v9263 = vrot.slane %v9225, %v9262
    %v9264 = vlaneseq
    %v9265 = vshrl.u32 %v9264, 7
    %v9266 = vsub.s32 1, %v9265
    %v9267 = vrot.slane %v9225, %v9266
    %v9268 = vlaneseq
    %v9269 = vshrl.u32 %v9268, 7
    %v9270 = vsub.s32 2, %v9269
    %v9271 = vrot.slane %v9225, %v9270
    %v9272 = vlaneseq
    %v9273 = vshrl.u32 %v9272, 7
    %v9274 = vsub.s32 3, %v9273
    %v9275 = vrot.slane %v9225, %v9274
    %v9288 = vmul.f32 %v9212, %v9231
    %v9289 = vmul.f32 %v9213, %v9235
    %v9290 = vmul.f32 %v9214, %v9239
    %v9291 = vmul.f32 %v9215, %v9243
    %v9292 = vmul.f32 %v9216, %v9247
    %v9293 = vmul.f32 %v9217, %v9251
    %v9294 = vmul.f32 %v9218, %v9255
    %v9295 = vmul.f32 %v9219, %v9259
    %v9296 = vmul.f32 %v9220, %v9263
    %v9297 = vmul.f32 %v9221, %v9267
    %v9298 = vmul.f32 %v9222, %v9271
    %v9299 = vmul.f32 %v9223, %v9275
    %v9300 = vld [vmem:[#allocation10] sm:$0xff]
    %v9301 = vld [vmem:[#allocation10 + $0x8] sm:$0xf]
    %v9304 = vlaneseq
    %v9305 = vshrl.u32 %v9304, 7
    %v9306 = vsub.s32 0, %v9305
    %v9307 = vrot.slane %v9300, %v9306
    %v9308 = vlaneseq
    %v9309 = vshrl.u32 %v9308, 7
    %v9310 = vsub.s32 1, %v9309
    %v9311 = vrot.slane %v9300, %v9310
    %v9312 = vlaneseq
    %v9313 = vshrl.u32 %v9312, 7
    %v9314 = vsub.s32 2, %v9313
    %v9315 = vrot.slane %v9300, %v9314
    %v9316 = vlaneseq
    %v9317 = vshrl.u32 %v9316, 7
    %v9318 = vsub.s32 3, %v9317
    %v9319 = vrot.slane %v9300, %v9318
    %v9320 = vlaneseq
    %v9321 = vshrl.u32 %v9320, 7
    %v9322 = vsub.s32 4, %v9321
    %v9323 = vrot.slane %v9300, %v9322
    %v9324 = vlaneseq
    %v9325 = vshrl.u32 %v9324, 7
    %v9326 = vsub.s32 5, %v9325
    %v9327 = vrot.slane %v9300, %v9326
    %v9328 = vlaneseq
    %v9329 = vshrl.u32 %v9328, 7
    %v9330 = vsub.s32 6, %v9329
    %v9331 = vrot.slane %v9300, %v9330
    %v9332 = vlaneseq
    %v9333 = vshrl.u32 %v9332, 7
    %v9334 = vsub.s32 7, %v9333
    %v9335 = vrot.slane %v9300, %v9334
    %v9336 = vlaneseq
    %v9337 = vshrl.u32 %v9336, 7
    %v9338 = vsub.s32 0, %v9337
    %v9339 = vrot.slane %v9301, %v9338
    %v9340 = vlaneseq
    %v9341 = vshrl.u32 %v9340, 7
    %v9342 = vsub.s32 1, %v9341
    %v9343 = vrot.slane %v9301, %v9342
    %v9344 = vlaneseq
    %v9345 = vshrl.u32 %v9344, 7
    %v9346 = vsub.s32 2, %v9345
    %v9347 = vrot.slane %v9301, %v9346
    %v9348 = vlaneseq
    %v9349 = vshrl.u32 %v9348, 7
    %v9350 = vsub.s32 3, %v9349
    %v9351 = vrot.slane %v9301, %v9350
    %v9364 = vadd.f32 %v9288, %v9307
    %v9365 = vadd.f32 %v9289, %v9311
    %v9366 = vadd.f32 %v9290, %v9315
    %v9367 = vadd.f32 %v9291, %v9319
    %v9368 = vadd.f32 %v9292, %v9323
    %v9369 = vadd.f32 %v9293, %v9327
    %v9370 = vadd.f32 %v9294, %v9331
    %v9371 = vadd.f32 %v9295, %v9335
    %v9372 = vadd.f32 %v9296, %v9339
    %v9373 = vadd.f32 %v9297, %v9343
    %v9374 = vadd.f32 %v9298, %v9347
    %v9375 = vadd.f32 %v9299, %v9351
    %v9376 = vpack.c.bf16 %v9364, %v9364
    %v9377 = vpack.c.bf16 %v9365, %v9365
    %v9378 = vpack.c.bf16 %v9366, %v9366
    %v9379 = vpack.c.bf16 %v9367, %v9367
    %v9380 = vpack.c.bf16 %v9368, %v9368
    %v9381 = vpack.c.bf16 %v9369, %v9369
    %v9382 = vpack.c.bf16 %v9370, %v9370
    %v9383 = vpack.c.bf16 %v9371, %v9371
    %v9384 = vpack.c.bf16 %v9372, %v9372
    %v9385 = vpack.c.bf16 %v9373, %v9373
    %v9386 = vpack.c.bf16 %v9374, %v9374
    %v9387 = vpack.c.bf16 %v9375, %v9375
    %v9388 = vld [vmem:[#allocation12] sm:$0xf]
    %v9389 = vld [vmem:[#allocation12 + $0x4] sm:$0xf]
    %v9390 = vld [vmem:[#allocation12 + $0x8] sm:$0xf]
    %v9391 = vld [vmem:[#allocation12 + $0xc] sm:$0xf]
    %v9392 = vld [vmem:[#allocation12 + $0x10] sm:$0xf]
    %v9393 = vld [vmem:[#allocation12 + $0x14] sm:$0xf]
    %v9394 = vld [vmem:[#allocation12 + $0x18] sm:$0xf]
    %v9395 = vld [vmem:[#allocation12 + $0x1c] sm:$0xf]
    %v9396 = vld [vmem:[#allocation12 + $0x20] sm:$0xf]
    %v9397 = vld [vmem:[#allocation12 + $0x24] sm:$0xf]
    %v9398 = vld [vmem:[#allocation12 + $0x28] sm:$0xf]
    %v9399 = vld [vmem:[#allocation12 + $0x2c] sm:$0xf]
    %v9400 = vld [vmem:[#allocation12 + $0x30] sm:$0xf]
    %v9401 = vld [vmem:[#allocation12 + $0x34] sm:$0xf]
    %v9402 = vld [vmem:[#allocation12 + $0x38] sm:$0xf]
    %v9403 = vld [vmem:[#allocation12 + $0x3c] sm:$0xf]
    %v9404 = vld [vmem:[#allocation12 + $0x40] sm:$0xf]
    %v9405 = vld [vmem:[#allocation12 + $0x44] sm:$0xf]
    %v9406 = vld [vmem:[#allocation12 + $0x48] sm:$0xf]
    %v9407 = vld [vmem:[#allocation12 + $0x4c] sm:$0xf]
    %v9408 = vld [vmem:[#allocation12 + $0x50] sm:$0xf]
    %v9409 = vld [vmem:[#allocation12 + $0x54] sm:$0xf]
    %v9410 = vld [vmem:[#allocation12 + $0x58] sm:$0xf]
    %v9411 = vld [vmem:[#allocation12 + $0x5c] sm:$0xf]
    %v9412 = vld [vmem:[#allocation12 + $0x60] sm:$0xf]
    %v9413 = vld [vmem:[#allocation12 + $0x64] sm:$0xf]
    %v9414 = vld [vmem:[#allocation12 + $0x68] sm:$0xf]
    %v9415 = vld [vmem:[#allocation12 + $0x6c] sm:$0xf]
    %v9416 = vld [vmem:[#allocation12 + $0x70] sm:$0xf]
    %v9417 = vld [vmem:[#allocation12 + $0x74] sm:$0xf]
    %v9418 = vld [vmem:[#allocation12 + $0x78] sm:$0xf]
    %v9419 = vld [vmem:[#allocation12 + $0x7c] sm:$0xf]
    %v9420 = vld [vmem:[#allocation12 + $0x80] sm:$0xf]
    %v9421 = vld [vmem:[#allocation12 + $0x84] sm:$0xf]
    %v9422 = vld [vmem:[#allocation12 + $0x88] sm:$0xf]
    %v9423 = vld [vmem:[#allocation12 + $0x8c] sm:$0xf]
    %v9424 = vld [vmem:[#allocation12 + $0x90] sm:$0xf]
    %v9425 = vld [vmem:[#allocation12 + $0x94] sm:$0xf]
    %v9426 = vld [vmem:[#allocation12 + $0x98] sm:$0xf]
    %v9427 = vld [vmem:[#allocation12 + $0x9c] sm:$0xf]
    %v9428 = vld [vmem:[#allocation12 + $0xa0] sm:$0xf]
    %v9429 = vld [vmem:[#allocation12 + $0xa4] sm:$0xf]
    %v9430 = vld [vmem:[#allocation12 + $0xa8] sm:$0xf]
    %v9431 = vld [vmem:[#allocation12 + $0xac] sm:$0xf]
    %v9432 = vld [vmem:[#allocation12 + $0xb0] sm:$0xf]
    %v9433 = vld [vmem:[#allocation12 + $0xb4] sm:$0xf]
    %v9434 = vld [vmem:[#allocation12 + $0xb8] sm:$0xf]
    %v9435 = vld [vmem:[#allocation12 + $0xbc] sm:$0xf]
    %v9436 = vld [vmem:[#allocation12 + $0xc0] sm:$0xf]
    %v9437 = vld [vmem:[#allocation12 + $0xc4] sm:$0xf]
    %v9438 = vld [vmem:[#allocation12 + $0xc8] sm:$0xf]
    %v9439 = vld [vmem:[#allocation12 + $0xcc] sm:$0xf]
    %v9440 = vld [vmem:[#allocation12 + $0xd0] sm:$0xf]
    %v9441 = vld [vmem:[#allocation12 + $0xd4] sm:$0xf]
    %v9442 = vld [vmem:[#allocation12 + $0xd8] sm:$0xf]
    %v9443 = vld [vmem:[#allocation12 + $0xdc] sm:$0xf]
    %v9444 = vld [vmem:[#allocation12 + $0xe0] sm:$0xf]
    %v9445 = vld [vmem:[#allocation12 + $0xe4] sm:$0xf]
    %v9446 = vld [vmem:[#allocation12 + $0xe8] sm:$0xf]
    %v9447 = vld [vmem:[#allocation12 + $0xec] sm:$0xf]
    %v9448 = vld [vmem:[#allocation12 + $0xf0] sm:$0xf]
    %v9449 = vld [vmem:[#allocation12 + $0xf4] sm:$0xf]
    %v9450 = vld [vmem:[#allocation12 + $0xf8] sm:$0xf]
    %v9451 = vld [vmem:[#allocation12 + $0xfc] sm:$0xf]
    %v9452 = vld [vmem:[#allocation12 + $0x100] sm:$0xf]
    %v9453 = vld [vmem:[#allocation12 + $0x104] sm:$0xf]
    %v9454 = vld [vmem:[#allocation12 + $0x108] sm:$0xf]
    %v9455 = vld [vmem:[#allocation12 + $0x10c] sm:$0xf]
    %v9456 = vld [vmem:[#allocation12 + $0x110] sm:$0xf]
    %v9457 = vld [vmem:[#allocation12 + $0x114] sm:$0xf]
    %v9458 = vld [vmem:[#allocation12 + $0x118] sm:$0xf]
    %v9459 = vld [vmem:[#allocation12 + $0x11c] sm:$0xf]
    %v9460 = vld [vmem:[#allocation12 + $0x120] sm:$0xf]
    %v9461 = vld [vmem:[#allocation12 + $0x124] sm:$0xf]
    %v9462 = vld [vmem:[#allocation12 + $0x128] sm:$0xf]
    %v9463 = vld [vmem:[#allocation12 + $0x12c] sm:$0xf]
    %v9464 = vld [vmem:[#allocation12 + $0x130] sm:$0xf]
    %v9465 = vld [vmem:[#allocation12 + $0x134] sm:$0xf]
    %v9466 = vld [vmem:[#allocation12 + $0x138] sm:$0xf]
    %v9467 = vld [vmem:[#allocation12 + $0x13c] sm:$0xf]
    %v9468 = vld [vmem:[#allocation12 + $0x140] sm:$0xf]
    %v9469 = vld [vmem:[#allocation12 + $0x144] sm:$0xf]
    %v9470 = vld [vmem:[#allocation12 + $0x148] sm:$0xf]
    %v9471 = vld [vmem:[#allocation12 + $0x14c] sm:$0xf]
    %v9472 = vld [vmem:[#allocation12 + $0x150] sm:$0xf]
    %v9473 = vld [vmem:[#allocation12 + $0x154] sm:$0xf]
    %v9474 = vld [vmem:[#allocation12 + $0x158] sm:$0xf]
    %v9475 = vld [vmem:[#allocation12 + $0x15c] sm:$0xf]
    %v9476 = vld [vmem:[#allocation12 + $0x160] sm:$0xf]
    %v9477 = vld [vmem:[#allocation12 + $0x164] sm:$0xf]
    %v9478 = vld [vmem:[#allocation12 + $0x168] sm:$0xf]
    %v9479 = vld [vmem:[#allocation12 + $0x16c] sm:$0xf]
    %v9480 = vld [vmem:[#allocation12 + $0x170] sm:$0xf]
    %v9481 = vld [vmem:[#allocation12 + $0x174] sm:$0xf]
    %v9482 = vld [vmem:[#allocation12 + $0x178] sm:$0xf]
    %v9483 = vld [vmem:[#allocation12 + $0x17c] sm:$0xf]
    %v9484 = vld [vmem:[#allocation12 + $0x180] sm:$0xf]
    %v9485 = vld [vmem:[#allocation12 + $0x184] sm:$0xf]
    %v9486 = vld [vmem:[#allocation12 + $0x188] sm:$0xf]
    %v9487 = vld [vmem:[#allocation12 + $0x18c] sm:$0xf]
    %v9488 = vld [vmem:[#allocation12 + $0x190] sm:$0xf]
    %v9489 = vld [vmem:[#allocation12 + $0x194] sm:$0xf]
    %v9490 = vld [vmem:[#allocation12 + $0x198] sm:$0xf]
    %v9491 = vld [vmem:[#allocation12 + $0x19c] sm:$0xf]
    %v9492 = vld [vmem:[#allocation12 + $0x1a0] sm:$0xf]
    %v9493 = vld [vmem:[#allocation12 + $0x1a4] sm:$0xf]
    %v9494 = vld [vmem:[#allocation12 + $0x1a8] sm:$0xf]
    %v9495 = vld [vmem:[#allocation12 + $0x1ac] sm:$0xf]
    %v9496 = vld [vmem:[#allocation12 + $0x1b0] sm:$0xf]
    %v9497 = vld [vmem:[#allocation12 + $0x1b4] sm:$0xf]
    %v9498 = vld [vmem:[#allocation12 + $0x1b8] sm:$0xf]
    %v9499 = vld [vmem:[#allocation12 + $0x1bc] sm:$0xf]
    %v9500 = vld [vmem:[#allocation12 + $0x1c0] sm:$0xf]
    %v9501 = vld [vmem:[#allocation12 + $0x1c4] sm:$0xf]
    %v9502 = vld [vmem:[#allocation12 + $0x1c8] sm:$0xf]
    %v9503 = vld [vmem:[#allocation12 + $0x1cc] sm:$0xf]
    %v9504 = vld [vmem:[#allocation12 + $0x1d0] sm:$0xf]
    %v9505 = vld [vmem:[#allocation12 + $0x1d4] sm:$0xf]
    %v9506 = vld [vmem:[#allocation12 + $0x1d8] sm:$0xf]
    %v9507 = vld [vmem:[#allocation12 + $0x1dc] sm:$0xf]
    %v9508 = vld [vmem:[#allocation12 + $0x1e0] sm:$0xf]
    %v9509 = vld [vmem:[#allocation12 + $0x1e4] sm:$0xf]
    %v9510 = vld [vmem:[#allocation12 + $0x1e8] sm:$0xf]
    %v9511 = vld [vmem:[#allocation12 + $0x1ec] sm:$0xf]
    %v9512 = vld [vmem:[#allocation12 + $0x1f0] sm:$0xf]
    %v9513 = vld [vmem:[#allocation12 + $0x1f4] sm:$0xf]
    %v9514 = vld [vmem:[#allocation12 + $0x1f8] sm:$0xf]
    %v9515 = vld [vmem:[#allocation12 + $0x1fc] sm:$0xf]
    %v9516 = vld [vmem:[#allocation12 + $0x200] sm:$0xf]
    %v9517 = vld [vmem:[#allocation12 + $0x204] sm:$0xf]
    %v9518 = vld [vmem:[#allocation12 + $0x208] sm:$0xf]
    %v9519 = vld [vmem:[#allocation12 + $0x20c] sm:$0xf]
    %v9520 = vld [vmem:[#allocation12 + $0x210] sm:$0xf]
    %v9521 = vld [vmem:[#allocation12 + $0x214] sm:$0xf]
    %v9522 = vld [vmem:[#allocation12 + $0x218] sm:$0xf]
    %v9523 = vld [vmem:[#allocation12 + $0x21c] sm:$0xf]
    %v9524 = vld [vmem:[#allocation12 + $0x220] sm:$0xf]
    %v9525 = vld [vmem:[#allocation12 + $0x224] sm:$0xf]
    %v9526 = vld [vmem:[#allocation12 + $0x228] sm:$0xf]
    %v9527 = vld [vmem:[#allocation12 + $0x22c] sm:$0xf]
    %v9528 = vld [vmem:[#allocation12 + $0x230] sm:$0xf]
    %v9529 = vld [vmem:[#allocation12 + $0x234] sm:$0xf]
    %v9530 = vld [vmem:[#allocation12 + $0x238] sm:$0xf]
    %v9531 = vld [vmem:[#allocation12 + $0x23c] sm:$0xf]
    %v9532 = vld [vmem:[#allocation12 + $0x240] sm:$0xf]
    %v9533 = vld [vmem:[#allocation12 + $0x244] sm:$0xf]
    %v9534 = vld [vmem:[#allocation12 + $0x248] sm:$0xf]
    %v9535 = vld [vmem:[#allocation12 + $0x24c] sm:$0xf]
    %v9536 = vld [vmem:[#allocation12 + $0x250] sm:$0xf]
    %v9537 = vld [vmem:[#allocation12 + $0x254] sm:$0xf]
    %v9538 = vld [vmem:[#allocation12 + $0x258] sm:$0xf]
    %v9539 = vld [vmem:[#allocation12 + $0x25c] sm:$0xf]
    %v9540 = vld [vmem:[#allocation12 + $0x260] sm:$0xf]
    %v9541 = vld [vmem:[#allocation12 + $0x264] sm:$0xf]
    %v9542 = vld [vmem:[#allocation12 + $0x268] sm:$0xf]
    %v9543 = vld [vmem:[#allocation12 + $0x26c] sm:$0xf]
    %v9544 = vld [vmem:[#allocation12 + $0x270] sm:$0xf]
    %v9545 = vld [vmem:[#allocation12 + $0x274] sm:$0xf]
    %v9546 = vld [vmem:[#allocation12 + $0x278] sm:$0xf]
    %v9547 = vld [vmem:[#allocation12 + $0x27c] sm:$0xf]
    %v9548 = vld [vmem:[#allocation12 + $0x280] sm:$0xf]
    %v9549 = vld [vmem:[#allocation12 + $0x284] sm:$0xf]
    %v9550 = vld [vmem:[#allocation12 + $0x288] sm:$0xf]
    %v9551 = vld [vmem:[#allocation12 + $0x28c] sm:$0xf]
    %v9552 = vld [vmem:[#allocation12 + $0x290] sm:$0xf]
    %v9553 = vld [vmem:[#allocation12 + $0x294] sm:$0xf]
    %v9554 = vld [vmem:[#allocation12 + $0x298] sm:$0xf]
    %v9555 = vld [vmem:[#allocation12 + $0x29c] sm:$0xf]
    %v9556 = vld [vmem:[#allocation12 + $0x2a0] sm:$0xf]
    %v9557 = vld [vmem:[#allocation12 + $0x2a4] sm:$0xf]
    %v9558 = vld [vmem:[#allocation12 + $0x2a8] sm:$0xf]
    %v9559 = vld [vmem:[#allocation12 + $0x2ac] sm:$0xf]
    %v9560 = vld [vmem:[#allocation12 + $0x2b0] sm:$0xf]
    %v9561 = vld [vmem:[#allocation12 + $0x2b4] sm:$0xf]
    %v9562 = vld [vmem:[#allocation12 + $0x2b8] sm:$0xf]
    %v9563 = vld [vmem:[#allocation12 + $0x2bc] sm:$0xf]
    %v9564 = vld [vmem:[#allocation12 + $0x2c0] sm:$0xf]
    %v9565 = vld [vmem:[#allocation12 + $0x2c4] sm:$0xf]
    %v9566 = vld [vmem:[#allocation12 + $0x2c8] sm:$0xf]
    %v9567 = vld [vmem:[#allocation12 + $0x2cc] sm:$0xf]
    %v9568 = vld [vmem:[#allocation12 + $0x2d0] sm:$0xf]
    %v9569 = vld [vmem:[#allocation12 + $0x2d4] sm:$0xf]
    %v9570 = vld [vmem:[#allocation12 + $0x2d8] sm:$0xf]
    %v9571 = vld [vmem:[#allocation12 + $0x2dc] sm:$0xf]
    %v9572 = vld [vmem:[#allocation12 + $0x2e0] sm:$0xf]
    %v9573 = vld [vmem:[#allocation12 + $0x2e4] sm:$0xf]
    %v9574 = vld [vmem:[#allocation12 + $0x2e8] sm:$0xf]
    %v9575 = vld [vmem:[#allocation12 + $0x2ec] sm:$0xf]
    %v9576 = vld [vmem:[#allocation12 + $0x2f0] sm:$0xf]
    %v9577 = vld [vmem:[#allocation12 + $0x2f4] sm:$0xf]
    %v9578 = vld [vmem:[#allocation12 + $0x2f8] sm:$0xf]
    %v9579 = vld [vmem:[#allocation12 + $0x2fc] sm:$0xf]
    %v9580 = vld [vmem:[#allocation13] sm:$0x1]
    %v9582 = vlaneseq
    %v9583 = vshrl.u32 %v9582, 7
    %v9584 = vsub.s32 0, %v9583
    %v9585 = vrot.slane %v9580, %v9584
    %v9779 = vunpack.c.l.b16 %v9388
    %v9780 = vunpack.c.l.b16 %v9389
    %v9781 = vunpack.c.l.b16 %v9390
    %v9782 = vunpack.c.l.b16 %v9391
    %v9783 = vunpack.c.l.b16 %v9392
    %v9784 = vunpack.c.l.b16 %v9393
    %v9785 = vunpack.c.l.b16 %v9394
    %v9786 = vunpack.c.l.b16 %v9395
    %v9787 = vunpack.c.l.b16 %v9396
    %v9788 = vunpack.c.l.b16 %v9397
    %v9789 = vunpack.c.l.b16 %v9398
    %v9790 = vunpack.c.l.b16 %v9399
    %v9791 = vunpack.c.l.b16 %v9400
    %v9792 = vunpack.c.l.b16 %v9401
    %v9793 = vunpack.c.l.b16 %v9402
    %v9794 = vunpack.c.l.b16 %v9403
    %v9795 = vunpack.c.l.b16 %v9404
    %v9796 = vunpack.c.l.b16 %v9405
    %v9797 = vunpack.c.l.b16 %v9406
    %v9798 = vunpack.c.l.b16 %v9407
    %v9799 = vunpack.c.l.b16 %v9408
    %v9800 = vunpack.c.l.b16 %v9409
    %v9801 = vunpack.c.l.b16 %v9410
    %v9802 = vunpack.c.l.b16 %v9411
    %v9803 = vunpack.c.l.b16 %v9412
    %v9804 = vunpack.c.l.b16 %v9413
    %v9805 = vunpack.c.l.b16 %v9414
    %v9806 = vunpack.c.l.b16 %v9415
    %v9807 = vunpack.c.l.b16 %v9416
    %v9808 = vunpack.c.l.b16 %v9417
    %v9809 = vunpack.c.l.b16 %v9418
    %v9810 = vunpack.c.l.b16 %v9419
    %v9811 = vunpack.c.l.b16 %v9420
    %v9812 = vunpack.c.l.b16 %v9421
    %v9813 = vunpack.c.l.b16 %v9422
    %v9814 = vunpack.c.l.b16 %v9423
    %v9815 = vunpack.c.l.b16 %v9424
    %v9816 = vunpack.c.l.b16 %v9425
    %v9817 = vunpack.c.l.b16 %v9426
    %v9818 = vunpack.c.l.b16 %v9427
    %v9819 = vunpack.c.l.b16 %v9428
    %v9820 = vunpack.c.l.b16 %v9429
    %v9821 = vunpack.c.l.b16 %v9430
    %v9822 = vunpack.c.l.b16 %v9431
    %v9823 = vunpack.c.l.b16 %v9432
    %v9824 = vunpack.c.l.b16 %v9433
    %v9825 = vunpack.c.l.b16 %v9434
    %v9826 = vunpack.c.l.b16 %v9435
    %v9827 = vunpack.c.l.b16 %v9436
    %v9828 = vunpack.c.l.b16 %v9437
    %v9829 = vunpack.c.l.b16 %v9438
    %v9830 = vunpack.c.l.b16 %v9439
    %v9831 = vunpack.c.l.b16 %v9440
    %v9832 = vunpack.c.l.b16 %v9441
    %v9833 = vunpack.c.l.b16 %v9442
    %v9834 = vunpack.c.l.b16 %v9443
    %v9835 = vunpack.c.l.b16 %v9444
    %v9836 = vunpack.c.l.b16 %v9445
    %v9837 = vunpack.c.l.b16 %v9446
    %v9838 = vunpack.c.l.b16 %v9447
    %v9839 = vunpack.c.l.b16 %v9448
    %v9840 = vunpack.c.l.b16 %v9449
    %v9841 = vunpack.c.l.b16 %v9450
    %v9842 = vunpack.c.l.b16 %v9451
    %v9843 = vunpack.c.l.b16 %v9452
    %v9844 = vunpack.c.l.b16 %v9453
    %v9845 = vunpack.c.l.b16 %v9454
    %v9846 = vunpack.c.l.b16 %v9455
    %v9847 = vunpack.c.l.b16 %v9456
    %v9848 = vunpack.c.l.b16 %v9457
    %v9849 = vunpack.c.l.b16 %v9458
    %v9850 = vunpack.c.l.b16 %v9459
    %v9851 = vunpack.c.l.b16 %v9460
    %v9852 = vunpack.c.l.b16 %v9461
    %v9853 = vunpack.c.l.b16 %v9462
    %v9854 = vunpack.c.l.b16 %v9463
    %v9855 = vunpack.c.l.b16 %v9464
    %v9856 = vunpack.c.l.b16 %v9465
    %v9857 = vunpack.c.l.b16 %v9466
    %v9858 = vunpack.c.l.b16 %v9467
    %v9859 = vunpack.c.l.b16 %v9468
    %v9860 = vunpack.c.l.b16 %v9469
    %v9861 = vunpack.c.l.b16 %v9470
    %v9862 = vunpack.c.l.b16 %v9471
    %v9863 = vunpack.c.l.b16 %v9472
    %v9864 = vunpack.c.l.b16 %v9473
    %v9865 = vunpack.c.l.b16 %v9474
    %v9866 = vunpack.c.l.b16 %v9475
    %v9867 = vunpack.c.l.b16 %v9476
    %v9868 = vunpack.c.l.b16 %v9477
    %v9869 = vunpack.c.l.b16 %v9478
    %v9870 = vunpack.c.l.b16 %v9479
    %v9871 = vunpack.c.l.b16 %v9480
    %v9872 = vunpack.c.l.b16 %v9481
    %v9873 = vunpack.c.l.b16 %v9482
    %v9874 = vunpack.c.l.b16 %v9483
    %v9875 = vunpack.c.l.b16 %v9484
    %v9876 = vunpack.c.l.b16 %v9485
    %v9877 = vunpack.c.l.b16 %v9486
    %v9878 = vunpack.c.l.b16 %v9487
    %v9879 = vunpack.c.l.b16 %v9488
    %v9880 = vunpack.c.l.b16 %v9489
    %v9881 = vunpack.c.l.b16 %v9490
    %v9882 = vunpack.c.l.b16 %v9491
    %v9883 = vunpack.c.l.b16 %v9492
    %v9884 = vunpack.c.l.b16 %v9493
    %v9885 = vunpack.c.l.b16 %v9494
    %v9886 = vunpack.c.l.b16 %v9495
    %v9887 = vunpack.c.l.b16 %v9496
    %v9888 = vunpack.c.l.b16 %v9497
    %v9889 = vunpack.c.l.b16 %v9498
    %v9890 = vunpack.c.l.b16 %v9499
    %v9891 = vunpack.c.l.b16 %v9500
    %v9892 = vunpack.c.l.b16 %v9501
    %v9893 = vunpack.c.l.b16 %v9502
    %v9894 = vunpack.c.l.b16 %v9503
    %v9895 = vunpack.c.l.b16 %v9504
    %v9896 = vunpack.c.l.b16 %v9505
    %v9897 = vunpack.c.l.b16 %v9506
    %v9898 = vunpack.c.l.b16 %v9507
    %v9899 = vunpack.c.l.b16 %v9508
    %v9900 = vunpack.c.l.b16 %v9509
    %v9901 = vunpack.c.l.b16 %v9510
    %v9902 = vunpack.c.l.b16 %v9511
    %v9903 = vunpack.c.l.b16 %v9512
    %v9904 = vunpack.c.l.b16 %v9513
    %v9905 = vunpack.c.l.b16 %v9514
    %v9906 = vunpack.c.l.b16 %v9515
    %v9907 = vunpack.c.l.b16 %v9516
    %v9908 = vunpack.c.l.b16 %v9517
    %v9909 = vunpack.c.l.b16 %v9518
    %v9910 = vunpack.c.l.b16 %v9519
    %v9911 = vunpack.c.l.b16 %v9520
    %v9912 = vunpack.c.l.b16 %v9521
    %v9913 = vunpack.c.l.b16 %v9522
    %v9914 = vunpack.c.l.b16 %v9523
    %v9915 = vunpack.c.l.b16 %v9524
    %v9916 = vunpack.c.l.b16 %v9525
    %v9917 = vunpack.c.l.b16 %v9526
    %v9918 = vunpack.c.l.b16 %v9527
    %v9919 = vunpack.c.l.b16 %v9528
    %v9920 = vunpack.c.l.b16 %v9529
    %v9921 = vunpack.c.l.b16 %v9530
    %v9922 = vunpack.c.l.b16 %v9531
    %v9923 = vunpack.c.l.b16 %v9532
    %v9924 = vunpack.c.l.b16 %v9533
    %v9925 = vunpack.c.l.b16 %v9534
    %v9926 = vunpack.c.l.b16 %v9535
    %v9927 = vunpack.c.l.b16 %v9536
    %v9928 = vunpack.c.l.b16 %v9537
    %v9929 = vunpack.c.l.b16 %v9538
    %v9930 = vunpack.c.l.b16 %v9539
    %v9931 = vunpack.c.l.b16 %v9540
    %v9932 = vunpack.c.l.b16 %v9541
    %v9933 = vunpack.c.l.b16 %v9542
    %v9934 = vunpack.c.l.b16 %v9543
    %v9935 = vunpack.c.l.b16 %v9544
    %v9936 = vunpack.c.l.b16 %v9545
    %v9937 = vunpack.c.l.b16 %v9546
    %v9938 = vunpack.c.l.b16 %v9547
    %v9939 = vunpack.c.l.b16 %v9548
    %v9940 = vunpack.c.l.b16 %v9549
    %v9941 = vunpack.c.l.b16 %v9550
    %v9942 = vunpack.c.l.b16 %v9551
    %v9943 = vunpack.c.l.b16 %v9552
    %v9944 = vunpack.c.l.b16 %v9553
    %v9945 = vunpack.c.l.b16 %v9554
    %v9946 = vunpack.c.l.b16 %v9555
    %v9947 = vunpack.c.l.b16 %v9556
    %v9948 = vunpack.c.l.b16 %v9557
    %v9949 = vunpack.c.l.b16 %v9558
    %v9950 = vunpack.c.l.b16 %v9559
    %v9951 = vunpack.c.l.b16 %v9560
    %v9952 = vunpack.c.l.b16 %v9561
    %v9953 = vunpack.c.l.b16 %v9562
    %v9954 = vunpack.c.l.b16 %v9563
    %v9955 = vunpack.c.l.b16 %v9564
    %v9956 = vunpack.c.l.b16 %v9565
    %v9957 = vunpack.c.l.b16 %v9566
    %v9958 = vunpack.c.l.b16 %v9567
    %v9959 = vunpack.c.l.b16 %v9568
    %v9960 = vunpack.c.l.b16 %v9569
    %v9961 = vunpack.c.l.b16 %v9570
    %v9962 = vunpack.c.l.b16 %v9571
    %v9963 = vunpack.c.l.b16 %v9572
    %v9964 = vunpack.c.l.b16 %v9573
    %v9965 = vunpack.c.l.b16 %v9574
    %v9966 = vunpack.c.l.b16 %v9575
    %v9967 = vunpack.c.l.b16 %v9576
    %v9968 = vunpack.c.l.b16 %v9577
    %v9969 = vunpack.c.l.b16 %v9578
    %v9970 = vunpack.c.l.b16 %v9579
    %v9971 = vpack.c.b16 %v9780, %v9779
    %v9972 = vpack.c.b16 %v9782, %v9781
    %v9973 = vpack.c.b16 %v9784, %v9783
    %v9974 = vpack.c.b16 %v9786, %v9785
    %v9975 = vpack.c.b16 %v9788, %v9787
    %v9976 = vpack.c.b16 %v9790, %v9789
    %v9977 = vpack.c.b16 %v9792, %v9791
    %v9978 = vpack.c.b16 %v9794, %v9793
    %v9979 = vpack.c.b16 %v9796, %v9795
    %v9980 = vpack.c.b16 %v9798, %v9797
    %v9981 = vpack.c.b16 %v9800, %v9799
    %v9982 = vpack.c.b16 %v9802, %v9801
    %v9983 = vpack.c.b16 %v9804, %v9803
    %v9984 = vpack.c.b16 %v9806, %v9805
    %v9985 = vpack.c.b16 %v9808, %v9807
    %v9986 = vpack.c.b16 %v9810, %v9809
    %v9987 = vpack.c.b16 %v9812, %v9811
    %v9988 = vpack.c.b16 %v9814, %v9813
    %v9989 = vpack.c.b16 %v9816, %v9815
    %v9990 = vpack.c.b16 %v9818, %v9817
    %v9991 = vpack.c.b16 %v9820, %v9819
    %v9992 = vpack.c.b16 %v9822, %v9821
    %v9993 = vpack.c.b16 %v9824, %v9823
    %v9994 = vpack.c.b16 %v9826, %v9825
    %v9995 = vpack.c.b16 %v9828, %v9827
    %v9996 = vpack.c.b16 %v9830, %v9829
    %v9997 = vpack.c.b16 %v9832, %v9831
    %v9998 = vpack.c.b16 %v9834, %v9833
    %v9999 = vpack.c.b16 %v9836, %v9835
    %v10000 = vpack.c.b16 %v9838, %v9837
    %v10001 = vpack.c.b16 %v9840, %v9839
    %v10002 = vpack.c.b16 %v9842, %v9841
    %v10003 = vpack.c.b16 %v9844, %v9843
    %v10004 = vpack.c.b16 %v9846, %v9845
    %v10005 = vpack.c.b16 %v9848, %v9847
    %v10006 = vpack.c.b16 %v9850, %v9849
    %v10007 = vpack.c.b16 %v9852, %v9851
    %v10008 = vpack.c.b16 %v9854, %v9853
    %v10009 = vpack.c.b16 %v9856, %v9855
    %v10010 = vpack.c.b16 %v9858, %v9857
    %v10011 = vpack.c.b16 %v9860, %v9859
    %v10012 = vpack.c.b16 %v9862, %v9861
    %v10013 = vpack.c.b16 %v9864, %v9863
    %v10014 = vpack.c.b16 %v9866, %v9865
    %v10015 = vpack.c.b16 %v9868, %v9867
    %v10016 = vpack.c.b16 %v9870, %v9869
    %v10017 = vpack.c.b16 %v9872, %v9871
    %v10018 = vpack.c.b16 %v9874, %v9873
    %v10019 = vpack.c.b16 %v9876, %v9875
    %v10020 = vpack.c.b16 %v9878, %v9877
    %v10021 = vpack.c.b16 %v9880, %v9879
    %v10022 = vpack.c.b16 %v9882, %v9881
    %v10023 = vpack.c.b16 %v9884, %v9883
    %v10024 = vpack.c.b16 %v9886, %v9885
    %v10025 = vpack.c.b16 %v9888, %v9887
    %v10026 = vpack.c.b16 %v9890, %v9889
    %v10027 = vpack.c.b16 %v9892, %v9891
    %v10028 = vpack.c.b16 %v9894, %v9893
    %v10029 = vpack.c.b16 %v9896, %v9895
    %v10030 = vpack.c.b16 %v9898, %v9897
    %v10031 = vpack.c.b16 %v9900, %v9899
    %v10032 = vpack.c.b16 %v9902, %v9901
    %v10033 = vpack.c.b16 %v9904, %v9903
    %v10034 = vpack.c.b16 %v9906, %v9905
    %v10035 = vpack.c.b16 %v9908, %v9907
    %v10036 = vpack.c.b16 %v9910, %v9909
    %v10037 = vpack.c.b16 %v9912, %v9911
    %v10038 = vpack.c.b16 %v9914, %v9913
    %v10039 = vpack.c.b16 %v9916, %v9915
    %v10040 = vpack.c.b16 %v9918, %v9917
    %v10041 = vpack.c.b16 %v9920, %v9919
    %v10042 = vpack.c.b16 %v9922, %v9921
    %v10043 = vpack.c.b16 %v9924, %v9923
    %v10044 = vpack.c.b16 %v9926, %v9925
    %v10045 = vpack.c.b16 %v9928, %v9927
    %v10046 = vpack.c.b16 %v9930, %v9929
    %v10047 = vpack.c.b16 %v9932, %v9931
    %v10048 = vpack.c.b16 %v9934, %v9933
    %v10049 = vpack.c.b16 %v9936, %v9935
    %v10050 = vpack.c.b16 %v9938, %v9937
    %v10051 = vpack.c.b16 %v9940, %v9939
    %v10052 = vpack.c.b16 %v9942, %v9941
    %v10053 = vpack.c.b16 %v9944, %v9943
    %v10054 = vpack.c.b16 %v9946, %v9945
    %v10055 = vpack.c.b16 %v9948, %v9947
    %v10056 = vpack.c.b16 %v9950, %v9949
    %v10057 = vpack.c.b16 %v9952, %v9951
    %v10058 = vpack.c.b16 %v9954, %v9953
    %v10059 = vpack.c.b16 %v9956, %v9955
    %v10060 = vpack.c.b16 %v9958, %v9957
    %v10061 = vpack.c.b16 %v9960, %v9959
    %v10062 = vpack.c.b16 %v9962, %v9961
    %v10063 = vpack.c.b16 %v9964, %v9963
    %v10064 = vpack.c.b16 %v9966, %v9965
    %v10065 = vpack.c.b16 %v9968, %v9967
    %v10066 = vpack.c.b16 %v9970, %v9969
    %10163 = vmatprep.subr.bf16.mxu0 0
    %10164 = vmatpush1.bf16.msra.mxu0 %v9971
    %10165 = vmatprep.subr.bf16.mxu0 0
    %10166 = vmatpush1.bf16.msra.mxu0 %v9972
    %10167 = vmatprep.subr.bf16.mxu0 0
    %10168 = vmatpush1.bf16.msra.mxu0 %v9973
    %10169 = vmatprep.subr.bf16.mxu0 0
    %10170 = vmatpush1.bf16.msra.mxu0 %v9974
    %10171 = vmatprep.subr.bf16.mxu0 0
    %10172 = vmatpush1.bf16.msra.mxu0 %v9975
    %10173 = vmatprep.subr.bf16.mxu0 0
    %10174 = vmatpush1.bf16.msra.mxu0 %v9976
    %10175 = vmatprep.subr.bf16.mxu0 0
    %10176 = vmatpush1.bf16.msra.mxu0 %v9977
    %10177 = vmatprep.subr.bf16.mxu0 0
    %10178 = vmatpush1.bf16.msra.mxu0 %v9978
    %10179 = vmatprep.subr.bf16.mxu0 0
    %10180 = vmatpush1.bf16.msra.mxu0 %v9979
    %10181 = vmatprep.subr.bf16.mxu0 0
    %10182 = vmatpush1.bf16.msra.mxu0 %v9980
    %10183 = vmatprep.subr.bf16.mxu0 0
    %10184 = vmatpush1.bf16.msra.mxu0 %v9981
    %10185 = vmatprep.subr.bf16.mxu0 0
    %10186 = vmatpush1.bf16.msra.mxu0 %v9982
    %10187 = vmatprep.subr.bf16.mxu0 0
    %10188 = vmatpush1.bf16.msra.mxu0 %v9983
    %10189 = vmatprep.subr.bf16.mxu0 0
    %10190 = vmatpush1.bf16.msra.mxu0 %v9984
    %10191 = vmatprep.subr.bf16.mxu0 0
    %10192 = vmatpush1.bf16.msra.mxu0 %v9985
    %10193 = vmatprep.subr.bf16.mxu0 0
    %10194 = vmatpush1.bf16.msra.mxu0 %v9986
    %10195 = vmatprep.mubr.bf16.mxu0 %v9377
    %10196 = vmatmul.mubr.bf16.gmra.mrb[0].mxu0 %v9376
    %v10197 = vpop.f32.mrb[0].mxu0
    %v10198 = vadd.f32 %v9585, %v10197
    %v10199 = vpop.f32.mrb[0].mxu0
    %v10200 = vpop.f32.mrb[0].mxu0
    %v10201 = vpop.f32.mrb[0].mxu0
    %10202 = vdwg.mxu0
    %10203 = vmatprep.subr.bf16.mxu0 0
    %10204 = vmatpush1.bf16.msra.mxu0 %v9987
    %10205 = vmatprep.subr.bf16.mxu0 0
    %10206 = vmatpush1.bf16.msra.mxu0 %v9988
    %10207 = vmatprep.subr.bf16.mxu0 0
    %10208 = vmatpush1.bf16.msra.mxu0 %v9989
    %10209 = vmatprep.subr.bf16.mxu0 0
    %10210 = vmatpush1.bf16.msra.mxu0 %v9990
    %10211 = vmatprep.subr.bf16.mxu0 0
    %10212 = vmatpush1.bf16.msra.mxu0 %v9991
    %10213 = vmatprep.subr.bf16.mxu0 0
    %10214 = vmatpush1.bf16.msra.mxu0 %v9992
    %10215 = vmatprep.subr.bf16.mxu0 0
    %10216 = vmatpush1.bf16.msra.mxu0 %v9993
    %10217 = vmatprep.subr.bf16.mxu0 0
    %10218 = vmatpush1.bf16.msra.mxu0 %v9994
    %10219 = vmatprep.subr.bf16.mxu0 0
    %10220 = vmatpush1.bf16.msra.mxu0 %v9995
    %10221 = vmatprep.subr.bf16.mxu0 0
    %10222 = vmatpush1.bf16.msra.mxu0 %v9996
    %10223 = vmatprep.subr.bf16.mxu0 0
    %10224 = vmatpush1.bf16.msra.mxu0 %v9997
    %10225 = vmatprep.subr.bf16.mxu0 0
    %10226 = vmatpush1.bf16.msra.mxu0 %v9998
    %10227 = vmatprep.subr.bf16.mxu0 0
    %10228 = vmatpush1.bf16.msra.mxu0 %v9999
    %10229 = vmatprep.subr.bf16.mxu0 0
    %10230 = vmatpush1.bf16.msra.mxu0 %v10000
    %10231 = vmatprep.subr.bf16.mxu0 0
    %10232 = vmatpush1.bf16.msra.mxu0 %v10001
    %10233 = vmatprep.subr.bf16.mxu0 0
    %10234 = vmatpush1.bf16.msra.mxu0 %v10002
    %10235 = vmatprep.mubr.bf16.mxu0 %v9379
    %10236 = vmatmul.mubr.bf16.gmra.mrb[0].mxu0 %v9378
    %v10237 = vpop.f32.mrb[0].mxu0
    %v10238 = vadd.f32 %v10198, %v10237
    %v10239 = vpop.f32.mrb[0].mxu0
    %v10240 = vpop.f32.mrb[0].mxu0
    %v10241 = vpop.f32.mrb[0].mxu0
    %10242 = vdwg.mxu0
    %10243 = vmatprep.subr.bf16.mxu0 0
    %10244 = vmatpush1.bf16.msra.mxu0 %v10003
    %10245 = vmatprep.subr.bf16.mxu0 0
    %10246 = vmatpush1.bf16.msra.mxu0 %v10004
    %10247 = vmatprep.subr.bf16.mxu0 0
    %10248 = vmatpush1.bf16.msra.mxu0 %v10005
    %10249 = vmatprep.subr.bf16.mxu0 0
    %10250 = vmatpush1.bf16.msra.mxu0 %v10006
    %10251 = vmatprep.subr.bf16.mxu0 0
    %10252 = vmatpush1.bf16.msra.mxu0 %v10007
    %10253 = vmatprep.subr.bf16.mxu0 0
    %10254 = vmatpush1.bf16.msra.mxu0 %v10008
    %10255 = vmatprep.subr.bf16.mxu0 0
    %10256 = vmatpush1.bf16.msra.mxu0 %v10009
    %10257 = vmatprep.subr.bf16.mxu0 0
    %10258 = vmatpush1.bf16.msra.mxu0 %v10010
    %10259 = vmatprep.subr.bf16.mxu0 0
    %10260 = vmatpush1.bf16.msra.mxu0 %v10011
    %10261 = vmatprep.subr.bf16.mxu0 0
    %10262 = vmatpush1.bf16.msra.mxu0 %v10012
    %10263 = vmatprep.subr.bf16.mxu0 0
    %10264 = vmatpush1.bf16.msra.mxu0 %v10013
    %10265 = vmatprep.subr.bf16.mxu0 0
    %10266 = vmatpush1.bf16.msra.mxu0 %v10014
    %10267 = vmatprep.subr.bf16.mxu0 0
    %10268 = vmatpush1.bf16.msra.mxu0 %v10015
    %10269 = vmatprep.subr.bf16.mxu0 0
    %10270 = vmatpush1.bf16.msra.mxu0 %v10016
    %10271 = vmatprep.subr.bf16.mxu0 0
    %10272 = vmatpush1.bf16.msra.mxu0 %v10017
    %10273 = vmatprep.subr.bf16.mxu0 0
    %10274 = vmatpush1.bf16.msra.mxu0 %v10018
    %10275 = vmatprep.mubr.bf16.mxu0 %v9381
    %10276 = vmatmul.mubr.bf16.gmra.mrb[0].mxu0 %v9380
    %v10277 = vpop.f32.mrb[0].mxu0
    %v10278 = vadd.f32 %v10238, %v10277
    %v10279 = vpop.f32.mrb[0].mxu0
    %v10280 = vpop.f32.mrb[0].mxu0
    %v10281 = vpop.f32.mrb[0].mxu0
    %10282 = vdwg.mxu0
    %10283 = vmatprep.subr.bf16.mxu0 0
    %10284 = vmatpush1.bf16.msra.mxu0 %v10019
    %10285 = vmatprep.subr.bf16.mxu0 0
    %10286 = vmatpush1.bf16.msra.mxu0 %v10020
    %10287 = vmatprep.subr.bf16.mxu0 0
    %10288 = vmatpush1.bf16.msra.mxu0 %v10021
    %10289 = vmatprep.subr.bf16.mxu0 0
    %10290 = vmatpush1.bf16.msra.mxu0 %v10022
    %10291 = vmatprep.subr.bf16.mxu0 0
    %10292 = vmatpush1.bf16.msra.mxu0 %v10023
    %10293 = vmatprep.subr.bf16.mxu0 0
    %10294 = vmatpush1.bf16.msra.mxu0 %v10024
    %10295 = vmatprep.subr.bf16.mxu0 0
    %10296 = vmatpush1.bf16.msra.mxu0 %v10025
    %10297 = vmatprep.subr.bf16.mxu0 0
    %10298 = vmatpush1.bf16.msra.mxu0 %v10026
    %10299 = vmatprep.subr.bf16.mxu0 0
    %10300 = vmatpush1.bf16.msra.mxu0 %v10027
    %10301 = vmatprep.subr.bf16.mxu0 0
    %10302 = vmatpush1.bf16.msra.mxu0 %v10028
    %10303 = vmatprep.subr.bf16.mxu0 0
    %10304 = vmatpush1.bf16.msra.mxu0 %v10029
    %10305 = vmatprep.subr.bf16.mxu0 0
    %10306 = vmatpush1.bf16.msra.mxu0 %v10030
    %10307 = vmatprep.subr.bf16.mxu0 0
    %10308 = vmatpush1.bf16.msra.mxu0 %v10031
    %10309 = vmatprep.subr.bf16.mxu0 0
    %10310 = vmatpush1.bf16.msra.mxu0 %v10032
    %10311 = vmatprep.subr.bf16.mxu0 0
    %10312 = vmatpush1.bf16.msra.mxu0 %v10033
    %10313 = vmatprep.subr.bf16.mxu0 0
    %10314 = vmatpush1.bf16.msra.mxu0 %v10034
    %10315 = vmatprep.mubr.bf16.mxu0 %v9383
    %10316 = vmatmul.mubr.bf16.gmra.mrb[0].mxu0 %v9382
    %v10317 = vpop.f32.mrb[0].mxu0
    %v10318 = vadd.f32 %v10278, %v10317
    %v10319 = vpop.f32.mrb[0].mxu0
    %v10320 = vpop.f32.mrb[0].mxu0
    %v10321 = vpop.f32.mrb[0].mxu0
    %10322 = vdwg.mxu0
    %10323 = vmatprep.subr.bf16.mxu0 0
    %10324 = vmatpush1.bf16.msra.mxu0 %v10035
    %10325 = vmatprep.subr.bf16.mxu0 0
    %10326 = vmatpush1.bf16.msra.mxu0 %v10036
    %10327 = vmatprep.subr.bf16.mxu0 0
    %10328 = vmatpush1.bf16.msra.mxu0 %v10037
    %10329 = vmatprep.subr.bf16.mxu0 0
    %10330 = vmatpush1.bf16.msra.mxu0 %v10038
    %10331 = vmatprep.subr.bf16.mxu0 0
    %10332 = vmatpush1.bf16.msra.mxu0 %v10039
    %10333 = vmatprep.subr.bf16.mxu0 0
    %10334 = vmatpush1.bf16.msra.mxu0 %v10040
    %10335 = vmatprep.subr.bf16.mxu0 0
    %10336 = vmatpush1.bf16.msra.mxu0 %v10041
    %10337 = vmatprep.subr.bf16.mxu0 0
    %10338 = vmatpush1.bf16.msra.mxu0 %v10042
    %10339 = vmatprep.subr.bf16.mxu0 0
    %10340 = vmatpush1.bf16.msra.mxu0 %v10043
    %10341 = vmatprep.subr.bf16.mxu0 0
    %10342 = vmatpush1.bf16.msra.mxu0 %v10044
    %10343 = vmatprep.subr.bf16.mxu0 0
    %10344 = vmatpush1.bf16.msra.mxu0 %v10045
    %10345 = vmatprep.subr.bf16.mxu0 0
    %10346 = vmatpush1.bf16.msra.mxu0 %v10046
    %10347 = vmatprep.subr.bf16.mxu0 0
    %10348 = vmatpush1.bf16.msra.mxu0 %v10047
    %10349 = vmatprep.subr.bf16.mxu0 0
    %10350 = vmatpush1.bf16.msra.mxu0 %v10048
    %10351 = vmatprep.subr.bf16.mxu0 0
    %10352 = vmatpush1.bf16.msra.mxu0 %v10049
    %10353 = vmatprep.subr.bf16.mxu0 0
    %10354 = vmatpush1.bf16.msra.mxu0 %v10050
    %10355 = vmatprep.mubr.bf16.mxu0 %v9385
    %10356 = vmatmul.mubr.bf16.gmra.mrb[0].mxu0 %v9384
    %v10357 = vpop.f32.mrb[0].mxu0
    %v10358 = vadd.f32 %v10318, %v10357
    %v10359 = vpop.f32.mrb[0].mxu0
    %v10360 = vpop.f32.mrb[0].mxu0
    %v10361 = vpop.f32.mrb[0].mxu0
    %10362 = vdwg.mxu0
    %10363 = vmatprep.subr.bf16.mxu0 0
    %10364 = vmatpush1.bf16.msra.mxu0 %v10051
    %10365 = vmatprep.subr.bf16.mxu0 0
    %10366 = vmatpush1.bf16.msra.mxu0 %v10052
    %10367 = vmatprep.subr.bf16.mxu0 0
    %10368 = vmatpush1.bf16.msra.mxu0 %v10053
    %10369 = vmatprep.subr.bf16.mxu0 0
    %10370 = vmatpush1.bf16.msra.mxu0 %v10054
    %10371 = vmatprep.subr.bf16.mxu0 0
    %10372 = vmatpush1.bf16.msra.mxu0 %v10055
    %10373 = vmatprep.subr.bf16.mxu0 0
    %10374 = vmatpush1.bf16.msra.mxu0 %v10056
    %10375 = vmatprep.subr.bf16.mxu0 0
    %10376 = vmatpush1.bf16.msra.mxu0 %v10057
    %10377 = vmatprep.subr.bf16.mxu0 0
    %10378 = vmatpush1.bf16.msra.mxu0 %v10058
    %10379 = vmatprep.subr.bf16.mxu0 0
    %10380 = vmatpush1.bf16.msra.mxu0 %v10059
    %10381 = vmatprep.subr.bf16.mxu0 0
    %10382 = vmatpush1.bf16.msra.mxu0 %v10060
    %10383 = vmatprep.subr.bf16.mxu0 0
    %10384 = vmatpush1.bf16.msra.mxu0 %v10061
    %10385 = vmatprep.subr.bf16.mxu0 0
    %10386 = vmatpush1.bf16.msra.mxu0 %v10062
    %10387 = vmatprep.subr.bf16.mxu0 0
    %10388 = vmatpush1.bf16.msra.mxu0 %v10063
    %10389 = vmatprep.subr.bf16.mxu0 0
    %10390 = vmatpush1.bf16.msra.mxu0 %v10064
    %10391 = vmatprep.subr.bf16.mxu0 0
    %10392 = vmatpush1.bf16.msra.mxu0 %v10065
    %10393 = vmatprep.subr.bf16.mxu0 0
    %10394 = vmatpush1.bf16.msra.mxu0 %v10066
    %10395 = vmatprep.mubr.bf16.mxu0 %v9387
    %10396 = vmatmul.mubr.bf16.gmra.mrb[0].mxu0 %v9386
    %v10397 = vpop.f32.mrb[0].mxu0
    %v10398 = vadd.f32 %v10358, %v10397
    %v10399 = vpop.f32.mrb[0].mxu0
    %v10400 = vpop.f32.mrb[0].mxu0
    %v10401 = vpop.f32.mrb[0].mxu0
    %10402 = vdwg.mxu0
    %10403 = vst [vmem:[%s10] sm:$0xff] %v10398
    // Predicated region
    $region70: #{xin_multimodal_forward.3} parent=1 // pred_check
      _
    $region71: #{xin_multimodal_forward.3} parent=1 // pred_check_branch
      %10405 = sbr.rel (0) target = $region73
    $region72: #{xin_multimodal_forward.3} parent=1 // pred_region
      _
    $region73: #{xin_multimodal_forward.3} parent=1 // pred_fallthru
      _
    // Predicated region
    $region74: #{xin_multimodal_forward.3} parent=1 // pred_check
      _
    $region75: #{xin_multimodal_forward.3} parent=1 // pred_check_branch
      %10407 = sbr.rel (0) target = $region77
    $region76: #{xin_multimodal_forward.3} parent=1 // pred_region
      _
    $region77: #{xin_multimodal_forward.3} parent=1 // pred_fallthru
      _
    // Predicated region
    $region78: #{xin_multimodal_forward.3} parent=1 // pred_check
      _
    $region79: #{xin_multimodal_forward.3} parent=1 // pred_check_branch
      %10409 = sbr.rel (0) target = $region81
    $region80: #{xin_multimodal_forward.3} parent=1 // pred_region
      _
    $region81: #{xin_multimodal_forward.3} parent=1 // pred_fallthru
      _
    // Predicated region
    $region82: #{xin_multimodal_forward.3} parent=1 // pred_check
      _
    $region83: #{xin_multimodal_forward.3} parent=1 // pred_check_branch
      %10411 = sbr.rel (0) target = $region85
    $region84: #{xin_multimodal_forward.3} parent=1 // pred_region
      _
    $region85: #{xin_multimodal_forward.3} parent=1 // pred_fallthru
      _
    %10412 = vsyncpa [#allocation3], 1
    %10413 = vsyncpa [#allocation5], 1
    %10414 = vsyncpa [#allocation8], 1
    %10415 = vsyncpa [#allocation11], 1
    %10416 = vsyncpa [#allocation14], 1

</llo_original>
